<compile_context>
chip_gen: v5e
topology: v5e:2x2
jax: 0.10.0
libtpu: 0.0.40
codegen_flags: <defaults>
</compile_context>

<pallas_src>
import functools

import jax
import jax.numpy as jnp
from jax.experimental import pallas as pl
from jax.experimental.pallas import tpu as pltpu

NEG_SLOPE = 0.01   # nn.LeakyReLU default negative_slope
BN_EPS = 1e-5      # nn.BatchNorm2d default eps


def _round_up(x, m):
    return ((x + m - 1) // m) * m


# ---------------------------------------------------------------------------
# In-kernel helpers
# ---------------------------------------------------------------------------
def _shift_w(xp, s, use_roll):
    """W-axis (sublane) shift: result[h, x, :] = xp[h, x - s, :] (zeros flow in
    at the image boundary).  s in {+1, -1}.

    xp is a zero-ring padded buffer: rows 0 and H+1 are zero and columns
    [W, Wp) are zero, and callers only read columns [0, W); with the roll path
    every wrapped element therefore comes from a zero region.
    """
    if s == 0:
        return xp
    hp, wp, c = xp.shape
    if use_roll:
        flat = xp.reshape(hp * wp, c)
        flat = pltpu.roll(flat, shift=s % (hp * wp), axis=0)
        return flat.reshape(hp, wp, c)
    # Fallback: explicit zero column + misaligned copy (always lowers).
    zcol = jnp.zeros((hp, 1, c), xp.dtype)
    if s > 0:                                   # result[x] = xp[x-1]
        return jnp.concatenate([zcol, xp[:, :wp - 1, :]], axis=1)
    return jnp.concatenate([xp[:, 1:, :], zcol], axis=1)   # result[x] = xp[x+1]


def _dense_conv3x3(xp, w_ref, *, H, W, use_roll):
    """Dense 3x3 'same' conv as 3 MXU matmuls (dy taps) with K = 3*Cin.

    xp:    (H+2, Wp, Cin) bf16, data at rows [1,H] x cols [0,W), zero ring.
    w_ref: (3, 3*Cin, Cout) bf16 ref, index [ky, kx*Cin + c, cout].
    Returns (H*W, Cout) f32.
    """
    cin = xp.shape[-1]
    cout = w_ref.shape[-1]
    left = _shift_w(xp, +1, use_roll)    # values at input col x-1  (kx = 0)
    right = _shift_w(xp, -1, use_roll)   # values at input col x+1  (kx = 2)
    cat = jnp.concatenate([left, xp, right], axis=-1)        # (H+2, Wp, 3*Cin)
    acc = jnp.zeros((H * W, cout), jnp.float32)
    for ky in range(3):
        patch = cat[ky:ky + H, 0:W, :].reshape(H * W, 3 * cin)
        acc = acc + jnp.dot(patch, w_ref[ky],
                            preferred_element_type=jnp.float32)
    return acc


def _dw_conv3x3(xp, w_dw, bias, *, H, W, use_roll):
    """Depthwise 3x3 'same' conv as 9 VPU multiply-accumulate taps.

    xp:   (H+2, Wp, C) f32, data at rows [1,H] x cols [0,W), zero ring.
    w_dw: (9, C) f32, indexed [ky*3 + kx, c].
    Returns (H, W, C) f32 (conv + bias).
    """
    c = xp.shape[-1]
    shifted = (_shift_w(xp, +1, use_roll), xp, _shift_w(xp, -1, use_roll))
    acc = jnp.zeros((H, W, c), jnp.float32)
    for kx in range(3):
        sh = shifted[kx]
        for ky in range(3):
            acc = acc + sh[ky:ky + H, 0:W, :] * w_dw[ky * 3 + kx]
    return acc + bias


def _leaky_relu(x):
    return jnp.where(x >= 0, x, NEG_SLOPE * x)


def _zero_pad_ring(ref, H, W):
    """Zero only the pad ring (top/bottom rows + right zero-tail columns);
    the interior [1:H+1, 0:W) is fully overwritten every step."""
    hp, wp, c = ref.shape
    ref[0:1, :, :] = jnp.zeros((1, wp, c), ref.dtype)
    ref[H + 1:H + 2, :, :] = jnp.zeros((1, wp, c), ref.dtype)
    ref[1:H + 1, W:, :] = jnp.zeros((H, wp - W, c), ref.dtype)


# ---------------------------------------------------------------------------
# Fused kernel: mbconv1 + mbconv2 + bilinear resize, one grid step per image
# ---------------------------------------------------------------------------
def _mc_fused_kernel(x_ref, wg1_ref, bg1_ref, w1_ref, s1_ref, t1_ref,
                     wdw2_ref, bdw2_ref, w2_ref, s2_ref, t2_ref, rb_ref,
                     o_ref, pad1_ref, pad2_ref, pad3_ref, *, H, W, use_roll):
    # Re-zero only the pad rings (correct under megacore 'parallel' batch
    # scheduling; scratch is per-core and interiors are rewritten each step).
    _zero_pad_ring(pad1_ref, H, W)
    _zero_pad_ring(pad2_ref, H, W)
    _zero_pad_ring(pad3_ref, H, W)

    # ---- mbconv1 grouped 3x3 conv (groups = cin): 3 MXU matmuls on the
    #      dx-pre-baked input against a densified (3, 3*cin, 256) weight. ----
    x0 = x_ref[0]                                              # (H+2, Wp, 3*cin) bf16
    h1 = jnp.zeros((H * W, 256), jnp.float32)
    for ky in range(3):
        patch = x0[ky:ky + H, 0:W, :].reshape(H * W, -1)
        h1 = h1 + jnp.dot(patch, wg1_ref[ky],
                          preferred_element_type=jnp.float32)
    h1 = h1 + bg1_ref[...]                                     # grouped-conv bias
    pad1_ref[1:H + 1, 0:W, :] = h1.reshape(H, W, 256).astype(pad1_ref.dtype)

    # ---- mbconv1 dense 3x3 conv 256->128 (MXU) + folded BN + LeakyReLU ----
    a1 = _dense_conv3x3(pad1_ref[...], w1_ref, H=H, W=W, use_roll=use_roll)
    a1 = _leaky_relu(a1 * s1_ref[...] + t1_ref[...])           # (H*W, 128)
    pad2_ref[1:H + 1, 0:W, :] = a1.reshape(H, W, 128)

    # ---- mbconv2 depthwise 3x3 conv (9 VPU taps over 128 lanes) ----
    h2 = _dw_conv3x3(pad2_ref[...], wdw2_ref[...], bdw2_ref[0],
                     H=H, W=W, use_roll=use_roll)              # (H, W, 128)
    pad3_ref[1:H + 1, 0:W, :] = h2.astype(pad3_ref.dtype)

    # ---- mbconv2 dense 3x3 conv 128->128 (MXU) + folded BN + LeakyReLU ----
    a2 = _dense_conv3x3(pad3_ref[...], w2_ref, H=H, W=W, use_roll=use_roll)
    a2 = _leaky_relu(a2 * s2_ref[...] + t2_ref[...])           # (H*W, 128)

    # ---- bilinear resize fused into the epilogue: one MXU matmul with the
    #      precomputed interpolation matrix kron(ry, rx). ----
    out = jnp.dot(rb_ref[...], a2.astype(jnp.bfloat16),
                  preferred_element_type=jnp.float32)          # (Ho*Wo, 128)
    o_ref[0] = out.astype(o_ref.dtype)


# ---------------------------------------------------------------------------
# One-time parameter preparation (outside jit)
# ---------------------------------------------------------------------------
def bn_fold(conv_bias, gamma, beta, mean, var):
    """Fold eval-mode BatchNorm into a per-channel (scale, shift)."""
    s = gamma / jnp.sqrt(var + BN_EPS)
    return s, (conv_bias - mean) * s + beta


def _bilinear_matrix(in_size, out_size):
    """Row-stochastic (out, in) matrix matching F.interpolate bilinear,
    align_corners=False (half-pixel centers, edge clamped)."""
    dst = jnp.arange(out_size, dtype=jnp.float32)
    src = (dst + 0.5) * (in_size / out_size) - 0.5
    src = jnp.maximum(src, 0.0)
    i0 = jnp.minimum(jnp.floor(src).astype(jnp.int32), in_size - 1)
    i1 = jnp.minimum(i0 + 1, in_size - 1)
    frac = src - i0.astype(jnp.float32)
    r = jnp.zeros((out_size, in_size), jnp.float32)
    rows = jnp.arange(out_size)
    r = r.at[rows, i0].add(1.0 - frac)
    r = r.at[rows, i1].add(frac)
    return r


def prepare_params(params, in_channel, input_hw, target_hw):
    """Precompute everything the kernel consumes (done once, outside jit)."""
    cin = in_channel
    rep = 256 // cin
    H, W = input_hw
    Ho, Wo = target_hw
    prep = {}
    # mbconv1 grouped conv, densified to (3, 3*cin, 256): [ky, kx*cin + c, o]
    w1a = params["w1a"].reshape(256, 3, 3)                       # (o, ky, kx)
    onehot = (jnp.arange(256)[:, None] // rep ==
              jnp.arange(cin)[None, :]).astype(jnp.float32)      # (o, c)
    wg1 = jnp.einsum("oyx,oc->yxco", w1a, onehot).reshape(3, 3 * cin, 256)
    prep["wg1"] = wg1.astype(jnp.bfloat16)
    prep["bg1"] = params["b1a"].reshape(1, 256)
    # mbconv1 dense conv: OIHW -> HWIO -> (ky, kx*Cin + c, Cout)
    w1 = jnp.transpose(params["w1b"], (2, 3, 1, 0))
    prep["w1"] = w1.reshape(3, 3 * 256, 128).astype(jnp.bfloat16)
    s1, t1 = bn_fold(params["b1b"], params["bn1_g"], params["bn1_b"],
                     params["bn1_m"], params["bn1_v"])
    prep["s1"], prep["t1"] = s1.reshape(1, 128), t1.reshape(1, 128)
    # mbconv2 depthwise: VPU taps (9, 128)
    prep["wdw2"] = jnp.transpose(params["w2a"].reshape(128, 9), (1, 0))
    prep["bdw2"] = params["b2a"].reshape(1, 128)
    # mbconv2 dense conv
    w2 = jnp.transpose(params["w2b"], (2, 3, 1, 0))
    prep["w2"] = w2.reshape(3, 3 * 128, 128).astype(jnp.bfloat16)
    s2, t2 = bn_fold(params["b2b"], params["bn2_g"], params["bn2_b"],
                     params["bn2_m"], params["bn2_v"])
    prep["s2"], prep["t2"] = s2.reshape(1, 128), t2.reshape(1, 128)
    # bilinear resize as one matmul: out_flat = kron(ry, rx) @ y_flat
    ry = _bilinear_matrix(H, Ho)
    rx = _bilinear_matrix(W, Wo)
    prep["rb"] = jnp.kron(ry, rx).astype(jnp.bfloat16)           # (Ho*Wo, H*W)
    return prep


# ---------------------------------------------------------------------------
# MC forward
# ---------------------------------------------------------------------------
@functools.partial(jax.jit, static_argnames=("use_roll",))
def mc_forward(prep, x_nchw, target, use_roll=True):
    """x: (N, Cin, H, W) f32; only target's spatial size is used (as in the
    PyTorch module).  Returns (N, 128, Ho, Wo) f32."""
    n, cin, h, w = x_nchw.shape
    ho, wo = target.shape[2], target.shape[3]
    assert 256 % cin == 0
    assert prep["rb"].shape == (ho * wo, h * w), (
        "prepare_params() was built for different input/target sizes")
    wp = _round_up(w + 1, 8)      # >= W+1 so a zero tail exists for the rolls

    # NCHW -> NHWC; pre-bake the three dx taps of the grouped conv along the
    # channel axis (3*cin channels, NOT the old 256/cin replication); add the
    # 'same' zero row ring; pad W (sublane axis) to the 8-aligned scratch
    # width; bf16 because it feeds the MXU directly.
    x = jnp.transpose(x_nchw, (0, 2, 3, 1))                             # (N,H,W,cin)
    left = jnp.pad(x, ((0, 0), (0, 0), (1, 0), (0, 0)))[:, :, :w, :]    # img[x-1]
    right = jnp.pad(x, ((0, 0), (0, 0), (0, 1), (0, 0)))[:, :, 1:, :]   # img[x+1]
    xcat = jnp.concatenate([left, x, right], axis=-1)                   # (N,H,W,3cin)
    xcat = jnp.pad(xcat, ((0, 0), (1, 1), (0, wp - w), (0, 0)))
    xcat = xcat.astype(jnp.bfloat16)

    kernel = functools.partial(_mc_fused_kernel, H=h, W=w, use_roll=use_roll)
    out = pl.pallas_call(
        kernel,
        out_shape=jax.ShapeDtypeStruct((n, ho * wo, 128), jnp.float32),
        grid=(n,),
        in_specs=[
            pl.BlockSpec((1, h + 2, wp, 3 * cin), lambda i: (i, 0, 0, 0)),  # x
            pl.BlockSpec((3, 3 * cin, 256), lambda i: (0, 0, 0)),           # wg1
            pl.BlockSpec((1, 256), lambda i: (0, 0)),                       # bg1
            pl.BlockSpec((3, 3 * 256, 128), lambda i: (0, 0, 0)),           # w1
            pl.BlockSpec((1, 128), lambda i: (0, 0)),                       # s1
            pl.BlockSpec((1, 128), lambda i: (0, 0)),                       # t1
            pl.BlockSpec((9, 128), lambda i: (0, 0)),                       # wdw2
            pl.BlockSpec((1, 128), lambda i: (0, 0)),                       # bdw2
            pl.BlockSpec((3, 3 * 128, 128), lambda i: (0, 0, 0)),           # w2
            pl.BlockSpec((1, 128), lambda i: (0, 0)),                       # s2
            pl.BlockSpec((1, 128), lambda i: (0, 0)),                       # t2
            pl.BlockSpec((ho * wo, h * w), lambda i: (0, 0)),               # rb
        ],
        out_specs=pl.BlockSpec((1, ho * wo, 128), lambda i: (i, 0, 0)),
        scratch_shapes=[
            pltpu.VMEM((h + 2, wp, 256), jnp.bfloat16),  # grouped-conv out (MXU in)
            pltpu.VMEM((h + 2, wp, 128), jnp.float32),   # mbconv1 out (VPU in)
            pltpu.VMEM((h + 2, wp, 128), jnp.bfloat16),  # mbconv2 dw out (MXU in)
        ],
        compiler_params=pltpu.CompilerParams(
            dimension_semantics=("parallel",)),
    )(xcat, prep["wg1"], prep["bg1"], prep["w1"], prep["s1"], prep["t1"],
      prep["wdw2"], prep["bdw2"], prep["w2"], prep["s2"], prep["t2"],
      prep["rb"])

    # (N, Ho*Wo, 128) lane-dense kernel output -> NCHW
    return jnp.transpose(out, (0, 2, 1)).reshape(n, 128, ho, wo)


# ---------------------------------------------------------------------------
# Pure-JAX f32 reference (used only to pick the roll / no-roll path in main)
# ---------------------------------------------------------------------------
def mc_reference(params, x_nchw, target_hw):
    def conv(x, w, b, groups):
        y = jax.lax.conv_general_dilated(
            x, w, (1, 1), "SAME",
            dimension_numbers=("NCHW", "OIHW", "NCHW"),
            feature_group_count=groups)
        return y + b.reshape(1, -1, 1, 1)

    def bn(x, g, b, m, v):
        s = g / jnp.sqrt(v + BN_EPS)
        return x * s.reshape(1, -1, 1, 1) + (b - m * s).reshape(1, -1, 1, 1)

    cin = x_nchw.shape[1]
    y = conv(x_nchw, params["w1a"], params["b1a"], cin)
    y = conv(y, params["w1b"], params["b1b"], 1)
    y = _leaky_relu(bn(y, params["bn1_g"], params["bn1_b"],
                       params["bn1_m"], params["bn1_v"]))
    y = conv(y, params["w2a"], params["b2a"], 128)
    y = conv(y, params["w2b"], params["b2b"], 1)
    y = _leaky_relu(bn(y, params["bn2_g"], params["bn2_b"],
                       params["bn2_m"], params["bn2_v"]))
    ry = _bilinear_matrix(y.shape[2], target_hw[0])
    rx = _bilinear_matrix(y.shape[3], target_hw[1])
    y = jnp.einsum("oh,nchw->ncow", ry, y)
    y = jnp.einsum("pw,ncow->ncop", rx, y)
    return y


# ---------------------------------------------------------------------------
# Parameters (deterministic synthetic init, PyTorch shapes)
# ---------------------------------------------------------------------------
def init_params(key, in_channel):
    assert 256 % in_channel == 0
    ks = jax.random.split(key, 16)
    p = {}
    p["w1a"] = 0.10 * jax.random.normal(ks[0], (256, 1, 3, 3), jnp.float32)
    p["b1a"] = 0.05 * jax.random.normal(ks[1], (256,), jnp.float32)
    p["w1b"] = 0.05 * jax.random.normal(ks[2], (128, 256, 3, 3), jnp.float32)
    p["b1b"] = 0.05 * jax.random.normal(ks[3], (128,), jnp.float32)
    p["bn1_g"] = 1.0 + 0.10 * jax.random.normal(ks[4], (128,), jnp.float32)
    p["bn1_b"] = 0.05 * jax.random.normal(ks[5], (128,), jnp.float32)
    p["bn1_m"] = 0.05 * jax.random.normal(ks[6], (128,), jnp.float32)
    p["bn1_v"] = 0.5 + jax.random.uniform(ks[7], (128,), jnp.float32)
    p["w2a"] = 0.10 * jax.random.normal(ks[8], (128, 1, 3, 3), jnp.float32)
    p["b2a"] = 0.05 * jax.random.normal(ks[9], (128,), jnp.float32)
    p["w2b"] = 0.05 * jax.random.normal(ks[10], (128, 128, 3, 3), jnp.float32)
    p["b2b"] = 0.05 * jax.random.normal(ks[11], (128,), jnp.float32)
    p["bn2_g"] = 1.0 + 0.10 * jax.random.normal(ks[12], (128,), jnp.float32)
    p["bn2_b"] = 0.05 * jax.random.normal(ks[13], (128,), jnp.float32)
    p["bn2_m"] = 0.05 * jax.random.normal(ks[14], (128,), jnp.float32)
    p["bn2_v"] = 0.5 + jax.random.uniform(ks[15], (128,), jnp.float32)
    return p


# ---------------------------------------------------------------------------
if __name__ == "__main__":
    key = jax.random.PRNGKey(0)
    k_x, k_t, k_p = jax.random.split(key, 3)

    in_channel = 4
    x = jax.random.normal(k_x, (2, in_channel, 16, 16), jnp.float32)   # NCHW
    target = jax.random.normal(k_t, (2, 3, 24, 24), jnp.float32)       # size-only

    params = init_params(k_p, in_channel)
    prep = prepare_params(params, in_channel, input_hw=(16, 16),
                          target_hw=(24, 24))
    ref = mc_reference(params, x, (24, 24))                            # f32 oracle

    out = None
    try:
        cand = jax.block_until_ready(mc_forward(prep, x, target, use_roll=True))
        # accept the XLU-roll path only if it agrees with the f32 reference
        # (guards against roll lowering/semantics surprises; bf16 error << 0.25)
        if float(jnp.max(jnp.abs(cand - ref))) < 0.25:
            out = cand
    except Exception:
        out = None
    if out is None:
        # slice/concat fallback path: identical math, roll-free
        out = jax.block_until_ready(mc_forward(prep, x, target, use_roll=False))

    assert out.shape == (2, 128, 24, 24), out.shape
    assert bool(jnp.all(jnp.isfinite(out)))
    print("KERNEL_OK")
</pallas_src>

<mosaic_0001>
module attributes {stable_mosaic.version = 11 : i64} {
  func.func @_mc_fused_kernel(%arg0: i32, %arg1: memref<1x18x24x12xbf16, #tpu.memory_space<vmem>>, %arg2: memref<3x12x256xbf16, #tpu.memory_space<vmem>>, %arg3: memref<1x256xf32, #tpu.memory_space<vmem>>, %arg4: memref<3x768x128xbf16, #tpu.memory_space<vmem>>, %arg5: memref<1x128xf32, #tpu.memory_space<vmem>>, %arg6: memref<1x128xf32, #tpu.memory_space<vmem>>, %arg7: memref<9x128xf32, #tpu.memory_space<vmem>>, %arg8: memref<1x128xf32, #tpu.memory_space<vmem>>, %arg9: memref<3x384x128xbf16, #tpu.memory_space<vmem>>, %arg10: memref<1x128xf32, #tpu.memory_space<vmem>>, %arg11: memref<1x128xf32, #tpu.memory_space<vmem>>, %arg12: memref<576x256xbf16, #tpu.memory_space<vmem>>, %arg13: memref<1x576x128xf32, #tpu.memory_space<vmem>>, %arg14: memref<18x24x256xbf16, #tpu.memory_space<vmem>>, %arg15: memref<18x24x128xf32, #tpu.memory_space<vmem>>, %arg16: memref<18x24x128xbf16, #tpu.memory_space<vmem>>) attributes {dimension_semantics = [#tpu.dimension_semantics<parallel>], iteration_bounds = array<i64: 2>, scalar_prefetch = 0 : i64, scratch_operands = 3 : i64, tpu.core_type = #tpu.core_type<tc>, window_params = [{transform_indices = @transform_0, window_bounds = array<i64: 1, 18, 24, 12>}, {pipeline_mode = #tpu.pipeline_mode<synchronous>, transform_indices = @transform_1, window_bounds = array<i64: 3, 12, 256>}, {pipeline_mode = #tpu.pipeline_mode<synchronous>, transform_indices = @transform_2, window_bounds = array<i64: 1, 256>}, {pipeline_mode = #tpu.pipeline_mode<synchronous>, transform_indices = @transform_3, window_bounds = array<i64: 3, 768, 128>}, {pipeline_mode = #tpu.pipeline_mode<synchronous>, transform_indices = @transform_4, window_bounds = array<i64: 1, 128>}, {pipeline_mode = #tpu.pipeline_mode<synchronous>, transform_indices = @transform_5, window_bounds = array<i64: 1, 128>}, {pipeline_mode = #tpu.pipeline_mode<synchronous>, transform_indices = @transform_6, window_bounds = array<i64: 9, 128>}, {pipeline_mode = #tpu.pipeline_mode<synchronous>, transform_indices = @transform_7, window_bounds = array<i64: 1, 128>}, {pipeline_mode = #tpu.pipeline_mode<synchronous>, transform_indices = @transform_8, window_bounds = array<i64: 3, 384, 128>}, {pipeline_mode = #tpu.pipeline_mode<synchronous>, transform_indices = @transform_9, window_bounds = array<i64: 1, 128>}, {pipeline_mode = #tpu.pipeline_mode<synchronous>, transform_indices = @transform_10, window_bounds = array<i64: 1, 128>}, {pipeline_mode = #tpu.pipeline_mode<synchronous>, transform_indices = @transform_11, window_bounds = array<i64: 576, 256>}, {transform_indices = @transform_12, window_bounds = array<i64: 1, 576, 128>}]} {
    %cst = arith.constant 0.000000e+00 : bf16
    %0 = vector.broadcast %cst : bf16 to vector<1x24x256xbf16>
    %c0 = arith.constant 0 : index
    %c0_0 = arith.constant 0 : index
    %c0_1 = arith.constant 0 : index
    %1 = vector.load %arg14[%c0, %c0_0, %c0_1] : memref<18x24x256xbf16, #tpu.memory_space<vmem>>, vector<1x24x256xbf16>
    tpu.vector_store %arg14[%c0, %c0_0, %c0_1], %0 {strides = array<i32>} : memref<18x24x256xbf16, #tpu.memory_space<vmem>>, vector<1x24x256xbf16>,
    %cst_2 = arith.constant 0.000000e+00 : bf16
    %2 = vector.broadcast %cst_2 : bf16 to vector<1x24x256xbf16>
    %c17 = arith.constant 17 : index
    %c0_3 = arith.constant 0 : index
    %c0_4 = arith.constant 0 : index
    %3 = vector.load %arg14[%c17, %c0_3, %c0_4] : memref<18x24x256xbf16, #tpu.memory_space<vmem>>, vector<1x24x256xbf16>
    tpu.vector_store %arg14[%c17, %c0_3, %c0_4], %2 {strides = array<i32>} : memref<18x24x256xbf16, #tpu.memory_space<vmem>>, vector<1x24x256xbf16>,
    %cst_5 = arith.constant 0.000000e+00 : bf16
    %4 = vector.broadcast %cst_5 : bf16 to vector<16x8x256xbf16>
    %c1 = arith.constant 1 : index
    %c16 = arith.constant 16 : index
    %c0_6 = arith.constant 0 : index
    %5 = vector.load %arg14[%c1, %c16, %c0_6] : memref<18x24x256xbf16, #tpu.memory_space<vmem>>, vector<16x8x256xbf16>
    tpu.vector_store %arg14[%c1, %c16, %c0_6], %4 {strides = array<i32>} : memref<18x24x256xbf16, #tpu.memory_space<vmem>>, vector<16x8x256xbf16>,
    %cst_7 = arith.constant 0.000000e+00 : f32
    %6 = vector.broadcast %cst_7 : f32 to vector<1x24x128xf32>
    %c0_8 = arith.constant 0 : index
    %c0_9 = arith.constant 0 : index
    %c0_10 = arith.constant 0 : index
    %7 = vector.load %arg15[%c0_8, %c0_9, %c0_10] : memref<18x24x128xf32, #tpu.memory_space<vmem>>, vector<1x24x128xf32>
    tpu.vector_store %arg15[%c0_8, %c0_9, %c0_10], %6 {strides = array<i32>} : memref<18x24x128xf32, #tpu.memory_space<vmem>>, vector<1x24x128xf32>,
    %cst_11 = arith.constant 0.000000e+00 : f32
    %8 = vector.broadcast %cst_11 : f32 to vector<1x24x128xf32>
    %c17_12 = arith.constant 17 : index
    %c0_13 = arith.constant 0 : index
    %c0_14 = arith.constant 0 : index
    %9 = vector.load %arg15[%c17_12, %c0_13, %c0_14] : memref<18x24x128xf32, #tpu.memory_space<vmem>>, vector<1x24x128xf32>
    tpu.vector_store %arg15[%c17_12, %c0_13, %c0_14], %8 {strides = array<i32>} : memref<18x24x128xf32, #tpu.memory_space<vmem>>, vector<1x24x128xf32>,
    %cst_15 = arith.constant 0.000000e+00 : f32
    %10 = vector.broadcast %cst_15 : f32 to vector<16x8x128xf32>
    %c1_16 = arith.constant 1 : index
    %c16_17 = arith.constant 16 : index
    %c0_18 = arith.constant 0 : index
    %11 = vector.load %arg15[%c1_16, %c16_17, %c0_18] : memref<18x24x128xf32, #tpu.memory_space<vmem>>, vector<16x8x128xf32>
    tpu.vector_store %arg15[%c1_16, %c16_17, %c0_18], %10 {strides = array<i32>} : memref<18x24x128xf32, #tpu.memory_space<vmem>>, vector<16x8x128xf32>,
    %cst_19 = arith.constant 0.000000e+00 : bf16
    %12 = vector.broadcast %cst_19 : bf16 to vector<1x24x128xbf16>
    %c0_20 = arith.constant 0 : index
    %c0_21 = arith.constant 0 : index
    %c0_22 = arith.constant 0 : index
    %13 = vector.load %arg16[%c0_20, %c0_21, %c0_22] : memref<18x24x128xbf16, #tpu.memory_space<vmem>>, vector<1x24x128xbf16>
    tpu.vector_store %arg16[%c0_20, %c0_21, %c0_22], %12 {strides = array<i32>} : memref<18x24x128xbf16, #tpu.memory_space<vmem>>, vector<1x24x128xbf16>,
    %cst_23 = arith.constant 0.000000e+00 : bf16
    %14 = vector.broadcast %cst_23 : bf16 to vector<1x24x128xbf16>
    %c17_24 = arith.constant 17 : index
    %c0_25 = arith.constant 0 : index
    %c0_26 = arith.constant 0 : index
    %15 = vector.load %arg16[%c17_24, %c0_25, %c0_26] : memref<18x24x128xbf16, #tpu.memory_space<vmem>>, vector<1x24x128xbf16>
    tpu.vector_store %arg16[%c17_24, %c0_25, %c0_26], %14 {strides = array<i32>} : memref<18x24x128xbf16, #tpu.memory_space<vmem>>, vector<1x24x128xbf16>,
    %cst_27 = arith.constant 0.000000e+00 : bf16
    %16 = vector.broadcast %cst_27 : bf16 to vector<16x8x128xbf16>
    %c1_28 = arith.constant 1 : index
    %c16_29 = arith.constant 16 : index
    %c0_30 = arith.constant 0 : index
    %17 = vector.load %arg16[%c1_28, %c16_29, %c0_30] : memref<18x24x128xbf16, #tpu.memory_space<vmem>>, vector<16x8x128xbf16>
    tpu.vector_store %arg16[%c1_28, %c16_29, %c0_30], %16 {strides = array<i32>} : memref<18x24x128xbf16, #tpu.memory_space<vmem>>, vector<16x8x128xbf16>,
    %c0_31 = arith.constant 0 : index
    %c0_32 = arith.constant 0 : index
    %c0_33 = arith.constant 0 : index
    %c0_34 = arith.constant 0 : index
    %18 = vector.load %arg1[%c0_31, %c0_32, %c0_33, %c0_34] : memref<1x18x24x12xbf16, #tpu.memory_space<vmem>>, vector<1x18x24x12xbf16>
    %19 = vector.shape_cast %18 : vector<1x18x24x12xbf16> to vector<18x24x12xbf16>
    %cst_35 = arith.constant 0.000000e+00 : f32
    %20 = vector.broadcast %cst_35 : f32 to vector<256x256xf32>
    %21 = vector.extract_strided_slice %19 {offsets = [0, 0, 0], sizes = [16, 16, 12], strides = [1, 1, 1]} : vector<18x24x12xbf16> to vector<16x16x12xbf16>
    %22 = vector.shape_cast %21 : vector<16x16x12xbf16> to vector<256x12xbf16>
    %c0_36 = arith.constant 0 : index
    %c0_37 = arith.constant 0 : index
    %c0_38 = arith.constant 0 : index
    %23 = vector.load %arg2[%c0_36, %c0_37, %c0_38] : memref<3x12x256xbf16, #tpu.memory_space<vmem>>, vector<1x12x256xbf16>
    %24 = vector.shape_cast %23 : vector<1x12x256xbf16> to vector<12x256xbf16>
    %cst_39 = arith.constant dense<0.000000e+00> : vector<256x256xf32>
    %25 = tpu.matmul %22, %24, %cst_39 {dimension_numbers = #tpu.dot_dimension_numbers<[1], [0], [0], [1], [0, 0, 1, 1], [], []>} : vector<256x12xbf16>, vector<12x256xbf16>, vector<256x256xf32> -> vector<256x256xf32>
    %26 = arith.addf %20, %25 : vector<256x256xf32>
    %27 = vector.extract_strided_slice %19 {offsets = [1, 0, 0], sizes = [16, 16, 12], strides = [1, 1, 1]} : vector<18x24x12xbf16> to vector<16x16x12xbf16>
    %28 = vector.shape_cast %27 : vector<16x16x12xbf16> to vector<256x12xbf16>
    %c1_40 = arith.constant 1 : index
    %c0_41 = arith.constant 0 : index
    %c0_42 = arith.constant 0 : index
    %29 = vector.load %arg2[%c1_40, %c0_41, %c0_42] : memref<3x12x256xbf16, #tpu.memory_space<vmem>>, vector<1x12x256xbf16>
    %30 = vector.shape_cast %29 : vector<1x12x256xbf16> to vector<12x256xbf16>
    %cst_43 = arith.constant dense<0.000000e+00> : vector<256x256xf32>
    %31 = tpu.matmul %28, %30, %cst_43 {dimension_numbers = #tpu.dot_dimension_numbers<[1], [0], [0], [1], [0, 0, 1, 1], [], []>} : vector<256x12xbf16>, vector<12x256xbf16>, vector<256x256xf32> -> vector<256x256xf32>
    %32 = arith.addf %26, %31 : vector<256x256xf32>
    %33 = vector.extract_strided_slice %19 {offsets = [2, 0, 0], sizes = [16, 16, 12], strides = [1, 1, 1]} : vector<18x24x12xbf16> to vector<16x16x12xbf16>
    %34 = vector.shape_cast %33 : vector<16x16x12xbf16> to vector<256x12xbf16>
    %c2 = arith.constant 2 : index
    %c0_44 = arith.constant 0 : index
    %c0_45 = arith.constant 0 : index
    %35 = vector.load %arg2[%c2, %c0_44, %c0_45] : memref<3x12x256xbf16, #tpu.memory_space<vmem>>, vector<1x12x256xbf16>
    %36 = vector.shape_cast %35 : vector<1x12x256xbf16> to vector<12x256xbf16>
    %cst_46 = arith.constant dense<0.000000e+00> : vector<256x256xf32>
    %37 = tpu.matmul %34, %36, %cst_46 {dimension_numbers = #tpu.dot_dimension_numbers<[1], [0], [0], [1], [0, 0, 1, 1], [], []>} : vector<256x12xbf16>, vector<12x256xbf16>, vector<256x256xf32> -> vector<256x256xf32>
    %38 = arith.addf %32, %37 : vector<256x256xf32>
    %c0_47 = arith.constant 0 : index
    %c0_48 = arith.constant 0 : index
    %39 = vector.load %arg3[%c0_47, %c0_48] : memref<1x256xf32, #tpu.memory_space<vmem>>, vector<1x256xf32>
    %40 = vector.broadcast %39 : vector<1x256xf32> to vector<256x256xf32>
    %41 = arith.addf %38, %40 : vector<256x256xf32>
    %42 = vector.shape_cast %41 : vector<256x256xf32> to vector<16x16x256xf32>
    %43 = arith.truncf %42 : vector<16x16x256xf32> to vector<16x16x256xbf16>
    %c1_49 = arith.constant 1 : index
    %c0_50 = arith.constant 0 : index
    %c0_51 = arith.constant 0 : index
    %44 = vector.load %arg14[%c1_49, %c0_50, %c0_51] : memref<18x24x256xbf16, #tpu.memory_space<vmem>>, vector<16x16x256xbf16>
    tpu.vector_store %arg14[%c1_49, %c0_50, %c0_51], %43 {strides = array<i32>} : memref<18x24x256xbf16, #tpu.memory_space<vmem>>, vector<16x16x256xbf16>,
    %c0_52 = arith.constant 0 : index
    %c0_53 = arith.constant 0 : index
    %c0_54 = arith.constant 0 : index
    %45 = vector.load %arg14[%c0_52, %c0_53, %c0_54] : memref<18x24x256xbf16, #tpu.memory_space<vmem>>, vector<18x24x256xbf16>
    %46 = vector.shape_cast %45 : vector<18x24x256xbf16> to vector<432x256xbf16>
    %c1_i32 = arith.constant 1 : i32
    %47 = tpu.dynamic_rotate %46 by %c1_i32 dim 0 : vector<432x256xbf16>, i32 -> vector<432x256xbf16>
    %48 = vector.shape_cast %47 : vector<432x256xbf16> to vector<18x24x256xbf16>
    %49 = vector.shape_cast %45 : vector<18x24x256xbf16> to vector<432x256xbf16>
    %c431_i32 = arith.constant 431 : i32
    %50 = tpu.dynamic_rotate %49 by %c431_i32 dim 0 : vector<432x256xbf16>, i32 -> vector<432x256xbf16>
    %51 = vector.shape_cast %50 : vector<432x256xbf16> to vector<18x24x256xbf16>
    %52 = tpu.concatenate %48, %45, %51 in 2 : vector<18x24x256xbf16>, vector<18x24x256xbf16>, vector<18x24x256xbf16> -> vector<18x24x768xbf16>
    %cst_55 = arith.constant 0.000000e+00 : f32
    %53 = vector.broadcast %cst_55 : f32 to vector<256x128xf32>
    %54 = vector.extract_strided_slice %52 {offsets = [0, 0, 0], sizes = [16, 16, 768], strides = [1, 1, 1]} : vector<18x24x768xbf16> to vector<16x16x768xbf16>
    %55 = vector.shape_cast %54 : vector<16x16x768xbf16> to vector<256x768xbf16>
    %c0_56 = arith.constant 0 : index
    %c0_57 = arith.constant 0 : index
    %c0_58 = arith.constant 0 : index
    %56 = vector.load %arg4[%c0_56, %c0_57, %c0_58] : memref<3x768x128xbf16, #tpu.memory_space<vmem>>, vector<1x768x128xbf16>
    %57 = vector.shape_cast %56 : vector<1x768x128xbf16> to vector<768x128xbf16>
    %cst_59 = arith.constant dense<0.000000e+00> : vector<256x128xf32>
    %58 = tpu.matmul %55, %57, %cst_59 {dimension_numbers = #tpu.dot_dimension_numbers<[1], [0], [0], [1], [0, 0, 1, 1], [], []>} : vector<256x768xbf16>, vector<768x128xbf16>, vector<256x128xf32> -> vector<256x128xf32>
    %59 = arith.addf %53, %58 : vector<256x128xf32>
    %60 = vector.extract_strided_slice %52 {offsets = [1, 0, 0], sizes = [16, 16, 768], strides = [1, 1, 1]} : vector<18x24x768xbf16> to vector<16x16x768xbf16>
    %61 = vector.shape_cast %60 : vector<16x16x768xbf16> to vector<256x768xbf16>
    %c1_60 = arith.constant 1 : index
    %c0_61 = arith.constant 0 : index
    %c0_62 = arith.constant 0 : index
    %62 = vector.load %arg4[%c1_60, %c0_61, %c0_62] : memref<3x768x128xbf16, #tpu.memory_space<vmem>>, vector<1x768x128xbf16>
    %63 = vector.shape_cast %62 : vector<1x768x128xbf16> to vector<768x128xbf16>
    %cst_63 = arith.constant dense<0.000000e+00> : vector<256x128xf32>
    %64 = tpu.matmul %61, %63, %cst_63 {dimension_numbers = #tpu.dot_dimension_numbers<[1], [0], [0], [1], [0, 0, 1, 1], [], []>} : vector<256x768xbf16>, vector<768x128xbf16>, vector<256x128xf32> -> vector<256x128xf32>
    %65 = arith.addf %59, %64 : vector<256x128xf32>
    %66 = vector.extract_strided_slice %52 {offsets = [2, 0, 0], sizes = [16, 16, 768], strides = [1, 1, 1]} : vector<18x24x768xbf16> to vector<16x16x768xbf16>
    %67 = vector.shape_cast %66 : vector<16x16x768xbf16> to vector<256x768xbf16>
    %c2_64 = arith.constant 2 : index
    %c0_65 = arith.constant 0 : index
    %c0_66 = arith.constant 0 : index
    %68 = vector.load %arg4[%c2_64, %c0_65, %c0_66] : memref<3x768x128xbf16, #tpu.memory_space<vmem>>, vector<1x768x128xbf16>
    %69 = vector.shape_cast %68 : vector<1x768x128xbf16> to vector<768x128xbf16>
    %cst_67 = arith.constant dense<0.000000e+00> : vector<256x128xf32>
    %70 = tpu.matmul %67, %69, %cst_67 {dimension_numbers = #tpu.dot_dimension_numbers<[1], [0], [0], [1], [0, 0, 1, 1], [], []>} : vector<256x768xbf16>, vector<768x128xbf16>, vector<256x128xf32> -> vector<256x128xf32>
    %71 = arith.addf %65, %70 : vector<256x128xf32>
    %c0_68 = arith.constant 0 : index
    %c0_69 = arith.constant 0 : index
    %72 = vector.load %arg5[%c0_68, %c0_69] : memref<1x128xf32, #tpu.memory_space<vmem>>, vector<1x128xf32>
    %73 = vector.broadcast %72 : vector<1x128xf32> to vector<256x128xf32>
    %74 = arith.mulf %71, %73 : vector<256x128xf32>
    %c0_70 = arith.constant 0 : index
    %c0_71 = arith.constant 0 : index
    %75 = vector.load %arg6[%c0_70, %c0_71] : memref<1x128xf32, #tpu.memory_space<vmem>>, vector<1x128xf32>
    %76 = vector.broadcast %75 : vector<1x128xf32> to vector<256x128xf32>
    %77 = arith.addf %74, %76 : vector<256x128xf32>
    %cst_72 = arith.constant 0.000000e+00 : f32
    %78 = vector.broadcast %cst_72 : f32 to vector<256x128xf32>
    %79 = arith.cmpf oge, %77, %78 : vector<256x128xf32>
    %cst_73 = arith.constant 0.00999999977 : f32
    %80 = vector.broadcast %cst_73 : f32 to vector<256x128xf32>
    %81 = arith.mulf %80, %77 : vector<256x128xf32>
    %82 = arith.select %79, %77, %81 : vector<256x128xi1>, vector<256x128xf32>
    %83 = vector.shape_cast %82 : vector<256x128xf32> to vector<16x16x128xf32>
    %c1_74 = arith.constant 1 : index
    %c0_75 = arith.constant 0 : index
    %c0_76 = arith.constant 0 : index
    %84 = vector.load %arg15[%c1_74, %c0_75, %c0_76] : memref<18x24x128xf32, #tpu.memory_space<vmem>>, vector<16x16x128xf32>
    tpu.vector_store %arg15[%c1_74, %c0_75, %c0_76], %83 {strides = array<i32>} : memref<18x24x128xf32, #tpu.memory_space<vmem>>, vector<16x16x128xf32>,
    %c0_77 = arith.constant 0 : index
    %c0_78 = arith.constant 0 : index
    %c0_79 = arith.constant 0 : index
    %85 = vector.load %arg15[%c0_77, %c0_78, %c0_79] : memref<18x24x128xf32, #tpu.memory_space<vmem>>, vector<18x24x128xf32>
    %c0_80 = arith.constant 0 : index
    %c0_81 = arith.constant 0 : index
    %86 = vector.load %arg7[%c0_80, %c0_81] : memref<9x128xf32, #tpu.memory_space<vmem>>, vector<9x128xf32>
    %c0_82 = arith.constant 0 : index
    %c0_83 = arith.constant 0 : index
    %87 = vector.load %arg8[%c0_82, %c0_83] : memref<1x128xf32, #tpu.memory_space<vmem>>, vector<1x128xf32>
    %88 = vector.shape_cast %87 : vector<1x128xf32> to vector<128xf32>
    %89 = vector.shape_cast %85 : vector<18x24x128xf32> to vector<432x128xf32>
    %c1_i32_84 = arith.constant 1 : i32
    %90 = tpu.dynamic_rotate %89 by %c1_i32_84 dim 0 : vector<432x128xf32>, i32 -> vector<432x128xf32>
    %91 = vector.shape_cast %90 : vector<432x128xf32> to vector<18x24x128xf32>
    %92 = vector.shape_cast %85 : vector<18x24x128xf32> to vector<432x128xf32>
    %c431_i32_85 = arith.constant 431 : i32
    %93 = tpu.dynamic_rotate %92 by %c431_i32_85 dim 0 : vector<432x128xf32>, i32 -> vector<432x128xf32>
    %94 = vector.shape_cast %93 : vector<432x128xf32> to vector<18x24x128xf32>
    %cst_86 = arith.constant 0.000000e+00 : f32
    %95 = vector.broadcast %cst_86 : f32 to vector<16x16x128xf32>
    %96 = vector.extract_strided_slice %91 {offsets = [0, 0, 0], sizes = [16, 16, 128], strides = [1, 1, 1]} : vector<18x24x128xf32> to vector<16x16x128xf32>
    %97 = vector.extract_strided_slice %86 {offsets = [0, 0], sizes = [1, 128], strides = [1, 1]} : vector<9x128xf32> to vector<1x128xf32>
    %98 = vector.shape_cast %97 : vector<1x128xf32> to vector<128xf32>
    %99 = vector.shape_cast %98 : vector<128xf32> to vector<1x1x128xf32>
    %100 = vector.broadcast %99 : vector<1x1x128xf32> to vector<16x16x128xf32>
    %101 = arith.mulf %96, %100 : vector<16x16x128xf32>
    %102 = arith.addf %95, %101 : vector<16x16x128xf32>
    %103 = vector.extract_strided_slice %91 {offsets = [1, 0, 0], sizes = [16, 16, 128], strides = [1, 1, 1]} : vector<18x24x128xf32> to vector<16x16x128xf32>
    %104 = vector.extract_strided_slice %86 {offsets = [3, 0], sizes = [1, 128], strides = [1, 1]} : vector<9x128xf32> to vector<1x128xf32>
    %105 = vector.shape_cast %104 : vector<1x128xf32> to vector<128xf32>
    %106 = vector.shape_cast %105 : vector<128xf32> to vector<1x1x128xf32>
    %107 = vector.broadcast %106 : vector<1x1x128xf32> to vector<16x16x128xf32>
    %108 = arith.mulf %103, %107 : vector<16x16x128xf32>
    %109 = arith.addf %102, %108 : vector<16x16x128xf32>
    %110 = vector.extract_strided_slice %91 {offsets = [2, 0, 0], sizes = [16, 16, 128], strides = [1, 1, 1]} : vector<18x24x128xf32> to vector<16x16x128xf32>
    %111 = vector.extract_strided_slice %86 {offsets = [6, 0], sizes = [1, 128], strides = [1, 1]} : vector<9x128xf32> to vector<1x128xf32>
    %112 = vector.shape_cast %111 : vector<1x128xf32> to vector<128xf32>
    %113 = vector.shape_cast %112 : vector<128xf32> to vector<1x1x128xf32>
    %114 = vector.broadcast %113 : vector<1x1x128xf32> to vector<16x16x128xf32>
    %115 = arith.mulf %110, %114 : vector<16x16x128xf32>
    %116 = arith.addf %109, %115 : vector<16x16x128xf32>
    %117 = vector.extract_strided_slice %85 {offsets = [0, 0, 0], sizes = [16, 16, 128], strides = [1, 1, 1]} : vector<18x24x128xf32> to vector<16x16x128xf32>
    %118 = vector.extract_strided_slice %86 {offsets = [1, 0], sizes = [1, 128], strides = [1, 1]} : vector<9x128xf32> to vector<1x128xf32>
    %119 = vector.shape_cast %118 : vector<1x128xf32> to vector<128xf32>
    %120 = vector.shape_cast %119 : vector<128xf32> to vector<1x1x128xf32>
    %121 = vector.broadcast %120 : vector<1x1x128xf32> to vector<16x16x128xf32>
    %122 = arith.mulf %117, %121 : vector<16x16x128xf32>
    %123 = arith.addf %116, %122 : vector<16x16x128xf32>
    %124 = vector.extract_strided_slice %85 {offsets = [1, 0, 0], sizes = [16, 16, 128], strides = [1, 1, 1]} : vector<18x24x128xf32> to vector<16x16x128xf32>
    %125 = vector.extract_strided_slice %86 {offsets = [4, 0], sizes = [1, 128], strides = [1, 1]} : vector<9x128xf32> to vector<1x128xf32>
    %126 = vector.shape_cast %125 : vector<1x128xf32> to vector<128xf32>
    %127 = vector.shape_cast %126 : vector<128xf32> to vector<1x1x128xf32>
    %128 = vector.broadcast %127 : vector<1x1x128xf32> to vector<16x16x128xf32>
    %129 = arith.mulf %124, %128 : vector<16x16x128xf32>
    %130 = arith.addf %123, %129 : vector<16x16x128xf32>
    %131 = vector.extract_strided_slice %85 {offsets = [2, 0, 0], sizes = [16, 16, 128], strides = [1, 1, 1]} : vector<18x24x128xf32> to vector<16x16x128xf32>
    %132 = vector.extract_strided_slice %86 {offsets = [7, 0], sizes = [1, 128], strides = [1, 1]} : vector<9x128xf32> to vector<1x128xf32>
    %133 = vector.shape_cast %132 : vector<1x128xf32> to vector<128xf32>
    %134 = vector.shape_cast %133 : vector<128xf32> to vector<1x1x128xf32>
    %135 = vector.broadcast %134 : vector<1x1x128xf32> to vector<16x16x128xf32>
    %136 = arith.mulf %131, %135 : vector<16x16x128xf32>
    %137 = arith.addf %130, %136 : vector<16x16x128xf32>
    %138 = vector.extract_strided_slice %94 {offsets = [0, 0, 0], sizes = [16, 16, 128], strides = [1, 1, 1]} : vector<18x24x128xf32> to vector<16x16x128xf32>
    %139 = vector.extract_strided_slice %86 {offsets = [2, 0], sizes = [1, 128], strides = [1, 1]} : vector<9x128xf32> to vector<1x128xf32>
    %140 = vector.shape_cast %139 : vector<1x128xf32> to vector<128xf32>
    %141 = vector.shape_cast %140 : vector<128xf32> to vector<1x1x128xf32>
    %142 = vector.broadcast %141 : vector<1x1x128xf32> to vector<16x16x128xf32>
    %143 = arith.mulf %138, %142 : vector<16x16x128xf32>
    %144 = arith.addf %137, %143 : vector<16x16x128xf32>
    %145 = vector.extract_strided_slice %94 {offsets = [1, 0, 0], sizes = [16, 16, 128], strides = [1, 1, 1]} : vector<18x24x128xf32> to vector<16x16x128xf32>
    %146 = vector.extract_strided_slice %86 {offsets = [5, 0], sizes = [1, 128], strides = [1, 1]} : vector<9x128xf32> to vector<1x128xf32>
    %147 = vector.shape_cast %146 : vector<1x128xf32> to vector<128xf32>
    %148 = vector.shape_cast %147 : vector<128xf32> to vector<1x1x128xf32>
    %149 = vector.broadcast %148 : vector<1x1x128xf32> to vector<16x16x128xf32>
    %150 = arith.mulf %145, %149 : vector<16x16x128xf32>
    %151 = arith.addf %144, %150 : vector<16x16x128xf32>
    %152 = vector.extract_strided_slice %94 {offsets = [2, 0, 0], sizes = [16, 16, 128], strides = [1, 1, 1]} : vector<18x24x128xf32> to vector<16x16x128xf32>
    %153 = vector.extract_strided_slice %86 {offsets = [8, 0], sizes = [1, 128], strides = [1, 1]} : vector<9x128xf32> to vector<1x128xf32>
    %154 = vector.shape_cast %153 : vector<1x128xf32> to vector<128xf32>
    %155 = vector.shape_cast %154 : vector<128xf32> to vector<1x1x128xf32>
    %156 = vector.broadcast %155 : vector<1x1x128xf32> to vector<16x16x128xf32>
    %157 = arith.mulf %152, %156 : vector<16x16x128xf32>
    %158 = arith.addf %151, %157 : vector<16x16x128xf32>
    %159 = vector.shape_cast %88 : vector<128xf32> to vector<1x1x128xf32>
    %160 = vector.broadcast %159 : vector<1x1x128xf32> to vector<16x16x128xf32>
    %161 = arith.addf %158, %160 : vector<16x16x128xf32>
    %162 = arith.truncf %161 : vector<16x16x128xf32> to vector<16x16x128xbf16>
    %c1_87 = arith.constant 1 : index
    %c0_88 = arith.constant 0 : index
    %c0_89 = arith.constant 0 : index
    %163 = vector.load %arg16[%c1_87, %c0_88, %c0_89] : memref<18x24x128xbf16, #tpu.memory_space<vmem>>, vector<16x16x128xbf16>
    tpu.vector_store %arg16[%c1_87, %c0_88, %c0_89], %162 {strides = array<i32>} : memref<18x24x128xbf16, #tpu.memory_space<vmem>>, vector<16x16x128xbf16>,
    %c0_90 = arith.constant 0 : index
    %c0_91 = arith.constant 0 : index
    %c0_92 = arith.constant 0 : index
    %164 = vector.load %arg16[%c0_90, %c0_91, %c0_92] : memref<18x24x128xbf16, #tpu.memory_space<vmem>>, vector<18x24x128xbf16>
    %165 = vector.shape_cast %164 : vector<18x24x128xbf16> to vector<432x128xbf16>
    %c1_i32_93 = arith.constant 1 : i32
    %166 = tpu.dynamic_rotate %165 by %c1_i32_93 dim 0 : vector<432x128xbf16>, i32 -> vector<432x128xbf16>
    %167 = vector.shape_cast %166 : vector<432x128xbf16> to vector<18x24x128xbf16>
    %168 = vector.shape_cast %164 : vector<18x24x128xbf16> to vector<432x128xbf16>
    %c431_i32_94 = arith.constant 431 : i32
    %169 = tpu.dynamic_rotate %168 by %c431_i32_94 dim 0 : vector<432x128xbf16>, i32 -> vector<432x128xbf16>
    %170 = vector.shape_cast %169 : vector<432x128xbf16> to vector<18x24x128xbf16>
    %171 = tpu.concatenate %167, %164, %170 in 2 : vector<18x24x128xbf16>, vector<18x24x128xbf16>, vector<18x24x128xbf16> -> vector<18x24x384xbf16>
    %cst_95 = arith.constant 0.000000e+00 : f32
    %172 = vector.broadcast %cst_95 : f32 to vector<256x128xf32>
    %173 = vector.extract_strided_slice %171 {offsets = [0, 0, 0], sizes = [16, 16, 384], strides = [1, 1, 1]} : vector<18x24x384xbf16> to vector<16x16x384xbf16>
    %174 = vector.shape_cast %173 : vector<16x16x384xbf16> to vector<256x384xbf16>
    %c0_96 = arith.constant 0 : index
    %c0_97 = arith.constant 0 : index
    %c0_98 = arith.constant 0 : index
    %175 = vector.load %arg9[%c0_96, %c0_97, %c0_98] : memref<3x384x128xbf16, #tpu.memory_space<vmem>>, vector<1x384x128xbf16>
    %176 = vector.shape_cast %175 : vector<1x384x128xbf16> to vector<384x128xbf16>
    %cst_99 = arith.constant dense<0.000000e+00> : vector<256x128xf32>
    %177 = tpu.matmul %174, %176, %cst_99 {dimension_numbers = #tpu.dot_dimension_numbers<[1], [0], [0], [1], [0, 0, 1, 1], [], []>} : vector<256x384xbf16>, vector<384x128xbf16>, vector<256x128xf32> -> vector<256x128xf32>
    %178 = arith.addf %172, %177 : vector<256x128xf32>
    %179 = vector.extract_strided_slice %171 {offsets = [1, 0, 0], sizes = [16, 16, 384], strides = [1, 1, 1]} : vector<18x24x384xbf16> to vector<16x16x384xbf16>
    %180 = vector.shape_cast %179 : vector<16x16x384xbf16> to vector<256x384xbf16>
    %c1_100 = arith.constant 1 : index
    %c0_101 = arith.constant 0 : index
    %c0_102 = arith.constant 0 : index
    %181 = vector.load %arg9[%c1_100, %c0_101, %c0_102] : memref<3x384x128xbf16, #tpu.memory_space<vmem>>, vector<1x384x128xbf16>
    %182 = vector.shape_cast %181 : vector<1x384x128xbf16> to vector<384x128xbf16>
    %cst_103 = arith.constant dense<0.000000e+00> : vector<256x128xf32>
    %183 = tpu.matmul %180, %182, %cst_103 {dimension_numbers = #tpu.dot_dimension_numbers<[1], [0], [0], [1], [0, 0, 1, 1], [], []>} : vector<256x384xbf16>, vector<384x128xbf16>, vector<256x128xf32> -> vector<256x128xf32>
    %184 = arith.addf %178, %183 : vector<256x128xf32>
    %185 = vector.extract_strided_slice %171 {offsets = [2, 0, 0], sizes = [16, 16, 384], strides = [1, 1, 1]} : vector<18x24x384xbf16> to vector<16x16x384xbf16>
    %186 = vector.shape_cast %185 : vector<16x16x384xbf16> to vector<256x384xbf16>
    %c2_104 = arith.constant 2 : index
    %c0_105 = arith.constant 0 : index
    %c0_106 = arith.constant 0 : index
    %187 = vector.load %arg9[%c2_104, %c0_105, %c0_106] : memref<3x384x128xbf16, #tpu.memory_space<vmem>>, vector<1x384x128xbf16>
    %188 = vector.shape_cast %187 : vector<1x384x128xbf16> to vector<384x128xbf16>
    %cst_107 = arith.constant dense<0.000000e+00> : vector<256x128xf32>
    %189 = tpu.matmul %186, %188, %cst_107 {dimension_numbers = #tpu.dot_dimension_numbers<[1], [0], [0], [1], [0, 0, 1, 1], [], []>} : vector<256x384xbf16>, vector<384x128xbf16>, vector<256x128xf32> -> vector<256x128xf32>
    %190 = arith.addf %184, %189 : vector<256x128xf32>
    %c0_108 = arith.constant 0 : index
    %c0_109 = arith.constant 0 : index
    %191 = vector.load %arg10[%c0_108, %c0_109] : memref<1x128xf32, #tpu.memory_space<vmem>>, vector<1x128xf32>
    %192 = vector.broadcast %191 : vector<1x128xf32> to vector<256x128xf32>
    %193 = arith.mulf %190, %192 : vector<256x128xf32>
    %c0_110 = arith.constant 0 : index
    %c0_111 = arith.constant 0 : index
    %194 = vector.load %arg11[%c0_110, %c0_111] : memref<1x128xf32, #tpu.memory_space<vmem>>, vector<1x128xf32>
    %195 = vector.broadcast %194 : vector<1x128xf32> to vector<256x128xf32>
    %196 = arith.addf %193, %195 : vector<256x128xf32>
    %cst_112 = arith.constant 0.000000e+00 : f32
    %197 = vector.broadcast %cst_112 : f32 to vector<256x128xf32>
    %198 = arith.cmpf oge, %196, %197 : vector<256x128xf32>
    %cst_113 = arith.constant 0.00999999977 : f32
    %199 = vector.broadcast %cst_113 : f32 to vector<256x128xf32>
    %200 = arith.mulf %199, %196 : vector<256x128xf32>
    %201 = arith.select %198, %196, %200 : vector<256x128xi1>, vector<256x128xf32>
    %c0_114 = arith.constant 0 : index
    %c0_115 = arith.constant 0 : index
    %202 = vector.load %arg12[%c0_114, %c0_115] : memref<576x256xbf16, #tpu.memory_space<vmem>>, vector<576x256xbf16>
    %203 = arith.truncf %201 : vector<256x128xf32> to vector<256x128xbf16>
    %cst_116 = arith.constant dense<0.000000e+00> : vector<576x128xf32>
    %204 = tpu.matmul %202, %203, %cst_116 {dimension_numbers = #tpu.dot_dimension_numbers<[1], [0], [0], [1], [0, 0, 1, 1], [], []>} : vector<576x256xbf16>, vector<256x128xbf16>, vector<576x128xf32> -> vector<576x128xf32>
    %c0_117 = arith.constant 0 : index
    %c0_118 = arith.constant 0 : index
    %c0_119 = arith.constant 0 : index
    %205 = vector.load %arg13[%c0_117, %c0_118, %c0_119] : memref<1x576x128xf32, #tpu.memory_space<vmem>>, vector<1x576x128xf32>
    %206 = vector.shape_cast %205 : vector<1x576x128xf32> to vector<576x128xf32>
    %207 = vector.shape_cast %204 : vector<576x128xf32> to vector<1x576x128xf32>
    tpu.vector_store %arg13[%c0_117, %c0_118, %c0_119], %207 {strides = array<i32>} : memref<1x576x128xf32, #tpu.memory_space<vmem>>, vector<1x576x128xf32>,
    return
  }
  func.func @transform_0(%arg0: i32) -> (i32, i32, i32, i32) {
    %c0_i32 = arith.constant 0 : i32
    %c0_i32_0 = arith.constant 0 : i32
    %c0_i32_1 = arith.constant 0 : i32
    %c0_i32_2 = arith.constant 0 : i32
    return %arg0, %c0_i32, %c0_i32_0, %c0_i32_1 : i32, i32, i32, i32
  }
  func.func @transform_1(%arg0: i32) -> (i32, i32, i32) {
    %c0_i32 = arith.constant 0 : i32
    %c0_i32_0 = arith.constant 0 : i32
    %c0_i32_1 = arith.constant 0 : i32
    %c0_i32_2 = arith.constant 0 : i32
    return %c0_i32, %c0_i32_0, %c0_i32_1 : i32, i32, i32
  }
  func.func @transform_2(%arg0: i32) -> (i32, i32) {
    %c0_i32 = arith.constant 0 : i32
    %c0_i32_0 = arith.constant 0 : i32
    %c0_i32_1 = arith.constant 0 : i32
    return %c0_i32, %c0_i32_0 : i32, i32
  }
  func.func @transform_3(%arg0: i32) -> (i32, i32, i32) {
    %c0_i32 = arith.constant 0 : i32
    %c0_i32_0 = arith.constant 0 : i32
    %c0_i32_1 = arith.constant 0 : i32
    %c0_i32_2 = arith.constant 0 : i32
    return %c0_i32, %c0_i32_0, %c0_i32_1 : i32, i32, i32
  }
  func.func @transform_4(%arg0: i32) -> (i32, i32) {
    %c0_i32 = arith.constant 0 : i32
    %c0_i32_0 = arith.constant 0 : i32
    %c0_i32_1 = arith.constant 0 : i32
    return %c0_i32, %c0_i32_0 : i32, i32
  }
  func.func @transform_5(%arg0: i32) -> (i32, i32) {
    %c0_i32 = arith.constant 0 : i32
    %c0_i32_0 = arith.constant 0 : i32
    %c0_i32_1 = arith.constant 0 : i32
    return %c0_i32, %c0_i32_0 : i32, i32
  }
  func.func @transform_6(%arg0: i32) -> (i32, i32) {
    %c0_i32 = arith.constant 0 : i32
    %c0_i32_0 = arith.constant 0 : i32
    %c0_i32_1 = arith.constant 0 : i32
    return %c0_i32, %c0_i32_0 : i32, i32
  }
  func.func @transform_7(%arg0: i32) -> (i32, i32) {
    %c0_i32 = arith.constant 0 : i32
    %c0_i32_0 = arith.constant 0 : i32
    %c0_i32_1 = arith.constant 0 : i32
    return %c0_i32, %c0_i32_0 : i32, i32
  }
  func.func @transform_8(%arg0: i32) -> (i32, i32, i32) {
    %c0_i32 = arith.constant 0 : i32
    %c0_i32_0 = arith.constant 0 : i32
    %c0_i32_1 = arith.constant 0 : i32
    %c0_i32_2 = arith.constant 0 : i32
    return %c0_i32, %c0_i32_0, %c0_i32_1 : i32, i32, i32
  }
  func.func @transform_9(%arg0: i32) -> (i32, i32) {
    %c0_i32 = arith.constant 0 : i32
    %c0_i32_0 = arith.constant 0 : i32
    %c0_i32_1 = arith.constant 0 : i32
    return %c0_i32, %c0_i32_0 : i32, i32
  }
  func.func @transform_10(%arg0: i32) -> (i32, i32) {
    %c0_i32 = arith.constant 0 : i32
    %c0_i32_0 = arith.constant 0 : i32
    %c0_i32_1 = arith.constant 0 : i32
    return %c0_i32, %c0_i32_0 : i32, i32
  }
  func.func @transform_11(%arg0: i32) -> (i32, i32) {
    %c0_i32 = arith.constant 0 : i32
    %c0_i32_0 = arith.constant 0 : i32
    %c0_i32_1 = arith.constant 0 : i32
    return %c0_i32, %c0_i32_0 : i32, i32
  }
  func.func @transform_12(%arg0: i32) -> (i32, i32, i32) {
    %c0_i32 = arith.constant 0 : i32
    %c0_i32_0 = arith.constant 0 : i32
    %c0_i32_1 = arith.constant 0 : i32
    return %arg0, %c0_i32, %c0_i32_0 : i32, i32, i32
  }
}

module attributes {stable_mosaic.version = 11 : i64} {
  func.func @_mc_fused_kernel(%arg0: i32, %arg1: memref<1x18x24x12xbf16, #tpu.memory_space<vmem>>, %arg2: memref<3x12x256xbf16, #tpu.memory_space<vmem>>, %arg3: memref<1x256xf32, #tpu.memory_space<vmem>>, %arg4: memref<3x768x128xbf16, #tpu.memory_space<vmem>>, %arg5: memref<1x128xf32, #tpu.memory_space<vmem>>, %arg6: memref<1x128xf32, #tpu.memory_space<vmem>>, %arg7: memref<9x128xf32, #tpu.memory_space<vmem>>, %arg8: memref<1x128xf32, #tpu.memory_space<vmem>>, %arg9: memref<3x384x128xbf16, #tpu.memory_space<vmem>>, %arg10: memref<1x128xf32, #tpu.memory_space<vmem>>, %arg11: memref<1x128xf32, #tpu.memory_space<vmem>>, %arg12: memref<576x256xbf16, #tpu.memory_space<vmem>>, %arg13: memref<1x576x128xf32, #tpu.memory_space<vmem>>, %arg14: memref<18x24x256xbf16, #tpu.memory_space<vmem>>, %arg15: memref<18x24x128xf32, #tpu.memory_space<vmem>>, %arg16: memref<18x24x128xbf16, #tpu.memory_space<vmem>>) attributes {dimension_semantics = [#tpu.dimension_semantics<parallel>], iteration_bounds = array<i64: 2>, scalar_prefetch = 0 : i64, scratch_operands = 3 : i64, tpu.core_type = #tpu.core_type<tc>, window_params = [{transform_indices = @transform_0, window_bounds = array<i64: 1, 18, 24, 12>}, {pipeline_mode = #tpu.pipeline_mode<synchronous>, transform_indices = @transform_1, window_bounds = array<i64: 3, 12, 256>}, {pipeline_mode = #tpu.pipeline_mode<synchronous>, transform_indices = @transform_2, window_bounds = array<i64: 1, 256>}, {pipeline_mode = #tpu.pipeline_mode<synchronous>, transform_indices = @transform_3, window_bounds = array<i64: 3, 768, 128>}, {pipeline_mode = #tpu.pipeline_mode<synchronous>, transform_indices = @transform_4, window_bounds = array<i64: 1, 128>}, {pipeline_mode = #tpu.pipeline_mode<synchronous>, transform_indices = @transform_5, window_bounds = array<i64: 1, 128>}, {pipeline_mode = #tpu.pipeline_mode<synchronous>, transform_indices = @transform_6, window_bounds = array<i64: 9, 128>}, {pipeline_mode = #tpu.pipeline_mode<synchronous>, transform_indices = @transform_7, window_bounds = array<i64: 1, 128>}, {pipeline_mode = #tpu.pipeline_mode<synchronous>, transform_indices = @transform_8, window_bounds = array<i64: 3, 384, 128>}, {pipeline_mode = #tpu.pipeline_mode<synchronous>, transform_indices = @transform_9, window_bounds = array<i64: 1, 128>}, {pipeline_mode = #tpu.pipeline_mode<synchronous>, transform_indices = @transform_10, window_bounds = array<i64: 1, 128>}, {pipeline_mode = #tpu.pipeline_mode<synchronous>, transform_indices = @transform_11, window_bounds = array<i64: 576, 256>}, {transform_indices = @transform_12, window_bounds = array<i64: 1, 576, 128>}]} {
    %cst = arith.constant 0.000000e+00 : bf16
    %0 = vector.broadcast %cst : bf16 to vector<1x24x256xbf16>
    %c0 = arith.constant 0 : index
    %c0_0 = arith.constant 0 : index
    %c0_1 = arith.constant 0 : index
    %1 = vector.load %arg14[%c0, %c0_0, %c0_1] : memref<18x24x256xbf16, #tpu.memory_space<vmem>>, vector<1x24x256xbf16>
    tpu.vector_store %arg14[%c0, %c0_0, %c0_1], %0 {strides = array<i32>} : memref<18x24x256xbf16, #tpu.memory_space<vmem>>, vector<1x24x256xbf16>,
    %cst_2 = arith.constant 0.000000e+00 : bf16
    %2 = vector.broadcast %cst_2 : bf16 to vector<1x24x256xbf16>
    %c17 = arith.constant 17 : index
    %c0_3 = arith.constant 0 : index
    %c0_4 = arith.constant 0 : index
    %3 = vector.load %arg14[%c17, %c0_3, %c0_4] : memref<18x24x256xbf16, #tpu.memory_space<vmem>>, vector<1x24x256xbf16>
    tpu.vector_store %arg14[%c17, %c0_3, %c0_4], %2 {strides = array<i32>} : memref<18x24x256xbf16, #tpu.memory_space<vmem>>, vector<1x24x256xbf16>,
    %cst_5 = arith.constant 0.000000e+00 : bf16
    %4 = vector.broadcast %cst_5 : bf16 to vector<16x8x256xbf16>
    %c1 = arith.constant 1 : index
    %c16 = arith.constant 16 : index
    %c0_6 = arith.constant 0 : index
    %5 = vector.load %arg14[%c1, %c16, %c0_6] : memref<18x24x256xbf16, #tpu.memory_space<vmem>>, vector<16x8x256xbf16>
    tpu.vector_store %arg14[%c1, %c16, %c0_6], %4 {strides = array<i32>} : memref<18x24x256xbf16, #tpu.memory_space<vmem>>, vector<16x8x256xbf16>,
    %cst_7 = arith.constant 0.000000e+00 : f32
    %6 = vector.broadcast %cst_7 : f32 to vector<1x24x128xf32>
    %c0_8 = arith.constant 0 : index
    %c0_9 = arith.constant 0 : index
    %c0_10 = arith.constant 0 : index
    %7 = vector.load %arg15[%c0_8, %c0_9, %c0_10] : memref<18x24x128xf32, #tpu.memory_space<vmem>>, vector<1x24x128xf32>
    tpu.vector_store %arg15[%c0_8, %c0_9, %c0_10], %6 {strides = array<i32>} : memref<18x24x128xf32, #tpu.memory_space<vmem>>, vector<1x24x128xf32>,
    %cst_11 = arith.constant 0.000000e+00 : f32
    %8 = vector.broadcast %cst_11 : f32 to vector<1x24x128xf32>
    %c17_12 = arith.constant 17 : index
    %c0_13 = arith.constant 0 : index
    %c0_14 = arith.constant 0 : index
    %9 = vector.load %arg15[%c17_12, %c0_13, %c0_14] : memref<18x24x128xf32, #tpu.memory_space<vmem>>, vector<1x24x128xf32>
    tpu.vector_store %arg15[%c17_12, %c0_13, %c0_14], %8 {strides = array<i32>} : memref<18x24x128xf32, #tpu.memory_space<vmem>>, vector<1x24x128xf32>,
    %cst_15 = arith.constant 0.000000e+00 : f32
    %10 = vector.broadcast %cst_15 : f32 to vector<16x8x128xf32>
    %c1_16 = arith.constant 1 : index
    %c16_17 = arith.constant 16 : index
    %c0_18 = arith.constant 0 : index
    %11 = vector.load %arg15[%c1_16, %c16_17, %c0_18] : memref<18x24x128xf32, #tpu.memory_space<vmem>>, vector<16x8x128xf32>
    tpu.vector_store %arg15[%c1_16, %c16_17, %c0_18], %10 {strides = array<i32>} : memref<18x24x128xf32, #tpu.memory_space<vmem>>, vector<16x8x128xf32>,
    %cst_19 = arith.constant 0.000000e+00 : bf16
    %12 = vector.broadcast %cst_19 : bf16 to vector<1x24x128xbf16>
    %c0_20 = arith.constant 0 : index
    %c0_21 = arith.constant 0 : index
    %c0_22 = arith.constant 0 : index
    %13 = vector.load %arg16[%c0_20, %c0_21, %c0_22] : memref<18x24x128xbf16, #tpu.memory_space<vmem>>, vector<1x24x128xbf16>
    tpu.vector_store %arg16[%c0_20, %c0_21, %c0_22], %12 {strides = array<i32>} : memref<18x24x128xbf16, #tpu.memory_space<vmem>>, vector<1x24x128xbf16>,
    %cst_23 = arith.constant 0.000000e+00 : bf16
    %14 = vector.broadcast %cst_23 : bf16 to vector<1x24x128xbf16>
    %c17_24 = arith.constant 17 : index
    %c0_25 = arith.constant 0 : index
    %c0_26 = arith.constant 0 : index
    %15 = vector.load %arg16[%c17_24, %c0_25, %c0_26] : memref<18x24x128xbf16, #tpu.memory_space<vmem>>, vector<1x24x128xbf16>
    tpu.vector_store %arg16[%c17_24, %c0_25, %c0_26], %14 {strides = array<i32>} : memref<18x24x128xbf16, #tpu.memory_space<vmem>>, vector<1x24x128xbf16>,
    %cst_27 = arith.constant 0.000000e+00 : bf16
    %16 = vector.broadcast %cst_27 : bf16 to vector<16x8x128xbf16>
    %c1_28 = arith.constant 1 : index
    %c16_29 = arith.constant 16 : index
    %c0_30 = arith.constant 0 : index
    %17 = vector.load %arg16[%c1_28, %c16_29, %c0_30] : memref<18x24x128xbf16, #tpu.memory_space<vmem>>, vector<16x8x128xbf16>
    tpu.vector_store %arg16[%c1_28, %c16_29, %c0_30], %16 {strides = array<i32>} : memref<18x24x128xbf16, #tpu.memory_space<vmem>>, vector<16x8x128xbf16>,
    %c0_31 = arith.constant 0 : index
    %c0_32 = arith.constant 0 : index
    %c0_33 = arith.constant 0 : index
    %c0_34 = arith.constant 0 : index
    %18 = vector.load %arg1[%c0_31, %c0_32, %c0_33, %c0_34] : memref<1x18x24x12xbf16, #tpu.memory_space<vmem>>, vector<1x18x24x12xbf16>
    %19 = vector.shape_cast %18 : vector<1x18x24x12xbf16> to vector<18x24x12xbf16>
    %cst_35 = arith.constant 0.000000e+00 : f32
    %20 = vector.broadcast %cst_35 : f32 to vector<256x256xf32>
    %21 = vector.extract_strided_slice %19 {offsets = [0, 0, 0], sizes = [16, 16, 12], strides = [1, 1, 1]} : vector<18x24x12xbf16> to vector<16x16x12xbf16>
    %22 = vector.shape_cast %21 : vector<16x16x12xbf16> to vector<256x12xbf16>
    %c0_36 = arith.constant 0 : index
    %c0_37 = arith.constant 0 : index
    %c0_38 = arith.constant 0 : index
    %23 = vector.load %arg2[%c0_36, %c0_37, %c0_38] : memref<3x12x256xbf16, #tpu.memory_space<vmem>>, vector<1x12x256xbf16>
    %24 = vector.shape_cast %23 : vector<1x12x256xbf16> to vector<12x256xbf16>
    %cst_39 = arith.constant dense<0.000000e+00> : vector<256x256xf32>
    %25 = tpu.matmul %22, %24, %cst_39 {dimension_numbers = #tpu.dot_dimension_numbers<[1], [0], [0], [1], [0, 0, 1, 1], [], []>} : vector<256x12xbf16>, vector<12x256xbf16>, vector<256x256xf32> -> vector<256x256xf32>
    %26 = arith.addf %20, %25 : vector<256x256xf32>
    %27 = vector.extract_strided_slice %19 {offsets = [1, 0, 0], sizes = [16, 16, 12], strides = [1, 1, 1]} : vector<18x24x12xbf16> to vector<16x16x12xbf16>
    %28 = vector.shape_cast %27 : vector<16x16x12xbf16> to vector<256x12xbf16>
    %c1_40 = arith.constant 1 : index
    %c0_41 = arith.constant 0 : index
    %c0_42 = arith.constant 0 : index
    %29 = vector.load %arg2[%c1_40, %c0_41, %c0_42] : memref<3x12x256xbf16, #tpu.memory_space<vmem>>, vector<1x12x256xbf16>
    %30 = vector.shape_cast %29 : vector<1x12x256xbf16> to vector<12x256xbf16>
    %cst_43 = arith.constant dense<0.000000e+00> : vector<256x256xf32>
    %31 = tpu.matmul %28, %30, %cst_43 {dimension_numbers = #tpu.dot_dimension_numbers<[1], [0], [0], [1], [0, 0, 1, 1], [], []>} : vector<256x12xbf16>, vector<12x256xbf16>, vector<256x256xf32> -> vector<256x256xf32>
    %32 = arith.addf %26, %31 : vector<256x256xf32>
    %33 = vector.extract_strided_slice %19 {offsets = [2, 0, 0], sizes = [16, 16, 12], strides = [1, 1, 1]} : vector<18x24x12xbf16> to vector<16x16x12xbf16>
    %34 = vector.shape_cast %33 : vector<16x16x12xbf16> to vector<256x12xbf16>
    %c2 = arith.constant 2 : index
    %c0_44 = arith.constant 0 : index
    %c0_45 = arith.constant 0 : index
    %35 = vector.load %arg2[%c2, %c0_44, %c0_45] : memref<3x12x256xbf16, #tpu.memory_space<vmem>>, vector<1x12x256xbf16>
    %36 = vector.shape_cast %35 : vector<1x12x256xbf16> to vector<12x256xbf16>
    %cst_46 = arith.constant dense<0.000000e+00> : vector<256x256xf32>
    %37 = tpu.matmul %34, %36, %cst_46 {dimension_numbers = #tpu.dot_dimension_numbers<[1], [0], [0], [1], [0, 0, 1, 1], [], []>} : vector<256x12xbf16>, vector<12x256xbf16>, vector<256x256xf32> -> vector<256x256xf32>
    %38 = arith.addf %32, %37 : vector<256x256xf32>
    %c0_47 = arith.constant 0 : index
    %c0_48 = arith.constant 0 : index
    %39 = vector.load %arg3[%c0_47, %c0_48] : memref<1x256xf32, #tpu.memory_space<vmem>>, vector<1x256xf32>
    %40 = vector.broadcast %39 : vector<1x256xf32> to vector<256x256xf32>
    %41 = arith.addf %38, %40 : vector<256x256xf32>
    %42 = vector.shape_cast %41 : vector<256x256xf32> to vector<16x16x256xf32>
    %43 = arith.truncf %42 : vector<16x16x256xf32> to vector<16x16x256xbf16>
    %c1_49 = arith.constant 1 : index
    %c0_50 = arith.constant 0 : index
    %c0_51 = arith.constant 0 : index
    %44 = vector.load %arg14[%c1_49, %c0_50, %c0_51] : memref<18x24x256xbf16, #tpu.memory_space<vmem>>, vector<16x16x256xbf16>
    tpu.vector_store %arg14[%c1_49, %c0_50, %c0_51], %43 {strides = array<i32>} : memref<18x24x256xbf16, #tpu.memory_space<vmem>>, vector<16x16x256xbf16>,
    %c0_52 = arith.constant 0 : index
    %c0_53 = arith.constant 0 : index
    %c0_54 = arith.constant 0 : index
    %45 = vector.load %arg14[%c0_52, %c0_53, %c0_54] : memref<18x24x256xbf16, #tpu.memory_space<vmem>>, vector<18x24x256xbf16>
    %cst_55 = arith.constant 0.000000e+00 : bf16
    %46 = vector.broadcast %cst_55 : bf16 to vector<18x1x256xbf16>
    %47 = vector.extract_strided_slice %45 {offsets = [0, 0, 0], sizes = [18, 23, 256], strides = [1, 1, 1]} : vector<18x24x256xbf16> to vector<18x23x256xbf16>
    %48 = tpu.concatenate %46, %47 in 1 : vector<18x1x256xbf16>, vector<18x23x256xbf16> -> vector<18x24x256xbf16>
    %cst_56 = arith.constant 0.000000e+00 : bf16
    %49 = vector.broadcast %cst_56 : bf16 to vector<18x1x256xbf16>
    %50 = vector.extract_strided_slice %45 {offsets = [0, 1, 0], sizes = [18, 23, 256], strides = [1, 1, 1]} : vector<18x24x256xbf16> to vector<18x23x256xbf16>
    %51 = tpu.concatenate %50, %49 in 1 : vector<18x23x256xbf16>, vector<18x1x256xbf16> -> vector<18x24x256xbf16>
    %52 = tpu.concatenate %48, %45, %51 in 2 : vector<18x24x256xbf16>, vector<18x24x256xbf16>, vector<18x24x256xbf16> -> vector<18x24x768xbf16>
    %cst_57 = arith.constant 0.000000e+00 : f32
    %53 = vector.broadcast %cst_57 : f32 to vector<256x128xf32>
    %54 = vector.extract_strided_slice %52 {offsets = [0, 0, 0], sizes = [16, 16, 768], strides = [1, 1, 1]} : vector<18x24x768xbf16> to vector<16x16x768xbf16>
    %55 = vector.shape_cast %54 : vector<16x16x768xbf16> to vector<256x768xbf16>
    %c0_58 = arith.constant 0 : index
    %c0_59 = arith.constant 0 : index
    %c0_60 = arith.constant 0 : index
    %56 = vector.load %arg4[%c0_58, %c0_59, %c0_60] : memref<3x768x128xbf16, #tpu.memory_space<vmem>>, vector<1x768x128xbf16>
    %57 = vector.shape_cast %56 : vector<1x768x128xbf16> to vector<768x128xbf16>
    %cst_61 = arith.constant dense<0.000000e+00> : vector<256x128xf32>
    %58 = tpu.matmul %55, %57, %cst_61 {dimension_numbers = #tpu.dot_dimension_numbers<[1], [0], [0], [1], [0, 0, 1, 1], [], []>} : vector<256x768xbf16>, vector<768x128xbf16>, vector<256x128xf32> -> vector<256x128xf32>
    %59 = arith.addf %53, %58 : vector<256x128xf32>
    %60 = vector.extract_strided_slice %52 {offsets = [1, 0, 0], sizes = [16, 16, 768], strides = [1, 1, 1]} : vector<18x24x768xbf16> to vector<16x16x768xbf16>
    %61 = vector.shape_cast %60 : vector<16x16x768xbf16> to vector<256x768xbf16>
    %c1_62 = arith.constant 1 : index
    %c0_63 = arith.constant 0 : index
    %c0_64 = arith.constant 0 : index
    %62 = vector.load %arg4[%c1_62, %c0_63, %c0_64] : memref<3x768x128xbf16, #tpu.memory_space<vmem>>, vector<1x768x128xbf16>
    %63 = vector.shape_cast %62 : vector<1x768x128xbf16> to vector<768x128xbf16>
    %cst_65 = arith.constant dense<0.000000e+00> : vector<256x128xf32>
    %64 = tpu.matmul %61, %63, %cst_65 {dimension_numbers = #tpu.dot_dimension_numbers<[1], [0], [0], [1], [0, 0, 1, 1], [], []>} : vector<256x768xbf16>, vector<768x128xbf16>, vector<256x128xf32> -> vector<256x128xf32>
    %65 = arith.addf %59, %64 : vector<256x128xf32>
    %66 = vector.extract_strided_slice %52 {offsets = [2, 0, 0], sizes = [16, 16, 768], strides = [1, 1, 1]} : vector<18x24x768xbf16> to vector<16x16x768xbf16>
    %67 = vector.shape_cast %66 : vector<16x16x768xbf16> to vector<256x768xbf16>
    %c2_66 = arith.constant 2 : index
    %c0_67 = arith.constant 0 : index
    %c0_68 = arith.constant 0 : index
    %68 = vector.load %arg4[%c2_66, %c0_67, %c0_68] : memref<3x768x128xbf16, #tpu.memory_space<vmem>>, vector<1x768x128xbf16>
    %69 = vector.shape_cast %68 : vector<1x768x128xbf16> to vector<768x128xbf16>
    %cst_69 = arith.constant dense<0.000000e+00> : vector<256x128xf32>
    %70 = tpu.matmul %67, %69, %cst_69 {dimension_numbers = #tpu.dot_dimension_numbers<[1], [0], [0], [1], [0, 0, 1, 1], [], []>} : vector<256x768xbf16>, vector<768x128xbf16>, vector<256x128xf32> -> vector<256x128xf32>
    %71 = arith.addf %65, %70 : vector<256x128xf32>
    %c0_70 = arith.constant 0 : index
    %c0_71 = arith.constant 0 : index
    %72 = vector.load %arg5[%c0_70, %c0_71] : memref<1x128xf32, #tpu.memory_space<vmem>>, vector<1x128xf32>
    %73 = vector.broadcast %72 : vector<1x128xf32> to vector<256x128xf32>
    %74 = arith.mulf %71, %73 : vector<256x128xf32>
    %c0_72 = arith.constant 0 : index
    %c0_73 = arith.constant 0 : index
    %75 = vector.load %arg6[%c0_72, %c0_73] : memref<1x128xf32, #tpu.memory_space<vmem>>, vector<1x128xf32>
    %76 = vector.broadcast %75 : vector<1x128xf32> to vector<256x128xf32>
    %77 = arith.addf %74, %76 : vector<256x128xf32>
    %cst_74 = arith.constant 0.000000e+00 : f32
    %78 = vector.broadcast %cst_74 : f32 to vector<256x128xf32>
    %79 = arith.cmpf oge, %77, %78 : vector<256x128xf32>
    %cst_75 = arith.constant 0.00999999977 : f32
    %80 = vector.broadcast %cst_75 : f32 to vector<256x128xf32>
    %81 = arith.mulf %80, %77 : vector<256x128xf32>
    %82 = arith.select %79, %77, %81 : vector<256x128xi1>, vector<256x128xf32>
    %83 = vector.shape_cast %82 : vector<256x128xf32> to vector<16x16x128xf32>
    %c1_76 = arith.constant 1 : index
    %c0_77 = arith.constant 0 : index
    %c0_78 = arith.constant 0 : index
    %84 = vector.load %arg15[%c1_76, %c0_77, %c0_78] : memref<18x24x128xf32, #tpu.memory_space<vmem>>, vector<16x16x128xf32>
    tpu.vector_store %arg15[%c1_76, %c0_77, %c0_78], %83 {strides = array<i32>} : memref<18x24x128xf32, #tpu.memory_space<vmem>>, vector<16x16x128xf32>,
    %c0_79 = arith.constant 0 : index
    %c0_80 = arith.constant 0 : index
    %c0_81 = arith.constant 0 : index
    %85 = vector.load %arg15[%c0_79, %c0_80, %c0_81] : memref<18x24x128xf32, #tpu.memory_space<vmem>>, vector<18x24x128xf32>
    %c0_82 = arith.constant 0 : index
    %c0_83 = arith.constant 0 : index
    %86 = vector.load %arg7[%c0_82, %c0_83] : memref<9x128xf32, #tpu.memory_space<vmem>>, vector<9x128xf32>
    %c0_84 = arith.constant 0 : index
    %c0_85 = arith.constant 0 : index
    %87 = vector.load %arg8[%c0_84, %c0_85] : memref<1x128xf32, #tpu.memory_space<vmem>>, vector<1x128xf32>
    %88 = vector.shape_cast %87 : vector<1x128xf32> to vector<128xf32>
    %cst_86 = arith.constant 0.000000e+00 : f32
    %89 = vector.broadcast %cst_86 : f32 to vector<18x1x128xf32>
    %90 = vector.extract_strided_slice %85 {offsets = [0, 0, 0], sizes = [18, 23, 128], strides = [1, 1, 1]} : vector<18x24x128xf32> to vector<18x23x128xf32>
    %91 = tpu.concatenate %89, %90 in 1 : vector<18x1x128xf32>, vector<18x23x128xf32> -> vector<18x24x128xf32>
    %cst_87 = arith.constant 0.000000e+00 : f32
    %92 = vector.broadcast %cst_87 : f32 to vector<18x1x128xf32>
    %93 = vector.extract_strided_slice %85 {offsets = [0, 1, 0], sizes = [18, 23, 128], strides = [1, 1, 1]} : vector<18x24x128xf32> to vector<18x23x128xf32>
    %94 = tpu.concatenate %93, %92 in 1 : vector<18x23x128xf32>, vector<18x1x128xf32> -> vector<18x24x128xf32>
    %cst_88 = arith.constant 0.000000e+00 : f32
    %95 = vector.broadcast %cst_88 : f32 to vector<16x16x128xf32>
    %96 = vector.extract_strided_slice %91 {offsets = [0, 0, 0], sizes = [16, 16, 128], strides = [1, 1, 1]} : vector<18x24x128xf32> to vector<16x16x128xf32>
    %97 = vector.extract_strided_slice %86 {offsets = [0, 0], sizes = [1, 128], strides = [1, 1]} : vector<9x128xf32> to vector<1x128xf32>
    %98 = vector.shape_cast %97 : vector<1x128xf32> to vector<128xf32>
    %99 = vector.shape_cast %98 : vector<128xf32> to vector<1x1x128xf32>
    %100 = vector.broadcast %99 : vector<1x1x128xf32> to vector<16x16x128xf32>
    %101 = arith.mulf %96, %100 : vector<16x16x128xf32>
    %102 = arith.addf %95, %101 : vector<16x16x128xf32>
    %103 = vector.extract_strided_slice %91 {offsets = [1, 0, 0], sizes = [16, 16, 128], strides = [1, 1, 1]} : vector<18x24x128xf32> to vector<16x16x128xf32>
    %104 = vector.extract_strided_slice %86 {offsets = [3, 0], sizes = [1, 128], strides = [1, 1]} : vector<9x128xf32> to vector<1x128xf32>
    %105 = vector.shape_cast %104 : vector<1x128xf32> to vector<128xf32>
    %106 = vector.shape_cast %105 : vector<128xf32> to vector<1x1x128xf32>
    %107 = vector.broadcast %106 : vector<1x1x128xf32> to vector<16x16x128xf32>
    %108 = arith.mulf %103, %107 : vector<16x16x128xf32>
    %109 = arith.addf %102, %108 : vector<16x16x128xf32>
    %110 = vector.extract_strided_slice %91 {offsets = [2, 0, 0], sizes = [16, 16, 128], strides = [1, 1, 1]} : vector<18x24x128xf32> to vector<16x16x128xf32>
    %111 = vector.extract_strided_slice %86 {offsets = [6, 0], sizes = [1, 128], strides = [1, 1]} : vector<9x128xf32> to vector<1x128xf32>
    %112 = vector.shape_cast %111 : vector<1x128xf32> to vector<128xf32>
    %113 = vector.shape_cast %112 : vector<128xf32> to vector<1x1x128xf32>
    %114 = vector.broadcast %113 : vector<1x1x128xf32> to vector<16x16x128xf32>
    %115 = arith.mulf %110, %114 : vector<16x16x128xf32>
    %116 = arith.addf %109, %115 : vector<16x16x128xf32>
    %117 = vector.extract_strided_slice %85 {offsets = [0, 0, 0], sizes = [16, 16, 128], strides = [1, 1, 1]} : vector<18x24x128xf32> to vector<16x16x128xf32>
    %118 = vector.extract_strided_slice %86 {offsets = [1, 0], sizes = [1, 128], strides = [1, 1]} : vector<9x128xf32> to vector<1x128xf32>
    %119 = vector.shape_cast %118 : vector<1x128xf32> to vector<128xf32>
    %120 = vector.shape_cast %119 : vector<128xf32> to vector<1x1x128xf32>
    %121 = vector.broadcast %120 : vector<1x1x128xf32> to vector<16x16x128xf32>
    %122 = arith.mulf %117, %121 : vector<16x16x128xf32>
    %123 = arith.addf %116, %122 : vector<16x16x128xf32>
    %124 = vector.extract_strided_slice %85 {offsets = [1, 0, 0], sizes = [16, 16, 128], strides = [1, 1, 1]} : vector<18x24x128xf32> to vector<16x16x128xf32>
    %125 = vector.extract_strided_slice %86 {offsets = [4, 0], sizes = [1, 128], strides = [1, 1]} : vector<9x128xf32> to vector<1x128xf32>
    %126 = vector.shape_cast %125 : vector<1x128xf32> to vector<128xf32>
    %127 = vector.shape_cast %126 : vector<128xf32> to vector<1x1x128xf32>
    %128 = vector.broadcast %127 : vector<1x1x128xf32> to vector<16x16x128xf32>
    %129 = arith.mulf %124, %128 : vector<16x16x128xf32>
    %130 = arith.addf %123, %129 : vector<16x16x128xf32>
    %131 = vector.extract_strided_slice %85 {offsets = [2, 0, 0], sizes = [16, 16, 128], strides = [1, 1, 1]} : vector<18x24x128xf32> to vector<16x16x128xf32>
    %132 = vector.extract_strided_slice %86 {offsets = [7, 0], sizes = [1, 128], strides = [1, 1]} : vector<9x128xf32> to vector<1x128xf32>
    %133 = vector.shape_cast %132 : vector<1x128xf32> to vector<128xf32>
    %134 = vector.shape_cast %133 : vector<128xf32> to vector<1x1x128xf32>
    %135 = vector.broadcast %134 : vector<1x1x128xf32> to vector<16x16x128xf32>
    %136 = arith.mulf %131, %135 : vector<16x16x128xf32>
    %137 = arith.addf %130, %136 : vector<16x16x128xf32>
    %138 = vector.extract_strided_slice %94 {offsets = [0, 0, 0], sizes = [16, 16, 128], strides = [1, 1, 1]} : vector<18x24x128xf32> to vector<16x16x128xf32>
    %139 = vector.extract_strided_slice %86 {offsets = [2, 0], sizes = [1, 128], strides = [1, 1]} : vector<9x128xf32> to vector<1x128xf32>
    %140 = vector.shape_cast %139 : vector<1x128xf32> to vector<128xf32>
    %141 = vector.shape_cast %140 : vector<128xf32> to vector<1x1x128xf32>
    %142 = vector.broadcast %141 : vector<1x1x128xf32> to vector<16x16x128xf32>
    %143 = arith.mulf %138, %142 : vector<16x16x128xf32>
    %144 = arith.addf %137, %143 : vector<16x16x128xf32>
    %145 = vector.extract_strided_slice %94 {offsets = [1, 0, 0], sizes = [16, 16, 128], strides = [1, 1, 1]} : vector<18x24x128xf32> to vector<16x16x128xf32>
    %146 = vector.extract_strided_slice %86 {offsets = [5, 0], sizes = [1, 128], strides = [1, 1]} : vector<9x128xf32> to vector<1x128xf32>
    %147 = vector.shape_cast %146 : vector<1x128xf32> to vector<128xf32>
    %148 = vector.shape_cast %147 : vector<128xf32> to vector<1x1x128xf32>
    %149 = vector.broadcast %148 : vector<1x1x128xf32> to vector<16x16x128xf32>
    %150 = arith.mulf %145, %149 : vector<16x16x128xf32>
    %151 = arith.addf %144, %150 : vector<16x16x128xf32>
    %152 = vector.extract_strided_slice %94 {offsets = [2, 0, 0], sizes = [16, 16, 128], strides = [1, 1, 1]} : vector<18x24x128xf32> to vector<16x16x128xf32>
    %153 = vector.extract_strided_slice %86 {offsets = [8, 0], sizes = [1, 128], strides = [1, 1]} : vector<9x128xf32> to vector<1x128xf32>
    %154 = vector.shape_cast %153 : vector<1x128xf32> to vector<128xf32>
    %155 = vector.shape_cast %154 : vector<128xf32> to vector<1x1x128xf32>
    %156 = vector.broadcast %155 : vector<1x1x128xf32> to vector<16x16x128xf32>
    %157 = arith.mulf %152, %156 : vector<16x16x128xf32>
    %158 = arith.addf %151, %157 : vector<16x16x128xf32>
    %159 = vector.shape_cast %88 : vector<128xf32> to vector<1x1x128xf32>
    %160 = vector.broadcast %159 : vector<1x1x128xf32> to vector<16x16x128xf32>
    %161 = arith.addf %158, %160 : vector<16x16x128xf32>
    %162 = arith.truncf %161 : vector<16x16x128xf32> to vector<16x16x128xbf16>
    %c1_89 = arith.constant 1 : index
    %c0_90 = arith.constant 0 : index
    %c0_91 = arith.constant 0 : index
    %163 = vector.load %arg16[%c1_89, %c0_90, %c0_91] : memref<18x24x128xbf16, #tpu.memory_space<vmem>>, vector<16x16x128xbf16>
    tpu.vector_store %arg16[%c1_89, %c0_90, %c0_91], %162 {strides = array<i32>} : memref<18x24x128xbf16, #tpu.memory_space<vmem>>, vector<16x16x128xbf16>,
    %c0_92 = arith.constant 0 : index
    %c0_93 = arith.constant 0 : index
    %c0_94 = arith.constant 0 : index
    %164 = vector.load %arg16[%c0_92, %c0_93, %c0_94] : memref<18x24x128xbf16, #tpu.memory_space<vmem>>, vector<18x24x128xbf16>
    %cst_95 = arith.constant 0.000000e+00 : bf16
    %165 = vector.broadcast %cst_95 : bf16 to vector<18x1x128xbf16>
    %166 = vector.extract_strided_slice %164 {offsets = [0, 0, 0], sizes = [18, 23, 128], strides = [1, 1, 1]} : vector<18x24x128xbf16> to vector<18x23x128xbf16>
    %167 = tpu.concatenate %165, %166 in 1 : vector<18x1x128xbf16>, vector<18x23x128xbf16> -> vector<18x24x128xbf16>
    %cst_96 = arith.constant 0.000000e+00 : bf16
    %168 = vector.broadcast %cst_96 : bf16 to vector<18x1x128xbf16>
    %169 = vector.extract_strided_slice %164 {offsets = [0, 1, 0], sizes = [18, 23, 128], strides = [1, 1, 1]} : vector<18x24x128xbf16> to vector<18x23x128xbf16>
    %170 = tpu.concatenate %169, %168 in 1 : vector<18x23x128xbf16>, vector<18x1x128xbf16> -> vector<18x24x128xbf16>
    %171 = tpu.concatenate %167, %164, %170 in 2 : vector<18x24x128xbf16>, vector<18x24x128xbf16>, vector<18x24x128xbf16> -> vector<18x24x384xbf16>
    %cst_97 = arith.constant 0.000000e+00 : f32
    %172 = vector.broadcast %cst_97 : f32 to vector<256x128xf32>
    %173 = vector.extract_strided_slice %171 {offsets = [0, 0, 0], sizes = [16, 16, 384], strides = [1, 1, 1]} : vector<18x24x384xbf16> to vector<16x16x384xbf16>
    %174 = vector.shape_cast %173 : vector<16x16x384xbf16> to vector<256x384xbf16>
    %c0_98 = arith.constant 0 : index
    %c0_99 = arith.constant 0 : index
    %c0_100 = arith.constant 0 : index
    %175 = vector.load %arg9[%c0_98, %c0_99, %c0_100] : memref<3x384x128xbf16, #tpu.memory_space<vmem>>, vector<1x384x128xbf16>
    %176 = vector.shape_cast %175 : vector<1x384x128xbf16> to vector<384x128xbf16>
    %cst_101 = arith.constant dense<0.000000e+00> : vector<256x128xf32>
    %177 = tpu.matmul %174, %176, %cst_101 {dimension_numbers = #tpu.dot_dimension_numbers<[1], [0], [0], [1], [0, 0, 1, 1], [], []>} : vector<256x384xbf16>, vector<384x128xbf16>, vector<256x128xf32> -> vector<256x128xf32>
    %178 = arith.addf %172, %177 : vector<256x128xf32>
    %179 = vector.extract_strided_slice %171 {offsets = [1, 0, 0], sizes = [16, 16, 384], strides = [1, 1, 1]} : vector<18x24x384xbf16> to vector<16x16x384xbf16>
    %180 = vector.shape_cast %179 : vector<16x16x384xbf16> to vector<256x384xbf16>
    %c1_102 = arith.constant 1 : index
    %c0_103 = arith.constant 0 : index
    %c0_104 = arith.constant 0 : index
    %181 = vector.load %arg9[%c1_102, %c0_103, %c0_104] : memref<3x384x128xbf16, #tpu.memory_space<vmem>>, vector<1x384x128xbf16>
    %182 = vector.shape_cast %181 : vector<1x384x128xbf16> to vector<384x128xbf16>
    %cst_105 = arith.constant dense<0.000000e+00> : vector<256x128xf32>
    %183 = tpu.matmul %180, %182, %cst_105 {dimension_numbers = #tpu.dot_dimension_numbers<[1], [0], [0], [1], [0, 0, 1, 1], [], []>} : vector<256x384xbf16>, vector<384x128xbf16>, vector<256x128xf32> -> vector<256x128xf32>
    %184 = arith.addf %178, %183 : vector<256x128xf32>
    %185 = vector.extract_strided_slice %171 {offsets = [2, 0, 0], sizes = [16, 16, 384], strides = [1, 1, 1]} : vector<18x24x384xbf16> to vector<16x16x384xbf16>
    %186 = vector.shape_cast %185 : vector<16x16x384xbf16> to vector<256x384xbf16>
    %c2_106 = arith.constant 2 : index
    %c0_107 = arith.constant 0 : index
    %c0_108 = arith.constant 0 : index
    %187 = vector.load %arg9[%c2_106, %c0_107, %c0_108] : memref<3x384x128xbf16, #tpu.memory_space<vmem>>, vector<1x384x128xbf16>
    %188 = vector.shape_cast %187 : vector<1x384x128xbf16> to vector<384x128xbf16>
    %cst_109 = arith.constant dense<0.000000e+00> : vector<256x128xf32>
    %189 = tpu.matmul %186, %188, %cst_109 {dimension_numbers = #tpu.dot_dimension_numbers<[1], [0], [0], [1], [0, 0, 1, 1], [], []>} : vector<256x384xbf16>, vector<384x128xbf16>, vector<256x128xf32> -> vector<256x128xf32>
    %190 = arith.addf %184, %189 : vector<256x128xf32>
    %c0_110 = arith.constant 0 : index
    %c0_111 = arith.constant 0 : index
    %191 = vector.load %arg10[%c0_110, %c0_111] : memref<1x128xf32, #tpu.memory_space<vmem>>, vector<1x128xf32>
    %192 = vector.broadcast %191 : vector<1x128xf32> to vector<256x128xf32>
    %193 = arith.mulf %190, %192 : vector<256x128xf32>
    %c0_112 = arith.constant 0 : index
    %c0_113 = arith.constant 0 : index
    %194 = vector.load %arg11[%c0_112, %c0_113] : memref<1x128xf32, #tpu.memory_space<vmem>>, vector<1x128xf32>
    %195 = vector.broadcast %194 : vector<1x128xf32> to vector<256x128xf32>
    %196 = arith.addf %193, %195 : vector<256x128xf32>
    %cst_114 = arith.constant 0.000000e+00 : f32
    %197 = vector.broadcast %cst_114 : f32 to vector<256x128xf32>
    %198 = arith.cmpf oge, %196, %197 : vector<256x128xf32>
    %cst_115 = arith.constant 0.00999999977 : f32
    %199 = vector.broadcast %cst_115 : f32 to vector<256x128xf32>
    %200 = arith.mulf %199, %196 : vector<256x128xf32>
    %201 = arith.select %198, %196, %200 : vector<256x128xi1>, vector<256x128xf32>
    %c0_116 = arith.constant 0 : index
    %c0_117 = arith.constant 0 : index
    %202 = vector.load %arg12[%c0_116, %c0_117] : memref<576x256xbf16, #tpu.memory_space<vmem>>, vector<576x256xbf16>
    %203 = arith.truncf %201 : vector<256x128xf32> to vector<256x128xbf16>
    %cst_118 = arith.constant dense<0.000000e+00> : vector<576x128xf32>
    %204 = tpu.matmul %202, %203, %cst_118 {dimension_numbers = #tpu.dot_dimension_numbers<[1], [0], [0], [1], [0, 0, 1, 1], [], []>} : vector<576x256xbf16>, vector<256x128xbf16>, vector<576x128xf32> -> vector<576x128xf32>
    %c0_119 = arith.constant 0 : index
    %c0_120 = arith.constant 0 : index
    %c0_121 = arith.constant 0 : index
    %205 = vector.load %arg13[%c0_119, %c0_120, %c0_121] : memref<1x576x128xf32, #tpu.memory_space<vmem>>, vector<1x576x128xf32>
    %206 = vector.shape_cast %205 : vector<1x576x128xf32> to vector<576x128xf32>
    %207 = vector.shape_cast %204 : vector<576x128xf32> to vector<1x576x128xf32>
    tpu.vector_store %arg13[%c0_119, %c0_120, %c0_121], %207 {strides = array<i32>} : memref<1x576x128xf32, #tpu.memory_space<vmem>>, vector<1x576x128xf32>,
    return
  }
  func.func @transform_0(%arg0: i32) -> (i32, i32, i32, i32) {
    %c0_i32 = arith.constant 0 : i32
    %c0_i32_0 = arith.constant 0 : i32
    %c0_i32_1 = arith.constant 0 : i32
    %c0_i32_2 = arith.constant 0 : i32
    return %arg0, %c0_i32, %c0_i32_0, %c0_i32_1 : i32, i32, i32, i32
  }
  func.func @transform_1(%arg0: i32) -> (i32, i32, i32) {
    %c0_i32 = arith.constant 0 : i32
    %c0_i32_0 = arith.constant 0 : i32
    %c0_i32_1 = arith.constant 0 : i32
    %c0_i32_2 = arith.constant 0 : i32
    return %c0_i32, %c0_i32_0, %c0_i32_1 : i32, i32, i32
  }
  func.func @transform_2(%arg0: i32) -> (i32, i32) {
    %c0_i32 = arith.constant 0 : i32
    %c0_i32_0 = arith.constant 0 : i32
    %c0_i32_1 = arith.constant 0 : i32
    return %c0_i32, %c0_i32_0 : i32, i32
  }
  func.func @transform_3(%arg0: i32) -> (i32, i32, i32) {
    %c0_i32 = arith.constant 0 : i32
    %c0_i32_0 = arith.constant 0 : i32
    %c0_i32_1 = arith.constant 0 : i32
    %c0_i32_2 = arith.constant 0 : i32
    return %c0_i32, %c0_i32_0, %c0_i32_1 : i32, i32, i32
  }
  func.func @transform_4(%arg0: i32) -> (i32, i32) {
    %c0_i32 = arith.constant 0 : i32
    %c0_i32_0 = arith.constant 0 : i32
    %c0_i32_1 = arith.constant 0 : i32
    return %c0_i32, %c0_i32_0 : i32, i32
  }
  func.func @transform_5(%arg0: i32) -> (i32, i32) {
    %c0_i32 = arith.constant 0 : i32
    %c0_i32_0 = arith.constant 0 : i32
    %c0_i32_1 = arith.constant 0 : i32
    return %c0_i32, %c0_i32_0 : i32, i32
  }
  func.func @transform_6(%arg0: i32) -> (i32, i32) {
    %c0_i32 = arith.constant 0 : i32
    %c0_i32_0 = arith.constant 0 : i32
    %c0_i32_1 = arith.constant 0 : i32
    return %c0_i32, %c0_i32_0 : i32, i32
  }
  func.func @transform_7(%arg0: i32) -> (i32, i32) {
    %c0_i32 = arith.constant 0 : i32
    %c0_i32_0 = arith.constant 0 : i32
    %c0_i32_1 = arith.constant 0 : i32
    return %c0_i32, %c0_i32_0 : i32, i32
  }
  func.func @transform_8(%arg0: i32) -> (i32, i32, i32) {
    %c0_i32 = arith.constant 0 : i32
    %c0_i32_0 = arith.constant 0 : i32
    %c0_i32_1 = arith.constant 0 : i32
    %c0_i32_2 = arith.constant 0 : i32
    return %c0_i32, %c0_i32_0, %c0_i32_1 : i32, i32, i32
  }
  func.func @transform_9(%arg0: i32) -> (i32, i32) {
    %c0_i32 = arith.constant 0 : i32
    %c0_i32_0 = arith.constant 0 : i32
    %c0_i32_1 = arith.constant 0 : i32
    return %c0_i32, %c0_i32_0 : i32, i32
  }
  func.func @transform_10(%arg0: i32) -> (i32, i32) {
    %c0_i32 = arith.constant 0 : i32
    %c0_i32_0 = arith.constant 0 : i32
    %c0_i32_1 = arith.constant 0 : i32
    return %c0_i32, %c0_i32_0 : i32, i32
  }
  func.func @transform_11(%arg0: i32) -> (i32, i32) {
    %c0_i32 = arith.constant 0 : i32
    %c0_i32_0 = arith.constant 0 : i32
    %c0_i32_1 = arith.constant 0 : i32
    return %c0_i32, %c0_i32_0 : i32, i32
  }
  func.func @transform_12(%arg0: i32) -> (i32, i32, i32) {
    %c0_i32 = arith.constant 0 : i32
    %c0_i32_0 = arith.constant 0 : i32
    %c0_i32_1 = arith.constant 0 : i32
    return %arg0, %c0_i32, %c0_i32_0 : i32, i32, i32
  }
}

</mosaic_0001>

<llo_original>
// kernel: mc_forward.1
$region0: #{mc_forward.1}
  #allocation0 [shape = 'u32[]', space=smem, size = 0x4, offset = 0x4, fixed_abs, tag = 'smem constant byte address 0x4 - core index']
  #allocation1 [shape = 'u32[72,128]{1,0:T(1,128)}', space=vmem, size = 0x9000, scoped, tag = 'internal scratch']
  #allocation2 [shape = 'bf16[18,24,256]{2,1,0:T(8,128)(2,1)}', space=vmem, size = 0x36000, scoped, tag = 'scratch operand']
  #allocation3 [shape = 'f32[18,24,128]{2,1,0:T(8,128)}', space=vmem, size = 0x36000, scoped, tag = 'scratch operand']
  #allocation4 [shape = 'bf16[18,24,128]{2,1,0:T(8,128)(2,1)}', space=vmem, size = 0x1b000, scoped, tag = 'scratch operand']
  %s0 = inlined_call_operand.vmem [shape: bf16[2,18,24,12], index: 0, kind: input, shape index: {}]
  %s1 = inlined_call_operand.vmem [shape: bf16[3,12,256], index: 1, kind: input, shape index: {}]
  %s2 = inlined_call_operand.vmem [shape: f32[1,256], index: 2, kind: input, shape index: {}]
  %s3 = inlined_call_operand.vmem [shape: bf16[3,768,128], index: 3, kind: input, shape index: {}]
  %s4 = inlined_call_operand.vmem [shape: f32[1,128], index: 4, kind: input, shape index: {}]
  %s5 = inlined_call_operand.vmem [shape: f32[1,128], index: 5, kind: input, shape index: {}]
  %s6 = inlined_call_operand.vmem [shape: f32[9,128], index: 6, kind: input, shape index: {}]
  %s7 = inlined_call_operand.vmem [shape: f32[1,128], index: 7, kind: input, shape index: {}]
  %s8 = inlined_call_operand.vmem [shape: bf16[3,384,128], index: 8, kind: input, shape index: {}]
  %s9 = inlined_call_operand.vmem [shape: f32[1,128], index: 9, kind: input, shape index: {}]
  %s10 = inlined_call_operand.vmem [shape: f32[1,128], index: 10, kind: input, shape index: {}]
  %s11 = inlined_call_operand.vmem [shape: bf16[576,256], index: 11, kind: input, shape index: {}]
  %s12 = inlined_call_operand.hbm [shape: f32[2,576,128], index: 12, kind: output, shape index: {}]
  %s13 = sld [smem:[#allocation0]]
  $region81: #{mc_forward.1} parent=0
    _
  %s15 = ssub.s32 1, %s13
  %s16 = scalar_select 0, %s15, %s13
  $region1: #{mc_forward.1} parent=0
    #allocation5 [shape = 'u8[589824]{0}', space=vmem, size = 0x90000, scoped, tag = 'output window, operand 0']
    #allocation6 [shape = 's32[2]{0}', space=sflag, size = 0x8, scoped, tag = 'scoped memory for mc_forward.1']
    %17 = vsyncpa [#allocation6], 0
    %s18 = scalar_lea.sflag [#allocation6], 1
    %19 = vsyncpa %s18, 0
    loop: start=0, step=1, limit=4
    $region2: #{mc_forward.1} parent=1 // loop_pre_header
      _
    $region3: #{mc_forward.1} parent=1 // loop_header
      %s21 = sphi 0, %s25
      %p22 = scmp.ge.s32.totalorder %s21, 4
      %s31 = sphi 0, %s33
      %s34 = sphi 0, %s31
      %s35 = sphi 0, %s34
      %s51 = sphi 0, %s35
      %s55 = sphi 0, %s55
      %s57 = sphi 0, %s55
      %s58 = sphi 0, %s57
      %s72 = sphi 0, %s58
      %s76 = sphi 0, %s76
      %s78 = sphi 0, %s76
      %s79 = sphi 0, %s78
      %s93 = sphi 0, %s79
      %s97 = sphi 0, %s97
      %s99 = sphi 0, %s97
      %s100 = sphi 0, %s99
      %s114 = sphi 0, %s100
      %s118 = sphi 0, %s118
      %s120 = sphi 0, %s118
      %s121 = sphi 0, %s120
      %s135 = sphi 0, %s121
      %s139 = sphi 0, %s139
      %s141 = sphi 0, %s139
      %s142 = sphi 0, %s141
      %s156 = sphi 0, %s142
      %s160 = sphi 0, %s160
      %s162 = sphi 0, %s160
      %s163 = sphi 0, %s162
      %s177 = sphi 0, %s163
      %s181 = sphi 0, %s181
      %s183 = sphi 0, %s181
      %s184 = sphi 0, %s183
      %s198 = sphi 0, %s184
      %s202 = sphi 0, %s202
      %s204 = sphi 0, %s202
      %s205 = sphi 0, %s204
      %s219 = sphi 0, %s205
      %s223 = sphi 0, %s223
      %s225 = sphi 0, %s223
      %s226 = sphi 0, %s225
      %s240 = sphi 0, %s226
      %s244 = sphi 0, %s244
      %s246 = sphi 0, %s244
      %s247 = sphi 0, %s246
      %s261 = sphi 0, %s247
      %s265 = sphi 0, %s265
      %s267 = sphi 0, %s265
      %s268 = sphi 0, %s267
      %s282 = sphi 0, %s268
      %s288 = sphi 0, %s290
      %s291 = sphi 0, %s288
      %s292 = sphi 0, %s291
      %s308 = sphi 0, %s292
    $region4: #{mc_forward.1} parent=1 // loop_header_branch
      %24 = sbr.rel (%p22) target = $region8
    $region5: #{mc_forward.1} parent=1 // loop_body
      %s26 = ssub.s32 %s21, 1
      %s27 = ssub.s32 %s21, 2
      %s28 = sadd.s32 %s21, 1
      %s29 = ssub.s32 %s21, %s28
      %p30 = scmp.eq.s32.totalorder %s29, 0
      %s32 = sadd.s32 %s31, 1
      %s33 = scalar_select %p30, %s31, %s32
      %p36 = pneg %p30
      %p37 = scmp.eq.s32.totalorder %s21, 1
      %p38 = por %p36, %p37
      %p39 = scmp.ne.s32.totalorder %s31, %s34
      %p40 = scmp.eq.s32.totalorder %s21, 0
      %p41 = por %p39, %p40
      %p42 = scmp.ne.s32.totalorder %s31, %s34
      %p43 = scmp.eq.s32.totalorder %s26, 1
      %p44 = por %p42, %p43
      %p45 = scmp.ne.s32.totalorder %s34, %s35
      %p46 = scmp.eq.s32.totalorder %s26, 0
      %p47 = por %p45, %p46
      %p48 = scmp.ne.s32.totalorder %s34, %s35
      %p49 = scmp.eq.s32.totalorder %s27, 1
      %p50 = por %p48, %p49
      %p52 = scmp.ne.s32.totalorder %s35, %s51
      %p53 = scmp.eq.s32.totalorder %s27, 0
      %p54 = por %p52, %p53
      %s56 = sadd.s32 %s55, 1
      %p59 = scmp.eq.s32.totalorder %s21, 1
      %p60 = scmp.ne.s32.totalorder %s55, %s57
      %p61 = scmp.eq.s32.totalorder %s21, 0
      %p62 = por %p60, %p61
      %p63 = scmp.ne.s32.totalorder %s55, %s57
      %p64 = scmp.eq.s32.totalorder %s26, 1
      %p65 = por %p63, %p64
      %p66 = scmp.ne.s32.totalorder %s57, %s58
      %p67 = scmp.eq.s32.totalorder %s26, 0
      %p68 = por %p66, %p67
      %p69 = scmp.ne.s32.totalorder %s57, %s58
      %p70 = scmp.eq.s32.totalorder %s27, 1
      %p71 = por %p69, %p70
      %p73 = scmp.ne.s32.totalorder %s58, %s72
      %p74 = scmp.eq.s32.totalorder %s27, 0
      %p75 = por %p73, %p74
      %s77 = sadd.s32 %s76, 1
      %p80 = scmp.eq.s32.totalorder %s21, 1
      %p81 = scmp.ne.s32.totalorder %s76, %s78
      %p82 = scmp.eq.s32.totalorder %s21, 0
      %p83 = por %p81, %p82
      %p84 = scmp.ne.s32.totalorder %s76, %s78
      %p85 = scmp.eq.s32.totalorder %s26, 1
      %p86 = por %p84, %p85
      %p87 = scmp.ne.s32.totalorder %s78, %s79
      %p88 = scmp.eq.s32.totalorder %s26, 0
      %p89 = por %p87, %p88
      %p90 = scmp.ne.s32.totalorder %s78, %s79
      %p91 = scmp.eq.s32.totalorder %s27, 1
      %p92 = por %p90, %p91
      %p94 = scmp.ne.s32.totalorder %s79, %s93
      %p95 = scmp.eq.s32.totalorder %s27, 0
      %p96 = por %p94, %p95
      %s98 = sadd.s32 %s97, 1
      %p101 = scmp.eq.s32.totalorder %s21, 1
      %p102 = scmp.ne.s32.totalorder %s97, %s99
      %p103 = scmp.eq.s32.totalorder %s21, 0
      %p104 = por %p102, %p103
      %p105 = scmp.ne.s32.totalorder %s97, %s99
      %p106 = scmp.eq.s32.totalorder %s26, 1
      %p107 = por %p105, %p106
      %p108 = scmp.ne.s32.totalorder %s99, %s100
      %p109 = scmp.eq.s32.totalorder %s26, 0
      %p110 = por %p108, %p109
      %p111 = scmp.ne.s32.totalorder %s99, %s100
      %p112 = scmp.eq.s32.totalorder %s27, 1
      %p113 = por %p111, %p112
      %p115 = scmp.ne.s32.totalorder %s100, %s114
      %p116 = scmp.eq.s32.totalorder %s27, 0
      %p117 = por %p115, %p116
      %s119 = sadd.s32 %s118, 1
      %p122 = scmp.eq.s32.totalorder %s21, 1
      %p123 = scmp.ne.s32.totalorder %s118, %s120
      %p124 = scmp.eq.s32.totalorder %s21, 0
      %p125 = por %p123, %p124
      %p126 = scmp.ne.s32.totalorder %s118, %s120
      %p127 = scmp.eq.s32.totalorder %s26, 1
      %p128 = por %p126, %p127
      %p129 = scmp.ne.s32.totalorder %s120, %s121
      %p130 = scmp.eq.s32.totalorder %s26, 0
      %p131 = por %p129, %p130
      %p132 = scmp.ne.s32.totalorder %s120, %s121
      %p133 = scmp.eq.s32.totalorder %s27, 1
      %p134 = por %p132, %p133
      %p136 = scmp.ne.s32.totalorder %s121, %s135
      %p137 = scmp.eq.s32.totalorder %s27, 0
      %p138 = por %p136, %p137
      %s140 = sadd.s32 %s139, 1
      %p143 = scmp.eq.s32.totalorder %s21, 1
      %p144 = scmp.ne.s32.totalorder %s139, %s141
      %p145 = scmp.eq.s32.totalorder %s21, 0
      %p146 = por %p144, %p145
      %p147 = scmp.ne.s32.totalorder %s139, %s141
      %p148 = scmp.eq.s32.totalorder %s26, 1
      %p149 = por %p147, %p148
      %p150 = scmp.ne.s32.totalorder %s141, %s142
      %p151 = scmp.eq.s32.totalorder %s26, 0
      %p152 = por %p150, %p151
      %p153 = scmp.ne.s32.totalorder %s141, %s142
      %p154 = scmp.eq.s32.totalorder %s27, 1
      %p155 = por %p153, %p154
      %p157 = scmp.ne.s32.totalorder %s142, %s156
      %p158 = scmp.eq.s32.totalorder %s27, 0
      %p159 = por %p157, %p158
      %s161 = sadd.s32 %s160, 1
      %p164 = scmp.eq.s32.totalorder %s21, 1
      %p165 = scmp.ne.s32.totalorder %s160, %s162
      %p166 = scmp.eq.s32.totalorder %s21, 0
      %p167 = por %p165, %p166
      %p168 = scmp.ne.s32.totalorder %s160, %s162
      %p169 = scmp.eq.s32.totalorder %s26, 1
      %p170 = por %p168, %p169
      %p171 = scmp.ne.s32.totalorder %s162, %s163
      %p172 = scmp.eq.s32.totalorder %s26, 0
      %p173 = por %p171, %p172
      %p174 = scmp.ne.s32.totalorder %s162, %s163
      %p175 = scmp.eq.s32.totalorder %s27, 1
      %p176 = por %p174, %p175
      %p178 = scmp.ne.s32.totalorder %s163, %s177
      %p179 = scmp.eq.s32.totalorder %s27, 0
      %p180 = por %p178, %p179
      %s182 = sadd.s32 %s181, 1
      %p185 = scmp.eq.s32.totalorder %s21, 1
      %p186 = scmp.ne.s32.totalorder %s181, %s183
      %p187 = scmp.eq.s32.totalorder %s21, 0
      %p188 = por %p186, %p187
      %p189 = scmp.ne.s32.totalorder %s181, %s183
      %p190 = scmp.eq.s32.totalorder %s26, 1
      %p191 = por %p189, %p190
      %p192 = scmp.ne.s32.totalorder %s183, %s184
      %p193 = scmp.eq.s32.totalorder %s26, 0
      %p194 = por %p192, %p193
      %p195 = scmp.ne.s32.totalorder %s183, %s184
      %p196 = scmp.eq.s32.totalorder %s27, 1
      %p197 = por %p195, %p196
      %p199 = scmp.ne.s32.totalorder %s184, %s198
      %p200 = scmp.eq.s32.totalorder %s27, 0
      %p201 = por %p199, %p200
      %s203 = sadd.s32 %s202, 1
      %p206 = scmp.eq.s32.totalorder %s21, 1
      %p207 = scmp.ne.s32.totalorder %s202, %s204
      %p208 = scmp.eq.s32.totalorder %s21, 0
      %p209 = por %p207, %p208
      %p210 = scmp.ne.s32.totalorder %s202, %s204
      %p211 = scmp.eq.s32.totalorder %s26, 1
      %p212 = por %p210, %p211
      %p213 = scmp.ne.s32.totalorder %s204, %s205
      %p214 = scmp.eq.s32.totalorder %s26, 0
      %p215 = por %p213, %p214
      %p216 = scmp.ne.s32.totalorder %s204, %s205
      %p217 = scmp.eq.s32.totalorder %s27, 1
      %p218 = por %p216, %p217
      %p220 = scmp.ne.s32.totalorder %s205, %s219
      %p221 = scmp.eq.s32.totalorder %s27, 0
      %p222 = por %p220, %p221
      %s224 = sadd.s32 %s223, 1
      %p227 = scmp.eq.s32.totalorder %s21, 1
      %p228 = scmp.ne.s32.totalorder %s223, %s225
      %p229 = scmp.eq.s32.totalorder %s21, 0
      %p230 = por %p228, %p229
      %p231 = scmp.ne.s32.totalorder %s223, %s225
      %p232 = scmp.eq.s32.totalorder %s26, 1
      %p233 = por %p231, %p232
      %p234 = scmp.ne.s32.totalorder %s225, %s226
      %p235 = scmp.eq.s32.totalorder %s26, 0
      %p236 = por %p234, %p235
      %p237 = scmp.ne.s32.totalorder %s225, %s226
      %p238 = scmp.eq.s32.totalorder %s27, 1
      %p239 = por %p237, %p238
      %p241 = scmp.ne.s32.totalorder %s226, %s240
      %p242 = scmp.eq.s32.totalorder %s27, 0
      %p243 = por %p241, %p242
      %s245 = sadd.s32 %s244, 1
      %p248 = scmp.eq.s32.totalorder %s21, 1
      %p249 = scmp.ne.s32.totalorder %s244, %s246
      %p250 = scmp.eq.s32.totalorder %s21, 0
      %p251 = por %p249, %p250
      %p252 = scmp.ne.s32.totalorder %s244, %s246
      %p253 = scmp.eq.s32.totalorder %s26, 1
      %p254 = por %p252, %p253
      %p255 = scmp.ne.s32.totalorder %s246, %s247
      %p256 = scmp.eq.s32.totalorder %s26, 0
      %p257 = por %p255, %p256
      %p258 = scmp.ne.s32.totalorder %s246, %s247
      %p259 = scmp.eq.s32.totalorder %s27, 1
      %p260 = por %p258, %p259
      %p262 = scmp.ne.s32.totalorder %s247, %s261
      %p263 = scmp.eq.s32.totalorder %s27, 0
      %p264 = por %p262, %p263
      %s266 = sadd.s32 %s265, 1
      %p269 = scmp.eq.s32.totalorder %s21, 1
      %p270 = scmp.ne.s32.totalorder %s265, %s267
      %p271 = scmp.eq.s32.totalorder %s21, 0
      %p272 = por %p270, %p271
      %p273 = scmp.ne.s32.totalorder %s265, %s267
      %p274 = scmp.eq.s32.totalorder %s26, 1
      %p275 = por %p273, %p274
      %p276 = scmp.ne.s32.totalorder %s267, %s268
      %p277 = scmp.eq.s32.totalorder %s26, 0
      %p278 = por %p276, %p277
      %p279 = scmp.ne.s32.totalorder %s267, %s268
      %p280 = scmp.eq.s32.totalorder %s27, 1
      %p281 = por %p279, %p280
      %p283 = scmp.ne.s32.totalorder %s268, %s282
      %p284 = scmp.eq.s32.totalorder %s27, 0
      %p285 = por %p283, %p284
      %s286 = ssub.s32 %s21, %s28
      %p287 = scmp.eq.s32.totalorder %s286, 0
      %s289 = sadd.s32 %s288, 1
      %s290 = scalar_select %p287, %s288, %s289
      %p293 = pneg %p287
      %p294 = scmp.eq.s32.totalorder %s21, 1
      %p295 = por %p293, %p294
      %p296 = scmp.ne.s32.totalorder %s288, %s291
      %p297 = scmp.eq.s32.totalorder %s21, 0
      %p298 = por %p296, %p297
      %p299 = scmp.ne.s32.totalorder %s288, %s291
      %p300 = scmp.eq.s32.totalorder %s26, 1
      %p301 = por %p299, %p300
      %p302 = scmp.ne.s32.totalorder %s291, %s292
      %p303 = scmp.eq.s32.totalorder %s26, 0
      %p304 = por %p302, %p303
      %p305 = scmp.ne.s32.totalorder %s291, %s292
      %p306 = scmp.eq.s32.totalorder %s27, 1
      %p307 = por %p305, %p306
      %p309 = scmp.ne.s32.totalorder %s292, %s308
      %p310 = scmp.eq.s32.totalorder %s27, 0
      %p311 = por %p309, %p310
      %p312 = scmp.le.s32.totalorder 1, %s21
      %p313 = scmp.lt.s32.totalorder %s21, 3
      %p314 = pnand %p312, %p313
      %p315 = pneg %p314
      // Predicated region
      $region9: #{mc_forward.1} parent=5 // pred_check
        _
      $region10: #{mc_forward.1} parent=5 // pred_check_branch
        %317 = sbr.rel (%p314) target = $region12
      $region11: #{mc_forward.1} parent=5 // pred_region
        %s318 = ssub.s32 %s21, 1
        // Predicated region
        $region13: #{mc_forward.1} parent=11 // pred_check
          %p319 = pneg %p68
        $region14: #{mc_forward.1} parent=11 // pred_check_branch
          %321 = sbr.rel (%p319) target = $region16
        $region15: #{mc_forward.1} parent=11 // pred_region
          _
        $region16: #{mc_forward.1} parent=11 // pred_fallthru
          _
        // Predicated region
        $region17: #{mc_forward.1} parent=11 // pred_check
          %p322 = pneg %p89
        $region18: #{mc_forward.1} parent=11 // pred_check_branch
          %324 = sbr.rel (%p322) target = $region20
        $region19: #{mc_forward.1} parent=11 // pred_region
          _
        $region20: #{mc_forward.1} parent=11 // pred_fallthru
          _
        // Predicated region
        $region21: #{mc_forward.1} parent=11 // pred_check
          %p325 = pneg %p110
        $region22: #{mc_forward.1} parent=11 // pred_check_branch
          %327 = sbr.rel (%p325) target = $region24
        $region23: #{mc_forward.1} parent=11 // pred_region
          _
        $region24: #{mc_forward.1} parent=11 // pred_fallthru
          _
        // Predicated region
        $region25: #{mc_forward.1} parent=11 // pred_check
          %p328 = pneg %p131
        $region26: #{mc_forward.1} parent=11 // pred_check_branch
          %330 = sbr.rel (%p328) target = $region28
        $region27: #{mc_forward.1} parent=11 // pred_region
          _
        $region28: #{mc_forward.1} parent=11 // pred_fallthru
          _
        // Predicated region
        $region29: #{mc_forward.1} parent=11 // pred_check
          %p331 = pneg %p152
        $region30: #{mc_forward.1} parent=11 // pred_check_branch
          %333 = sbr.rel (%p331) target = $region32
        $region31: #{mc_forward.1} parent=11 // pred_region
          _
        $region32: #{mc_forward.1} parent=11 // pred_fallthru
          _
        // Predicated region
        $region33: #{mc_forward.1} parent=11 // pred_check
          %p334 = pneg %p173
        $region34: #{mc_forward.1} parent=11 // pred_check_branch
          %336 = sbr.rel (%p334) target = $region36
        $region35: #{mc_forward.1} parent=11 // pred_region
          _
        $region36: #{mc_forward.1} parent=11 // pred_fallthru
          _
        // Predicated region
        $region37: #{mc_forward.1} parent=11 // pred_check
          %p337 = pneg %p194
        $region38: #{mc_forward.1} parent=11 // pred_check_branch
          %339 = sbr.rel (%p337) target = $region40
        $region39: #{mc_forward.1} parent=11 // pred_region
          _
        $region40: #{mc_forward.1} parent=11 // pred_fallthru
          _
        // Predicated region
        $region41: #{mc_forward.1} parent=11 // pred_check
          %p340 = pneg %p215
        $region42: #{mc_forward.1} parent=11 // pred_check_branch
          %342 = sbr.rel (%p340) target = $region44
        $region43: #{mc_forward.1} parent=11 // pred_region
          _
        $region44: #{mc_forward.1} parent=11 // pred_fallthru
          _
        // Predicated region
        $region45: #{mc_forward.1} parent=11 // pred_check
          %p343 = pneg %p236
        $region46: #{mc_forward.1} parent=11 // pred_check_branch
          %345 = sbr.rel (%p343) target = $region48
        $region47: #{mc_forward.1} parent=11 // pred_region
          _
        $region48: #{mc_forward.1} parent=11 // pred_fallthru
          _
        // Predicated region
        $region49: #{mc_forward.1} parent=11 // pred_check
          %p346 = pneg %p257
        $region50: #{mc_forward.1} parent=11 // pred_check_branch
          %348 = sbr.rel (%p346) target = $region52
        $region51: #{mc_forward.1} parent=11 // pred_region
          _
        $region52: #{mc_forward.1} parent=11 // pred_fallthru
          _
        // Predicated region
        $region53: #{mc_forward.1} parent=11 // pred_check
          %p349 = pneg %p278
        $region54: #{mc_forward.1} parent=11 // pred_check_branch
          %351 = sbr.rel (%p349) target = $region56
        $region55: #{mc_forward.1} parent=11 // pred_region
          _
        $region56: #{mc_forward.1} parent=11 // pred_fallthru
          _
      $region12: #{mc_forward.1} parent=5 // pred_fallthru
        _
      %p352 = scmp.lt.s32.totalorder %s21, 2
      // Predicated region
      $region57: #{mc_forward.1} parent=5 // pred_check
        %p353 = pneg %p352
      $region58: #{mc_forward.1} parent=5 // pred_check_branch
        %355 = sbr.rel (%p353) target = $region60
      $region59: #{mc_forward.1} parent=5 // pred_region
        // Predicated region
        $region61: #{mc_forward.1} parent=59 // pred_check
          %p356 = pneg %p41
        $region62: #{mc_forward.1} parent=59 // pred_check_branch
          %358 = sbr.rel (%p356) target = $region64
        $region63: #{mc_forward.1} parent=59 // pred_region
          %p359 = scmp.lt.s32.totalorder %s21, 1
          %s360 = scalar_select %p359, %s21, 1
          %s361 = smul.addr %s360, 54
          %s362 = smul.addr %s361, 4
          %s363 = scalar_lea.vmem %s0, %s362
        $region64: #{mc_forward.1} parent=59 // pred_fallthru
          _
      $region60: #{mc_forward.1} parent=5 // pred_fallthru
        _
      %p364 = scmp.le.s32.totalorder 1, %s21
      %p365 = scmp.lt.s32.totalorder %s21, 3
      %p366 = pnand %p364, %p365
      %p367 = pneg %p366
      // Predicated region
      $region65: #{mc_forward.1} parent=5 // pred_check
        _
      $region66: #{mc_forward.1} parent=5 // pred_check_branch
        %369 = sbr.rel (%p366) target = $region68
      $region67: #{mc_forward.1} parent=5 // pred_region
        %s370 = ssub.s32 %s21, 1
        %p371 = scmp.lt.s32.totalorder %s26, 1
        %s372 = scalar_select %p371, %s26, 1
        %s373 = smul.addr %s372, 54
        %s374 = smul.addr %s373, 4
        %s375 = scalar_lea.vmem %s0, %s374
        %p376 = pneg %p47
        %p377 = pneg %p44
        %p378 = pneg %p68
        %p379 = pneg %p65
        %p380 = pneg %p89
        %p381 = pneg %p86
        %p382 = pneg %p110
        %p383 = pneg %p107
        %p384 = pneg %p131
        %p385 = pneg %p128
        %p386 = pneg %p152
        %p387 = pneg %p149
        %p388 = pneg %p173
        %p389 = pneg %p170
        %p390 = pneg %p194
        %p391 = pneg %p191
        %p392 = pneg %p215
        %p393 = pneg %p212
        %p394 = pneg %p236
        %p395 = pneg %p233
        %p396 = pneg %p257
        %p397 = pneg %p254
        %p398 = pneg %p278
        %p399 = pneg %p275
        %p400 = pneg %p304
        %p401 = pneg %p301
        %s402 = sand.u32 %s291, 1
        %s403 = scalar_lea.sflag [#allocation6], %s402
        %s404 = sand.u32 %s291, 1
        %s405 = smul.addr %s404, 576
        %s406 = scalar_lea.vmem [#allocation5], %s405
        %p407 = scmp.lt.s32.totalorder %s26, 1
        %s408 = scalar_select %p407, %s26, 1
        %s409 = smul.addr %s408, 54
        %s410 = smul.addr %s409, 4
        %s411 = scalar_lea.vmem %s0, %s410
        %413 = vst [vmem:[#allocation2] sm:$0xff] 0
        %414 = vst [vmem:[#allocation2 + $0x8] sm:$0xff] 0
        %415 = vst [vmem:[#allocation2 + $0x10] sm:$0xff] 0
        %s416 = scalar_lea.vmem [#allocation2], 408
        %417 = vst [vmem:[%s416] sm:$0xff] 0
        %418 = vst [vmem:[%s416 + $0x8] sm:$0xff] 0
        %419 = vst [vmem:[%s416 + $0x10] sm:$0xff] 0
        %s420 = scalar_lea.vmem [#allocation2], 24
        %421 = vst [vmem:[%s420 + $0x10] sm:$0xff] 0
        %422 = vst [vmem:[%s420 + $0x28] sm:$0xff] 0
        %423 = vst [vmem:[%s420 + $0x40] sm:$0xff] 0
        %424 = vst [vmem:[%s420 + $0x58] sm:$0xff] 0
        %425 = vst [vmem:[%s420 + $0x70] sm:$0xff] 0
        %426 = vst [vmem:[%s420 + $0x88] sm:$0xff] 0
        %427 = vst [vmem:[%s420 + $0xa0] sm:$0xff] 0
        %428 = vst [vmem:[%s420 + $0xb8] sm:$0xff] 0
        %429 = vst [vmem:[%s420 + $0xd0] sm:$0xff] 0
        %430 = vst [vmem:[%s420 + $0xe8] sm:$0xff] 0
        %431 = vst [vmem:[%s420 + $0x100] sm:$0xff] 0
        %432 = vst [vmem:[%s420 + $0x118] sm:$0xff] 0
        %433 = vst [vmem:[%s420 + $0x130] sm:$0xff] 0
        %434 = vst [vmem:[%s420 + $0x148] sm:$0xff] 0
        %435 = vst [vmem:[%s420 + $0x160] sm:$0xff] 0
        %436 = vst [vmem:[%s420 + $0x178] sm:$0xff] 0
        %437 = vst [vmem:[#allocation3] sm:$0xff] 0.0
        %438 = vst [vmem:[#allocation3 + $0x8] sm:$0xff] 0.0
        %439 = vst [vmem:[#allocation3 + $0x10] sm:$0xff] 0.0
        %s440 = scalar_lea.vmem [#allocation3], 408
        %441 = vst [vmem:[%s440] sm:$0xff] 0.0
        %442 = vst [vmem:[%s440 + $0x8] sm:$0xff] 0.0
        %443 = vst [vmem:[%s440 + $0x10] sm:$0xff] 0.0
        %s444 = scalar_lea.vmem [#allocation3], 24
        %445 = vst [vmem:[%s444 + $0x10] sm:$0xff] 0.0
        %446 = vst [vmem:[%s444 + $0x28] sm:$0xff] 0.0
        %447 = vst [vmem:[%s444 + $0x40] sm:$0xff] 0.0
        %448 = vst [vmem:[%s444 + $0x58] sm:$0xff] 0.0
        %449 = vst [vmem:[%s444 + $0x70] sm:$0xff] 0.0
        %450 = vst [vmem:[%s444 + $0x88] sm:$0xff] 0.0
        %451 = vst [vmem:[%s444 + $0xa0] sm:$0xff] 0.0
        %452 = vst [vmem:[%s444 + $0xb8] sm:$0xff] 0.0
        %453 = vst [vmem:[%s444 + $0xd0] sm:$0xff] 0.0
        %454 = vst [vmem:[%s444 + $0xe8] sm:$0xff] 0.0
        %455 = vst [vmem:[%s444 + $0x100] sm:$0xff] 0.0
        %456 = vst [vmem:[%s444 + $0x118] sm:$0xff] 0.0
        %457 = vst [vmem:[%s444 + $0x130] sm:$0xff] 0.0
        %458 = vst [vmem:[%s444 + $0x148] sm:$0xff] 0.0
        %459 = vst [vmem:[%s444 + $0x160] sm:$0xff] 0.0
        %460 = vst [vmem:[%s444 + $0x178] sm:$0xff] 0.0
        %461 = vst [vmem:[#allocation4] sm:$0xf] 0
        %462 = vst [vmem:[#allocation4 + $0x4] sm:$0xf] 0
        %463 = vst [vmem:[#allocation4 + $0x8] sm:$0xf] 0
        %s464 = scalar_lea.vmem [#allocation4], 204
        %465 = vst [vmem:[%s464] sm:$0xf] 0
        %466 = vst [vmem:[%s464 + $0x4] sm:$0xf] 0
        %467 = vst [vmem:[%s464 + $0x8] sm:$0xf] 0
        %s468 = scalar_lea.vmem [#allocation4], 12
        %469 = vst [vmem:[%s468 + $0x8] sm:$0xf] 0
        %470 = vst [vmem:[%s468 + $0x14] sm:$0xf] 0
        %471 = vst [vmem:[%s468 + $0x20] sm:$0xf] 0
        %472 = vst [vmem:[%s468 + $0x2c] sm:$0xf] 0
        %473 = vst [vmem:[%s468 + $0x38] sm:$0xf] 0
        %474 = vst [vmem:[%s468 + $0x44] sm:$0xf] 0
        %475 = vst [vmem:[%s468 + $0x50] sm:$0xf] 0
        %476 = vst [vmem:[%s468 + $0x5c] sm:$0xf] 0
        %477 = vst [vmem:[%s468 + $0x68] sm:$0xf] 0
        %478 = vst [vmem:[%s468 + $0x74] sm:$0xf] 0
        %479 = vst [vmem:[%s468 + $0x80] sm:$0xf] 0
        %480 = vst [vmem:[%s468 + $0x8c] sm:$0xf] 0
        %481 = vst [vmem:[%s468 + $0x98] sm:$0xf] 0
        %482 = vst [vmem:[%s468 + $0xa4] sm:$0xf] 0
        %483 = vst [vmem:[%s468 + $0xb0] sm:$0xf] 0
        %484 = vst [vmem:[%s468 + $0xbc] sm:$0xf] 0
        %v485 = vld [vmem:[%s411] sm:$0xf]
        %v486 = vld [vmem:[%s411 + $0x4] sm:$0xf]
        %v487 = vld [vmem:[%s411 + $0xc] sm:$0xf]
        %v488 = vld [vmem:[%s411 + $0x10] sm:$0xf]
        %v489 = vld [vmem:[%s411 + $0x18] sm:$0xf]
        %v490 = vld [vmem:[%s411 + $0x1c] sm:$0xf]
        %v491 = vld [vmem:[%s411 + $0x24] sm:$0xf]
        %v492 = vld [vmem:[%s411 + $0x28] sm:$0xf]
        %v493 = vld [vmem:[%s411 + $0x30] sm:$0xf]
        %v494 = vld [vmem:[%s411 + $0x34] sm:$0xf]
        %v495 = vld [vmem:[%s411 + $0x3c] sm:$0xf]
        %v496 = vld [vmem:[%s411 + $0x40] sm:$0xf]
        %v497 = vld [vmem:[%s411 + $0x48] sm:$0xf]
        %v498 = vld [vmem:[%s411 + $0x4c] sm:$0xf]
        %v499 = vld [vmem:[%s411 + $0x54] sm:$0xf]
        %v500 = vld [vmem:[%s411 + $0x58] sm:$0xf]
        %v501 = vld [vmem:[%s411 + $0x60] sm:$0xf]
        %v502 = vld [vmem:[%s411 + $0x64] sm:$0xf]
        %v503 = vld [vmem:[%s411 + $0x6c] sm:$0xf]
        %v504 = vld [vmem:[%s411 + $0x70] sm:$0xf]
        %v505 = vld [vmem:[%s411 + $0x78] sm:$0xf]
        %v506 = vld [vmem:[%s411 + $0x7c] sm:$0xf]
        %v507 = vld [vmem:[%s411 + $0x84] sm:$0xf]
        %v508 = vld [vmem:[%s411 + $0x88] sm:$0xf]
        %v509 = vld [vmem:[%s411 + $0x90] sm:$0xf]
        %v510 = vld [vmem:[%s411 + $0x94] sm:$0xf]
        %v511 = vld [vmem:[%s411 + $0x9c] sm:$0xf]
        %v512 = vld [vmem:[%s411 + $0xa0] sm:$0xf]
        %v513 = vld [vmem:[%s411 + $0xa8] sm:$0xf]
        %v514 = vld [vmem:[%s411 + $0xac] sm:$0xf]
        %v515 = vld [vmem:[%s411 + $0xb4] sm:$0xf]
        %v516 = vld [vmem:[%s411 + $0xb8] sm:$0xf]
        %v517 = vld [vmem:[%s411 + $0xc0] sm:$0xf]
        %v518 = vld [vmem:[%s411 + $0xc4] sm:$0xf]
        %v519 = vld [vmem:[%s411 + $0xcc] sm:$0xf]
        %v520 = vld [vmem:[%s411 + $0xd0] sm:$0xf]
        %v521 = vld [vmem:[%s1] sm:$0xff]
        %v522 = vld [vmem:[%s1 + $0x8] sm:$0x33]
        %s523 = scalar_lea.vmem %s1, 16
        %v524 = vld [vmem:[%s523] sm:$0xff]
        %v525 = vld [vmem:[%s523 + $0x8] sm:$0x33]
        %v558 = vunpack.c.l.b16 %v487
        %v559 = vunpack.c.l.b16 %v488
        %v560 = vunpack.c.l.b16 %v489
        %v561 = vunpack.c.l.b16 %v490
        %v562 = vunpack.c.l.b16 %v491
        %v563 = vunpack.c.l.b16 %v492
        %v564 = vunpack.c.l.b16 %v493
        %v565 = vunpack.c.l.b16 %v494
        %v566 = vunpack.c.l.b16 %v495
        %v567 = vunpack.c.l.b16 %v496
        %v568 = vunpack.c.l.b16 %v497
        %v569 = vunpack.c.l.b16 %v498
        %v570 = vunpack.c.l.b16 %v499
        %v571 = vunpack.c.l.b16 %v500
        %v572 = vunpack.c.l.b16 %v501
        %v573 = vunpack.c.l.b16 %v502
        %v574 = vunpack.c.l.b16 %v503
        %v575 = vunpack.c.l.b16 %v504
        %v576 = vunpack.c.l.b16 %v505
        %v577 = vunpack.c.l.b16 %v506
        %v578 = vunpack.c.l.b16 %v507
        %v579 = vunpack.c.l.b16 %v508
        %v580 = vunpack.c.l.b16 %v509
        %v581 = vunpack.c.l.b16 %v510
        %v582 = vunpack.c.l.b16 %v511
        %v583 = vunpack.c.l.b16 %v512
        %v584 = vunpack.c.l.b16 %v513
        %v585 = vunpack.c.l.b16 %v514
        %v586 = vunpack.c.l.b16 %v515
        %v587 = vunpack.c.l.b16 %v516
        %v588 = vunpack.c.l.b16 %v517
        %v589 = vunpack.c.l.b16 %v518
        %v590 = vpack.c.b16 %v559, %v558
        %v591 = vpack.c.b16 %v561, %v560
        %v592 = vpack.c.b16 %v563, %v562
        %v593 = vpack.c.b16 %v565, %v564
        %v594 = vpack.c.b16 %v567, %v566
        %v595 = vpack.c.b16 %v569, %v568
        %v596 = vpack.c.b16 %v571, %v570
        %v597 = vpack.c.b16 %v573, %v572
        %v598 = vpack.c.b16 %v575, %v574
        %v599 = vpack.c.b16 %v577, %v576
        %v600 = vpack.c.b16 %v579, %v578
        %v601 = vpack.c.b16 %v581, %v580
        %v602 = vpack.c.b16 %v583, %v582
        %v603 = vpack.c.b16 %v585, %v584
        %v604 = vpack.c.b16 %v587, %v586
        %v605 = vpack.c.b16 %v589, %v588
        %v608 = vunpack.c.l.b16 %v524
        %v609 = vunpack.c.h.b16 %v524
        %v610 = vunpack.c.l.b16 %v525
        %v611 = vunpack.c.h.b16 %v525
        %v612 = vpack.c.b16 %v610, %v608
        %v613 = vpack.c.b16 %v611, %v609
        %vm614 = vcmask 97280
        %v616 = vsel %vm614, %v590, 0
        %v619 = vsel %vm614, %v591, 0
        %v622 = vsel %vm614, %v592, 0
        %v625 = vsel %vm614, %v593, 0
        %v628 = vsel %vm614, %v594, 0
        %v631 = vsel %vm614, %v595, 0
        %v634 = vsel %vm614, %v596, 0
        %v637 = vsel %vm614, %v597, 0
        %v640 = vsel %vm614, %v598, 0
        %v643 = vsel %vm614, %v599, 0
        %v646 = vsel %vm614, %v600, 0
        %v649 = vsel %vm614, %v601, 0
        %v652 = vsel %vm614, %v602, 0
        %v655 = vsel %vm614, %v603, 0
        %v658 = vsel %vm614, %v604, 0
        %v661 = vsel %vm614, %v605, 0
        %vm663 = vcmask 1045504
        %v665 = vsel %vm663, %v612, 0
        %v668 = vsel %vm663, %v613, 0
        %670 = vmatpush.bf16.msra.mxu0 0
        %671 = vmatpush.bf16.msra.mxu0 0
        %672 = vmatpush.bf16.msra.mxu0 0
        %673 = vmatpush.bf16.msra.mxu0 0
        %674 = vmatpush.bf16.msra.mxu0 0
        %675 = vmatpush.bf16.msra.mxu0 0
        %676 = vmatpush.bf16.msra.mxu0 0
        %677 = vmatpush.bf16.msra.mxu0 %v665
        %678 = vmatmul.bf16.gmra.mxu0 %v616
        %v679 = vpop.f32.mrf.mxu0
        %v680 = vadd.f32 0.0, %v679
        %v681 = vpop.f32.mrf.mxu0
        %v682 = vadd.f32 0.0, %v681
        %683 = vmatmul.bf16.gmra.mxu0 %v619
        %v684 = vpop.f32.mrf.mxu0
        %v685 = vadd.f32 0.0, %v684
        %v686 = vpop.f32.mrf.mxu0
        %v687 = vadd.f32 0.0, %v686
        %688 = vmatmul.bf16.gmra.mxu0 %v622
        %v689 = vpop.f32.mrf.mxu0
        %v690 = vadd.f32 0.0, %v689
        %v691 = vpop.f32.mrf.mxu0
        %v692 = vadd.f32 0.0, %v691
        %693 = vmatmul.bf16.gmra.mxu0 %v625
        %v694 = vpop.f32.mrf.mxu0
        %v695 = vadd.f32 0.0, %v694
        %v696 = vpop.f32.mrf.mxu0
        %v697 = vadd.f32 0.0, %v696
        %698 = vmatmul.bf16.gmra.mxu0 %v628
        %v699 = vpop.f32.mrf.mxu0
        %v700 = vadd.f32 0.0, %v699
        %v701 = vpop.f32.mrf.mxu0
        %v702 = vadd.f32 0.0, %v701
        %703 = vmatmul.bf16.gmra.mxu0 %v631
        %v704 = vpop.f32.mrf.mxu0
        %v705 = vadd.f32 0.0, %v704
        %v706 = vpop.f32.mrf.mxu0
        %v707 = vadd.f32 0.0, %v706
        %708 = vmatmul.bf16.gmra.mxu0 %v634
        %v709 = vpop.f32.mrf.mxu0
        %v710 = vadd.f32 0.0, %v709
        %v711 = vpop.f32.mrf.mxu0
        %v712 = vadd.f32 0.0, %v711
        %713 = vmatmul.bf16.gmra.mxu0 %v637
        %v714 = vpop.f32.mrf.mxu0
        %v715 = vadd.f32 0.0, %v714
        %v716 = vpop.f32.mrf.mxu0
        %v717 = vadd.f32 0.0, %v716
        %718 = vmatmul.bf16.gmra.mxu0 %v640
        %v719 = vpop.f32.mrf.mxu0
        %v720 = vadd.f32 0.0, %v719
        %v721 = vpop.f32.mrf.mxu0
        %v722 = vadd.f32 0.0, %v721
        %723 = vmatmul.bf16.gmra.mxu0 %v643
        %v724 = vpop.f32.mrf.mxu0
        %v725 = vadd.f32 0.0, %v724
        %v726 = vpop.f32.mrf.mxu0
        %v727 = vadd.f32 0.0, %v726
        %728 = vmatmul.bf16.gmra.mxu0 %v646
        %v729 = vpop.f32.mrf.mxu0
        %v730 = vadd.f32 0.0, %v729
        %v731 = vpop.f32.mrf.mxu0
        %v732 = vadd.f32 0.0, %v731
        %733 = vmatmul.bf16.gmra.mxu0 %v649
        %v734 = vpop.f32.mrf.mxu0
        %v735 = vadd.f32 0.0, %v734
        %v736 = vpop.f32.mrf.mxu0
        %v737 = vadd.f32 0.0, %v736
        %738 = vmatmul.bf16.gmra.mxu0 %v652
        %v739 = vpop.f32.mrf.mxu0
        %v740 = vadd.f32 0.0, %v739
        %v741 = vpop.f32.mrf.mxu0
        %v742 = vadd.f32 0.0, %v741
        %743 = vmatmul.bf16.gmra.mxu0 %v655
        %v744 = vpop.f32.mrf.mxu0
        %v745 = vadd.f32 0.0, %v744
        %v746 = vpop.f32.mrf.mxu0
        %v747 = vadd.f32 0.0, %v746
        %748 = vmatmul.bf16.gmra.mxu0 %v658
        %v749 = vpop.f32.mrf.mxu0
        %v750 = vadd.f32 0.0, %v749
        %v751 = vpop.f32.mrf.mxu0
        %v752 = vadd.f32 0.0, %v751
        %753 = vmatmul.bf16.gmra.mxu0 %v661
        %v754 = vpop.f32.mrf.mxu0
        %v755 = vadd.f32 0.0, %v754
        %v756 = vpop.f32.mrf.mxu0
        %v757 = vadd.f32 0.0, %v756
        %758 = vdwg.mxu0
        %759 = vmatpush.bf16.msra.mxu0 0
        %760 = vmatpush.bf16.msra.mxu0 0
        %761 = vmatpush.bf16.msra.mxu0 0
        %762 = vmatpush.bf16.msra.mxu0 0
        %763 = vmatpush.bf16.msra.mxu0 0
        %764 = vmatpush.bf16.msra.mxu0 0
        %765 = vmatpush.bf16.msra.mxu0 0
        %766 = vmatpush.bf16.msra.mxu0 %v668
        %767 = vmatmul.bf16.gmra.mxu0 %v616
        %v768 = vpop.f32.mrf.mxu0
        %v769 = vadd.f32 0.0, %v768
        %v770 = vpop.f32.mrf.mxu0
        %v771 = vadd.f32 0.0, %v770
        %772 = vmatmul.bf16.gmra.mxu0 %v619
        %v773 = vpop.f32.mrf.mxu0
        %v774 = vadd.f32 0.0, %v773
        %v775 = vpop.f32.mrf.mxu0
        %v776 = vadd.f32 0.0, %v775
        %777 = vmatmul.bf16.gmra.mxu0 %v622
        %v778 = vpop.f32.mrf.mxu0
        %v779 = vadd.f32 0.0, %v778
        %v780 = vpop.f32.mrf.mxu0
        %v781 = vadd.f32 0.0, %v780
        %782 = vmatmul.bf16.gmra.mxu0 %v625
        %v783 = vpop.f32.mrf.mxu0
        %v784 = vadd.f32 0.0, %v783
        %v785 = vpop.f32.mrf.mxu0
        %v786 = vadd.f32 0.0, %v785
        %787 = vmatmul.bf16.gmra.mxu0 %v628
        %v788 = vpop.f32.mrf.mxu0
        %v789 = vadd.f32 0.0, %v788
        %v790 = vpop.f32.mrf.mxu0
        %v791 = vadd.f32 0.0, %v790
        %792 = vmatmul.bf16.gmra.mxu0 %v631
        %v793 = vpop.f32.mrf.mxu0
        %v794 = vadd.f32 0.0, %v793
        %v795 = vpop.f32.mrf.mxu0
        %v796 = vadd.f32 0.0, %v795
        %797 = vmatmul.bf16.gmra.mxu0 %v634
        %v798 = vpop.f32.mrf.mxu0
        %v799 = vadd.f32 0.0, %v798
        %v800 = vpop.f32.mrf.mxu0
        %v801 = vadd.f32 0.0, %v800
        %802 = vmatmul.bf16.gmra.mxu0 %v637
        %v803 = vpop.f32.mrf.mxu0
        %v804 = vadd.f32 0.0, %v803
        %v805 = vpop.f32.mrf.mxu0
        %v806 = vadd.f32 0.0, %v805
        %807 = vmatmul.bf16.gmra.mxu0 %v640
        %v808 = vpop.f32.mrf.mxu0
        %v809 = vadd.f32 0.0, %v808
        %v810 = vpop.f32.mrf.mxu0
        %v811 = vadd.f32 0.0, %v810
        %812 = vmatmul.bf16.gmra.mxu0 %v643
        %v813 = vpop.f32.mrf.mxu0
        %v814 = vadd.f32 0.0, %v813
        %v815 = vpop.f32.mrf.mxu0
        %v816 = vadd.f32 0.0, %v815
        %817 = vmatmul.bf16.gmra.mxu0 %v646
        %v818 = vpop.f32.mrf.mxu0
        %v819 = vadd.f32 0.0, %v818
        %v820 = vpop.f32.mrf.mxu0
        %v821 = vadd.f32 0.0, %v820
        %822 = vmatmul.bf16.gmra.mxu0 %v649
        %v823 = vpop.f32.mrf.mxu0
        %v824 = vadd.f32 0.0, %v823
        %v825 = vpop.f32.mrf.mxu0
        %v826 = vadd.f32 0.0, %v825
        %827 = vmatmul.bf16.gmra.mxu0 %v652
        %v828 = vpop.f32.mrf.mxu0
        %v829 = vadd.f32 0.0, %v828
        %v830 = vpop.f32.mrf.mxu0
        %v831 = vadd.f32 0.0, %v830
        %832 = vmatmul.bf16.gmra.mxu0 %v655
        %v833 = vpop.f32.mrf.mxu0
        %v834 = vadd.f32 0.0, %v833
        %v835 = vpop.f32.mrf.mxu0
        %v836 = vadd.f32 0.0, %v835
        %837 = vmatmul.bf16.gmra.mxu0 %v658
        %v838 = vpop.f32.mrf.mxu0
        %v839 = vadd.f32 0.0, %v838
        %v840 = vpop.f32.mrf.mxu0
        %v841 = vadd.f32 0.0, %v840
        %842 = vmatmul.bf16.gmra.mxu0 %v661
        %v843 = vpop.f32.mrf.mxu0
        %v844 = vadd.f32 0.0, %v843
        %v845 = vpop.f32.mrf.mxu0
        %v846 = vadd.f32 0.0, %v845
        %847 = vdwg.mxu0
        %v850 = vunpack.c.l.b16 %v485
        %v851 = vunpack.c.l.b16 %v486
        %v852 = vpack.c.b16 %v851, %v850
        %v855 = vunpack.c.l.b16 %v521
        %v856 = vunpack.c.h.b16 %v521
        %v857 = vunpack.c.l.b16 %v522
        %v858 = vunpack.c.h.b16 %v522
        %v859 = vpack.c.b16 %v857, %v855
        %v860 = vpack.c.b16 %v858, %v856
        %v862 = vsel %vm614, %v852, 0
        %v865 = vsel %vm663, %v859, 0
        %v868 = vsel %vm663, %v860, 0
        %870 = vmatpush.bf16.msra.mxu0 0
        %871 = vmatpush.bf16.msra.mxu0 0
        %872 = vmatpush.bf16.msra.mxu0 0
        %873 = vmatpush.bf16.msra.mxu0 0
        %874 = vmatpush.bf16.msra.mxu0 0
        %875 = vmatpush.bf16.msra.mxu0 0
        %876 = vmatpush.bf16.msra.mxu0 0
        %877 = vmatpush.bf16.msra.mxu0 %v865
        %878 = vmatmul.bf16.gmra.mxu0 %v862
        %v879 = vpop.f32.mrf.mxu0
        %v880 = vadd.f32 %v680, %v879
        %v881 = vpop.f32.mrf.mxu0
        %v882 = vadd.f32 %v682, %v881
        %883 = vmatmul.bf16.gmra.mxu0 %v616
        %v884 = vpop.f32.mrf.mxu0
        %v885 = vadd.f32 %v685, %v884
        %v886 = vpop.f32.mrf.mxu0
        %v887 = vadd.f32 %v687, %v886
        %888 = vmatmul.bf16.gmra.mxu0 %v619
        %v889 = vpop.f32.mrf.mxu0
        %v890 = vadd.f32 %v690, %v889
        %v891 = vpop.f32.mrf.mxu0
        %v892 = vadd.f32 %v692, %v891
        %893 = vmatmul.bf16.gmra.mxu0 %v622
        %v894 = vpop.f32.mrf.mxu0
        %v895 = vadd.f32 %v695, %v894
        %v896 = vpop.f32.mrf.mxu0
        %v897 = vadd.f32 %v697, %v896
        %898 = vmatmul.bf16.gmra.mxu0 %v625
        %v899 = vpop.f32.mrf.mxu0
        %v900 = vadd.f32 %v700, %v899
        %v901 = vpop.f32.mrf.mxu0
        %v902 = vadd.f32 %v702, %v901
        %903 = vmatmul.bf16.gmra.mxu0 %v628
        %v904 = vpop.f32.mrf.mxu0
        %v905 = vadd.f32 %v705, %v904
        %v906 = vpop.f32.mrf.mxu0
        %v907 = vadd.f32 %v707, %v906
        %908 = vmatmul.bf16.gmra.mxu0 %v631
        %v909 = vpop.f32.mrf.mxu0
        %v910 = vadd.f32 %v710, %v909
        %v911 = vpop.f32.mrf.mxu0
        %v912 = vadd.f32 %v712, %v911
        %913 = vmatmul.bf16.gmra.mxu0 %v634
        %v914 = vpop.f32.mrf.mxu0
        %v915 = vadd.f32 %v715, %v914
        %v916 = vpop.f32.mrf.mxu0
        %v917 = vadd.f32 %v717, %v916
        %918 = vmatmul.bf16.gmra.mxu0 %v637
        %v919 = vpop.f32.mrf.mxu0
        %v920 = vadd.f32 %v720, %v919
        %v921 = vpop.f32.mrf.mxu0
        %v922 = vadd.f32 %v722, %v921
        %923 = vmatmul.bf16.gmra.mxu0 %v640
        %v924 = vpop.f32.mrf.mxu0
        %v925 = vadd.f32 %v725, %v924
        %v926 = vpop.f32.mrf.mxu0
        %v927 = vadd.f32 %v727, %v926
        %928 = vmatmul.bf16.gmra.mxu0 %v643
        %v929 = vpop.f32.mrf.mxu0
        %v930 = vadd.f32 %v730, %v929
        %v931 = vpop.f32.mrf.mxu0
        %v932 = vadd.f32 %v732, %v931
        %933 = vmatmul.bf16.gmra.mxu0 %v646
        %v934 = vpop.f32.mrf.mxu0
        %v935 = vadd.f32 %v735, %v934
        %v936 = vpop.f32.mrf.mxu0
        %v937 = vadd.f32 %v737, %v936
        %938 = vmatmul.bf16.gmra.mxu0 %v649
        %v939 = vpop.f32.mrf.mxu0
        %v940 = vadd.f32 %v740, %v939
        %v941 = vpop.f32.mrf.mxu0
        %v942 = vadd.f32 %v742, %v941
        %943 = vmatmul.bf16.gmra.mxu0 %v652
        %v944 = vpop.f32.mrf.mxu0
        %v945 = vadd.f32 %v745, %v944
        %v946 = vpop.f32.mrf.mxu0
        %v947 = vadd.f32 %v747, %v946
        %948 = vmatmul.bf16.gmra.mxu0 %v655
        %v949 = vpop.f32.mrf.mxu0
        %v950 = vadd.f32 %v750, %v949
        %v951 = vpop.f32.mrf.mxu0
        %v952 = vadd.f32 %v752, %v951
        %953 = vmatmul.bf16.gmra.mxu0 %v658
        %v954 = vpop.f32.mrf.mxu0
        %v955 = vadd.f32 %v755, %v954
        %v956 = vpop.f32.mrf.mxu0
        %v957 = vadd.f32 %v757, %v956
        %958 = vdwg.mxu0
        %959 = vmatpush.bf16.msra.mxu0 0
        %960 = vmatpush.bf16.msra.mxu0 0
        %961 = vmatpush.bf16.msra.mxu0 0
        %962 = vmatpush.bf16.msra.mxu0 0
        %963 = vmatpush.bf16.msra.mxu0 0
        %964 = vmatpush.bf16.msra.mxu0 0
        %965 = vmatpush.bf16.msra.mxu0 0
        %966 = vmatpush.bf16.msra.mxu0 %v868
        %967 = vmatmul.bf16.gmra.mxu0 %v862
        %v968 = vpop.f32.mrf.mxu0
        %v969 = vadd.f32 %v769, %v968
        %v970 = vpop.f32.mrf.mxu0
        %v971 = vadd.f32 %v771, %v970
        %972 = vmatmul.bf16.gmra.mxu0 %v616
        %v973 = vpop.f32.mrf.mxu0
        %v974 = vadd.f32 %v774, %v973
        %v975 = vpop.f32.mrf.mxu0
        %v976 = vadd.f32 %v776, %v975
        %977 = vmatmul.bf16.gmra.mxu0 %v619
        %v978 = vpop.f32.mrf.mxu0
        %v979 = vadd.f32 %v779, %v978
        %v980 = vpop.f32.mrf.mxu0
        %v981 = vadd.f32 %v781, %v980
        %982 = vmatmul.bf16.gmra.mxu0 %v622
        %v983 = vpop.f32.mrf.mxu0
        %v984 = vadd.f32 %v784, %v983
        %v985 = vpop.f32.mrf.mxu0
        %v986 = vadd.f32 %v786, %v985
        %987 = vmatmul.bf16.gmra.mxu0 %v625
        %v988 = vpop.f32.mrf.mxu0
        %v989 = vadd.f32 %v789, %v988
        %v990 = vpop.f32.mrf.mxu0
        %v991 = vadd.f32 %v791, %v990
        %992 = vmatmul.bf16.gmra.mxu0 %v628
        %v993 = vpop.f32.mrf.mxu0
        %v994 = vadd.f32 %v794, %v993
        %v995 = vpop.f32.mrf.mxu0
        %v996 = vadd.f32 %v796, %v995
        %997 = vmatmul.bf16.gmra.mxu0 %v631
        %v998 = vpop.f32.mrf.mxu0
        %v999 = vadd.f32 %v799, %v998
        %v1000 = vpop.f32.mrf.mxu0
        %v1001 = vadd.f32 %v801, %v1000
        %1002 = vmatmul.bf16.gmra.mxu0 %v634
        %v1003 = vpop.f32.mrf.mxu0
        %v1004 = vadd.f32 %v804, %v1003
        %v1005 = vpop.f32.mrf.mxu0
        %v1006 = vadd.f32 %v806, %v1005
        %1007 = vmatmul.bf16.gmra.mxu0 %v637
        %v1008 = vpop.f32.mrf.mxu0
        %v1009 = vadd.f32 %v809, %v1008
        %v1010 = vpop.f32.mrf.mxu0
        %v1011 = vadd.f32 %v811, %v1010
        %1012 = vmatmul.bf16.gmra.mxu0 %v640
        %v1013 = vpop.f32.mrf.mxu0
        %v1014 = vadd.f32 %v814, %v1013
        %v1015 = vpop.f32.mrf.mxu0
        %v1016 = vadd.f32 %v816, %v1015
        %1017 = vmatmul.bf16.gmra.mxu0 %v643
        %v1018 = vpop.f32.mrf.mxu0
        %v1019 = vadd.f32 %v819, %v1018
        %v1020 = vpop.f32.mrf.mxu0
        %v1021 = vadd.f32 %v821, %v1020
        %1022 = vmatmul.bf16.gmra.mxu0 %v646
        %v1023 = vpop.f32.mrf.mxu0
        %v1024 = vadd.f32 %v824, %v1023
        %v1025 = vpop.f32.mrf.mxu0
        %v1026 = vadd.f32 %v826, %v1025
        %1027 = vmatmul.bf16.gmra.mxu0 %v649
        %v1028 = vpop.f32.mrf.mxu0
        %v1029 = vadd.f32 %v829, %v1028
        %v1030 = vpop.f32.mrf.mxu0
        %v1031 = vadd.f32 %v831, %v1030
        %1032 = vmatmul.bf16.gmra.mxu0 %v652
        %v1033 = vpop.f32.mrf.mxu0
        %v1034 = vadd.f32 %v834, %v1033
        %v1035 = vpop.f32.mrf.mxu0
        %v1036 = vadd.f32 %v836, %v1035
        %1037 = vmatmul.bf16.gmra.mxu0 %v655
        %v1038 = vpop.f32.mrf.mxu0
        %v1039 = vadd.f32 %v839, %v1038
        %v1040 = vpop.f32.mrf.mxu0
        %v1041 = vadd.f32 %v841, %v1040
        %1042 = vmatmul.bf16.gmra.mxu0 %v658
        %v1043 = vpop.f32.mrf.mxu0
        %v1044 = vadd.f32 %v844, %v1043
        %v1045 = vpop.f32.mrf.mxu0
        %v1046 = vadd.f32 %v846, %v1045
        %1047 = vdwg.mxu0
        %s1048 = scalar_lea.vmem %s1, 32
        %v1049 = vld [vmem:[%s1048] sm:$0xff]
        %v1050 = vld [vmem:[%s1048 + $0x8] sm:$0x33]
        %v1053 = vunpack.c.l.b16 %v519
        %v1054 = vunpack.c.l.b16 %v520
        %v1055 = vpack.c.b16 %v1054, %v1053
        %v1058 = vunpack.c.l.b16 %v1049
        %v1059 = vunpack.c.h.b16 %v1049
        %v1060 = vunpack.c.l.b16 %v1050
        %v1061 = vunpack.c.h.b16 %v1050
        %v1062 = vpack.c.b16 %v1060, %v1058
        %v1063 = vpack.c.b16 %v1061, %v1059
        %v1065 = vsel %vm614, %v1055, 0
        %v1068 = vsel %vm663, %v1062, 0
        %v1071 = vsel %vm663, %v1063, 0
        %1073 = vmatpush.bf16.msra.mxu0 0
        %1074 = vmatpush.bf16.msra.mxu0 0
        %1075 = vmatpush.bf16.msra.mxu0 0
        %1076 = vmatpush.bf16.msra.mxu0 0
        %1077 = vmatpush.bf16.msra.mxu0 0
        %1078 = vmatpush.bf16.msra.mxu0 0
        %1079 = vmatpush.bf16.msra.mxu0 0
        %1080 = vmatpush.bf16.msra.mxu0 %v1068
        %1081 = vmatmul.bf16.gmra.mxu0 %v619
        %v1082 = vpop.f32.mrf.mxu0
        %v1083 = vadd.f32 0.0, %v1082
        %v1084 = vpop.f32.mrf.mxu0
        %v1085 = vadd.f32 0.0, %v1084
        %1086 = vmatmul.bf16.gmra.mxu0 %v622
        %v1087 = vpop.f32.mrf.mxu0
        %v1088 = vadd.f32 0.0, %v1087
        %v1089 = vpop.f32.mrf.mxu0
        %v1090 = vadd.f32 0.0, %v1089
        %1091 = vmatmul.bf16.gmra.mxu0 %v625
        %v1092 = vpop.f32.mrf.mxu0
        %v1093 = vadd.f32 0.0, %v1092
        %v1094 = vpop.f32.mrf.mxu0
        %v1095 = vadd.f32 0.0, %v1094
        %1096 = vmatmul.bf16.gmra.mxu0 %v628
        %v1097 = vpop.f32.mrf.mxu0
        %v1098 = vadd.f32 0.0, %v1097
        %v1099 = vpop.f32.mrf.mxu0
        %v1100 = vadd.f32 0.0, %v1099
        %1101 = vmatmul.bf16.gmra.mxu0 %v631
        %v1102 = vpop.f32.mrf.mxu0
        %v1103 = vadd.f32 0.0, %v1102
        %v1104 = vpop.f32.mrf.mxu0
        %v1105 = vadd.f32 0.0, %v1104
        %1106 = vmatmul.bf16.gmra.mxu0 %v634
        %v1107 = vpop.f32.mrf.mxu0
        %v1108 = vadd.f32 0.0, %v1107
        %v1109 = vpop.f32.mrf.mxu0
        %v1110 = vadd.f32 0.0, %v1109
        %1111 = vmatmul.bf16.gmra.mxu0 %v637
        %v1112 = vpop.f32.mrf.mxu0
        %v1113 = vadd.f32 0.0, %v1112
        %v1114 = vpop.f32.mrf.mxu0
        %v1115 = vadd.f32 0.0, %v1114
        %1116 = vmatmul.bf16.gmra.mxu0 %v640
        %v1117 = vpop.f32.mrf.mxu0
        %v1118 = vadd.f32 0.0, %v1117
        %v1119 = vpop.f32.mrf.mxu0
        %v1120 = vadd.f32 0.0, %v1119
        %1121 = vmatmul.bf16.gmra.mxu0 %v643
        %v1122 = vpop.f32.mrf.mxu0
        %v1123 = vadd.f32 0.0, %v1122
        %v1124 = vpop.f32.mrf.mxu0
        %v1125 = vadd.f32 0.0, %v1124
        %1126 = vmatmul.bf16.gmra.mxu0 %v646
        %v1127 = vpop.f32.mrf.mxu0
        %v1128 = vadd.f32 0.0, %v1127
        %v1129 = vpop.f32.mrf.mxu0
        %v1130 = vadd.f32 0.0, %v1129
        %1131 = vmatmul.bf16.gmra.mxu0 %v649
        %v1132 = vpop.f32.mrf.mxu0
        %v1133 = vadd.f32 0.0, %v1132
        %v1134 = vpop.f32.mrf.mxu0
        %v1135 = vadd.f32 0.0, %v1134
        %1136 = vmatmul.bf16.gmra.mxu0 %v652
        %v1137 = vpop.f32.mrf.mxu0
        %v1138 = vadd.f32 0.0, %v1137
        %v1139 = vpop.f32.mrf.mxu0
        %v1140 = vadd.f32 0.0, %v1139
        %1141 = vmatmul.bf16.gmra.mxu0 %v655
        %v1142 = vpop.f32.mrf.mxu0
        %v1143 = vadd.f32 0.0, %v1142
        %v1144 = vpop.f32.mrf.mxu0
        %v1145 = vadd.f32 0.0, %v1144
        %1146 = vmatmul.bf16.gmra.mxu0 %v658
        %v1147 = vpop.f32.mrf.mxu0
        %v1148 = vadd.f32 0.0, %v1147
        %v1149 = vpop.f32.mrf.mxu0
        %v1150 = vadd.f32 0.0, %v1149
        %1151 = vmatmul.bf16.gmra.mxu0 %v661
        %v1152 = vpop.f32.mrf.mxu0
        %v1153 = vadd.f32 0.0, %v1152
        %v1154 = vpop.f32.mrf.mxu0
        %v1155 = vadd.f32 0.0, %v1154
        %1156 = vmatmul.bf16.gmra.mxu0 %v1065
        %v1157 = vpop.f32.mrf.mxu0
        %v1158 = vadd.f32 0.0, %v1157
        %v1159 = vpop.f32.mrf.mxu0
        %v1160 = vadd.f32 0.0, %v1159
        %1161 = vdwg.mxu0
        %1162 = vmatpush.bf16.msra.mxu0 0
        %1163 = vmatpush.bf16.msra.mxu0 0
        %1164 = vmatpush.bf16.msra.mxu0 0
        %1165 = vmatpush.bf16.msra.mxu0 0
        %1166 = vmatpush.bf16.msra.mxu0 0
        %1167 = vmatpush.bf16.msra.mxu0 0
        %1168 = vmatpush.bf16.msra.mxu0 0
        %1169 = vmatpush.bf16.msra.mxu0 %v1071
        %1170 = vmatmul.bf16.gmra.mxu0 %v619
        %v1171 = vpop.f32.mrf.mxu0
        %v1172 = vadd.f32 0.0, %v1171
        %v1173 = vpop.f32.mrf.mxu0
        %v1174 = vadd.f32 0.0, %v1173
        %1175 = vmatmul.bf16.gmra.mxu0 %v622
        %v1176 = vpop.f32.mrf.mxu0
        %v1177 = vadd.f32 0.0, %v1176
        %v1178 = vpop.f32.mrf.mxu0
        %v1179 = vadd.f32 0.0, %v1178
        %1180 = vmatmul.bf16.gmra.mxu0 %v625
        %v1181 = vpop.f32.mrf.mxu0
        %v1182 = vadd.f32 0.0, %v1181
        %v1183 = vpop.f32.mrf.mxu0
        %v1184 = vadd.f32 0.0, %v1183
        %1185 = vmatmul.bf16.gmra.mxu0 %v628
        %v1186 = vpop.f32.mrf.mxu0
        %v1187 = vadd.f32 0.0, %v1186
        %v1188 = vpop.f32.mrf.mxu0
        %v1189 = vadd.f32 0.0, %v1188
        %1190 = vmatmul.bf16.gmra.mxu0 %v631
        %v1191 = vpop.f32.mrf.mxu0
        %v1192 = vadd.f32 0.0, %v1191
        %v1193 = vpop.f32.mrf.mxu0
        %v1194 = vadd.f32 0.0, %v1193
        %1195 = vmatmul.bf16.gmra.mxu0 %v634
        %v1196 = vpop.f32.mrf.mxu0
        %v1197 = vadd.f32 0.0, %v1196
        %v1198 = vpop.f32.mrf.mxu0
        %v1199 = vadd.f32 0.0, %v1198
        %1200 = vmatmul.bf16.gmra.mxu0 %v637
        %v1201 = vpop.f32.mrf.mxu0
        %v1202 = vadd.f32 0.0, %v1201
        %v1203 = vpop.f32.mrf.mxu0
        %v1204 = vadd.f32 0.0, %v1203
        %1205 = vmatmul.bf16.gmra.mxu0 %v640
        %v1206 = vpop.f32.mrf.mxu0
        %v1207 = vadd.f32 0.0, %v1206
        %v1208 = vpop.f32.mrf.mxu0
        %v1209 = vadd.f32 0.0, %v1208
        %1210 = vmatmul.bf16.gmra.mxu0 %v643
        %v1211 = vpop.f32.mrf.mxu0
        %v1212 = vadd.f32 0.0, %v1211
        %v1213 = vpop.f32.mrf.mxu0
        %v1214 = vadd.f32 0.0, %v1213
        %1215 = vmatmul.bf16.gmra.mxu0 %v646
        %v1216 = vpop.f32.mrf.mxu0
        %v1217 = vadd.f32 0.0, %v1216
        %v1218 = vpop.f32.mrf.mxu0
        %v1219 = vadd.f32 0.0, %v1218
        %1220 = vmatmul.bf16.gmra.mxu0 %v649
        %v1221 = vpop.f32.mrf.mxu0
        %v1222 = vadd.f32 0.0, %v1221
        %v1223 = vpop.f32.mrf.mxu0
        %v1224 = vadd.f32 0.0, %v1223
        %1225 = vmatmul.bf16.gmra.mxu0 %v652
        %v1226 = vpop.f32.mrf.mxu0
        %v1227 = vadd.f32 0.0, %v1226
        %v1228 = vpop.f32.mrf.mxu0
        %v1229 = vadd.f32 0.0, %v1228
        %1230 = vmatmul.bf16.gmra.mxu0 %v655
        %v1231 = vpop.f32.mrf.mxu0
        %v1232 = vadd.f32 0.0, %v1231
        %v1233 = vpop.f32.mrf.mxu0
        %v1234 = vadd.f32 0.0, %v1233
        %1235 = vmatmul.bf16.gmra.mxu0 %v658
        %v1236 = vpop.f32.mrf.mxu0
        %v1237 = vadd.f32 0.0, %v1236
        %v1238 = vpop.f32.mrf.mxu0
        %v1239 = vadd.f32 0.0, %v1238
        %1240 = vmatmul.bf16.gmra.mxu0 %v661
        %v1241 = vpop.f32.mrf.mxu0
        %v1242 = vadd.f32 0.0, %v1241
        %v1243 = vpop.f32.mrf.mxu0
        %v1244 = vadd.f32 0.0, %v1243
        %1245 = vmatmul.bf16.gmra.mxu0 %v1065
        %v1246 = vpop.f32.mrf.mxu0
        %v1247 = vadd.f32 0.0, %v1246
        %v1248 = vpop.f32.mrf.mxu0
        %v1249 = vadd.f32 0.0, %v1248
        %1250 = vdwg.mxu0
        %v1251 = vadd.f32 %v880, %v1083
        %v1252 = vadd.f32 %v969, %v1172
        %v1253 = vadd.f32 %v882, %v1085
        %v1254 = vadd.f32 %v971, %v1174
        %v1255 = vadd.f32 %v885, %v1088
        %v1256 = vadd.f32 %v974, %v1177
        %v1257 = vadd.f32 %v887, %v1090
        %v1258 = vadd.f32 %v976, %v1179
        %v1259 = vadd.f32 %v890, %v1093
        %v1260 = vadd.f32 %v979, %v1182
        %v1261 = vadd.f32 %v892, %v1095
        %v1262 = vadd.f32 %v981, %v1184
        %v1263 = vadd.f32 %v895, %v1098
        %v1264 = vadd.f32 %v984, %v1187
        %v1265 = vadd.f32 %v897, %v1100
        %v1266 = vadd.f32 %v986, %v1189
        %v1267 = vadd.f32 %v900, %v1103
        %v1268 = vadd.f32 %v989, %v1192
        %v1269 = vadd.f32 %v902, %v1105
        %v1270 = vadd.f32 %v991, %v1194
        %v1271 = vadd.f32 %v905, %v1108
        %v1272 = vadd.f32 %v994, %v1197
        %v1273 = vadd.f32 %v907, %v1110
        %v1274 = vadd.f32 %v996, %v1199
        %v1275 = vadd.f32 %v910, %v1113
        %v1276 = vadd.f32 %v999, %v1202
        %v1277 = vadd.f32 %v912, %v1115
        %v1278 = vadd.f32 %v1001, %v1204
        %v1279 = vadd.f32 %v915, %v1118
        %v1280 = vadd.f32 %v1004, %v1207
        %v1281 = vadd.f32 %v917, %v1120
        %v1282 = vadd.f32 %v1006, %v1209
        %v1283 = vadd.f32 %v920, %v1123
        %v1284 = vadd.f32 %v1009, %v1212
        %v1285 = vadd.f32 %v922, %v1125
        %v1286 = vadd.f32 %v1011, %v1214
        %v1287 = vadd.f32 %v925, %v1128
        %v1288 = vadd.f32 %v1014, %v1217
        %v1289 = vadd.f32 %v927, %v1130
        %v1290 = vadd.f32 %v1016, %v1219
        %v1291 = vadd.f32 %v930, %v1133
        %v1292 = vadd.f32 %v1019, %v1222
        %v1293 = vadd.f32 %v932, %v1135
        %v1294 = vadd.f32 %v1021, %v1224
        %v1295 = vadd.f32 %v935, %v1138
        %v1296 = vadd.f32 %v1024, %v1227
        %v1297 = vadd.f32 %v937, %v1140
        %v1298 = vadd.f32 %v1026, %v1229
        %v1299 = vadd.f32 %v940, %v1143
        %v1300 = vadd.f32 %v1029, %v1232
        %v1301 = vadd.f32 %v942, %v1145
        %v1302 = vadd.f32 %v1031, %v1234
        %v1303 = vadd.f32 %v945, %v1148
        %v1304 = vadd.f32 %v1034, %v1237
        %v1305 = vadd.f32 %v947, %v1150
        %v1306 = vadd.f32 %v1036, %v1239
        %v1307 = vadd.f32 %v950, %v1153
        %v1308 = vadd.f32 %v1039, %v1242
        %v1309 = vadd.f32 %v952, %v1155
        %v1310 = vadd.f32 %v1041, %v1244
        %v1311 = vadd.f32 %v955, %v1158
        %v1312 = vadd.f32 %v1044, %v1247
        %v1313 = vadd.f32 %v957, %v1160
        %v1314 = vadd.f32 %v1046, %v1249
        %v1315 = vld [vmem:[%s2] sm:$0x3]
        %v1317 = vperm.slane %v1315, 0
        %v1318 = vperm.slane %v1315, 1
        %v1321 = vadd.f32 %v1251, %v1317
        %v1322 = vadd.f32 %v1252, %v1318
        %v1323 = vadd.f32 %v1253, %v1317
        %v1324 = vadd.f32 %v1254, %v1318
        %v1325 = vadd.f32 %v1255, %v1317
        %v1326 = vadd.f32 %v1256, %v1318
        %v1327 = vadd.f32 %v1257, %v1317
        %v1328 = vadd.f32 %v1258, %v1318
        %v1329 = vadd.f32 %v1259, %v1317
        %v1330 = vadd.f32 %v1260, %v1318
        %v1331 = vadd.f32 %v1261, %v1317
        %v1332 = vadd.f32 %v1262, %v1318
        %v1333 = vadd.f32 %v1263, %v1317
        %v1334 = vadd.f32 %v1264, %v1318
        %v1335 = vadd.f32 %v1265, %v1317
        %v1336 = vadd.f32 %v1266, %v1318
        %v1337 = vadd.f32 %v1267, %v1317
        %v1338 = vadd.f32 %v1268, %v1318
        %v1339 = vadd.f32 %v1269, %v1317
        %v1340 = vadd.f32 %v1270, %v1318
        %v1341 = vadd.f32 %v1271, %v1317
        %v1342 = vadd.f32 %v1272, %v1318
        %v1343 = vadd.f32 %v1273, %v1317
        %v1344 = vadd.f32 %v1274, %v1318
        %v1345 = vadd.f32 %v1275, %v1317
        %v1346 = vadd.f32 %v1276, %v1318
        %v1347 = vadd.f32 %v1277, %v1317
        %v1348 = vadd.f32 %v1278, %v1318
        %v1349 = vadd.f32 %v1279, %v1317
        %v1350 = vadd.f32 %v1280, %v1318
        %v1351 = vadd.f32 %v1281, %v1317
        %v1352 = vadd.f32 %v1282, %v1318
        %v1353 = vadd.f32 %v1283, %v1317
        %v1354 = vadd.f32 %v1284, %v1318
        %v1355 = vadd.f32 %v1285, %v1317
        %v1356 = vadd.f32 %v1286, %v1318
        %v1357 = vadd.f32 %v1287, %v1317
        %v1358 = vadd.f32 %v1288, %v1318
        %v1359 = vadd.f32 %v1289, %v1317
        %v1360 = vadd.f32 %v1290, %v1318
        %v1361 = vadd.f32 %v1291, %v1317
        %v1362 = vadd.f32 %v1292, %v1318
        %v1363 = vadd.f32 %v1293, %v1317
        %v1364 = vadd.f32 %v1294, %v1318
        %v1365 = vadd.f32 %v1295, %v1317
        %v1366 = vadd.f32 %v1296, %v1318
        %v1367 = vadd.f32 %v1297, %v1317
        %v1368 = vadd.f32 %v1298, %v1318
        %v1369 = vadd.f32 %v1299, %v1317
        %v1370 = vadd.f32 %v1300, %v1318
        %v1371 = vadd.f32 %v1301, %v1317
        %v1372 = vadd.f32 %v1302, %v1318
        %v1373 = vadd.f32 %v1303, %v1317
        %v1374 = vadd.f32 %v1304, %v1318
        %v1375 = vadd.f32 %v1305, %v1317
        %v1376 = vadd.f32 %v1306, %v1318
        %v1377 = vadd.f32 %v1307, %v1317
        %v1378 = vadd.f32 %v1308, %v1318
        %v1379 = vadd.f32 %v1309, %v1317
        %v1380 = vadd.f32 %v1310, %v1318
        %v1381 = vadd.f32 %v1311, %v1317
        %v1382 = vadd.f32 %v1312, %v1318
        %v1383 = vadd.f32 %v1313, %v1317
        %v1384 = vadd.f32 %v1314, %v1318
        %v1385 = vpack.c.bf16 %v1322, %v1321
        %v1386 = vpack.c.bf16 %v1324, %v1323
        %v1387 = vpack.c.bf16 %v1326, %v1325
        %v1388 = vpack.c.bf16 %v1328, %v1327
        %v1389 = vpack.c.bf16 %v1330, %v1329
        %v1390 = vpack.c.bf16 %v1332, %v1331
        %v1391 = vpack.c.bf16 %v1334, %v1333
        %v1392 = vpack.c.bf16 %v1336, %v1335
        %v1393 = vpack.c.bf16 %v1338, %v1337
        %v1394 = vpack.c.bf16 %v1340, %v1339
        %v1395 = vpack.c.bf16 %v1342, %v1341
        %v1396 = vpack.c.bf16 %v1344, %v1343
        %v1397 = vpack.c.bf16 %v1346, %v1345
        %v1398 = vpack.c.bf16 %v1348, %v1347
        %v1399 = vpack.c.bf16 %v1350, %v1349
        %v1400 = vpack.c.bf16 %v1352, %v1351
        %v1401 = vpack.c.bf16 %v1354, %v1353
        %v1402 = vpack.c.bf16 %v1356, %v1355
        %v1403 = vpack.c.bf16 %v1358, %v1357
        %v1404 = vpack.c.bf16 %v1360, %v1359
        %v1405 = vpack.c.bf16 %v1362, %v1361
        %v1406 = vpack.c.bf16 %v1364, %v1363
        %v1407 = vpack.c.bf16 %v1366, %v1365
        %v1408 = vpack.c.bf16 %v1368, %v1367
        %v1409 = vpack.c.bf16 %v1370, %v1369
        %v1410 = vpack.c.bf16 %v1372, %v1371
        %v1411 = vpack.c.bf16 %v1374, %v1373
        %v1412 = vpack.c.bf16 %v1376, %v1375
        %v1413 = vpack.c.bf16 %v1378, %v1377
        %v1414 = vpack.c.bf16 %v1380, %v1379
        %v1415 = vpack.c.bf16 %v1382, %v1381
        %v1416 = vpack.c.bf16 %v1384, %v1383
        %1417 = vst [vmem:[%s420] sm:$0xff] %v1385
        %1418 = vst [vmem:[%s420 + $0x8] sm:$0xff] %v1386
        %1419 = vst [vmem:[%s420 + $0x18] sm:$0xff] %v1387
        %1420 = vst [vmem:[%s420 + $0x20] sm:$0xff] %v1388
        %1421 = vst [vmem:[%s420 + $0x30] sm:$0xff] %v1389
        %1422 = vst [vmem:[%s420 + $0x38] sm:$0xff] %v1390
        %1423 = vst [vmem:[%s420 + $0x48] sm:$0xff] %v1391
        %1424 = vst [vmem:[%s420 + $0x50] sm:$0xff] %v1392
        %1425 = vst [vmem:[%s420 + $0x60] sm:$0xff] %v1393
        %1426 = vst [vmem:[%s420 + $0x68] sm:$0xff] %v1394
        %1427 = vst [vmem:[%s420 + $0x78] sm:$0xff] %v1395
        %1428 = vst [vmem:[%s420 + $0x80] sm:$0xff] %v1396
        %1429 = vst [vmem:[%s420 + $0x90] sm:$0xff] %v1397
        %1430 = vst [vmem:[%s420 + $0x98] sm:$0xff] %v1398
        %1431 = vst [vmem:[%s420 + $0xa8] sm:$0xff] %v1399
        %1432 = vst [vmem:[%s420 + $0xb0] sm:$0xff] %v1400
        %1433 = vst [vmem:[%s420 + $0xc0] sm:$0xff] %v1401
        %1434 = vst [vmem:[%s420 + $0xc8] sm:$0xff] %v1402
        %1435 = vst [vmem:[%s420 + $0xd8] sm:$0xff] %v1403
        %1436 = vst [vmem:[%s420 + $0xe0] sm:$0xff] %v1404
        %1437 = vst [vmem:[%s420 + $0xf0] sm:$0xff] %v1405
        %1438 = vst [vmem:[%s420 + $0xf8] sm:$0xff] %v1406
        %1439 = vst [vmem:[%s420 + $0x108] sm:$0xff] %v1407
        %1440 = vst [vmem:[%s420 + $0x110] sm:$0xff] %v1408
        %1441 = vst [vmem:[%s420 + $0x120] sm:$0xff] %v1409
        %1442 = vst [vmem:[%s420 + $0x128] sm:$0xff] %v1410
        %1443 = vst [vmem:[%s420 + $0x138] sm:$0xff] %v1411
        %1444 = vst [vmem:[%s420 + $0x140] sm:$0xff] %v1412
        %1445 = vst [vmem:[%s420 + $0x150] sm:$0xff] %v1413
        %1446 = vst [vmem:[%s420 + $0x158] sm:$0xff] %v1414
        %1447 = vst [vmem:[%s420 + $0x168] sm:$0xff] %v1415
        %1448 = vst [vmem:[%s420 + $0x170] sm:$0xff] %v1416
        %v1449 = vld [vmem:[#allocation2] sm:$0xff]
        %v1450 = vld [vmem:[#allocation2 + $0x8] sm:$0xff]
        %v1451 = vld [vmem:[#allocation2 + $0x10] sm:$0xff]
        %v1452 = vld [vmem:[#allocation2 + $0x18] sm:$0xff]
        %v1453 = vld [vmem:[#allocation2 + $0x20] sm:$0xff]
        %v1454 = vld [vmem:[#allocation2 + $0x28] sm:$0xff]
        %v1455 = vld [vmem:[#allocation2 + $0x30] sm:$0xff]
        %v1456 = vld [vmem:[#allocation2 + $0x38] sm:$0xff]
        %v1457 = vld [vmem:[#allocation2 + $0x40] sm:$0xff]
        %v1458 = vld [vmem:[#allocation2 + $0x48] sm:$0xff]
        %v1459 = vld [vmem:[#allocation2 + $0x50] sm:$0xff]
        %v1460 = vld [vmem:[#allocation2 + $0x58] sm:$0xff]
        %v1461 = vld [vmem:[#allocation2 + $0x60] sm:$0xff]
        %v1462 = vld [vmem:[#allocation2 + $0x68] sm:$0xff]
        %v1463 = vld [vmem:[#allocation2 + $0x70] sm:$0xff]
        %v1464 = vld [vmem:[#allocation2 + $0x78] sm:$0xff]
        %v1465 = vld [vmem:[#allocation2 + $0x80] sm:$0xff]
        %v1466 = vld [vmem:[#allocation2 + $0x88] sm:$0xff]
        %v1467 = vld [vmem:[#allocation2 + $0x90] sm:$0xff]
        %v1468 = vld [vmem:[#allocation2 + $0x98] sm:$0xff]
        %v1469 = vld [vmem:[#allocation2 + $0xa0] sm:$0xff]
        %v1470 = vld [vmem:[#allocation2 + $0xa8] sm:$0xff]
        %v1471 = vld [vmem:[#allocation2 + $0xb0] sm:$0xff]
        %v1472 = vld [vmem:[#allocation2 + $0xb8] sm:$0xff]
        %v1473 = vld [vmem:[#allocation2 + $0xc0] sm:$0xff]
        %v1474 = vld [vmem:[#allocation2 + $0xc8] sm:$0xff]
        %v1475 = vld [vmem:[#allocation2 + $0xd0] sm:$0xff]
        %v1476 = vld [vmem:[#allocation2 + $0xd8] sm:$0xff]
        %v1477 = vld [vmem:[#allocation2 + $0xe0] sm:$0xff]
        %v1478 = vld [vmem:[#allocation2 + $0xe8] sm:$0xff]
        %v1479 = vld [vmem:[#allocation2 + $0xf0] sm:$0xff]
        %v1480 = vld [vmem:[#allocation2 + $0xf8] sm:$0xff]
        %v1481 = vld [vmem:[#allocation2 + $0x100] sm:$0xff]
        %v1482 = vld [vmem:[#allocation2 + $0x108] sm:$0xff]
        %v1483 = vld [vmem:[#allocation2 + $0x110] sm:$0xff]
        %v1484 = vld [vmem:[#allocation2 + $0x118] sm:$0xff]
        %v1485 = vld [vmem:[#allocation2 + $0x120] sm:$0xff]
        %v1486 = vld [vmem:[#allocation2 + $0x128] sm:$0xff]
        %v1487 = vld [vmem:[#allocation2 + $0x130] sm:$0xff]
        %v1488 = vld [vmem:[#allocation2 + $0x138] sm:$0xff]
        %v1489 = vld [vmem:[#allocation2 + $0x140] sm:$0xff]
        %v1490 = vld [vmem:[#allocation2 + $0x148] sm:$0xff]
        %v1491 = vld [vmem:[#allocation2 + $0x150] sm:$0xff]
        %v1492 = vld [vmem:[#allocation2 + $0x158] sm:$0xff]
        %v1493 = vld [vmem:[#allocation2 + $0x160] sm:$0xff]
        %v1494 = vld [vmem:[#allocation2 + $0x168] sm:$0xff]
        %v1495 = vld [vmem:[#allocation2 + $0x170] sm:$0xff]
        %v1496 = vld [vmem:[#allocation2 + $0x178] sm:$0xff]
        %v1497 = vld [vmem:[#allocation2 + $0x180] sm:$0xff]
        %v1498 = vld [vmem:[#allocation2 + $0x188] sm:$0xff]
        %v1499 = vld [vmem:[#allocation2 + $0x190] sm:$0xff]
        %v1500 = vld [vmem:[#allocation2 + $0x198] sm:$0xff]
        %v1501 = vld [vmem:[#allocation2 + $0x1a0] sm:$0xff]
        %v1502 = vld [vmem:[#allocation2 + $0x1a8] sm:$0xff]
        %v1539 = vunpack.c.l.b16 %v1449
        %v1540 = vunpack.c.h.b16 %v1449
        %v1541 = vunpack.c.l.b16 %v1450
        %v1542 = vunpack.c.h.b16 %v1450
        %v1543 = vunpack.c.l.b16 %v1452
        %v1544 = vunpack.c.h.b16 %v1452
        %v1545 = vunpack.c.l.b16 %v1453
        %v1546 = vunpack.c.h.b16 %v1453
        %v1547 = vunpack.c.l.b16 %v1455
        %v1548 = vunpack.c.h.b16 %v1455
        %v1549 = vunpack.c.l.b16 %v1456
        %v1550 = vunpack.c.h.b16 %v1456
        %v1551 = vunpack.c.l.b16 %v1458
        %v1552 = vunpack.c.h.b16 %v1458
        %v1553 = vunpack.c.l.b16 %v1459
        %v1554 = vunpack.c.h.b16 %v1459
        %v1555 = vunpack.c.l.b16 %v1461
        %v1556 = vunpack.c.h.b16 %v1461
        %v1557 = vunpack.c.l.b16 %v1462
        %v1558 = vunpack.c.h.b16 %v1462
        %v1559 = vunpack.c.l.b16 %v1464
        %v1560 = vunpack.c.h.b16 %v1464
        %v1561 = vunpack.c.l.b16 %v1465
        %v1562 = vunpack.c.h.b16 %v1465
        %v1563 = vunpack.c.l.b16 %v1467
        %v1564 = vunpack.c.h.b16 %v1467
        %v1565 = vunpack.c.l.b16 %v1468
        %v1566 = vunpack.c.h.b16 %v1468
        %v1567 = vunpack.c.l.b16 %v1470
        %v1568 = vunpack.c.h.b16 %v1470
        %v1569 = vunpack.c.l.b16 %v1471
        %v1570 = vunpack.c.h.b16 %v1471
        %v1571 = vunpack.c.l.b16 %v1473
        %v1572 = vunpack.c.h.b16 %v1473
        %v1573 = vunpack.c.l.b16 %v1474
        %v1574 = vunpack.c.h.b16 %v1474
        %v1575 = vunpack.c.l.b16 %v1476
        %v1576 = vunpack.c.h.b16 %v1476
        %v1577 = vunpack.c.l.b16 %v1477
        %v1578 = vunpack.c.h.b16 %v1477
        %v1579 = vunpack.c.l.b16 %v1479
        %v1580 = vunpack.c.h.b16 %v1479
        %v1581 = vunpack.c.l.b16 %v1480
        %v1582 = vunpack.c.h.b16 %v1480
        %v1583 = vunpack.c.l.b16 %v1482
        %v1584 = vunpack.c.h.b16 %v1482
        %v1585 = vunpack.c.l.b16 %v1483
        %v1586 = vunpack.c.h.b16 %v1483
        %v1587 = vunpack.c.l.b16 %v1485
        %v1588 = vunpack.c.h.b16 %v1485
        %v1589 = vunpack.c.l.b16 %v1486
        %v1590 = vunpack.c.h.b16 %v1486
        %v1591 = vunpack.c.l.b16 %v1488
        %v1592 = vunpack.c.h.b16 %v1488
        %v1593 = vunpack.c.l.b16 %v1489
        %v1594 = vunpack.c.h.b16 %v1489
        %v1595 = vunpack.c.l.b16 %v1491
        %v1596 = vunpack.c.h.b16 %v1491
        %v1597 = vunpack.c.l.b16 %v1492
        %v1598 = vunpack.c.h.b16 %v1492
        %v1599 = vunpack.c.l.b16 %v1494
        %v1600 = vunpack.c.h.b16 %v1494
        %v1601 = vunpack.c.l.b16 %v1495
        %v1602 = vunpack.c.h.b16 %v1495
        %v1603 = vunpack.c.l.b16 %v1497
        %v1604 = vunpack.c.h.b16 %v1497
        %v1605 = vunpack.c.l.b16 %v1498
        %v1606 = vunpack.c.h.b16 %v1498
        %v1607 = vunpack.c.l.b16 %v1500
        %v1608 = vunpack.c.h.b16 %v1500
        %v1609 = vunpack.c.l.b16 %v1501
        %v1610 = vunpack.c.h.b16 %v1501
        %v1611 = vpack.c.b16 %v1541, %v1539
        %v1612 = vpack.c.b16 %v1542, %v1540
        %v1613 = vpack.c.b16 %v1545, %v1543
        %v1614 = vpack.c.b16 %v1546, %v1544
        %v1615 = vpack.c.b16 %v1549, %v1547
        %v1616 = vpack.c.b16 %v1550, %v1548
        %v1617 = vpack.c.b16 %v1553, %v1551
        %v1618 = vpack.c.b16 %v1554, %v1552
        %v1619 = vpack.c.b16 %v1557, %v1555
        %v1620 = vpack.c.b16 %v1558, %v1556
        %v1621 = vpack.c.b16 %v1561, %v1559
        %v1622 = vpack.c.b16 %v1562, %v1560
        %v1623 = vpack.c.b16 %v1565, %v1563
        %v1624 = vpack.c.b16 %v1566, %v1564
        %v1625 = vpack.c.b16 %v1569, %v1567
        %v1626 = vpack.c.b16 %v1570, %v1568
        %v1627 = vpack.c.b16 %v1573, %v1571
        %v1628 = vpack.c.b16 %v1574, %v1572
        %v1629 = vpack.c.b16 %v1577, %v1575
        %v1630 = vpack.c.b16 %v1578, %v1576
        %v1631 = vpack.c.b16 %v1581, %v1579
        %v1632 = vpack.c.b16 %v1582, %v1580
        %v1633 = vpack.c.b16 %v1585, %v1583
        %v1634 = vpack.c.b16 %v1586, %v1584
        %v1635 = vpack.c.b16 %v1589, %v1587
        %v1636 = vpack.c.b16 %v1590, %v1588
        %v1637 = vpack.c.b16 %v1593, %v1591
        %v1638 = vpack.c.b16 %v1594, %v1592
        %v1639 = vpack.c.b16 %v1597, %v1595
        %v1640 = vpack.c.b16 %v1598, %v1596
        %v1641 = vpack.c.b16 %v1601, %v1599
        %v1642 = vpack.c.b16 %v1602, %v1600
        %v1643 = vpack.c.b16 %v1605, %v1603
        %v1644 = vpack.c.b16 %v1606, %v1604
        %v1645 = vpack.c.b16 %v1609, %v1607
        %v1646 = vpack.c.b16 %v1610, %v1608
        %v1648 = vshrl.u32 %v1611, 16
        %v1650 = vrot.slane %v1648, 7
        %v1651 = vshll.u32 %v1611, 16
        %v1653 = vor.u32 %v1650, %v1651
        %v1655 = vshrl.u32 %v1612, 16
        %v1657 = vrot.slane %v1655, 7
        %v1658 = vshll.u32 %v1612, 16
        %v1660 = vor.u32 %v1657, %v1658
        %v1662 = vshrl.u32 %v1613, 16
        %v1664 = vrot.slane %v1662, 7
        %v1665 = vshll.u32 %v1613, 16
        %v1667 = vor.u32 %v1664, %v1665
        %v1669 = vshrl.u32 %v1614, 16
        %v1671 = vrot.slane %v1669, 7
        %v1672 = vshll.u32 %v1614, 16
        %v1674 = vor.u32 %v1671, %v1672
        %v1676 = vshrl.u32 %v1615, 16
        %v1678 = vrot.slane %v1676, 7
        %v1679 = vshll.u32 %v1615, 16
        %v1681 = vor.u32 %v1678, %v1679
        %v1683 = vshrl.u32 %v1616, 16
        %v1685 = vrot.slane %v1683, 7
        %v1686 = vshll.u32 %v1616, 16
        %v1688 = vor.u32 %v1685, %v1686
        %v1690 = vshrl.u32 %v1617, 16
        %v1692 = vrot.slane %v1690, 7
        %v1693 = vshll.u32 %v1617, 16
        %v1695 = vor.u32 %v1692, %v1693
        %v1697 = vshrl.u32 %v1618, 16
        %v1699 = vrot.slane %v1697, 7
        %v1700 = vshll.u32 %v1618, 16
        %v1702 = vor.u32 %v1699, %v1700
        %v1704 = vshrl.u32 %v1619, 16
        %v1706 = vrot.slane %v1704, 7
        %v1707 = vshll.u32 %v1619, 16
        %v1709 = vor.u32 %v1706, %v1707
        %v1711 = vshrl.u32 %v1620, 16
        %v1713 = vrot.slane %v1711, 7
        %v1714 = vshll.u32 %v1620, 16
        %v1716 = vor.u32 %v1713, %v1714
        %v1718 = vshrl.u32 %v1621, 16
        %v1720 = vrot.slane %v1718, 7
        %v1721 = vshll.u32 %v1621, 16
        %v1723 = vor.u32 %v1720, %v1721
        %v1725 = vshrl.u32 %v1622, 16
        %v1727 = vrot.slane %v1725, 7
        %v1728 = vshll.u32 %v1622, 16
        %v1730 = vor.u32 %v1727, %v1728
        %v1732 = vshrl.u32 %v1623, 16
        %v1734 = vrot.slane %v1732, 7
        %v1735 = vshll.u32 %v1623, 16
        %v1737 = vor.u32 %v1734, %v1735
        %v1739 = vshrl.u32 %v1624, 16
        %v1741 = vrot.slane %v1739, 7
        %v1742 = vshll.u32 %v1624, 16
        %v1744 = vor.u32 %v1741, %v1742
        %v1746 = vshrl.u32 %v1625, 16
        %v1748 = vrot.slane %v1746, 7
        %v1749 = vshll.u32 %v1625, 16
        %v1751 = vor.u32 %v1748, %v1749
        %v1753 = vshrl.u32 %v1626, 16
        %v1755 = vrot.slane %v1753, 7
        %v1756 = vshll.u32 %v1626, 16
        %v1758 = vor.u32 %v1755, %v1756
        %v1760 = vshrl.u32 %v1627, 16
        %v1762 = vrot.slane %v1760, 7
        %v1763 = vshll.u32 %v1627, 16
        %v1765 = vor.u32 %v1762, %v1763
        %v1767 = vshrl.u32 %v1628, 16
        %v1769 = vrot.slane %v1767, 7
        %v1770 = vshll.u32 %v1628, 16
        %v1772 = vor.u32 %v1769, %v1770
        %v1774 = vshrl.u32 %v1629, 16
        %v1776 = vrot.slane %v1774, 7
        %v1777 = vshll.u32 %v1629, 16
        %v1779 = vor.u32 %v1776, %v1777
        %v1781 = vshrl.u32 %v1630, 16
        %v1783 = vrot.slane %v1781, 7
        %v1784 = vshll.u32 %v1630, 16
        %v1786 = vor.u32 %v1783, %v1784
        %v1788 = vshrl.u32 %v1631, 16
        %v1790 = vrot.slane %v1788, 7
        %v1791 = vshll.u32 %v1631, 16
        %v1793 = vor.u32 %v1790, %v1791
        %v1795 = vshrl.u32 %v1632, 16
        %v1797 = vrot.slane %v1795, 7
        %v1798 = vshll.u32 %v1632, 16
        %v1800 = vor.u32 %v1797, %v1798
        %v1802 = vshrl.u32 %v1633, 16
        %v1804 = vrot.slane %v1802, 7
        %v1805 = vshll.u32 %v1633, 16
        %v1807 = vor.u32 %v1804, %v1805
        %v1809 = vshrl.u32 %v1634, 16
        %v1811 = vrot.slane %v1809, 7
        %v1812 = vshll.u32 %v1634, 16
        %v1814 = vor.u32 %v1811, %v1812
        %v1816 = vshrl.u32 %v1635, 16
        %v1818 = vrot.slane %v1816, 7
        %v1819 = vshll.u32 %v1635, 16
        %v1821 = vor.u32 %v1818, %v1819
        %v1823 = vshrl.u32 %v1636, 16
        %v1825 = vrot.slane %v1823, 7
        %v1826 = vshll.u32 %v1636, 16
        %v1828 = vor.u32 %v1825, %v1826
        %v1830 = vshrl.u32 %v1637, 16
        %v1832 = vrot.slane %v1830, 7
        %v1833 = vshll.u32 %v1637, 16
        %v1835 = vor.u32 %v1832, %v1833
        %v1837 = vshrl.u32 %v1638, 16
        %v1839 = vrot.slane %v1837, 7
        %v1840 = vshll.u32 %v1638, 16
        %v1842 = vor.u32 %v1839, %v1840
        %v1844 = vshrl.u32 %v1639, 16
        %v1846 = vrot.slane %v1844, 7
        %v1847 = vshll.u32 %v1639, 16
        %v1849 = vor.u32 %v1846, %v1847
        %v1851 = vshrl.u32 %v1640, 16
        %v1853 = vrot.slane %v1851, 7
        %v1854 = vshll.u32 %v1640, 16
        %v1856 = vor.u32 %v1853, %v1854
        %v1858 = vshrl.u32 %v1641, 16
        %v1860 = vrot.slane %v1858, 7
        %v1861 = vshll.u32 %v1641, 16
        %v1863 = vor.u32 %v1860, %v1861
        %v1865 = vshrl.u32 %v1642, 16
        %v1867 = vrot.slane %v1865, 7
        %v1868 = vshll.u32 %v1642, 16
        %v1870 = vor.u32 %v1867, %v1868
        %v1872 = vshrl.u32 %v1643, 16
        %v1874 = vrot.slane %v1872, 7
        %v1875 = vshll.u32 %v1643, 16
        %v1877 = vor.u32 %v1874, %v1875
        %v1879 = vshrl.u32 %v1644, 16
        %v1881 = vrot.slane %v1879, 7
        %v1882 = vshll.u32 %v1644, 16
        %v1884 = vor.u32 %v1881, %v1882
        %v1886 = vshrl.u32 %v1645, 16
        %v1888 = vrot.slane %v1886, 7
        %v1889 = vshll.u32 %v1645, 16
        %v1891 = vor.u32 %v1888, %v1889
        %v1893 = vshrl.u32 %v1646, 16
        %v1895 = vrot.slane %v1893, 7
        %v1896 = vshll.u32 %v1646, 16
        %v1898 = vor.u32 %v1895, %v1896
        %vm1935 = vcmask 1040384
        %vm1936 = vsmask.f32 256
        %vm1937 = vmand %vm1935, %vm1936
        %v1938 = vsel %vm1937, 0, %v1653
        %v1939 = vsel %vm1937, 0, %v1660
        %v1940 = vsel %vm1937, 0, %v1667
        %v1941 = vsel %vm1937, 0, %v1674
        %v1942 = vsel %vm1937, 0, %v1681
        %v1943 = vsel %vm1937, 0, %v1688
        %v1944 = vsel %vm1937, 0, %v1695
        %v1945 = vsel %vm1937, 0, %v1702
        %v1946 = vsel %vm1937, 0, %v1709
        %v1947 = vsel %vm1937, 0, %v1716
        %v1948 = vsel %vm1937, 0, %v1723
        %v1949 = vsel %vm1937, 0, %v1730
        %v1950 = vsel %vm1937, 0, %v1737
        %v1951 = vsel %vm1937, 0, %v1744
        %v1952 = vsel %vm1937, 0, %v1751
        %v1953 = vsel %vm1937, 0, %v1758
        %v1954 = vsel %vm1937, 0, %v1765
        %v1955 = vsel %vm1937, 0, %v1772
        %v1956 = vsel %vm1937, 0, %v1779
        %v1957 = vsel %vm1937, 0, %v1786
        %v1958 = vsel %vm1937, 0, %v1793
        %v1959 = vsel %vm1937, 0, %v1800
        %v1960 = vsel %vm1937, 0, %v1807
        %v1961 = vsel %vm1937, 0, %v1814
        %v1962 = vsel %vm1937, 0, %v1821
        %v1963 = vsel %vm1937, 0, %v1828
        %v1964 = vsel %vm1937, 0, %v1835
        %v1965 = vsel %vm1937, 0, %v1842
        %v1966 = vsel %vm1937, 0, %v1849
        %v1967 = vsel %vm1937, 0, %v1856
        %v1968 = vsel %vm1937, 0, %v1863
        %v1969 = vsel %vm1937, 0, %v1870
        %v1970 = vsel %vm1937, 0, %v1877
        %v1971 = vsel %vm1937, 0, %v1884
        %v1972 = vsel %vm1937, 0, %v1891
        %v1973 = vsel %vm1937, 0, %v1898
        %v1992 = vunpack.c.l.b16 %v1451
        %v1993 = vunpack.c.h.b16 %v1451
        %v1994 = vunpack.c.l.b16 %v1454
        %v1995 = vunpack.c.h.b16 %v1454
        %v1996 = vunpack.c.l.b16 %v1457
        %v1997 = vunpack.c.h.b16 %v1457
        %v1998 = vunpack.c.l.b16 %v1460
        %v1999 = vunpack.c.h.b16 %v1460
        %v2000 = vunpack.c.l.b16 %v1463
        %v2001 = vunpack.c.h.b16 %v1463
        %v2002 = vunpack.c.l.b16 %v1466
        %v2003 = vunpack.c.h.b16 %v1466
        %v2004 = vunpack.c.l.b16 %v1469
        %v2005 = vunpack.c.h.b16 %v1469
        %v2006 = vunpack.c.l.b16 %v1472
        %v2007 = vunpack.c.h.b16 %v1472
        %v2008 = vunpack.c.l.b16 %v1475
        %v2009 = vunpack.c.h.b16 %v1475
        %v2010 = vunpack.c.l.b16 %v1478
        %v2011 = vunpack.c.h.b16 %v1478
        %v2012 = vunpack.c.l.b16 %v1481
        %v2013 = vunpack.c.h.b16 %v1481
        %v2014 = vunpack.c.l.b16 %v1484
        %v2015 = vunpack.c.h.b16 %v1484
        %v2016 = vunpack.c.l.b16 %v1487
        %v2017 = vunpack.c.h.b16 %v1487
        %v2018 = vunpack.c.l.b16 %v1490
        %v2019 = vunpack.c.h.b16 %v1490
        %v2020 = vunpack.c.l.b16 %v1493
        %v2021 = vunpack.c.h.b16 %v1493
        %v2022 = vunpack.c.l.b16 %v1496
        %v2023 = vunpack.c.h.b16 %v1496
        %v2024 = vunpack.c.l.b16 %v1499
        %v2025 = vunpack.c.h.b16 %v1499
        %v2026 = vunpack.c.l.b16 %v1502
        %v2027 = vunpack.c.h.b16 %v1502
        %v2028 = vpack.c.b16 %v1992, %v1992
        %v2029 = vpack.c.b16 %v1993, %v1993
        %v2030 = vpack.c.b16 %v1994, %v1994
        %v2031 = vpack.c.b16 %v1995, %v1995
        %v2032 = vpack.c.b16 %v1996, %v1996
        %v2033 = vpack.c.b16 %v1997, %v1997
        %v2034 = vpack.c.b16 %v1998, %v1998
        %v2035 = vpack.c.b16 %v1999, %v1999
        %v2036 = vpack.c.b16 %v2000, %v2000
        %v2037 = vpack.c.b16 %v2001, %v2001
        %v2038 = vpack.c.b16 %v2002, %v2002
        %v2039 = vpack.c.b16 %v2003, %v2003
        %v2040 = vpack.c.b16 %v2004, %v2004
        %v2041 = vpack.c.b16 %v2005, %v2005
        %v2042 = vpack.c.b16 %v2006, %v2006
        %v2043 = vpack.c.b16 %v2007, %v2007
        %v2044 = vpack.c.b16 %v2008, %v2008
        %v2045 = vpack.c.b16 %v2009, %v2009
        %v2046 = vpack.c.b16 %v2010, %v2010
        %v2047 = vpack.c.b16 %v2011, %v2011
        %v2048 = vpack.c.b16 %v2012, %v2012
        %v2049 = vpack.c.b16 %v2013, %v2013
        %v2050 = vpack.c.b16 %v2014, %v2014
        %v2051 = vpack.c.b16 %v2015, %v2015
        %v2052 = vpack.c.b16 %v2016, %v2016
        %v2053 = vpack.c.b16 %v2017, %v2017
        %v2054 = vpack.c.b16 %v2018, %v2018
        %v2055 = vpack.c.b16 %v2019, %v2019
        %v2056 = vpack.c.b16 %v2020, %v2020
        %v2057 = vpack.c.b16 %v2021, %v2021
        %v2058 = vpack.c.b16 %v2022, %v2022
        %v2059 = vpack.c.b16 %v2023, %v2023
        %v2060 = vpack.c.b16 %v2024, %v2024
        %v2061 = vpack.c.b16 %v2025, %v2025
        %v2062 = vpack.c.b16 %v2026, %v2026
        %v2063 = vpack.c.b16 %v2027, %v2027
        %vm2064 = vsmask.f32 7424
        %v2065 = vrot.slane %v1651, 1
        %v2066 = vor.u32 %v1648, %v2065
        %v2068 = vshll.u32 %v2028, 16
        %v2070 = vrot.slane %v2068, 1
        %v2071 = vsel %vm2064, %v2066, %v2070
        %v2072 = vrot.slane %v1658, 1
        %v2073 = vor.u32 %v1655, %v2072
        %v2075 = vshll.u32 %v2029, 16
        %v2077 = vrot.slane %v2075, 1
        %v2078 = vsel %vm2064, %v2073, %v2077
        %v2079 = vrot.slane %v1665, 1
        %v2080 = vor.u32 %v1662, %v2079
        %v2082 = vshll.u32 %v2030, 16
        %v2084 = vrot.slane %v2082, 1
        %v2085 = vsel %vm2064, %v2080, %v2084
        %v2086 = vrot.slane %v1672, 1
        %v2087 = vor.u32 %v1669, %v2086
        %v2089 = vshll.u32 %v2031, 16
        %v2091 = vrot.slane %v2089, 1
        %v2092 = vsel %vm2064, %v2087, %v2091
        %v2093 = vrot.slane %v1679, 1
        %v2094 = vor.u32 %v1676, %v2093
        %v2096 = vshll.u32 %v2032, 16
        %v2098 = vrot.slane %v2096, 1
        %v2099 = vsel %vm2064, %v2094, %v2098
        %v2100 = vrot.slane %v1686, 1
        %v2101 = vor.u32 %v1683, %v2100
        %v2103 = vshll.u32 %v2033, 16
        %v2105 = vrot.slane %v2103, 1
        %v2106 = vsel %vm2064, %v2101, %v2105
        %v2107 = vrot.slane %v1693, 1
        %v2108 = vor.u32 %v1690, %v2107
        %v2110 = vshll.u32 %v2034, 16
        %v2112 = vrot.slane %v2110, 1
        %v2113 = vsel %vm2064, %v2108, %v2112
        %v2114 = vrot.slane %v1700, 1
        %v2115 = vor.u32 %v1697, %v2114
        %v2117 = vshll.u32 %v2035, 16
        %v2119 = vrot.slane %v2117, 1
        %v2120 = vsel %vm2064, %v2115, %v2119
        %v2121 = vrot.slane %v1707, 1
        %v2122 = vor.u32 %v1704, %v2121
        %v2124 = vshll.u32 %v2036, 16
        %v2126 = vrot.slane %v2124, 1
        %v2127 = vsel %vm2064, %v2122, %v2126
        %v2128 = vrot.slane %v1714, 1
        %v2129 = vor.u32 %v1711, %v2128
        %v2131 = vshll.u32 %v2037, 16
        %v2133 = vrot.slane %v2131, 1
        %v2134 = vsel %vm2064, %v2129, %v2133
        %v2135 = vrot.slane %v1721, 1
        %v2136 = vor.u32 %v1718, %v2135
        %v2138 = vshll.u32 %v2038, 16
        %v2140 = vrot.slane %v2138, 1
        %v2141 = vsel %vm2064, %v2136, %v2140
        %v2142 = vrot.slane %v1728, 1
        %v2143 = vor.u32 %v1725, %v2142
        %v2145 = vshll.u32 %v2039, 16
        %v2147 = vrot.slane %v2145, 1
        %v2148 = vsel %vm2064, %v2143, %v2147
        %v2149 = vrot.slane %v1735, 1
        %v2150 = vor.u32 %v1732, %v2149
        %v2152 = vshll.u32 %v2040, 16
        %v2154 = vrot.slane %v2152, 1
        %v2155 = vsel %vm2064, %v2150, %v2154
        %v2156 = vrot.slane %v1742, 1
        %v2157 = vor.u32 %v1739, %v2156
        %v2159 = vshll.u32 %v2041, 16
        %v2161 = vrot.slane %v2159, 1
        %v2162 = vsel %vm2064, %v2157, %v2161
        %v2163 = vrot.slane %v1749, 1
        %v2164 = vor.u32 %v1746, %v2163
        %v2166 = vshll.u32 %v2042, 16
        %v2168 = vrot.slane %v2166, 1
        %v2169 = vsel %vm2064, %v2164, %v2168
        %v2170 = vrot.slane %v1756, 1
        %v2171 = vor.u32 %v1753, %v2170
        %v2173 = vshll.u32 %v2043, 16
        %v2175 = vrot.slane %v2173, 1
        %v2176 = vsel %vm2064, %v2171, %v2175
        %v2177 = vrot.slane %v1763, 1
        %v2178 = vor.u32 %v1760, %v2177
        %v2180 = vshll.u32 %v2044, 16
        %v2182 = vrot.slane %v2180, 1
        %v2183 = vsel %vm2064, %v2178, %v2182
        %v2184 = vrot.slane %v1770, 1
        %v2185 = vor.u32 %v1767, %v2184
        %v2187 = vshll.u32 %v2045, 16
        %v2189 = vrot.slane %v2187, 1
        %v2190 = vsel %vm2064, %v2185, %v2189
        %v2191 = vrot.slane %v1777, 1
        %v2192 = vor.u32 %v1774, %v2191
        %v2194 = vshll.u32 %v2046, 16
        %v2196 = vrot.slane %v2194, 1
        %v2197 = vsel %vm2064, %v2192, %v2196
        %v2198 = vrot.slane %v1784, 1
        %v2199 = vor.u32 %v1781, %v2198
        %v2201 = vshll.u32 %v2047, 16
        %v2203 = vrot.slane %v2201, 1
        %v2204 = vsel %vm2064, %v2199, %v2203
        %v2205 = vrot.slane %v1791, 1
        %v2206 = vor.u32 %v1788, %v2205
        %v2208 = vshll.u32 %v2048, 16
        %v2210 = vrot.slane %v2208, 1
        %v2211 = vsel %vm2064, %v2206, %v2210
        %v2212 = vrot.slane %v1798, 1
        %v2213 = vor.u32 %v1795, %v2212
        %v2215 = vshll.u32 %v2049, 16
        %v2217 = vrot.slane %v2215, 1
        %v2218 = vsel %vm2064, %v2213, %v2217
        %v2219 = vrot.slane %v1805, 1
        %v2220 = vor.u32 %v1802, %v2219
        %v2222 = vshll.u32 %v2050, 16
        %v2224 = vrot.slane %v2222, 1
        %v2225 = vsel %vm2064, %v2220, %v2224
        %v2226 = vrot.slane %v1812, 1
        %v2227 = vor.u32 %v1809, %v2226
        %v2229 = vshll.u32 %v2051, 16
        %v2231 = vrot.slane %v2229, 1
        %v2232 = vsel %vm2064, %v2227, %v2231
        %v2233 = vrot.slane %v1819, 1
        %v2234 = vor.u32 %v1816, %v2233
        %v2236 = vshll.u32 %v2052, 16
        %v2238 = vrot.slane %v2236, 1
        %v2239 = vsel %vm2064, %v2234, %v2238
        %v2240 = vrot.slane %v1826, 1
        %v2241 = vor.u32 %v1823, %v2240
        %v2243 = vshll.u32 %v2053, 16
        %v2245 = vrot.slane %v2243, 1
        %v2246 = vsel %vm2064, %v2241, %v2245
        %v2247 = vrot.slane %v1833, 1
        %v2248 = vor.u32 %v1830, %v2247
        %v2250 = vshll.u32 %v2054, 16
        %v2252 = vrot.slane %v2250, 1
        %v2253 = vsel %vm2064, %v2248, %v2252
        %v2254 = vrot.slane %v1840, 1
        %v2255 = vor.u32 %v1837, %v2254
        %v2257 = vshll.u32 %v2055, 16
        %v2259 = vrot.slane %v2257, 1
        %v2260 = vsel %vm2064, %v2255, %v2259
        %v2261 = vrot.slane %v1847, 1
        %v2262 = vor.u32 %v1844, %v2261
        %v2264 = vshll.u32 %v2056, 16
        %v2266 = vrot.slane %v2264, 1
        %v2267 = vsel %vm2064, %v2262, %v2266
        %v2268 = vrot.slane %v1854, 1
        %v2269 = vor.u32 %v1851, %v2268
        %v2271 = vshll.u32 %v2057, 16
        %v2273 = vrot.slane %v2271, 1
        %v2274 = vsel %vm2064, %v2269, %v2273
        %v2275 = vrot.slane %v1861, 1
        %v2276 = vor.u32 %v1858, %v2275
        %v2278 = vshll.u32 %v2058, 16
        %v2280 = vrot.slane %v2278, 1
        %v2281 = vsel %vm2064, %v2276, %v2280
        %v2282 = vrot.slane %v1868, 1
        %v2283 = vor.u32 %v1865, %v2282
        %v2285 = vshll.u32 %v2059, 16
        %v2287 = vrot.slane %v2285, 1
        %v2288 = vsel %vm2064, %v2283, %v2287
        %v2289 = vrot.slane %v1875, 1
        %v2290 = vor.u32 %v1872, %v2289
        %v2292 = vshll.u32 %v2060, 16
        %v2294 = vrot.slane %v2292, 1
        %v2295 = vsel %vm2064, %v2290, %v2294
        %v2296 = vrot.slane %v1882, 1
        %v2297 = vor.u32 %v1879, %v2296
        %v2299 = vshll.u32 %v2061, 16
        %v2301 = vrot.slane %v2299, 1
        %v2302 = vsel %vm2064, %v2297, %v2301
        %v2303 = vrot.slane %v1889, 1
        %v2304 = vor.u32 %v1886, %v2303
        %v2306 = vshll.u32 %v2062, 16
        %v2308 = vrot.slane %v2306, 1
        %v2309 = vsel %vm2064, %v2304, %v2308
        %v2310 = vrot.slane %v1896, 1
        %v2311 = vor.u32 %v1893, %v2310
        %v2313 = vshll.u32 %v2063, 16
        %v2315 = vrot.slane %v2313, 1
        %v2316 = vsel %vm2064, %v2311, %v2315
        %v2389 = vld [vmem:[%s3] sm:$0xf]
        %v2390 = vld [vmem:[%s3 + $0x4] sm:$0xf]
        %v2391 = vld [vmem:[%s3 + $0x8] sm:$0xf]
        %v2392 = vld [vmem:[%s3 + $0xc] sm:$0xf]
        %v2393 = vld [vmem:[%s3 + $0x10] sm:$0xf]
        %v2394 = vld [vmem:[%s3 + $0x14] sm:$0xf]
        %v2395 = vld [vmem:[%s3 + $0x18] sm:$0xf]
        %v2396 = vld [vmem:[%s3 + $0x1c] sm:$0xf]
        %v2397 = vld [vmem:[%s3 + $0x20] sm:$0xf]
        %v2398 = vld [vmem:[%s3 + $0x24] sm:$0xf]
        %v2399 = vld [vmem:[%s3 + $0x28] sm:$0xf]
        %v2400 = vld [vmem:[%s3 + $0x2c] sm:$0xf]
        %v2401 = vld [vmem:[%s3 + $0x30] sm:$0xf]
        %v2402 = vld [vmem:[%s3 + $0x34] sm:$0xf]
        %v2403 = vld [vmem:[%s3 + $0x38] sm:$0xf]
        %v2404 = vld [vmem:[%s3 + $0x3c] sm:$0xf]
        %v2405 = vld [vmem:[%s3 + $0x40] sm:$0xf]
        %v2406 = vld [vmem:[%s3 + $0x44] sm:$0xf]
        %v2407 = vld [vmem:[%s3 + $0x48] sm:$0xf]
        %v2408 = vld [vmem:[%s3 + $0x4c] sm:$0xf]
        %v2409 = vld [vmem:[%s3 + $0x50] sm:$0xf]
        %v2410 = vld [vmem:[%s3 + $0x54] sm:$0xf]
        %v2411 = vld [vmem:[%s3 + $0x58] sm:$0xf]
        %v2412 = vld [vmem:[%s3 + $0x5c] sm:$0xf]
        %v2413 = vld [vmem:[%s3 + $0x60] sm:$0xf]
        %v2414 = vld [vmem:[%s3 + $0x64] sm:$0xf]
        %v2415 = vld [vmem:[%s3 + $0x68] sm:$0xf]
        %v2416 = vld [vmem:[%s3 + $0x6c] sm:$0xf]
        %v2417 = vld [vmem:[%s3 + $0x70] sm:$0xf]
        %v2418 = vld [vmem:[%s3 + $0x74] sm:$0xf]
        %v2419 = vld [vmem:[%s3 + $0x78] sm:$0xf]
        %v2420 = vld [vmem:[%s3 + $0x7c] sm:$0xf]
        %v2421 = vld [vmem:[%s3 + $0x80] sm:$0xf]
        %v2422 = vld [vmem:[%s3 + $0x84] sm:$0xf]
        %v2423 = vld [vmem:[%s3 + $0x88] sm:$0xf]
        %v2424 = vld [vmem:[%s3 + $0x8c] sm:$0xf]
        %v2425 = vld [vmem:[%s3 + $0x90] sm:$0xf]
        %v2426 = vld [vmem:[%s3 + $0x94] sm:$0xf]
        %v2427 = vld [vmem:[%s3 + $0x98] sm:$0xf]
        %v2428 = vld [vmem:[%s3 + $0x9c] sm:$0xf]
        %v2429 = vld [vmem:[%s3 + $0xa0] sm:$0xf]
        %v2430 = vld [vmem:[%s3 + $0xa4] sm:$0xf]
        %v2431 = vld [vmem:[%s3 + $0xa8] sm:$0xf]
        %v2432 = vld [vmem:[%s3 + $0xac] sm:$0xf]
        %v2433 = vld [vmem:[%s3 + $0xb0] sm:$0xf]
        %v2434 = vld [vmem:[%s3 + $0xb4] sm:$0xf]
        %v2435 = vld [vmem:[%s3 + $0xb8] sm:$0xf]
        %v2436 = vld [vmem:[%s3 + $0xbc] sm:$0xf]
        %v2437 = vld [vmem:[%s3 + $0xc0] sm:$0xf]
        %v2438 = vld [vmem:[%s3 + $0xc4] sm:$0xf]
        %v2439 = vld [vmem:[%s3 + $0xc8] sm:$0xf]
        %v2440 = vld [vmem:[%s3 + $0xcc] sm:$0xf]
        %v2441 = vld [vmem:[%s3 + $0xd0] sm:$0xf]
        %v2442 = vld [vmem:[%s3 + $0xd4] sm:$0xf]
        %v2443 = vld [vmem:[%s3 + $0xd8] sm:$0xf]
        %v2444 = vld [vmem:[%s3 + $0xdc] sm:$0xf]
        %v2445 = vld [vmem:[%s3 + $0xe0] sm:$0xf]
        %v2446 = vld [vmem:[%s3 + $0xe4] sm:$0xf]
        %v2447 = vld [vmem:[%s3 + $0xe8] sm:$0xf]
        %v2448 = vld [vmem:[%s3 + $0xec] sm:$0xf]
        %v2449 = vld [vmem:[%s3 + $0xf0] sm:$0xf]
        %v2450 = vld [vmem:[%s3 + $0xf4] sm:$0xf]
        %v2451 = vld [vmem:[%s3 + $0xf8] sm:$0xf]
        %v2452 = vld [vmem:[%s3 + $0xfc] sm:$0xf]
        %v2453 = vld [vmem:[%s3 + $0x100] sm:$0xf]
        %v2454 = vld [vmem:[%s3 + $0x104] sm:$0xf]
        %v2455 = vld [vmem:[%s3 + $0x108] sm:$0xf]
        %v2456 = vld [vmem:[%s3 + $0x10c] sm:$0xf]
        %v2457 = vld [vmem:[%s3 + $0x110] sm:$0xf]
        %v2458 = vld [vmem:[%s3 + $0x114] sm:$0xf]
        %v2459 = vld [vmem:[%s3 + $0x118] sm:$0xf]
        %v2460 = vld [vmem:[%s3 + $0x11c] sm:$0xf]
        %v2461 = vld [vmem:[%s3 + $0x120] sm:$0xf]
        %v2462 = vld [vmem:[%s3 + $0x124] sm:$0xf]
        %v2463 = vld [vmem:[%s3 + $0x128] sm:$0xf]
        %v2464 = vld [vmem:[%s3 + $0x12c] sm:$0xf]
        %v2465 = vld [vmem:[%s3 + $0x130] sm:$0xf]
        %v2466 = vld [vmem:[%s3 + $0x134] sm:$0xf]
        %v2467 = vld [vmem:[%s3 + $0x138] sm:$0xf]
        %v2468 = vld [vmem:[%s3 + $0x13c] sm:$0xf]
        %v2469 = vld [vmem:[%s3 + $0x140] sm:$0xf]
        %v2470 = vld [vmem:[%s3 + $0x144] sm:$0xf]
        %v2471 = vld [vmem:[%s3 + $0x148] sm:$0xf]
        %v2472 = vld [vmem:[%s3 + $0x14c] sm:$0xf]
        %v2473 = vld [vmem:[%s3 + $0x150] sm:$0xf]
        %v2474 = vld [vmem:[%s3 + $0x154] sm:$0xf]
        %v2475 = vld [vmem:[%s3 + $0x158] sm:$0xf]
        %v2476 = vld [vmem:[%s3 + $0x15c] sm:$0xf]
        %v2477 = vld [vmem:[%s3 + $0x160] sm:$0xf]
        %v2478 = vld [vmem:[%s3 + $0x164] sm:$0xf]
        %v2479 = vld [vmem:[%s3 + $0x168] sm:$0xf]
        %v2480 = vld [vmem:[%s3 + $0x16c] sm:$0xf]
        %v2481 = vld [vmem:[%s3 + $0x170] sm:$0xf]
        %v2482 = vld [vmem:[%s3 + $0x174] sm:$0xf]
        %v2483 = vld [vmem:[%s3 + $0x178] sm:$0xf]
        %v2484 = vld [vmem:[%s3 + $0x17c] sm:$0xf]
        %s2485 = scalar_lea.vmem %s3, 384
        %v2486 = vld [vmem:[%s2485] sm:$0xf]
        %v2487 = vld [vmem:[%s2485 + $0x4] sm:$0xf]
        %v2488 = vld [vmem:[%s2485 + $0x8] sm:$0xf]
        %v2489 = vld [vmem:[%s2485 + $0xc] sm:$0xf]
        %v2490 = vld [vmem:[%s2485 + $0x10] sm:$0xf]
        %v2491 = vld [vmem:[%s2485 + $0x14] sm:$0xf]
        %v2492 = vld [vmem:[%s2485 + $0x18] sm:$0xf]
        %v2493 = vld [vmem:[%s2485 + $0x1c] sm:$0xf]
        %v2494 = vld [vmem:[%s2485 + $0x20] sm:$0xf]
        %v2495 = vld [vmem:[%s2485 + $0x24] sm:$0xf]
        %v2496 = vld [vmem:[%s2485 + $0x28] sm:$0xf]
        %v2497 = vld [vmem:[%s2485 + $0x2c] sm:$0xf]
        %v2498 = vld [vmem:[%s2485 + $0x30] sm:$0xf]
        %v2499 = vld [vmem:[%s2485 + $0x34] sm:$0xf]
        %v2500 = vld [vmem:[%s2485 + $0x38] sm:$0xf]
        %v2501 = vld [vmem:[%s2485 + $0x3c] sm:$0xf]
        %v2502 = vld [vmem:[%s2485 + $0x40] sm:$0xf]
        %v2503 = vld [vmem:[%s2485 + $0x44] sm:$0xf]
        %v2504 = vld [vmem:[%s2485 + $0x48] sm:$0xf]
        %v2505 = vld [vmem:[%s2485 + $0x4c] sm:$0xf]
        %v2506 = vld [vmem:[%s2485 + $0x50] sm:$0xf]
        %v2507 = vld [vmem:[%s2485 + $0x54] sm:$0xf]
        %v2508 = vld [vmem:[%s2485 + $0x58] sm:$0xf]
        %v2509 = vld [vmem:[%s2485 + $0x5c] sm:$0xf]
        %v2510 = vld [vmem:[%s2485 + $0x60] sm:$0xf]
        %v2511 = vld [vmem:[%s2485 + $0x64] sm:$0xf]
        %v2512 = vld [vmem:[%s2485 + $0x68] sm:$0xf]
        %v2513 = vld [vmem:[%s2485 + $0x6c] sm:$0xf]
        %v2514 = vld [vmem:[%s2485 + $0x70] sm:$0xf]
        %v2515 = vld [vmem:[%s2485 + $0x74] sm:$0xf]
        %v2516 = vld [vmem:[%s2485 + $0x78] sm:$0xf]
        %v2517 = vld [vmem:[%s2485 + $0x7c] sm:$0xf]
        %v2518 = vld [vmem:[%s2485 + $0x80] sm:$0xf]
        %v2519 = vld [vmem:[%s2485 + $0x84] sm:$0xf]
        %v2520 = vld [vmem:[%s2485 + $0x88] sm:$0xf]
        %v2521 = vld [vmem:[%s2485 + $0x8c] sm:$0xf]
        %v2522 = vld [vmem:[%s2485 + $0x90] sm:$0xf]
        %v2523 = vld [vmem:[%s2485 + $0x94] sm:$0xf]
        %v2524 = vld [vmem:[%s2485 + $0x98] sm:$0xf]
        %v2525 = vld [vmem:[%s2485 + $0x9c] sm:$0xf]
        %v2526 = vld [vmem:[%s2485 + $0xa0] sm:$0xf]
        %v2527 = vld [vmem:[%s2485 + $0xa4] sm:$0xf]
        %v2528 = vld [vmem:[%s2485 + $0xa8] sm:$0xf]
        %v2529 = vld [vmem:[%s2485 + $0xac] sm:$0xf]
        %v2530 = vld [vmem:[%s2485 + $0xb0] sm:$0xf]
        %v2531 = vld [vmem:[%s2485 + $0xb4] sm:$0xf]
        %v2532 = vld [vmem:[%s2485 + $0xb8] sm:$0xf]
        %v2533 = vld [vmem:[%s2485 + $0xbc] sm:$0xf]
        %v2534 = vld [vmem:[%s2485 + $0xc0] sm:$0xf]
        %v2535 = vld [vmem:[%s2485 + $0xc4] sm:$0xf]
        %v2536 = vld [vmem:[%s2485 + $0xc8] sm:$0xf]
        %v2537 = vld [vmem:[%s2485 + $0xcc] sm:$0xf]
        %v2538 = vld [vmem:[%s2485 + $0xd0] sm:$0xf]
        %v2539 = vld [vmem:[%s2485 + $0xd4] sm:$0xf]
        %v2540 = vld [vmem:[%s2485 + $0xd8] sm:$0xf]
        %v2541 = vld [vmem:[%s2485 + $0xdc] sm:$0xf]
        %v2542 = vld [vmem:[%s2485 + $0xe0] sm:$0xf]
        %v2543 = vld [vmem:[%s2485 + $0xe4] sm:$0xf]
        %v2544 = vld [vmem:[%s2485 + $0xe8] sm:$0xf]
        %v2545 = vld [vmem:[%s2485 + $0xec] sm:$0xf]
        %v2546 = vld [vmem:[%s2485 + $0xf0] sm:$0xf]
        %v2547 = vld [vmem:[%s2485 + $0xf4] sm:$0xf]
        %v2548 = vld [vmem:[%s2485 + $0xf8] sm:$0xf]
        %v2549 = vld [vmem:[%s2485 + $0xfc] sm:$0xf]
        %v2550 = vld [vmem:[%s2485 + $0x100] sm:$0xf]
        %v2551 = vld [vmem:[%s2485 + $0x104] sm:$0xf]
        %v2552 = vld [vmem:[%s2485 + $0x108] sm:$0xf]
        %v2553 = vld [vmem:[%s2485 + $0x10c] sm:$0xf]
        %v2554 = vld [vmem:[%s2485 + $0x110] sm:$0xf]
        %v2555 = vld [vmem:[%s2485 + $0x114] sm:$0xf]
        %v2556 = vld [vmem:[%s2485 + $0x118] sm:$0xf]
        %v2557 = vld [vmem:[%s2485 + $0x11c] sm:$0xf]
        %v2558 = vld [vmem:[%s2485 + $0x120] sm:$0xf]
        %v2559 = vld [vmem:[%s2485 + $0x124] sm:$0xf]
        %v2560 = vld [vmem:[%s2485 + $0x128] sm:$0xf]
        %v2561 = vld [vmem:[%s2485 + $0x12c] sm:$0xf]
        %v2562 = vld [vmem:[%s2485 + $0x130] sm:$0xf]
        %v2563 = vld [vmem:[%s2485 + $0x134] sm:$0xf]
        %v2564 = vld [vmem:[%s2485 + $0x138] sm:$0xf]
        %v2565 = vld [vmem:[%s2485 + $0x13c] sm:$0xf]
        %v2566 = vld [vmem:[%s2485 + $0x140] sm:$0xf]
        %v2567 = vld [vmem:[%s2485 + $0x144] sm:$0xf]
        %v2568 = vld [vmem:[%s2485 + $0x148] sm:$0xf]
        %v2569 = vld [vmem:[%s2485 + $0x14c] sm:$0xf]
        %v2570 = vld [vmem:[%s2485 + $0x150] sm:$0xf]
        %v2571 = vld [vmem:[%s2485 + $0x154] sm:$0xf]
        %v2572 = vld [vmem:[%s2485 + $0x158] sm:$0xf]
        %v2573 = vld [vmem:[%s2485 + $0x15c] sm:$0xf]
        %v2574 = vld [vmem:[%s2485 + $0x160] sm:$0xf]
        %v2575 = vld [vmem:[%s2485 + $0x164] sm:$0xf]
        %v2576 = vld [vmem:[%s2485 + $0x168] sm:$0xf]
        %v2577 = vld [vmem:[%s2485 + $0x16c] sm:$0xf]
        %v2578 = vld [vmem:[%s2485 + $0x170] sm:$0xf]
        %v2579 = vld [vmem:[%s2485 + $0x174] sm:$0xf]
        %v2580 = vld [vmem:[%s2485 + $0x178] sm:$0xf]
        %v2581 = vld [vmem:[%s2485 + $0x17c] sm:$0xf]
        %v2678 = vunpack.c.l.b16 %v2486
        %v2679 = vunpack.c.l.b16 %v2487
        %v2680 = vunpack.c.l.b16 %v2488
        %v2681 = vunpack.c.l.b16 %v2489
        %v2682 = vunpack.c.l.b16 %v2490
        %v2683 = vunpack.c.l.b16 %v2491
        %v2684 = vunpack.c.l.b16 %v2492
        %v2685 = vunpack.c.l.b16 %v2493
        %v2686 = vunpack.c.l.b16 %v2494
        %v2687 = vunpack.c.l.b16 %v2495
        %v2688 = vunpack.c.l.b16 %v2496
        %v2689 = vunpack.c.l.b16 %v2497
        %v2690 = vunpack.c.l.b16 %v2498
        %v2691 = vunpack.c.l.b16 %v2499
        %v2692 = vunpack.c.l.b16 %v2500
        %v2693 = vunpack.c.l.b16 %v2501
        %v2694 = vunpack.c.l.b16 %v2502
        %v2695 = vunpack.c.l.b16 %v2503
        %v2696 = vunpack.c.l.b16 %v2504
        %v2697 = vunpack.c.l.b16 %v2505
        %v2698 = vunpack.c.l.b16 %v2506
        %v2699 = vunpack.c.l.b16 %v2507
        %v2700 = vunpack.c.l.b16 %v2508
        %v2701 = vunpack.c.l.b16 %v2509
        %v2702 = vunpack.c.l.b16 %v2510
        %v2703 = vunpack.c.l.b16 %v2511
        %v2704 = vunpack.c.l.b16 %v2512
        %v2705 = vunpack.c.l.b16 %v2513
        %v2706 = vunpack.c.l.b16 %v2514
        %v2707 = vunpack.c.l.b16 %v2515
        %v2708 = vunpack.c.l.b16 %v2516
        %v2709 = vunpack.c.l.b16 %v2517
        %v2710 = vunpack.c.l.b16 %v2518
        %v2711 = vunpack.c.l.b16 %v2519
        %v2712 = vunpack.c.l.b16 %v2520
        %v2713 = vunpack.c.l.b16 %v2521
        %v2714 = vunpack.c.l.b16 %v2522
        %v2715 = vunpack.c.l.b16 %v2523
        %v2716 = vunpack.c.l.b16 %v2524
        %v2717 = vunpack.c.l.b16 %v2525
        %v2718 = vunpack.c.l.b16 %v2526
        %v2719 = vunpack.c.l.b16 %v2527
        %v2720 = vunpack.c.l.b16 %v2528
        %v2721 = vunpack.c.l.b16 %v2529
        %v2722 = vunpack.c.l.b16 %v2530
        %v2723 = vunpack.c.l.b16 %v2531
        %v2724 = vunpack.c.l.b16 %v2532
        %v2725 = vunpack.c.l.b16 %v2533
        %v2726 = vunpack.c.l.b16 %v2534
        %v2727 = vunpack.c.l.b16 %v2535
        %v2728 = vunpack.c.l.b16 %v2536
        %v2729 = vunpack.c.l.b16 %v2537
        %v2730 = vunpack.c.l.b16 %v2538
        %v2731 = vunpack.c.l.b16 %v2539
        %v2732 = vunpack.c.l.b16 %v2540
        %v2733 = vunpack.c.l.b16 %v2541
        %v2734 = vunpack.c.l.b16 %v2542
        %v2735 = vunpack.c.l.b16 %v2543
        %v2736 = vunpack.c.l.b16 %v2544
        %v2737 = vunpack.c.l.b16 %v2545
        %v2738 = vunpack.c.l.b16 %v2546
        %v2739 = vunpack.c.l.b16 %v2547
        %v2740 = vunpack.c.l.b16 %v2548
        %v2741 = vunpack.c.l.b16 %v2549
        %v2742 = vunpack.c.l.b16 %v2550
        %v2743 = vunpack.c.l.b16 %v2551
        %v2744 = vunpack.c.l.b16 %v2552
        %v2745 = vunpack.c.l.b16 %v2553
        %v2746 = vunpack.c.l.b16 %v2554
        %v2747 = vunpack.c.l.b16 %v2555
        %v2748 = vunpack.c.l.b16 %v2556
        %v2749 = vunpack.c.l.b16 %v2557
        %v2750 = vunpack.c.l.b16 %v2558
        %v2751 = vunpack.c.l.b16 %v2559
        %v2752 = vunpack.c.l.b16 %v2560
        %v2753 = vunpack.c.l.b16 %v2561
        %v2754 = vunpack.c.l.b16 %v2562
        %v2755 = vunpack.c.l.b16 %v2563
        %v2756 = vunpack.c.l.b16 %v2564
        %v2757 = vunpack.c.l.b16 %v2565
        %v2758 = vunpack.c.l.b16 %v2566
        %v2759 = vunpack.c.l.b16 %v2567
        %v2760 = vunpack.c.l.b16 %v2568
        %v2761 = vunpack.c.l.b16 %v2569
        %v2762 = vunpack.c.l.b16 %v2570
        %v2763 = vunpack.c.l.b16 %v2571
        %v2764 = vunpack.c.l.b16 %v2572
        %v2765 = vunpack.c.l.b16 %v2573
        %v2766 = vunpack.c.l.b16 %v2574
        %v2767 = vunpack.c.l.b16 %v2575
        %v2768 = vunpack.c.l.b16 %v2576
        %v2769 = vunpack.c.l.b16 %v2577
        %v2770 = vunpack.c.l.b16 %v2578
        %v2771 = vunpack.c.l.b16 %v2579
        %v2772 = vunpack.c.l.b16 %v2580
        %v2773 = vunpack.c.l.b16 %v2581
        %v2774 = vpack.c.b16 %v2679, %v2678
        %v2775 = vpack.c.b16 %v2681, %v2680
        %v2776 = vpack.c.b16 %v2683, %v2682
        %v2777 = vpack.c.b16 %v2685, %v2684
        %v2778 = vpack.c.b16 %v2687, %v2686
        %v2779 = vpack.c.b16 %v2689, %v2688
        %v2780 = vpack.c.b16 %v2691, %v2690
        %v2781 = vpack.c.b16 %v2693, %v2692
        %v2782 = vpack.c.b16 %v2695, %v2694
        %v2783 = vpack.c.b16 %v2697, %v2696
        %v2784 = vpack.c.b16 %v2699, %v2698
        %v2785 = vpack.c.b16 %v2701, %v2700
        %v2786 = vpack.c.b16 %v2703, %v2702
        %v2787 = vpack.c.b16 %v2705, %v2704
        %v2788 = vpack.c.b16 %v2707, %v2706
        %v2789 = vpack.c.b16 %v2709, %v2708
        %v2790 = vpack.c.b16 %v2711, %v2710
        %v2791 = vpack.c.b16 %v2713, %v2712
        %v2792 = vpack.c.b16 %v2715, %v2714
        %v2793 = vpack.c.b16 %v2717, %v2716
        %v2794 = vpack.c.b16 %v2719, %v2718
        %v2795 = vpack.c.b16 %v2721, %v2720
        %v2796 = vpack.c.b16 %v2723, %v2722
        %v2797 = vpack.c.b16 %v2725, %v2724
        %v2798 = vpack.c.b16 %v2727, %v2726
        %v2799 = vpack.c.b16 %v2729, %v2728
        %v2800 = vpack.c.b16 %v2731, %v2730
        %v2801 = vpack.c.b16 %v2733, %v2732
        %v2802 = vpack.c.b16 %v2735, %v2734
        %v2803 = vpack.c.b16 %v2737, %v2736
        %v2804 = vpack.c.b16 %v2739, %v2738
        %v2805 = vpack.c.b16 %v2741, %v2740
        %v2806 = vpack.c.b16 %v2743, %v2742
        %v2807 = vpack.c.b16 %v2745, %v2744
        %v2808 = vpack.c.b16 %v2747, %v2746
        %v2809 = vpack.c.b16 %v2749, %v2748
        %v2810 = vpack.c.b16 %v2751, %v2750
        %v2811 = vpack.c.b16 %v2753, %v2752
        %v2812 = vpack.c.b16 %v2755, %v2754
        %v2813 = vpack.c.b16 %v2757, %v2756
        %v2814 = vpack.c.b16 %v2759, %v2758
        %v2815 = vpack.c.b16 %v2761, %v2760
        %v2816 = vpack.c.b16 %v2763, %v2762
        %v2817 = vpack.c.b16 %v2765, %v2764
        %v2818 = vpack.c.b16 %v2767, %v2766
        %v2819 = vpack.c.b16 %v2769, %v2768
        %v2820 = vpack.c.b16 %v2771, %v2770
        %v2821 = vpack.c.b16 %v2773, %v2772
        %2870 = vmatpush.bf16.msra.mxu0 %v2781
        %2871 = vmatpush.bf16.msra.mxu0 %v2780
        %2872 = vmatpush.bf16.msra.mxu0 %v2779
        %2873 = vmatpush.bf16.msra.mxu0 %v2778
        %2874 = vmatpush.bf16.msra.mxu0 %v2777
        %2875 = vmatpush.bf16.msra.mxu0 %v2776
        %2876 = vmatpush.bf16.msra.mxu0 %v2775
        %2877 = vmatpush.bf16.msra.mxu0 %v2774
        %2878 = vmatmul.bf16.gmra.mxu0 %v1940
        %v2879 = vpop.f32.mrf.mxu0
        %v2880 = vadd.f32 0.0, %v2879
        %v2881 = vpop.f32.mrf.mxu0
        %v2882 = vadd.f32 0.0, %v2881
        %2883 = vmatmul.bf16.gmra.mxu0 %v1942
        %v2884 = vpop.f32.mrf.mxu0
        %v2885 = vadd.f32 0.0, %v2884
        %v2886 = vpop.f32.mrf.mxu0
        %v2887 = vadd.f32 0.0, %v2886
        %2888 = vmatmul.bf16.gmra.mxu0 %v1944
        %v2889 = vpop.f32.mrf.mxu0
        %v2890 = vadd.f32 0.0, %v2889
        %v2891 = vpop.f32.mrf.mxu0
        %v2892 = vadd.f32 0.0, %v2891
        %2893 = vmatmul.bf16.gmra.mxu0 %v1946
        %v2894 = vpop.f32.mrf.mxu0
        %v2895 = vadd.f32 0.0, %v2894
        %v2896 = vpop.f32.mrf.mxu0
        %v2897 = vadd.f32 0.0, %v2896
        %2898 = vmatmul.bf16.gmra.mxu0 %v1948
        %v2899 = vpop.f32.mrf.mxu0
        %v2900 = vadd.f32 0.0, %v2899
        %v2901 = vpop.f32.mrf.mxu0
        %v2902 = vadd.f32 0.0, %v2901
        %2903 = vmatmul.bf16.gmra.mxu0 %v1950
        %v2904 = vpop.f32.mrf.mxu0
        %v2905 = vadd.f32 0.0, %v2904
        %v2906 = vpop.f32.mrf.mxu0
        %v2907 = vadd.f32 0.0, %v2906
        %2908 = vmatmul.bf16.gmra.mxu0 %v1952
        %v2909 = vpop.f32.mrf.mxu0
        %v2910 = vadd.f32 0.0, %v2909
        %v2911 = vpop.f32.mrf.mxu0
        %v2912 = vadd.f32 0.0, %v2911
        %2913 = vmatmul.bf16.gmra.mxu0 %v1954
        %v2914 = vpop.f32.mrf.mxu0
        %v2915 = vadd.f32 0.0, %v2914
        %v2916 = vpop.f32.mrf.mxu0
        %v2917 = vadd.f32 0.0, %v2916
        %2918 = vmatmul.bf16.gmra.mxu0 %v1956
        %v2919 = vpop.f32.mrf.mxu0
        %v2920 = vadd.f32 0.0, %v2919
        %v2921 = vpop.f32.mrf.mxu0
        %v2922 = vadd.f32 0.0, %v2921
        %2923 = vmatmul.bf16.gmra.mxu0 %v1958
        %v2924 = vpop.f32.mrf.mxu0
        %v2925 = vadd.f32 0.0, %v2924
        %v2926 = vpop.f32.mrf.mxu0
        %v2927 = vadd.f32 0.0, %v2926
        %2928 = vmatmul.bf16.gmra.mxu0 %v1960
        %v2929 = vpop.f32.mrf.mxu0
        %v2930 = vadd.f32 0.0, %v2929
        %v2931 = vpop.f32.mrf.mxu0
        %v2932 = vadd.f32 0.0, %v2931
        %2933 = vmatmul.bf16.gmra.mxu0 %v1962
        %v2934 = vpop.f32.mrf.mxu0
        %v2935 = vadd.f32 0.0, %v2934
        %v2936 = vpop.f32.mrf.mxu0
        %v2937 = vadd.f32 0.0, %v2936
        %2938 = vmatmul.bf16.gmra.mxu0 %v1964
        %v2939 = vpop.f32.mrf.mxu0
        %v2940 = vadd.f32 0.0, %v2939
        %v2941 = vpop.f32.mrf.mxu0
        %v2942 = vadd.f32 0.0, %v2941
        %2943 = vmatmul.bf16.gmra.mxu0 %v1966
        %v2944 = vpop.f32.mrf.mxu0
        %v2945 = vadd.f32 0.0, %v2944
        %v2946 = vpop.f32.mrf.mxu0
        %v2947 = vadd.f32 0.0, %v2946
        %2948 = vmatmul.bf16.gmra.mxu0 %v1968
        %v2949 = vpop.f32.mrf.mxu0
        %v2950 = vadd.f32 0.0, %v2949
        %v2951 = vpop.f32.mrf.mxu0
        %v2952 = vadd.f32 0.0, %v2951
        %2953 = vmatmul.bf16.gmra.mxu0 %v1970
        %v2954 = vpop.f32.mrf.mxu0
        %v2955 = vadd.f32 0.0, %v2954
        %v2956 = vpop.f32.mrf.mxu0
        %v2957 = vadd.f32 0.0, %v2956
        %2958 = vdwg.mxu0
        %2959 = vmatpush.bf16.msra.mxu0 %v2789
        %2960 = vmatpush.bf16.msra.mxu0 %v2788
        %2961 = vmatpush.bf16.msra.mxu0 %v2787
        %2962 = vmatpush.bf16.msra.mxu0 %v2786
        %2963 = vmatpush.bf16.msra.mxu0 %v2785
        %2964 = vmatpush.bf16.msra.mxu0 %v2784
        %2965 = vmatpush.bf16.msra.mxu0 %v2783
        %2966 = vmatpush.bf16.msra.mxu0 %v2782
        %2967 = vmatmul.bf16.gmra.mxu0 %v1941
        %v2968 = vpop.f32.mrf.mxu0
        %v2969 = vadd.f32 %v2880, %v2968
        %v2970 = vpop.f32.mrf.mxu0
        %v2971 = vadd.f32 %v2882, %v2970
        %2972 = vmatmul.bf16.gmra.mxu0 %v1943
        %v2973 = vpop.f32.mrf.mxu0
        %v2974 = vadd.f32 %v2885, %v2973
        %v2975 = vpop.f32.mrf.mxu0
        %v2976 = vadd.f32 %v2887, %v2975
        %2977 = vmatmul.bf16.gmra.mxu0 %v1945
        %v2978 = vpop.f32.mrf.mxu0
        %v2979 = vadd.f32 %v2890, %v2978
        %v2980 = vpop.f32.mrf.mxu0
        %v2981 = vadd.f32 %v2892, %v2980
        %2982 = vmatmul.bf16.gmra.mxu0 %v1947
        %v2983 = vpop.f32.mrf.mxu0
        %v2984 = vadd.f32 %v2895, %v2983
        %v2985 = vpop.f32.mrf.mxu0
        %v2986 = vadd.f32 %v2897, %v2985
        %2987 = vmatmul.bf16.gmra.mxu0 %v1949
        %v2988 = vpop.f32.mrf.mxu0
        %v2989 = vadd.f32 %v2900, %v2988
        %v2990 = vpop.f32.mrf.mxu0
        %v2991 = vadd.f32 %v2902, %v2990
        %2992 = vmatmul.bf16.gmra.mxu0 %v1951
        %v2993 = vpop.f32.mrf.mxu0
        %v2994 = vadd.f32 %v2905, %v2993
        %v2995 = vpop.f32.mrf.mxu0
        %v2996 = vadd.f32 %v2907, %v2995
        %2997 = vmatmul.bf16.gmra.mxu0 %v1953
        %v2998 = vpop.f32.mrf.mxu0
        %v2999 = vadd.f32 %v2910, %v2998
        %v3000 = vpop.f32.mrf.mxu0
        %v3001 = vadd.f32 %v2912, %v3000
        %3002 = vmatmul.bf16.gmra.mxu0 %v1955
        %v3003 = vpop.f32.mrf.mxu0
        %v3004 = vadd.f32 %v2915, %v3003
        %v3005 = vpop.f32.mrf.mxu0
        %v3006 = vadd.f32 %v2917, %v3005
        %3007 = vmatmul.bf16.gmra.mxu0 %v1957
        %v3008 = vpop.f32.mrf.mxu0
        %v3009 = vadd.f32 %v2920, %v3008
        %v3010 = vpop.f32.mrf.mxu0
        %v3011 = vadd.f32 %v2922, %v3010
        %3012 = vmatmul.bf16.gmra.mxu0 %v1959
        %v3013 = vpop.f32.mrf.mxu0
        %v3014 = vadd.f32 %v2925, %v3013
        %v3015 = vpop.f32.mrf.mxu0
        %v3016 = vadd.f32 %v2927, %v3015
        %3017 = vmatmul.bf16.gmra.mxu0 %v1961
        %v3018 = vpop.f32.mrf.mxu0
        %v3019 = vadd.f32 %v2930, %v3018
        %v3020 = vpop.f32.mrf.mxu0
        %v3021 = vadd.f32 %v2932, %v3020
        %3022 = vmatmul.bf16.gmra.mxu0 %v1963
        %v3023 = vpop.f32.mrf.mxu0
        %v3024 = vadd.f32 %v2935, %v3023
        %v3025 = vpop.f32.mrf.mxu0
        %v3026 = vadd.f32 %v2937, %v3025
        %3027 = vmatmul.bf16.gmra.mxu0 %v1965
        %v3028 = vpop.f32.mrf.mxu0
        %v3029 = vadd.f32 %v2940, %v3028
        %v3030 = vpop.f32.mrf.mxu0
        %v3031 = vadd.f32 %v2942, %v3030
        %3032 = vmatmul.bf16.gmra.mxu0 %v1967
        %v3033 = vpop.f32.mrf.mxu0
        %v3034 = vadd.f32 %v2945, %v3033
        %v3035 = vpop.f32.mrf.mxu0
        %v3036 = vadd.f32 %v2947, %v3035
        %3037 = vmatmul.bf16.gmra.mxu0 %v1969
        %v3038 = vpop.f32.mrf.mxu0
        %v3039 = vadd.f32 %v2950, %v3038
        %v3040 = vpop.f32.mrf.mxu0
        %v3041 = vadd.f32 %v2952, %v3040
        %3042 = vmatmul.bf16.gmra.mxu0 %v1971
        %v3043 = vpop.f32.mrf.mxu0
        %v3044 = vadd.f32 %v2955, %v3043
        %v3045 = vpop.f32.mrf.mxu0
        %v3046 = vadd.f32 %v2957, %v3045
        %3047 = vdwg.mxu0
        %3048 = vmatpush.bf16.msra.mxu0 %v2797
        %3049 = vmatpush.bf16.msra.mxu0 %v2796
        %3050 = vmatpush.bf16.msra.mxu0 %v2795
        %3051 = vmatpush.bf16.msra.mxu0 %v2794
        %3052 = vmatpush.bf16.msra.mxu0 %v2793
        %3053 = vmatpush.bf16.msra.mxu0 %v2792
        %3054 = vmatpush.bf16.msra.mxu0 %v2791
        %3055 = vmatpush.bf16.msra.mxu0 %v2790
        %3056 = vmatmul.bf16.gmra.mxu0 %v1613
        %v3057 = vpop.f32.mrf.mxu0
        %v3058 = vadd.f32 %v2969, %v3057
        %v3059 = vpop.f32.mrf.mxu0
        %v3060 = vadd.f32 %v2971, %v3059
        %3061 = vmatmul.bf16.gmra.mxu0 %v1615
        %v3062 = vpop.f32.mrf.mxu0
        %v3063 = vadd.f32 %v2974, %v3062
        %v3064 = vpop.f32.mrf.mxu0
        %v3065 = vadd.f32 %v2976, %v3064
        %3066 = vmatmul.bf16.gmra.mxu0 %v1617
        %v3067 = vpop.f32.mrf.mxu0
        %v3068 = vadd.f32 %v2979, %v3067
        %v3069 = vpop.f32.mrf.mxu0
        %v3070 = vadd.f32 %v2981, %v3069
        %3071 = vmatmul.bf16.gmra.mxu0 %v1619
        %v3072 = vpop.f32.mrf.mxu0
        %v3073 = vadd.f32 %v2984, %v3072
        %v3074 = vpop.f32.mrf.mxu0
        %v3075 = vadd.f32 %v2986, %v3074
        %3076 = vmatmul.bf16.gmra.mxu0 %v1621
        %v3077 = vpop.f32.mrf.mxu0
        %v3078 = vadd.f32 %v2989, %v3077
        %v3079 = vpop.f32.mrf.mxu0
        %v3080 = vadd.f32 %v2991, %v3079
        %3081 = vmatmul.bf16.gmra.mxu0 %v1623
        %v3082 = vpop.f32.mrf.mxu0
        %v3083 = vadd.f32 %v2994, %v3082
        %v3084 = vpop.f32.mrf.mxu0
        %v3085 = vadd.f32 %v2996, %v3084
        %3086 = vmatmul.bf16.gmra.mxu0 %v1625
        %v3087 = vpop.f32.mrf.mxu0
        %v3088 = vadd.f32 %v2999, %v3087
        %v3089 = vpop.f32.mrf.mxu0
        %v3090 = vadd.f32 %v3001, %v3089
        %3091 = vmatmul.bf16.gmra.mxu0 %v1627
        %v3092 = vpop.f32.mrf.mxu0
        %v3093 = vadd.f32 %v3004, %v3092
        %v3094 = vpop.f32.mrf.mxu0
        %v3095 = vadd.f32 %v3006, %v3094
        %3096 = vmatmul.bf16.gmra.mxu0 %v1629
        %v3097 = vpop.f32.mrf.mxu0
        %v3098 = vadd.f32 %v3009, %v3097
        %v3099 = vpop.f32.mrf.mxu0
        %v3100 = vadd.f32 %v3011, %v3099
        %3101 = vmatmul.bf16.gmra.mxu0 %v1631
        %v3102 = vpop.f32.mrf.mxu0
        %v3103 = vadd.f32 %v3014, %v3102
        %v3104 = vpop.f32.mrf.mxu0
        %v3105 = vadd.f32 %v3016, %v3104
        %3106 = vmatmul.bf16.gmra.mxu0 %v1633
        %v3107 = vpop.f32.mrf.mxu0
        %v3108 = vadd.f32 %v3019, %v3107
        %v3109 = vpop.f32.mrf.mxu0
        %v3110 = vadd.f32 %v3021, %v3109
        %3111 = vmatmul.bf16.gmra.mxu0 %v1635
        %v3112 = vpop.f32.mrf.mxu0
        %v3113 = vadd.f32 %v3024, %v3112
        %v3114 = vpop.f32.mrf.mxu0
        %v3115 = vadd.f32 %v3026, %v3114
        %3116 = vmatmul.bf16.gmra.mxu0 %v1637
        %v3117 = vpop.f32.mrf.mxu0
        %v3118 = vadd.f32 %v3029, %v3117
        %v3119 = vpop.f32.mrf.mxu0
        %v3120 = vadd.f32 %v3031, %v3119
        %3121 = vmatmul.bf16.gmra.mxu0 %v1639
        %v3122 = vpop.f32.mrf.mxu0
        %v3123 = vadd.f32 %v3034, %v3122
        %v3124 = vpop.f32.mrf.mxu0
        %v3125 = vadd.f32 %v3036, %v3124
        %3126 = vmatmul.bf16.gmra.mxu0 %v1641
        %v3127 = vpop.f32.mrf.mxu0
        %v3128 = vadd.f32 %v3039, %v3127
        %v3129 = vpop.f32.mrf.mxu0
        %v3130 = vadd.f32 %v3041, %v3129
        %3131 = vmatmul.bf16.gmra.mxu0 %v1643
        %v3132 = vpop.f32.mrf.mxu0
        %v3133 = vadd.f32 %v3044, %v3132
        %v3134 = vpop.f32.mrf.mxu0
        %v3135 = vadd.f32 %v3046, %v3134
        %3136 = vdwg.mxu0
        %3137 = vmatpush.bf16.msra.mxu0 %v2805
        %3138 = vmatpush.bf16.msra.mxu0 %v2804
        %3139 = vmatpush.bf16.msra.mxu0 %v2803
        %3140 = vmatpush.bf16.msra.mxu0 %v2802
        %3141 = vmatpush.bf16.msra.mxu0 %v2801
        %3142 = vmatpush.bf16.msra.mxu0 %v2800
        %3143 = vmatpush.bf16.msra.mxu0 %v2799
        %3144 = vmatpush.bf16.msra.mxu0 %v2798
        %3145 = vmatmul.bf16.gmra.mxu0 %v1614
        %v3146 = vpop.f32.mrf.mxu0
        %v3147 = vadd.f32 %v3058, %v3146
        %v3148 = vpop.f32.mrf.mxu0
        %v3149 = vadd.f32 %v3060, %v3148
        %3150 = vmatmul.bf16.gmra.mxu0 %v1616
        %v3151 = vpop.f32.mrf.mxu0
        %v3152 = vadd.f32 %v3063, %v3151
        %v3153 = vpop.f32.mrf.mxu0
        %v3154 = vadd.f32 %v3065, %v3153
        %3155 = vmatmul.bf16.gmra.mxu0 %v1618
        %v3156 = vpop.f32.mrf.mxu0
        %v3157 = vadd.f32 %v3068, %v3156
        %v3158 = vpop.f32.mrf.mxu0
        %v3159 = vadd.f32 %v3070, %v3158
        %3160 = vmatmul.bf16.gmra.mxu0 %v1620
        %v3161 = vpop.f32.mrf.mxu0
        %v3162 = vadd.f32 %v3073, %v3161
        %v3163 = vpop.f32.mrf.mxu0
        %v3164 = vadd.f32 %v3075, %v3163
        %3165 = vmatmul.bf16.gmra.mxu0 %v1622
        %v3166 = vpop.f32.mrf.mxu0
        %v3167 = vadd.f32 %v3078, %v3166
        %v3168 = vpop.f32.mrf.mxu0
        %v3169 = vadd.f32 %v3080, %v3168
        %3170 = vmatmul.bf16.gmra.mxu0 %v1624
        %v3171 = vpop.f32.mrf.mxu0
        %v3172 = vadd.f32 %v3083, %v3171
        %v3173 = vpop.f32.mrf.mxu0
        %v3174 = vadd.f32 %v3085, %v3173
        %3175 = vmatmul.bf16.gmra.mxu0 %v1626
        %v3176 = vpop.f32.mrf.mxu0
        %v3177 = vadd.f32 %v3088, %v3176
        %v3178 = vpop.f32.mrf.mxu0
        %v3179 = vadd.f32 %v3090, %v3178
        %3180 = vmatmul.bf16.gmra.mxu0 %v1628
        %v3181 = vpop.f32.mrf.mxu0
        %v3182 = vadd.f32 %v3093, %v3181
        %v3183 = vpop.f32.mrf.mxu0
        %v3184 = vadd.f32 %v3095, %v3183
        %3185 = vmatmul.bf16.gmra.mxu0 %v1630
        %v3186 = vpop.f32.mrf.mxu0
        %v3187 = vadd.f32 %v3098, %v3186
        %v3188 = vpop.f32.mrf.mxu0
        %v3189 = vadd.f32 %v3100, %v3188
        %3190 = vmatmul.bf16.gmra.mxu0 %v1632
        %v3191 = vpop.f32.mrf.mxu0
        %v3192 = vadd.f32 %v3103, %v3191
        %v3193 = vpop.f32.mrf.mxu0
        %v3194 = vadd.f32 %v3105, %v3193
        %3195 = vmatmul.bf16.gmra.mxu0 %v1634
        %v3196 = vpop.f32.mrf.mxu0
        %v3197 = vadd.f32 %v3108, %v3196
        %v3198 = vpop.f32.mrf.mxu0
        %v3199 = vadd.f32 %v3110, %v3198
        %3200 = vmatmul.bf16.gmra.mxu0 %v1636
        %v3201 = vpop.f32.mrf.mxu0
        %v3202 = vadd.f32 %v3113, %v3201
        %v3203 = vpop.f32.mrf.mxu0
        %v3204 = vadd.f32 %v3115, %v3203
        %3205 = vmatmul.bf16.gmra.mxu0 %v1638
        %v3206 = vpop.f32.mrf.mxu0
        %v3207 = vadd.f32 %v3118, %v3206
        %v3208 = vpop.f32.mrf.mxu0
        %v3209 = vadd.f32 %v3120, %v3208
        %3210 = vmatmul.bf16.gmra.mxu0 %v1640
        %v3211 = vpop.f32.mrf.mxu0
        %v3212 = vadd.f32 %v3123, %v3211
        %v3213 = vpop.f32.mrf.mxu0
        %v3214 = vadd.f32 %v3125, %v3213
        %3215 = vmatmul.bf16.gmra.mxu0 %v1642
        %v3216 = vpop.f32.mrf.mxu0
        %v3217 = vadd.f32 %v3128, %v3216
        %v3218 = vpop.f32.mrf.mxu0
        %v3219 = vadd.f32 %v3130, %v3218
        %3220 = vmatmul.bf16.gmra.mxu0 %v1644
        %v3221 = vpop.f32.mrf.mxu0
        %v3222 = vadd.f32 %v3133, %v3221
        %v3223 = vpop.f32.mrf.mxu0
        %v3224 = vadd.f32 %v3135, %v3223
        %3225 = vdwg.mxu0
        %3226 = vmatpush.bf16.msra.mxu0 %v2813
        %3227 = vmatpush.bf16.msra.mxu0 %v2812
        %3228 = vmatpush.bf16.msra.mxu0 %v2811
        %3229 = vmatpush.bf16.msra.mxu0 %v2810
        %3230 = vmatpush.bf16.msra.mxu0 %v2809
        %3231 = vmatpush.bf16.msra.mxu0 %v2808
        %3232 = vmatpush.bf16.msra.mxu0 %v2807
        %3233 = vmatpush.bf16.msra.mxu0 %v2806
        %3234 = vmatmul.bf16.gmra.mxu0 %v2085
        %v3235 = vpop.f32.mrf.mxu0
        %v3236 = vadd.f32 %v3147, %v3235
        %v3237 = vpop.f32.mrf.mxu0
        %v3238 = vadd.f32 %v3149, %v3237
        %3239 = vmatmul.bf16.gmra.mxu0 %v2099
        %v3240 = vpop.f32.mrf.mxu0
        %v3241 = vadd.f32 %v3152, %v3240
        %v3242 = vpop.f32.mrf.mxu0
        %v3243 = vadd.f32 %v3154, %v3242
        %3244 = vmatmul.bf16.gmra.mxu0 %v2113
        %v3245 = vpop.f32.mrf.mxu0
        %v3246 = vadd.f32 %v3157, %v3245
        %v3247 = vpop.f32.mrf.mxu0
        %v3248 = vadd.f32 %v3159, %v3247
        %3249 = vmatmul.bf16.gmra.mxu0 %v2127
        %v3250 = vpop.f32.mrf.mxu0
        %v3251 = vadd.f32 %v3162, %v3250
        %v3252 = vpop.f32.mrf.mxu0
        %v3253 = vadd.f32 %v3164, %v3252
        %3254 = vmatmul.bf16.gmra.mxu0 %v2141
        %v3255 = vpop.f32.mrf.mxu0
        %v3256 = vadd.f32 %v3167, %v3255
        %v3257 = vpop.f32.mrf.mxu0
        %v3258 = vadd.f32 %v3169, %v3257
        %3259 = vmatmul.bf16.gmra.mxu0 %v2155
        %v3260 = vpop.f32.mrf.mxu0
        %v3261 = vadd.f32 %v3172, %v3260
        %v3262 = vpop.f32.mrf.mxu0
        %v3263 = vadd.f32 %v3174, %v3262
        %3264 = vmatmul.bf16.gmra.mxu0 %v2169
        %v3265 = vpop.f32.mrf.mxu0
        %v3266 = vadd.f32 %v3177, %v3265
        %v3267 = vpop.f32.mrf.mxu0
        %v3268 = vadd.f32 %v3179, %v3267
        %3269 = vmatmul.bf16.gmra.mxu0 %v2183
        %v3270 = vpop.f32.mrf.mxu0
        %v3271 = vadd.f32 %v3182, %v3270
        %v3272 = vpop.f32.mrf.mxu0
        %v3273 = vadd.f32 %v3184, %v3272
        %3274 = vmatmul.bf16.gmra.mxu0 %v2197
        %v3275 = vpop.f32.mrf.mxu0
        %v3276 = vadd.f32 %v3187, %v3275
        %v3277 = vpop.f32.mrf.mxu0
        %v3278 = vadd.f32 %v3189, %v3277
        %3279 = vmatmul.bf16.gmra.mxu0 %v2211
        %v3280 = vpop.f32.mrf.mxu0
        %v3281 = vadd.f32 %v3192, %v3280
        %v3282 = vpop.f32.mrf.mxu0
        %v3283 = vadd.f32 %v3194, %v3282
        %3284 = vmatmul.bf16.gmra.mxu0 %v2225
        %v3285 = vpop.f32.mrf.mxu0
        %v3286 = vadd.f32 %v3197, %v3285
        %v3287 = vpop.f32.mrf.mxu0
        %v3288 = vadd.f32 %v3199, %v3287
        %3289 = vmatmul.bf16.gmra.mxu0 %v2239
        %v3290 = vpop.f32.mrf.mxu0
        %v3291 = vadd.f32 %v3202, %v3290
        %v3292 = vpop.f32.mrf.mxu0
        %v3293 = vadd.f32 %v3204, %v3292
        %3294 = vmatmul.bf16.gmra.mxu0 %v2253
        %v3295 = vpop.f32.mrf.mxu0
        %v3296 = vadd.f32 %v3207, %v3295
        %v3297 = vpop.f32.mrf.mxu0
        %v3298 = vadd.f32 %v3209, %v3297
        %3299 = vmatmul.bf16.gmra.mxu0 %v2267
        %v3300 = vpop.f32.mrf.mxu0
        %v3301 = vadd.f32 %v3212, %v3300
        %v3302 = vpop.f32.mrf.mxu0
        %v3303 = vadd.f32 %v3214, %v3302
        %3304 = vmatmul.bf16.gmra.mxu0 %v2281
        %v3305 = vpop.f32.mrf.mxu0
        %v3306 = vadd.f32 %v3217, %v3305
        %v3307 = vpop.f32.mrf.mxu0
        %v3308 = vadd.f32 %v3219, %v3307
        %3309 = vmatmul.bf16.gmra.mxu0 %v2295
        %v3310 = vpop.f32.mrf.mxu0
        %v3311 = vadd.f32 %v3222, %v3310
        %v3312 = vpop.f32.mrf.mxu0
        %v3313 = vadd.f32 %v3224, %v3312
        %3314 = vdwg.mxu0
        %3315 = vmatpush.bf16.msra.mxu0 %v2821
        %3316 = vmatpush.bf16.msra.mxu0 %v2820
        %3317 = vmatpush.bf16.msra.mxu0 %v2819
        %3318 = vmatpush.bf16.msra.mxu0 %v2818
        %3319 = vmatpush.bf16.msra.mxu0 %v2817
        %3320 = vmatpush.bf16.msra.mxu0 %v2816
        %3321 = vmatpush.bf16.msra.mxu0 %v2815
        %3322 = vmatpush.bf16.msra.mxu0 %v2814
        %3323 = vmatmul.bf16.gmra.mxu0 %v2092
        %v3324 = vpop.f32.mrf.mxu0
        %v3325 = vadd.f32 %v3236, %v3324
        %v3326 = vpop.f32.mrf.mxu0
        %v3327 = vadd.f32 %v3238, %v3326
        %3328 = vmatmul.bf16.gmra.mxu0 %v2106
        %v3329 = vpop.f32.mrf.mxu0
        %v3330 = vadd.f32 %v3241, %v3329
        %v3331 = vpop.f32.mrf.mxu0
        %v3332 = vadd.f32 %v3243, %v3331
        %3333 = vmatmul.bf16.gmra.mxu0 %v2120
        %v3334 = vpop.f32.mrf.mxu0
        %v3335 = vadd.f32 %v3246, %v3334
        %v3336 = vpop.f32.mrf.mxu0
        %v3337 = vadd.f32 %v3248, %v3336
        %3338 = vmatmul.bf16.gmra.mxu0 %v2134
        %v3339 = vpop.f32.mrf.mxu0
        %v3340 = vadd.f32 %v3251, %v3339
        %v3341 = vpop.f32.mrf.mxu0
        %v3342 = vadd.f32 %v3253, %v3341
        %3343 = vmatmul.bf16.gmra.mxu0 %v2148
        %v3344 = vpop.f32.mrf.mxu0
        %v3345 = vadd.f32 %v3256, %v3344
        %v3346 = vpop.f32.mrf.mxu0
        %v3347 = vadd.f32 %v3258, %v3346
        %3348 = vmatmul.bf16.gmra.mxu0 %v2162
        %v3349 = vpop.f32.mrf.mxu0
        %v3350 = vadd.f32 %v3261, %v3349
        %v3351 = vpop.f32.mrf.mxu0
        %v3352 = vadd.f32 %v3263, %v3351
        %3353 = vmatmul.bf16.gmra.mxu0 %v2176
        %v3354 = vpop.f32.mrf.mxu0
        %v3355 = vadd.f32 %v3266, %v3354
        %v3356 = vpop.f32.mrf.mxu0
        %v3357 = vadd.f32 %v3268, %v3356
        %3358 = vmatmul.bf16.gmra.mxu0 %v2190
        %v3359 = vpop.f32.mrf.mxu0
        %v3360 = vadd.f32 %v3271, %v3359
        %v3361 = vpop.f32.mrf.mxu0
        %v3362 = vadd.f32 %v3273, %v3361
        %3363 = vmatmul.bf16.gmra.mxu0 %v2204
        %v3364 = vpop.f32.mrf.mxu0
        %v3365 = vadd.f32 %v3276, %v3364
        %v3366 = vpop.f32.mrf.mxu0
        %v3367 = vadd.f32 %v3278, %v3366
        %3368 = vmatmul.bf16.gmra.mxu0 %v2218
        %v3369 = vpop.f32.mrf.mxu0
        %v3370 = vadd.f32 %v3281, %v3369
        %v3371 = vpop.f32.mrf.mxu0
        %v3372 = vadd.f32 %v3283, %v3371
        %3373 = vmatmul.bf16.gmra.mxu0 %v2232
        %v3374 = vpop.f32.mrf.mxu0
        %v3375 = vadd.f32 %v3286, %v3374
        %v3376 = vpop.f32.mrf.mxu0
        %v3377 = vadd.f32 %v3288, %v3376
        %3378 = vmatmul.bf16.gmra.mxu0 %v2246
        %v3379 = vpop.f32.mrf.mxu0
        %v3380 = vadd.f32 %v3291, %v3379
        %v3381 = vpop.f32.mrf.mxu0
        %v3382 = vadd.f32 %v3293, %v3381
        %3383 = vmatmul.bf16.gmra.mxu0 %v2260
        %v3384 = vpop.f32.mrf.mxu0
        %v3385 = vadd.f32 %v3296, %v3384
        %v3386 = vpop.f32.mrf.mxu0
        %v3387 = vadd.f32 %v3298, %v3386
        %3388 = vmatmul.bf16.gmra.mxu0 %v2274
        %v3389 = vpop.f32.mrf.mxu0
        %v3390 = vadd.f32 %v3301, %v3389
        %v3391 = vpop.f32.mrf.mxu0
        %v3392 = vadd.f32 %v3303, %v3391
        %3393 = vmatmul.bf16.gmra.mxu0 %v2288
        %v3394 = vpop.f32.mrf.mxu0
        %v3395 = vadd.f32 %v3306, %v3394
        %v3396 = vpop.f32.mrf.mxu0
        %v3397 = vadd.f32 %v3308, %v3396
        %3398 = vmatmul.bf16.gmra.mxu0 %v2302
        %v3399 = vpop.f32.mrf.mxu0
        %v3400 = vadd.f32 %v3311, %v3399
        %v3401 = vpop.f32.mrf.mxu0
        %v3402 = vadd.f32 %v3313, %v3401
        %3403 = vdwg.mxu0
        %v3500 = vunpack.c.l.b16 %v2389
        %v3501 = vunpack.c.l.b16 %v2390
        %v3502 = vunpack.c.l.b16 %v2391
        %v3503 = vunpack.c.l.b16 %v2392
        %v3504 = vunpack.c.l.b16 %v2393
        %v3505 = vunpack.c.l.b16 %v2394
        %v3506 = vunpack.c.l.b16 %v2395
        %v3507 = vunpack.c.l.b16 %v2396
        %v3508 = vunpack.c.l.b16 %v2397
        %v3509 = vunpack.c.l.b16 %v2398
        %v3510 = vunpack.c.l.b16 %v2399
        %v3511 = vunpack.c.l.b16 %v2400
        %v3512 = vunpack.c.l.b16 %v2401
        %v3513 = vunpack.c.l.b16 %v2402
        %v3514 = vunpack.c.l.b16 %v2403
        %v3515 = vunpack.c.l.b16 %v2404
        %v3516 = vunpack.c.l.b16 %v2405
        %v3517 = vunpack.c.l.b16 %v2406
        %v3518 = vunpack.c.l.b16 %v2407
        %v3519 = vunpack.c.l.b16 %v2408
        %v3520 = vunpack.c.l.b16 %v2409
        %v3521 = vunpack.c.l.b16 %v2410
        %v3522 = vunpack.c.l.b16 %v2411
        %v3523 = vunpack.c.l.b16 %v2412
        %v3524 = vunpack.c.l.b16 %v2413
        %v3525 = vunpack.c.l.b16 %v2414
        %v3526 = vunpack.c.l.b16 %v2415
        %v3527 = vunpack.c.l.b16 %v2416
        %v3528 = vunpack.c.l.b16 %v2417
        %v3529 = vunpack.c.l.b16 %v2418
        %v3530 = vunpack.c.l.b16 %v2419
        %v3531 = vunpack.c.l.b16 %v2420
        %v3532 = vunpack.c.l.b16 %v2421
        %v3533 = vunpack.c.l.b16 %v2422
        %v3534 = vunpack.c.l.b16 %v2423
        %v3535 = vunpack.c.l.b16 %v2424
        %v3536 = vunpack.c.l.b16 %v2425
        %v3537 = vunpack.c.l.b16 %v2426
        %v3538 = vunpack.c.l.b16 %v2427
        %v3539 = vunpack.c.l.b16 %v2428
        %v3540 = vunpack.c.l.b16 %v2429
        %v3541 = vunpack.c.l.b16 %v2430
        %v3542 = vunpack.c.l.b16 %v2431
        %v3543 = vunpack.c.l.b16 %v2432
        %v3544 = vunpack.c.l.b16 %v2433
        %v3545 = vunpack.c.l.b16 %v2434
        %v3546 = vunpack.c.l.b16 %v2435
        %v3547 = vunpack.c.l.b16 %v2436
        %v3548 = vunpack.c.l.b16 %v2437
        %v3549 = vunpack.c.l.b16 %v2438
        %v3550 = vunpack.c.l.b16 %v2439
        %v3551 = vunpack.c.l.b16 %v2440
        %v3552 = vunpack.c.l.b16 %v2441
        %v3553 = vunpack.c.l.b16 %v2442
        %v3554 = vunpack.c.l.b16 %v2443
        %v3555 = vunpack.c.l.b16 %v2444
        %v3556 = vunpack.c.l.b16 %v2445
        %v3557 = vunpack.c.l.b16 %v2446
        %v3558 = vunpack.c.l.b16 %v2447
        %v3559 = vunpack.c.l.b16 %v2448
        %v3560 = vunpack.c.l.b16 %v2449
        %v3561 = vunpack.c.l.b16 %v2450
        %v3562 = vunpack.c.l.b16 %v2451
        %v3563 = vunpack.c.l.b16 %v2452
        %v3564 = vunpack.c.l.b16 %v2453
        %v3565 = vunpack.c.l.b16 %v2454
        %v3566 = vunpack.c.l.b16 %v2455
        %v3567 = vunpack.c.l.b16 %v2456
        %v3568 = vunpack.c.l.b16 %v2457
        %v3569 = vunpack.c.l.b16 %v2458
        %v3570 = vunpack.c.l.b16 %v2459
        %v3571 = vunpack.c.l.b16 %v2460
        %v3572 = vunpack.c.l.b16 %v2461
        %v3573 = vunpack.c.l.b16 %v2462
        %v3574 = vunpack.c.l.b16 %v2463
        %v3575 = vunpack.c.l.b16 %v2464
        %v3576 = vunpack.c.l.b16 %v2465
        %v3577 = vunpack.c.l.b16 %v2466
        %v3578 = vunpack.c.l.b16 %v2467
        %v3579 = vunpack.c.l.b16 %v2468
        %v3580 = vunpack.c.l.b16 %v2469
        %v3581 = vunpack.c.l.b16 %v2470
        %v3582 = vunpack.c.l.b16 %v2471
        %v3583 = vunpack.c.l.b16 %v2472
        %v3584 = vunpack.c.l.b16 %v2473
        %v3585 = vunpack.c.l.b16 %v2474
        %v3586 = vunpack.c.l.b16 %v2475
        %v3587 = vunpack.c.l.b16 %v2476
        %v3588 = vunpack.c.l.b16 %v2477
        %v3589 = vunpack.c.l.b16 %v2478
        %v3590 = vunpack.c.l.b16 %v2479
        %v3591 = vunpack.c.l.b16 %v2480
        %v3592 = vunpack.c.l.b16 %v2481
        %v3593 = vunpack.c.l.b16 %v2482
        %v3594 = vunpack.c.l.b16 %v2483
        %v3595 = vunpack.c.l.b16 %v2484
        %v3596 = vpack.c.b16 %v3501, %v3500
        %v3597 = vpack.c.b16 %v3503, %v3502
        %v3598 = vpack.c.b16 %v3505, %v3504
        %v3599 = vpack.c.b16 %v3507, %v3506
        %v3600 = vpack.c.b16 %v3509, %v3508
        %v3601 = vpack.c.b16 %v3511, %v3510
        %v3602 = vpack.c.b16 %v3513, %v3512
        %v3603 = vpack.c.b16 %v3515, %v3514
        %v3604 = vpack.c.b16 %v3517, %v3516
        %v3605 = vpack.c.b16 %v3519, %v3518
        %v3606 = vpack.c.b16 %v3521, %v3520
        %v3607 = vpack.c.b16 %v3523, %v3522
        %v3608 = vpack.c.b16 %v3525, %v3524
        %v3609 = vpack.c.b16 %v3527, %v3526
        %v3610 = vpack.c.b16 %v3529, %v3528
        %v3611 = vpack.c.b16 %v3531, %v3530
        %v3612 = vpack.c.b16 %v3533, %v3532
        %v3613 = vpack.c.b16 %v3535, %v3534
        %v3614 = vpack.c.b16 %v3537, %v3536
        %v3615 = vpack.c.b16 %v3539, %v3538
        %v3616 = vpack.c.b16 %v3541, %v3540
        %v3617 = vpack.c.b16 %v3543, %v3542
        %v3618 = vpack.c.b16 %v3545, %v3544
        %v3619 = vpack.c.b16 %v3547, %v3546
        %v3620 = vpack.c.b16 %v3549, %v3548
        %v3621 = vpack.c.b16 %v3551, %v3550
        %v3622 = vpack.c.b16 %v3553, %v3552
        %v3623 = vpack.c.b16 %v3555, %v3554
        %v3624 = vpack.c.b16 %v3557, %v3556
        %v3625 = vpack.c.b16 %v3559, %v3558
        %v3626 = vpack.c.b16 %v3561, %v3560
        %v3627 = vpack.c.b16 %v3563, %v3562
        %v3628 = vpack.c.b16 %v3565, %v3564
        %v3629 = vpack.c.b16 %v3567, %v3566
        %v3630 = vpack.c.b16 %v3569, %v3568
        %v3631 = vpack.c.b16 %v3571, %v3570
        %v3632 = vpack.c.b16 %v3573, %v3572
        %v3633 = vpack.c.b16 %v3575, %v3574
        %v3634 = vpack.c.b16 %v3577, %v3576
        %v3635 = vpack.c.b16 %v3579, %v3578
        %v3636 = vpack.c.b16 %v3581, %v3580
        %v3637 = vpack.c.b16 %v3583, %v3582
        %v3638 = vpack.c.b16 %v3585, %v3584
        %v3639 = vpack.c.b16 %v3587, %v3586
        %v3640 = vpack.c.b16 %v3589, %v3588
        %v3641 = vpack.c.b16 %v3591, %v3590
        %v3642 = vpack.c.b16 %v3593, %v3592
        %v3643 = vpack.c.b16 %v3595, %v3594
        %3692 = vmatpush.bf16.msra.mxu0 %v3603
        %3693 = vmatpush.bf16.msra.mxu0 %v3602
        %3694 = vmatpush.bf16.msra.mxu0 %v3601
        %3695 = vmatpush.bf16.msra.mxu0 %v3600
        %3696 = vmatpush.bf16.msra.mxu0 %v3599
        %3697 = vmatpush.bf16.msra.mxu0 %v3598
        %3698 = vmatpush.bf16.msra.mxu0 %v3597
        %3699 = vmatpush.bf16.msra.mxu0 %v3596
        %3700 = vmatmul.bf16.gmra.mxu0 %v1938
        %v3701 = vpop.f32.mrf.mxu0
        %v3702 = vadd.f32 %v3325, %v3701
        %v3703 = vpop.f32.mrf.mxu0
        %v3704 = vadd.f32 %v3327, %v3703
        %3705 = vmatmul.bf16.gmra.mxu0 %v1940
        %v3706 = vpop.f32.mrf.mxu0
        %v3707 = vadd.f32 %v3330, %v3706
        %v3708 = vpop.f32.mrf.mxu0
        %v3709 = vadd.f32 %v3332, %v3708
        %3710 = vmatmul.bf16.gmra.mxu0 %v1942
        %v3711 = vpop.f32.mrf.mxu0
        %v3712 = vadd.f32 %v3335, %v3711
        %v3713 = vpop.f32.mrf.mxu0
        %v3714 = vadd.f32 %v3337, %v3713
        %3715 = vmatmul.bf16.gmra.mxu0 %v1944
        %v3716 = vpop.f32.mrf.mxu0
        %v3717 = vadd.f32 %v3340, %v3716
        %v3718 = vpop.f32.mrf.mxu0
        %v3719 = vadd.f32 %v3342, %v3718
        %3720 = vmatmul.bf16.gmra.mxu0 %v1946
        %v3721 = vpop.f32.mrf.mxu0
        %v3722 = vadd.f32 %v3345, %v3721
        %v3723 = vpop.f32.mrf.mxu0
        %v3724 = vadd.f32 %v3347, %v3723
        %3725 = vmatmul.bf16.gmra.mxu0 %v1948
        %v3726 = vpop.f32.mrf.mxu0
        %v3727 = vadd.f32 %v3350, %v3726
        %v3728 = vpop.f32.mrf.mxu0
        %v3729 = vadd.f32 %v3352, %v3728
        %3730 = vmatmul.bf16.gmra.mxu0 %v1950
        %v3731 = vpop.f32.mrf.mxu0
        %v3732 = vadd.f32 %v3355, %v3731
        %v3733 = vpop.f32.mrf.mxu0
        %v3734 = vadd.f32 %v3357, %v3733
        %3735 = vmatmul.bf16.gmra.mxu0 %v1952
        %v3736 = vpop.f32.mrf.mxu0
        %v3737 = vadd.f32 %v3360, %v3736
        %v3738 = vpop.f32.mrf.mxu0
        %v3739 = vadd.f32 %v3362, %v3738
        %3740 = vmatmul.bf16.gmra.mxu0 %v1954
        %v3741 = vpop.f32.mrf.mxu0
        %v3742 = vadd.f32 %v3365, %v3741
        %v3743 = vpop.f32.mrf.mxu0
        %v3744 = vadd.f32 %v3367, %v3743
        %3745 = vmatmul.bf16.gmra.mxu0 %v1956
        %v3746 = vpop.f32.mrf.mxu0
        %v3747 = vadd.f32 %v3370, %v3746
        %v3748 = vpop.f32.mrf.mxu0
        %v3749 = vadd.f32 %v3372, %v3748
        %3750 = vmatmul.bf16.gmra.mxu0 %v1958
        %v3751 = vpop.f32.mrf.mxu0
        %v3752 = vadd.f32 %v3375, %v3751
        %v3753 = vpop.f32.mrf.mxu0
        %v3754 = vadd.f32 %v3377, %v3753
        %3755 = vmatmul.bf16.gmra.mxu0 %v1960
        %v3756 = vpop.f32.mrf.mxu0
        %v3757 = vadd.f32 %v3380, %v3756
        %v3758 = vpop.f32.mrf.mxu0
        %v3759 = vadd.f32 %v3382, %v3758
        %3760 = vmatmul.bf16.gmra.mxu0 %v1962
        %v3761 = vpop.f32.mrf.mxu0
        %v3762 = vadd.f32 %v3385, %v3761
        %v3763 = vpop.f32.mrf.mxu0
        %v3764 = vadd.f32 %v3387, %v3763
        %3765 = vmatmul.bf16.gmra.mxu0 %v1964
        %v3766 = vpop.f32.mrf.mxu0
        %v3767 = vadd.f32 %v3390, %v3766
        %v3768 = vpop.f32.mrf.mxu0
        %v3769 = vadd.f32 %v3392, %v3768
        %3770 = vmatmul.bf16.gmra.mxu0 %v1966
        %v3771 = vpop.f32.mrf.mxu0
        %v3772 = vadd.f32 %v3395, %v3771
        %v3773 = vpop.f32.mrf.mxu0
        %v3774 = vadd.f32 %v3397, %v3773
        %3775 = vmatmul.bf16.gmra.mxu0 %v1968
        %v3776 = vpop.f32.mrf.mxu0
        %v3777 = vadd.f32 %v3400, %v3776
        %v3778 = vpop.f32.mrf.mxu0
        %v3779 = vadd.f32 %v3402, %v3778
        %3780 = vdwg.mxu0
        %3781 = vmatpush.bf16.msra.mxu0 %v3611
        %3782 = vmatpush.bf16.msra.mxu0 %v3610
        %3783 = vmatpush.bf16.msra.mxu0 %v3609
        %3784 = vmatpush.bf16.msra.mxu0 %v3608
        %3785 = vmatpush.bf16.msra.mxu0 %v3607
        %3786 = vmatpush.bf16.msra.mxu0 %v3606
        %3787 = vmatpush.bf16.msra.mxu0 %v3605
        %3788 = vmatpush.bf16.msra.mxu0 %v3604
        %3789 = vmatmul.bf16.gmra.mxu0 %v1939
        %v3790 = vpop.f32.mrf.mxu0
        %v3791 = vadd.f32 %v3702, %v3790
        %v3792 = vpop.f32.mrf.mxu0
        %v3793 = vadd.f32 %v3704, %v3792
        %3794 = vmatmul.bf16.gmra.mxu0 %v1941
        %v3795 = vpop.f32.mrf.mxu0
        %v3796 = vadd.f32 %v3707, %v3795
        %v3797 = vpop.f32.mrf.mxu0
        %v3798 = vadd.f32 %v3709, %v3797
        %3799 = vmatmul.bf16.gmra.mxu0 %v1943
        %v3800 = vpop.f32.mrf.mxu0
        %v3801 = vadd.f32 %v3712, %v3800
        %v3802 = vpop.f32.mrf.mxu0
        %v3803 = vadd.f32 %v3714, %v3802
        %3804 = vmatmul.bf16.gmra.mxu0 %v1945
        %v3805 = vpop.f32.mrf.mxu0
        %v3806 = vadd.f32 %v3717, %v3805
        %v3807 = vpop.f32.mrf.mxu0
        %v3808 = vadd.f32 %v3719, %v3807
        %3809 = vmatmul.bf16.gmra.mxu0 %v1947
        %v3810 = vpop.f32.mrf.mxu0
        %v3811 = vadd.f32 %v3722, %v3810
        %v3812 = vpop.f32.mrf.mxu0
        %v3813 = vadd.f32 %v3724, %v3812
        %3814 = vmatmul.bf16.gmra.mxu0 %v1949
        %v3815 = vpop.f32.mrf.mxu0
        %v3816 = vadd.f32 %v3727, %v3815
        %v3817 = vpop.f32.mrf.mxu0
        %v3818 = vadd.f32 %v3729, %v3817
        %3819 = vmatmul.bf16.gmra.mxu0 %v1951
        %v3820 = vpop.f32.mrf.mxu0
        %v3821 = vadd.f32 %v3732, %v3820
        %v3822 = vpop.f32.mrf.mxu0
        %v3823 = vadd.f32 %v3734, %v3822
        %3824 = vmatmul.bf16.gmra.mxu0 %v1953
        %v3825 = vpop.f32.mrf.mxu0
        %v3826 = vadd.f32 %v3737, %v3825
        %v3827 = vpop.f32.mrf.mxu0
        %v3828 = vadd.f32 %v3739, %v3827
        %3829 = vmatmul.bf16.gmra.mxu0 %v1955
        %v3830 = vpop.f32.mrf.mxu0
        %v3831 = vadd.f32 %v3742, %v3830
        %v3832 = vpop.f32.mrf.mxu0
        %v3833 = vadd.f32 %v3744, %v3832
        %3834 = vmatmul.bf16.gmra.mxu0 %v1957
        %v3835 = vpop.f32.mrf.mxu0
        %v3836 = vadd.f32 %v3747, %v3835
        %v3837 = vpop.f32.mrf.mxu0
        %v3838 = vadd.f32 %v3749, %v3837
        %3839 = vmatmul.bf16.gmra.mxu0 %v1959
        %v3840 = vpop.f32.mrf.mxu0
        %v3841 = vadd.f32 %v3752, %v3840
        %v3842 = vpop.f32.mrf.mxu0
        %v3843 = vadd.f32 %v3754, %v3842
        %3844 = vmatmul.bf16.gmra.mxu0 %v1961
        %v3845 = vpop.f32.mrf.mxu0
        %v3846 = vadd.f32 %v3757, %v3845
        %v3847 = vpop.f32.mrf.mxu0
        %v3848 = vadd.f32 %v3759, %v3847
        %3849 = vmatmul.bf16.gmra.mxu0 %v1963
        %v3850 = vpop.f32.mrf.mxu0
        %v3851 = vadd.f32 %v3762, %v3850
        %v3852 = vpop.f32.mrf.mxu0
        %v3853 = vadd.f32 %v3764, %v3852
        %3854 = vmatmul.bf16.gmra.mxu0 %v1965
        %v3855 = vpop.f32.mrf.mxu0
        %v3856 = vadd.f32 %v3767, %v3855
        %v3857 = vpop.f32.mrf.mxu0
        %v3858 = vadd.f32 %v3769, %v3857
        %3859 = vmatmul.bf16.gmra.mxu0 %v1967
        %v3860 = vpop.f32.mrf.mxu0
        %v3861 = vadd.f32 %v3772, %v3860
        %v3862 = vpop.f32.mrf.mxu0
        %v3863 = vadd.f32 %v3774, %v3862
        %3864 = vmatmul.bf16.gmra.mxu0 %v1969
        %v3865 = vpop.f32.mrf.mxu0
        %v3866 = vadd.f32 %v3777, %v3865
        %v3867 = vpop.f32.mrf.mxu0
        %v3868 = vadd.f32 %v3779, %v3867
        %3869 = vdwg.mxu0
        %3870 = vmatpush.bf16.msra.mxu0 %v3619
        %3871 = vmatpush.bf16.msra.mxu0 %v3618
        %3872 = vmatpush.bf16.msra.mxu0 %v3617
        %3873 = vmatpush.bf16.msra.mxu0 %v3616
        %3874 = vmatpush.bf16.msra.mxu0 %v3615
        %3875 = vmatpush.bf16.msra.mxu0 %v3614
        %3876 = vmatpush.bf16.msra.mxu0 %v3613
        %3877 = vmatpush.bf16.msra.mxu0 %v3612
        %3878 = vmatmul.bf16.gmra.mxu0 %v1611
        %v3879 = vpop.f32.mrf.mxu0
        %v3880 = vadd.f32 %v3791, %v3879
        %v3881 = vpop.f32.mrf.mxu0
        %v3882 = vadd.f32 %v3793, %v3881
        %3883 = vmatmul.bf16.gmra.mxu0 %v1613
        %v3884 = vpop.f32.mrf.mxu0
        %v3885 = vadd.f32 %v3796, %v3884
        %v3886 = vpop.f32.mrf.mxu0
        %v3887 = vadd.f32 %v3798, %v3886
        %3888 = vmatmul.bf16.gmra.mxu0 %v1615
        %v3889 = vpop.f32.mrf.mxu0
        %v3890 = vadd.f32 %v3801, %v3889
        %v3891 = vpop.f32.mrf.mxu0
        %v3892 = vadd.f32 %v3803, %v3891
        %3893 = vmatmul.bf16.gmra.mxu0 %v1617
        %v3894 = vpop.f32.mrf.mxu0
        %v3895 = vadd.f32 %v3806, %v3894
        %v3896 = vpop.f32.mrf.mxu0
        %v3897 = vadd.f32 %v3808, %v3896
        %3898 = vmatmul.bf16.gmra.mxu0 %v1619
        %v3899 = vpop.f32.mrf.mxu0
        %v3900 = vadd.f32 %v3811, %v3899
        %v3901 = vpop.f32.mrf.mxu0
        %v3902 = vadd.f32 %v3813, %v3901
        %3903 = vmatmul.bf16.gmra.mxu0 %v1621
        %v3904 = vpop.f32.mrf.mxu0
        %v3905 = vadd.f32 %v3816, %v3904
        %v3906 = vpop.f32.mrf.mxu0
        %v3907 = vadd.f32 %v3818, %v3906
        %3908 = vmatmul.bf16.gmra.mxu0 %v1623
        %v3909 = vpop.f32.mrf.mxu0
        %v3910 = vadd.f32 %v3821, %v3909
        %v3911 = vpop.f32.mrf.mxu0
        %v3912 = vadd.f32 %v3823, %v3911
        %3913 = vmatmul.bf16.gmra.mxu0 %v1625
        %v3914 = vpop.f32.mrf.mxu0
        %v3915 = vadd.f32 %v3826, %v3914
        %v3916 = vpop.f32.mrf.mxu0
        %v3917 = vadd.f32 %v3828, %v3916
        %3918 = vmatmul.bf16.gmra.mxu0 %v1627
        %v3919 = vpop.f32.mrf.mxu0
        %v3920 = vadd.f32 %v3831, %v3919
        %v3921 = vpop.f32.mrf.mxu0
        %v3922 = vadd.f32 %v3833, %v3921
        %3923 = vmatmul.bf16.gmra.mxu0 %v1629
        %v3924 = vpop.f32.mrf.mxu0
        %v3925 = vadd.f32 %v3836, %v3924
        %v3926 = vpop.f32.mrf.mxu0
        %v3927 = vadd.f32 %v3838, %v3926
        %3928 = vmatmul.bf16.gmra.mxu0 %v1631
        %v3929 = vpop.f32.mrf.mxu0
        %v3930 = vadd.f32 %v3841, %v3929
        %v3931 = vpop.f32.mrf.mxu0
        %v3932 = vadd.f32 %v3843, %v3931
        %3933 = vmatmul.bf16.gmra.mxu0 %v1633
        %v3934 = vpop.f32.mrf.mxu0
        %v3935 = vadd.f32 %v3846, %v3934
        %v3936 = vpop.f32.mrf.mxu0
        %v3937 = vadd.f32 %v3848, %v3936
        %3938 = vmatmul.bf16.gmra.mxu0 %v1635
        %v3939 = vpop.f32.mrf.mxu0
        %v3940 = vadd.f32 %v3851, %v3939
        %v3941 = vpop.f32.mrf.mxu0
        %v3942 = vadd.f32 %v3853, %v3941
        %3943 = vmatmul.bf16.gmra.mxu0 %v1637
        %v3944 = vpop.f32.mrf.mxu0
        %v3945 = vadd.f32 %v3856, %v3944
        %v3946 = vpop.f32.mrf.mxu0
        %v3947 = vadd.f32 %v3858, %v3946
        %3948 = vmatmul.bf16.gmra.mxu0 %v1639
        %v3949 = vpop.f32.mrf.mxu0
        %v3950 = vadd.f32 %v3861, %v3949
        %v3951 = vpop.f32.mrf.mxu0
        %v3952 = vadd.f32 %v3863, %v3951
        %3953 = vmatmul.bf16.gmra.mxu0 %v1641
        %v3954 = vpop.f32.mrf.mxu0
        %v3955 = vadd.f32 %v3866, %v3954
        %v3956 = vpop.f32.mrf.mxu0
        %v3957 = vadd.f32 %v3868, %v3956
        %3958 = vdwg.mxu0
        %3959 = vmatpush.bf16.msra.mxu0 %v3627
        %3960 = vmatpush.bf16.msra.mxu0 %v3626
        %3961 = vmatpush.bf16.msra.mxu0 %v3625
        %3962 = vmatpush.bf16.msra.mxu0 %v3624
        %3963 = vmatpush.bf16.msra.mxu0 %v3623
        %3964 = vmatpush.bf16.msra.mxu0 %v3622
        %3965 = vmatpush.bf16.msra.mxu0 %v3621
        %3966 = vmatpush.bf16.msra.mxu0 %v3620
        %3967 = vmatmul.bf16.gmra.mxu0 %v1612
        %v3968 = vpop.f32.mrf.mxu0
        %v3969 = vadd.f32 %v3880, %v3968
        %v3970 = vpop.f32.mrf.mxu0
        %v3971 = vadd.f32 %v3882, %v3970
        %3972 = vmatmul.bf16.gmra.mxu0 %v1614
        %v3973 = vpop.f32.mrf.mxu0
        %v3974 = vadd.f32 %v3885, %v3973
        %v3975 = vpop.f32.mrf.mxu0
        %v3976 = vadd.f32 %v3887, %v3975
        %3977 = vmatmul.bf16.gmra.mxu0 %v1616
        %v3978 = vpop.f32.mrf.mxu0
        %v3979 = vadd.f32 %v3890, %v3978
        %v3980 = vpop.f32.mrf.mxu0
        %v3981 = vadd.f32 %v3892, %v3980
        %3982 = vmatmul.bf16.gmra.mxu0 %v1618
        %v3983 = vpop.f32.mrf.mxu0
        %v3984 = vadd.f32 %v3895, %v3983
        %v3985 = vpop.f32.mrf.mxu0
        %v3986 = vadd.f32 %v3897, %v3985
        %3987 = vmatmul.bf16.gmra.mxu0 %v1620
        %v3988 = vpop.f32.mrf.mxu0
        %v3989 = vadd.f32 %v3900, %v3988
        %v3990 = vpop.f32.mrf.mxu0
        %v3991 = vadd.f32 %v3902, %v3990
        %3992 = vmatmul.bf16.gmra.mxu0 %v1622
        %v3993 = vpop.f32.mrf.mxu0
        %v3994 = vadd.f32 %v3905, %v3993
        %v3995 = vpop.f32.mrf.mxu0
        %v3996 = vadd.f32 %v3907, %v3995
        %3997 = vmatmul.bf16.gmra.mxu0 %v1624
        %v3998 = vpop.f32.mrf.mxu0
        %v3999 = vadd.f32 %v3910, %v3998
        %v4000 = vpop.f32.mrf.mxu0
        %v4001 = vadd.f32 %v3912, %v4000
        %4002 = vmatmul.bf16.gmra.mxu0 %v1626
        %v4003 = vpop.f32.mrf.mxu0
        %v4004 = vadd.f32 %v3915, %v4003
        %v4005 = vpop.f32.mrf.mxu0
        %v4006 = vadd.f32 %v3917, %v4005
        %4007 = vmatmul.bf16.gmra.mxu0 %v1628
        %v4008 = vpop.f32.mrf.mxu0
        %v4009 = vadd.f32 %v3920, %v4008
        %v4010 = vpop.f32.mrf.mxu0
        %v4011 = vadd.f32 %v3922, %v4010
        %4012 = vmatmul.bf16.gmra.mxu0 %v1630
        %v4013 = vpop.f32.mrf.mxu0
        %v4014 = vadd.f32 %v3925, %v4013
        %v4015 = vpop.f32.mrf.mxu0
        %v4016 = vadd.f32 %v3927, %v4015
        %4017 = vmatmul.bf16.gmra.mxu0 %v1632
        %v4018 = vpop.f32.mrf.mxu0
        %v4019 = vadd.f32 %v3930, %v4018
        %v4020 = vpop.f32.mrf.mxu0
        %v4021 = vadd.f32 %v3932, %v4020
        %4022 = vmatmul.bf16.gmra.mxu0 %v1634
        %v4023 = vpop.f32.mrf.mxu0
        %v4024 = vadd.f32 %v3935, %v4023
        %v4025 = vpop.f32.mrf.mxu0
        %v4026 = vadd.f32 %v3937, %v4025
        %4027 = vmatmul.bf16.gmra.mxu0 %v1636
        %v4028 = vpop.f32.mrf.mxu0
        %v4029 = vadd.f32 %v3940, %v4028
        %v4030 = vpop.f32.mrf.mxu0
        %v4031 = vadd.f32 %v3942, %v4030
        %4032 = vmatmul.bf16.gmra.mxu0 %v1638
        %v4033 = vpop.f32.mrf.mxu0
        %v4034 = vadd.f32 %v3945, %v4033
        %v4035 = vpop.f32.mrf.mxu0
        %v4036 = vadd.f32 %v3947, %v4035
        %4037 = vmatmul.bf16.gmra.mxu0 %v1640
        %v4038 = vpop.f32.mrf.mxu0
        %v4039 = vadd.f32 %v3950, %v4038
        %v4040 = vpop.f32.mrf.mxu0
        %v4041 = vadd.f32 %v3952, %v4040
        %4042 = vmatmul.bf16.gmra.mxu0 %v1642
        %v4043 = vpop.f32.mrf.mxu0
        %v4044 = vadd.f32 %v3955, %v4043
        %v4045 = vpop.f32.mrf.mxu0
        %v4046 = vadd.f32 %v3957, %v4045
        %4047 = vdwg.mxu0
        %4048 = vmatpush.bf16.msra.mxu0 %v3635
        %4049 = vmatpush.bf16.msra.mxu0 %v3634
        %4050 = vmatpush.bf16.msra.mxu0 %v3633
        %4051 = vmatpush.bf16.msra.mxu0 %v3632
        %4052 = vmatpush.bf16.msra.mxu0 %v3631
        %4053 = vmatpush.bf16.msra.mxu0 %v3630
        %4054 = vmatpush.bf16.msra.mxu0 %v3629
        %4055 = vmatpush.bf16.msra.mxu0 %v3628
        %4056 = vmatmul.bf16.gmra.mxu0 %v2071
        %v4057 = vpop.f32.mrf.mxu0
        %v4058 = vadd.f32 %v3969, %v4057
        %v4059 = vpop.f32.mrf.mxu0
        %v4060 = vadd.f32 %v3971, %v4059
        %4061 = vmatmul.bf16.gmra.mxu0 %v2085
        %v4062 = vpop.f32.mrf.mxu0
        %v4063 = vadd.f32 %v3974, %v4062
        %v4064 = vpop.f32.mrf.mxu0
        %v4065 = vadd.f32 %v3976, %v4064
        %4066 = vmatmul.bf16.gmra.mxu0 %v2099
        %v4067 = vpop.f32.mrf.mxu0
        %v4068 = vadd.f32 %v3979, %v4067
        %v4069 = vpop.f32.mrf.mxu0
        %v4070 = vadd.f32 %v3981, %v4069
        %4071 = vmatmul.bf16.gmra.mxu0 %v2113
        %v4072 = vpop.f32.mrf.mxu0
        %v4073 = vadd.f32 %v3984, %v4072
        %v4074 = vpop.f32.mrf.mxu0
        %v4075 = vadd.f32 %v3986, %v4074
        %4076 = vmatmul.bf16.gmra.mxu0 %v2127
        %v4077 = vpop.f32.mrf.mxu0
        %v4078 = vadd.f32 %v3989, %v4077
        %v4079 = vpop.f32.mrf.mxu0
        %v4080 = vadd.f32 %v3991, %v4079
        %4081 = vmatmul.bf16.gmra.mxu0 %v2141
        %v4082 = vpop.f32.mrf.mxu0
        %v4083 = vadd.f32 %v3994, %v4082
        %v4084 = vpop.f32.mrf.mxu0
        %v4085 = vadd.f32 %v3996, %v4084
        %4086 = vmatmul.bf16.gmra.mxu0 %v2155
        %v4087 = vpop.f32.mrf.mxu0
        %v4088 = vadd.f32 %v3999, %v4087
        %v4089 = vpop.f32.mrf.mxu0
        %v4090 = vadd.f32 %v4001, %v4089
        %4091 = vmatmul.bf16.gmra.mxu0 %v2169
        %v4092 = vpop.f32.mrf.mxu0
        %v4093 = vadd.f32 %v4004, %v4092
        %v4094 = vpop.f32.mrf.mxu0
        %v4095 = vadd.f32 %v4006, %v4094
        %4096 = vmatmul.bf16.gmra.mxu0 %v2183
        %v4097 = vpop.f32.mrf.mxu0
        %v4098 = vadd.f32 %v4009, %v4097
        %v4099 = vpop.f32.mrf.mxu0
        %v4100 = vadd.f32 %v4011, %v4099
        %4101 = vmatmul.bf16.gmra.mxu0 %v2197
        %v4102 = vpop.f32.mrf.mxu0
        %v4103 = vadd.f32 %v4014, %v4102
        %v4104 = vpop.f32.mrf.mxu0
        %v4105 = vadd.f32 %v4016, %v4104
        %4106 = vmatmul.bf16.gmra.mxu0 %v2211
        %v4107 = vpop.f32.mrf.mxu0
        %v4108 = vadd.f32 %v4019, %v4107
        %v4109 = vpop.f32.mrf.mxu0
        %v4110 = vadd.f32 %v4021, %v4109
        %4111 = vmatmul.bf16.gmra.mxu0 %v2225
        %v4112 = vpop.f32.mrf.mxu0
        %v4113 = vadd.f32 %v4024, %v4112
        %v4114 = vpop.f32.mrf.mxu0
        %v4115 = vadd.f32 %v4026, %v4114
        %4116 = vmatmul.bf16.gmra.mxu0 %v2239
        %v4117 = vpop.f32.mrf.mxu0
        %v4118 = vadd.f32 %v4029, %v4117
        %v4119 = vpop.f32.mrf.mxu0
        %v4120 = vadd.f32 %v4031, %v4119
        %4121 = vmatmul.bf16.gmra.mxu0 %v2253
        %v4122 = vpop.f32.mrf.mxu0
        %v4123 = vadd.f32 %v4034, %v4122
        %v4124 = vpop.f32.mrf.mxu0
        %v4125 = vadd.f32 %v4036, %v4124
        %4126 = vmatmul.bf16.gmra.mxu0 %v2267
        %v4127 = vpop.f32.mrf.mxu0
        %v4128 = vadd.f32 %v4039, %v4127
        %v4129 = vpop.f32.mrf.mxu0
        %v4130 = vadd.f32 %v4041, %v4129
        %4131 = vmatmul.bf16.gmra.mxu0 %v2281
        %v4132 = vpop.f32.mrf.mxu0
        %v4133 = vadd.f32 %v4044, %v4132
        %v4134 = vpop.f32.mrf.mxu0
        %v4135 = vadd.f32 %v4046, %v4134
        %4136 = vdwg.mxu0
        %4137 = vmatpush.bf16.msra.mxu0 %v3643
        %4138 = vmatpush.bf16.msra.mxu0 %v3642
        %4139 = vmatpush.bf16.msra.mxu0 %v3641
        %4140 = vmatpush.bf16.msra.mxu0 %v3640
        %4141 = vmatpush.bf16.msra.mxu0 %v3639
        %4142 = vmatpush.bf16.msra.mxu0 %v3638
        %4143 = vmatpush.bf16.msra.mxu0 %v3637
        %4144 = vmatpush.bf16.msra.mxu0 %v3636
        %4145 = vmatmul.bf16.gmra.mxu0 %v2078
        %v4146 = vpop.f32.mrf.mxu0
        %v4147 = vadd.f32 %v4058, %v4146
        %v4148 = vpop.f32.mrf.mxu0
        %v4149 = vadd.f32 %v4060, %v4148
        %4150 = vmatmul.bf16.gmra.mxu0 %v2092
        %v4151 = vpop.f32.mrf.mxu0
        %v4152 = vadd.f32 %v4063, %v4151
        %v4153 = vpop.f32.mrf.mxu0
        %v4154 = vadd.f32 %v4065, %v4153
        %4155 = vmatmul.bf16.gmra.mxu0 %v2106
        %v4156 = vpop.f32.mrf.mxu0
        %v4157 = vadd.f32 %v4068, %v4156
        %v4158 = vpop.f32.mrf.mxu0
        %v4159 = vadd.f32 %v4070, %v4158
        %4160 = vmatmul.bf16.gmra.mxu0 %v2120
        %v4161 = vpop.f32.mrf.mxu0
        %v4162 = vadd.f32 %v4073, %v4161
        %v4163 = vpop.f32.mrf.mxu0
        %v4164 = vadd.f32 %v4075, %v4163
        %4165 = vmatmul.bf16.gmra.mxu0 %v2134
        %v4166 = vpop.f32.mrf.mxu0
        %v4167 = vadd.f32 %v4078, %v4166
        %v4168 = vpop.f32.mrf.mxu0
        %v4169 = vadd.f32 %v4080, %v4168
        %4170 = vmatmul.bf16.gmra.mxu0 %v2148
        %v4171 = vpop.f32.mrf.mxu0
        %v4172 = vadd.f32 %v4083, %v4171
        %v4173 = vpop.f32.mrf.mxu0
        %v4174 = vadd.f32 %v4085, %v4173
        %4175 = vmatmul.bf16.gmra.mxu0 %v2162
        %v4176 = vpop.f32.mrf.mxu0
        %v4177 = vadd.f32 %v4088, %v4176
        %v4178 = vpop.f32.mrf.mxu0
        %v4179 = vadd.f32 %v4090, %v4178
        %4180 = vmatmul.bf16.gmra.mxu0 %v2176
        %v4181 = vpop.f32.mrf.mxu0
        %v4182 = vadd.f32 %v4093, %v4181
        %v4183 = vpop.f32.mrf.mxu0
        %v4184 = vadd.f32 %v4095, %v4183
        %4185 = vmatmul.bf16.gmra.mxu0 %v2190
        %v4186 = vpop.f32.mrf.mxu0
        %v4187 = vadd.f32 %v4098, %v4186
        %v4188 = vpop.f32.mrf.mxu0
        %v4189 = vadd.f32 %v4100, %v4188
        %4190 = vmatmul.bf16.gmra.mxu0 %v2204
        %v4191 = vpop.f32.mrf.mxu0
        %v4192 = vadd.f32 %v4103, %v4191
        %v4193 = vpop.f32.mrf.mxu0
        %v4194 = vadd.f32 %v4105, %v4193
        %4195 = vmatmul.bf16.gmra.mxu0 %v2218
        %v4196 = vpop.f32.mrf.mxu0
        %v4197 = vadd.f32 %v4108, %v4196
        %v4198 = vpop.f32.mrf.mxu0
        %v4199 = vadd.f32 %v4110, %v4198
        %4200 = vmatmul.bf16.gmra.mxu0 %v2232
        %v4201 = vpop.f32.mrf.mxu0
        %v4202 = vadd.f32 %v4113, %v4201
        %v4203 = vpop.f32.mrf.mxu0
        %v4204 = vadd.f32 %v4115, %v4203
        %4205 = vmatmul.bf16.gmra.mxu0 %v2246
        %v4206 = vpop.f32.mrf.mxu0
        %v4207 = vadd.f32 %v4118, %v4206
        %v4208 = vpop.f32.mrf.mxu0
        %v4209 = vadd.f32 %v4120, %v4208
        %4210 = vmatmul.bf16.gmra.mxu0 %v2260
        %v4211 = vpop.f32.mrf.mxu0
        %v4212 = vadd.f32 %v4123, %v4211
        %v4213 = vpop.f32.mrf.mxu0
        %v4214 = vadd.f32 %v4125, %v4213
        %4215 = vmatmul.bf16.gmra.mxu0 %v2274
        %v4216 = vpop.f32.mrf.mxu0
        %v4217 = vadd.f32 %v4128, %v4216
        %v4218 = vpop.f32.mrf.mxu0
        %v4219 = vadd.f32 %v4130, %v4218
        %4220 = vmatmul.bf16.gmra.mxu0 %v2288
        %v4221 = vpop.f32.mrf.mxu0
        %v4222 = vadd.f32 %v4133, %v4221
        %v4223 = vpop.f32.mrf.mxu0
        %v4224 = vadd.f32 %v4135, %v4223
        %4225 = vdwg.mxu0
        %s4226 = scalar_lea.vmem %s3, 768
        %v4227 = vld [vmem:[%s4226] sm:$0xf]
        %v4228 = vld [vmem:[%s4226 + $0x4] sm:$0xf]
        %v4229 = vld [vmem:[%s4226 + $0x8] sm:$0xf]
        %v4230 = vld [vmem:[%s4226 + $0xc] sm:$0xf]
        %v4231 = vld [vmem:[%s4226 + $0x10] sm:$0xf]
        %v4232 = vld [vmem:[%s4226 + $0x14] sm:$0xf]
        %v4233 = vld [vmem:[%s4226 + $0x18] sm:$0xf]
        %v4234 = vld [vmem:[%s4226 + $0x1c] sm:$0xf]
        %v4235 = vld [vmem:[%s4226 + $0x20] sm:$0xf]
        %v4236 = vld [vmem:[%s4226 + $0x24] sm:$0xf]
        %v4237 = vld [vmem:[%s4226 + $0x28] sm:$0xf]
        %v4238 = vld [vmem:[%s4226 + $0x2c] sm:$0xf]
        %v4239 = vld [vmem:[%s4226 + $0x30] sm:$0xf]
        %v4240 = vld [vmem:[%s4226 + $0x34] sm:$0xf]
        %v4241 = vld [vmem:[%s4226 + $0x38] sm:$0xf]
        %v4242 = vld [vmem:[%s4226 + $0x3c] sm:$0xf]
        %v4243 = vld [vmem:[%s4226 + $0x40] sm:$0xf]
        %v4244 = vld [vmem:[%s4226 + $0x44] sm:$0xf]
        %v4245 = vld [vmem:[%s4226 + $0x48] sm:$0xf]
        %v4246 = vld [vmem:[%s4226 + $0x4c] sm:$0xf]
        %v4247 = vld [vmem:[%s4226 + $0x50] sm:$0xf]
        %v4248 = vld [vmem:[%s4226 + $0x54] sm:$0xf]
        %v4249 = vld [vmem:[%s4226 + $0x58] sm:$0xf]
        %v4250 = vld [vmem:[%s4226 + $0x5c] sm:$0xf]
        %v4251 = vld [vmem:[%s4226 + $0x60] sm:$0xf]
        %v4252 = vld [vmem:[%s4226 + $0x64] sm:$0xf]
        %v4253 = vld [vmem:[%s4226 + $0x68] sm:$0xf]
        %v4254 = vld [vmem:[%s4226 + $0x6c] sm:$0xf]
        %v4255 = vld [vmem:[%s4226 + $0x70] sm:$0xf]
        %v4256 = vld [vmem:[%s4226 + $0x74] sm:$0xf]
        %v4257 = vld [vmem:[%s4226 + $0x78] sm:$0xf]
        %v4258 = vld [vmem:[%s4226 + $0x7c] sm:$0xf]
        %v4259 = vld [vmem:[%s4226 + $0x80] sm:$0xf]
        %v4260 = vld [vmem:[%s4226 + $0x84] sm:$0xf]
        %v4261 = vld [vmem:[%s4226 + $0x88] sm:$0xf]
        %v4262 = vld [vmem:[%s4226 + $0x8c] sm:$0xf]
        %v4263 = vld [vmem:[%s4226 + $0x90] sm:$0xf]
        %v4264 = vld [vmem:[%s4226 + $0x94] sm:$0xf]
        %v4265 = vld [vmem:[%s4226 + $0x98] sm:$0xf]
        %v4266 = vld [vmem:[%s4226 + $0x9c] sm:$0xf]
        %v4267 = vld [vmem:[%s4226 + $0xa0] sm:$0xf]
        %v4268 = vld [vmem:[%s4226 + $0xa4] sm:$0xf]
        %v4269 = vld [vmem:[%s4226 + $0xa8] sm:$0xf]
        %v4270 = vld [vmem:[%s4226 + $0xac] sm:$0xf]
        %v4271 = vld [vmem:[%s4226 + $0xb0] sm:$0xf]
        %v4272 = vld [vmem:[%s4226 + $0xb4] sm:$0xf]
        %v4273 = vld [vmem:[%s4226 + $0xb8] sm:$0xf]
        %v4274 = vld [vmem:[%s4226 + $0xbc] sm:$0xf]
        %v4275 = vld [vmem:[%s4226 + $0xc0] sm:$0xf]
        %v4276 = vld [vmem:[%s4226 + $0xc4] sm:$0xf]
        %v4277 = vld [vmem:[%s4226 + $0xc8] sm:$0xf]
        %v4278 = vld [vmem:[%s4226 + $0xcc] sm:$0xf]
        %v4279 = vld [vmem:[%s4226 + $0xd0] sm:$0xf]
        %v4280 = vld [vmem:[%s4226 + $0xd4] sm:$0xf]
        %v4281 = vld [vmem:[%s4226 + $0xd8] sm:$0xf]
        %v4282 = vld [vmem:[%s4226 + $0xdc] sm:$0xf]
        %v4283 = vld [vmem:[%s4226 + $0xe0] sm:$0xf]
        %v4284 = vld [vmem:[%s4226 + $0xe4] sm:$0xf]
        %v4285 = vld [vmem:[%s4226 + $0xe8] sm:$0xf]
        %v4286 = vld [vmem:[%s4226 + $0xec] sm:$0xf]
        %v4287 = vld [vmem:[%s4226 + $0xf0] sm:$0xf]
        %v4288 = vld [vmem:[%s4226 + $0xf4] sm:$0xf]
        %v4289 = vld [vmem:[%s4226 + $0xf8] sm:$0xf]
        %v4290 = vld [vmem:[%s4226 + $0xfc] sm:$0xf]
        %v4291 = vld [vmem:[%s4226 + $0x100] sm:$0xf]
        %v4292 = vld [vmem:[%s4226 + $0x104] sm:$0xf]
        %v4293 = vld [vmem:[%s4226 + $0x108] sm:$0xf]
        %v4294 = vld [vmem:[%s4226 + $0x10c] sm:$0xf]
        %v4295 = vld [vmem:[%s4226 + $0x110] sm:$0xf]
        %v4296 = vld [vmem:[%s4226 + $0x114] sm:$0xf]
        %v4297 = vld [vmem:[%s4226 + $0x118] sm:$0xf]
        %v4298 = vld [vmem:[%s4226 + $0x11c] sm:$0xf]
        %v4299 = vld [vmem:[%s4226 + $0x120] sm:$0xf]
        %v4300 = vld [vmem:[%s4226 + $0x124] sm:$0xf]
        %v4301 = vld [vmem:[%s4226 + $0x128] sm:$0xf]
        %v4302 = vld [vmem:[%s4226 + $0x12c] sm:$0xf]
        %v4303 = vld [vmem:[%s4226 + $0x130] sm:$0xf]
        %v4304 = vld [vmem:[%s4226 + $0x134] sm:$0xf]
        %v4305 = vld [vmem:[%s4226 + $0x138] sm:$0xf]
        %v4306 = vld [vmem:[%s4226 + $0x13c] sm:$0xf]
        %v4307 = vld [vmem:[%s4226 + $0x140] sm:$0xf]
        %v4308 = vld [vmem:[%s4226 + $0x144] sm:$0xf]
        %v4309 = vld [vmem:[%s4226 + $0x148] sm:$0xf]
        %v4310 = vld [vmem:[%s4226 + $0x14c] sm:$0xf]
        %v4311 = vld [vmem:[%s4226 + $0x150] sm:$0xf]
        %v4312 = vld [vmem:[%s4226 + $0x154] sm:$0xf]
        %v4313 = vld [vmem:[%s4226 + $0x158] sm:$0xf]
        %v4314 = vld [vmem:[%s4226 + $0x15c] sm:$0xf]
        %v4315 = vld [vmem:[%s4226 + $0x160] sm:$0xf]
        %v4316 = vld [vmem:[%s4226 + $0x164] sm:$0xf]
        %v4317 = vld [vmem:[%s4226 + $0x168] sm:$0xf]
        %v4318 = vld [vmem:[%s4226 + $0x16c] sm:$0xf]
        %v4319 = vld [vmem:[%s4226 + $0x170] sm:$0xf]
        %v4320 = vld [vmem:[%s4226 + $0x174] sm:$0xf]
        %v4321 = vld [vmem:[%s4226 + $0x178] sm:$0xf]
        %v4322 = vld [vmem:[%s4226 + $0x17c] sm:$0xf]
        %v4419 = vunpack.c.l.b16 %v4227
        %v4420 = vunpack.c.l.b16 %v4228
        %v4421 = vunpack.c.l.b16 %v4229
        %v4422 = vunpack.c.l.b16 %v4230
        %v4423 = vunpack.c.l.b16 %v4231
        %v4424 = vunpack.c.l.b16 %v4232
        %v4425 = vunpack.c.l.b16 %v4233
        %v4426 = vunpack.c.l.b16 %v4234
        %v4427 = vunpack.c.l.b16 %v4235
        %v4428 = vunpack.c.l.b16 %v4236
        %v4429 = vunpack.c.l.b16 %v4237
        %v4430 = vunpack.c.l.b16 %v4238
        %v4431 = vunpack.c.l.b16 %v4239
        %v4432 = vunpack.c.l.b16 %v4240
        %v4433 = vunpack.c.l.b16 %v4241
        %v4434 = vunpack.c.l.b16 %v4242
        %v4435 = vunpack.c.l.b16 %v4243
        %v4436 = vunpack.c.l.b16 %v4244
        %v4437 = vunpack.c.l.b16 %v4245
        %v4438 = vunpack.c.l.b16 %v4246
        %v4439 = vunpack.c.l.b16 %v4247
        %v4440 = vunpack.c.l.b16 %v4248
        %v4441 = vunpack.c.l.b16 %v4249
        %v4442 = vunpack.c.l.b16 %v4250
        %v4443 = vunpack.c.l.b16 %v4251
        %v4444 = vunpack.c.l.b16 %v4252
        %v4445 = vunpack.c.l.b16 %v4253
        %v4446 = vunpack.c.l.b16 %v4254
        %v4447 = vunpack.c.l.b16 %v4255
        %v4448 = vunpack.c.l.b16 %v4256
        %v4449 = vunpack.c.l.b16 %v4257
        %v4450 = vunpack.c.l.b16 %v4258
        %v4451 = vunpack.c.l.b16 %v4259
        %v4452 = vunpack.c.l.b16 %v4260
        %v4453 = vunpack.c.l.b16 %v4261
        %v4454 = vunpack.c.l.b16 %v4262
        %v4455 = vunpack.c.l.b16 %v4263
        %v4456 = vunpack.c.l.b16 %v4264
        %v4457 = vunpack.c.l.b16 %v4265
        %v4458 = vunpack.c.l.b16 %v4266
        %v4459 = vunpack.c.l.b16 %v4267
        %v4460 = vunpack.c.l.b16 %v4268
        %v4461 = vunpack.c.l.b16 %v4269
        %v4462 = vunpack.c.l.b16 %v4270
        %v4463 = vunpack.c.l.b16 %v4271
        %v4464 = vunpack.c.l.b16 %v4272
        %v4465 = vunpack.c.l.b16 %v4273
        %v4466 = vunpack.c.l.b16 %v4274
        %v4467 = vunpack.c.l.b16 %v4275
        %v4468 = vunpack.c.l.b16 %v4276
        %v4469 = vunpack.c.l.b16 %v4277
        %v4470 = vunpack.c.l.b16 %v4278
        %v4471 = vunpack.c.l.b16 %v4279
        %v4472 = vunpack.c.l.b16 %v4280
        %v4473 = vunpack.c.l.b16 %v4281
        %v4474 = vunpack.c.l.b16 %v4282
        %v4475 = vunpack.c.l.b16 %v4283
        %v4476 = vunpack.c.l.b16 %v4284
        %v4477 = vunpack.c.l.b16 %v4285
        %v4478 = vunpack.c.l.b16 %v4286
        %v4479 = vunpack.c.l.b16 %v4287
        %v4480 = vunpack.c.l.b16 %v4288
        %v4481 = vunpack.c.l.b16 %v4289
        %v4482 = vunpack.c.l.b16 %v4290
        %v4483 = vunpack.c.l.b16 %v4291
        %v4484 = vunpack.c.l.b16 %v4292
        %v4485 = vunpack.c.l.b16 %v4293
        %v4486 = vunpack.c.l.b16 %v4294
        %v4487 = vunpack.c.l.b16 %v4295
        %v4488 = vunpack.c.l.b16 %v4296
        %v4489 = vunpack.c.l.b16 %v4297
        %v4490 = vunpack.c.l.b16 %v4298
        %v4491 = vunpack.c.l.b16 %v4299
        %v4492 = vunpack.c.l.b16 %v4300
        %v4493 = vunpack.c.l.b16 %v4301
        %v4494 = vunpack.c.l.b16 %v4302
        %v4495 = vunpack.c.l.b16 %v4303
        %v4496 = vunpack.c.l.b16 %v4304
        %v4497 = vunpack.c.l.b16 %v4305
        %v4498 = vunpack.c.l.b16 %v4306
        %v4499 = vunpack.c.l.b16 %v4307
        %v4500 = vunpack.c.l.b16 %v4308
        %v4501 = vunpack.c.l.b16 %v4309
        %v4502 = vunpack.c.l.b16 %v4310
        %v4503 = vunpack.c.l.b16 %v4311
        %v4504 = vunpack.c.l.b16 %v4312
        %v4505 = vunpack.c.l.b16 %v4313
        %v4506 = vunpack.c.l.b16 %v4314
        %v4507 = vunpack.c.l.b16 %v4315
        %v4508 = vunpack.c.l.b16 %v4316
        %v4509 = vunpack.c.l.b16 %v4317
        %v4510 = vunpack.c.l.b16 %v4318
        %v4511 = vunpack.c.l.b16 %v4319
        %v4512 = vunpack.c.l.b16 %v4320
        %v4513 = vunpack.c.l.b16 %v4321
        %v4514 = vunpack.c.l.b16 %v4322
        %v4515 = vpack.c.b16 %v4420, %v4419
        %v4516 = vpack.c.b16 %v4422, %v4421
        %v4517 = vpack.c.b16 %v4424, %v4423
        %v4518 = vpack.c.b16 %v4426, %v4425
        %v4519 = vpack.c.b16 %v4428, %v4427
        %v4520 = vpack.c.b16 %v4430, %v4429
        %v4521 = vpack.c.b16 %v4432, %v4431
        %v4522 = vpack.c.b16 %v4434, %v4433
        %v4523 = vpack.c.b16 %v4436, %v4435
        %v4524 = vpack.c.b16 %v4438, %v4437
        %v4525 = vpack.c.b16 %v4440, %v4439
        %v4526 = vpack.c.b16 %v4442, %v4441
        %v4527 = vpack.c.b16 %v4444, %v4443
        %v4528 = vpack.c.b16 %v4446, %v4445
        %v4529 = vpack.c.b16 %v4448, %v4447
        %v4530 = vpack.c.b16 %v4450, %v4449
        %v4531 = vpack.c.b16 %v4452, %v4451
        %v4532 = vpack.c.b16 %v4454, %v4453
        %v4533 = vpack.c.b16 %v4456, %v4455
        %v4534 = vpack.c.b16 %v4458, %v4457
        %v4535 = vpack.c.b16 %v4460, %v4459
        %v4536 = vpack.c.b16 %v4462, %v4461
        %v4537 = vpack.c.b16 %v4464, %v4463
        %v4538 = vpack.c.b16 %v4466, %v4465
        %v4539 = vpack.c.b16 %v4468, %v4467
        %v4540 = vpack.c.b16 %v4470, %v4469
        %v4541 = vpack.c.b16 %v4472, %v4471
        %v4542 = vpack.c.b16 %v4474, %v4473
        %v4543 = vpack.c.b16 %v4476, %v4475
        %v4544 = vpack.c.b16 %v4478, %v4477
        %v4545 = vpack.c.b16 %v4480, %v4479
        %v4546 = vpack.c.b16 %v4482, %v4481
        %v4547 = vpack.c.b16 %v4484, %v4483
        %v4548 = vpack.c.b16 %v4486, %v4485
        %v4549 = vpack.c.b16 %v4488, %v4487
        %v4550 = vpack.c.b16 %v4490, %v4489
        %v4551 = vpack.c.b16 %v4492, %v4491
        %v4552 = vpack.c.b16 %v4494, %v4493
        %v4553 = vpack.c.b16 %v4496, %v4495
        %v4554 = vpack.c.b16 %v4498, %v4497
        %v4555 = vpack.c.b16 %v4500, %v4499
        %v4556 = vpack.c.b16 %v4502, %v4501
        %v4557 = vpack.c.b16 %v4504, %v4503
        %v4558 = vpack.c.b16 %v4506, %v4505
        %v4559 = vpack.c.b16 %v4508, %v4507
        %v4560 = vpack.c.b16 %v4510, %v4509
        %v4561 = vpack.c.b16 %v4512, %v4511
        %v4562 = vpack.c.b16 %v4514, %v4513
        %4611 = vmatpush.bf16.msra.mxu0 %v4522
        %4612 = vmatpush.bf16.msra.mxu0 %v4521
        %4613 = vmatpush.bf16.msra.mxu0 %v4520
        %4614 = vmatpush.bf16.msra.mxu0 %v4519
        %4615 = vmatpush.bf16.msra.mxu0 %v4518
        %4616 = vmatpush.bf16.msra.mxu0 %v4517
        %4617 = vmatpush.bf16.msra.mxu0 %v4516
        %4618 = vmatpush.bf16.msra.mxu0 %v4515
        %4619 = vmatmul.bf16.gmra.mxu0 %v1942
        %v4620 = vpop.f32.mrf.mxu0
        %v4621 = vadd.f32 0.0, %v4620
        %v4622 = vpop.f32.mrf.mxu0
        %v4623 = vadd.f32 0.0, %v4622
        %4624 = vmatmul.bf16.gmra.mxu0 %v1944
        %v4625 = vpop.f32.mrf.mxu0
        %v4626 = vadd.f32 0.0, %v4625
        %v4627 = vpop.f32.mrf.mxu0
        %v4628 = vadd.f32 0.0, %v4627
        %4629 = vmatmul.bf16.gmra.mxu0 %v1946
        %v4630 = vpop.f32.mrf.mxu0
        %v4631 = vadd.f32 0.0, %v4630
        %v4632 = vpop.f32.mrf.mxu0
        %v4633 = vadd.f32 0.0, %v4632
        %4634 = vmatmul.bf16.gmra.mxu0 %v1948
        %v4635 = vpop.f32.mrf.mxu0
        %v4636 = vadd.f32 0.0, %v4635
        %v4637 = vpop.f32.mrf.mxu0
        %v4638 = vadd.f32 0.0, %v4637
        %4639 = vmatmul.bf16.gmra.mxu0 %v1950
        %v4640 = vpop.f32.mrf.mxu0
        %v4641 = vadd.f32 0.0, %v4640
        %v4642 = vpop.f32.mrf.mxu0
        %v4643 = vadd.f32 0.0, %v4642
        %4644 = vmatmul.bf16.gmra.mxu0 %v1952
        %v4645 = vpop.f32.mrf.mxu0
        %v4646 = vadd.f32 0.0, %v4645
        %v4647 = vpop.f32.mrf.mxu0
        %v4648 = vadd.f32 0.0, %v4647
        %4649 = vmatmul.bf16.gmra.mxu0 %v1954
        %v4650 = vpop.f32.mrf.mxu0
        %v4651 = vadd.f32 0.0, %v4650
        %v4652 = vpop.f32.mrf.mxu0
        %v4653 = vadd.f32 0.0, %v4652
        %4654 = vmatmul.bf16.gmra.mxu0 %v1956
        %v4655 = vpop.f32.mrf.mxu0
        %v4656 = vadd.f32 0.0, %v4655
        %v4657 = vpop.f32.mrf.mxu0
        %v4658 = vadd.f32 0.0, %v4657
        %4659 = vmatmul.bf16.gmra.mxu0 %v1958
        %v4660 = vpop.f32.mrf.mxu0
        %v4661 = vadd.f32 0.0, %v4660
        %v4662 = vpop.f32.mrf.mxu0
        %v4663 = vadd.f32 0.0, %v4662
        %4664 = vmatmul.bf16.gmra.mxu0 %v1960
        %v4665 = vpop.f32.mrf.mxu0
        %v4666 = vadd.f32 0.0, %v4665
        %v4667 = vpop.f32.mrf.mxu0
        %v4668 = vadd.f32 0.0, %v4667
        %4669 = vmatmul.bf16.gmra.mxu0 %v1962
        %v4670 = vpop.f32.mrf.mxu0
        %v4671 = vadd.f32 0.0, %v4670
        %v4672 = vpop.f32.mrf.mxu0
        %v4673 = vadd.f32 0.0, %v4672
        %4674 = vmatmul.bf16.gmra.mxu0 %v1964
        %v4675 = vpop.f32.mrf.mxu0
        %v4676 = vadd.f32 0.0, %v4675
        %v4677 = vpop.f32.mrf.mxu0
        %v4678 = vadd.f32 0.0, %v4677
        %4679 = vmatmul.bf16.gmra.mxu0 %v1966
        %v4680 = vpop.f32.mrf.mxu0
        %v4681 = vadd.f32 0.0, %v4680
        %v4682 = vpop.f32.mrf.mxu0
        %v4683 = vadd.f32 0.0, %v4682
        %4684 = vmatmul.bf16.gmra.mxu0 %v1968
        %v4685 = vpop.f32.mrf.mxu0
        %v4686 = vadd.f32 0.0, %v4685
        %v4687 = vpop.f32.mrf.mxu0
        %v4688 = vadd.f32 0.0, %v4687
        %4689 = vmatmul.bf16.gmra.mxu0 %v1970
        %v4690 = vpop.f32.mrf.mxu0
        %v4691 = vadd.f32 0.0, %v4690
        %v4692 = vpop.f32.mrf.mxu0
        %v4693 = vadd.f32 0.0, %v4692
        %4694 = vmatmul.bf16.gmra.mxu0 %v1972
        %v4695 = vpop.f32.mrf.mxu0
        %v4696 = vadd.f32 0.0, %v4695
        %v4697 = vpop.f32.mrf.mxu0
        %v4698 = vadd.f32 0.0, %v4697
        %4699 = vdwg.mxu0
        %4700 = vmatpush.bf16.msra.mxu0 %v4530
        %4701 = vmatpush.bf16.msra.mxu0 %v4529
        %4702 = vmatpush.bf16.msra.mxu0 %v4528
        %4703 = vmatpush.bf16.msra.mxu0 %v4527
        %4704 = vmatpush.bf16.msra.mxu0 %v4526
        %4705 = vmatpush.bf16.msra.mxu0 %v4525
        %4706 = vmatpush.bf16.msra.mxu0 %v4524
        %4707 = vmatpush.bf16.msra.mxu0 %v4523
        %4708 = vmatmul.bf16.gmra.mxu0 %v1943
        %v4709 = vpop.f32.mrf.mxu0
        %v4710 = vadd.f32 %v4621, %v4709
        %v4711 = vpop.f32.mrf.mxu0
        %v4712 = vadd.f32 %v4623, %v4711
        %4713 = vmatmul.bf16.gmra.mxu0 %v1945
        %v4714 = vpop.f32.mrf.mxu0
        %v4715 = vadd.f32 %v4626, %v4714
        %v4716 = vpop.f32.mrf.mxu0
        %v4717 = vadd.f32 %v4628, %v4716
        %4718 = vmatmul.bf16.gmra.mxu0 %v1947
        %v4719 = vpop.f32.mrf.mxu0
        %v4720 = vadd.f32 %v4631, %v4719
        %v4721 = vpop.f32.mrf.mxu0
        %v4722 = vadd.f32 %v4633, %v4721
        %4723 = vmatmul.bf16.gmra.mxu0 %v1949
        %v4724 = vpop.f32.mrf.mxu0
        %v4725 = vadd.f32 %v4636, %v4724
        %v4726 = vpop.f32.mrf.mxu0
        %v4727 = vadd.f32 %v4638, %v4726
        %4728 = vmatmul.bf16.gmra.mxu0 %v1951
        %v4729 = vpop.f32.mrf.mxu0
        %v4730 = vadd.f32 %v4641, %v4729
        %v4731 = vpop.f32.mrf.mxu0
        %v4732 = vadd.f32 %v4643, %v4731
        %4733 = vmatmul.bf16.gmra.mxu0 %v1953
        %v4734 = vpop.f32.mrf.mxu0
        %v4735 = vadd.f32 %v4646, %v4734
        %v4736 = vpop.f32.mrf.mxu0
        %v4737 = vadd.f32 %v4648, %v4736
        %4738 = vmatmul.bf16.gmra.mxu0 %v1955
        %v4739 = vpop.f32.mrf.mxu0
        %v4740 = vadd.f32 %v4651, %v4739
        %v4741 = vpop.f32.mrf.mxu0
        %v4742 = vadd.f32 %v4653, %v4741
        %4743 = vmatmul.bf16.gmra.mxu0 %v1957
        %v4744 = vpop.f32.mrf.mxu0
        %v4745 = vadd.f32 %v4656, %v4744
        %v4746 = vpop.f32.mrf.mxu0
        %v4747 = vadd.f32 %v4658, %v4746
        %4748 = vmatmul.bf16.gmra.mxu0 %v1959
        %v4749 = vpop.f32.mrf.mxu0
        %v4750 = vadd.f32 %v4661, %v4749
        %v4751 = vpop.f32.mrf.mxu0
        %v4752 = vadd.f32 %v4663, %v4751
        %4753 = vmatmul.bf16.gmra.mxu0 %v1961
        %v4754 = vpop.f32.mrf.mxu0
        %v4755 = vadd.f32 %v4666, %v4754
        %v4756 = vpop.f32.mrf.mxu0
        %v4757 = vadd.f32 %v4668, %v4756
        %4758 = vmatmul.bf16.gmra.mxu0 %v1963
        %v4759 = vpop.f32.mrf.mxu0
        %v4760 = vadd.f32 %v4671, %v4759
        %v4761 = vpop.f32.mrf.mxu0
        %v4762 = vadd.f32 %v4673, %v4761
        %4763 = vmatmul.bf16.gmra.mxu0 %v1965
        %v4764 = vpop.f32.mrf.mxu0
        %v4765 = vadd.f32 %v4676, %v4764
        %v4766 = vpop.f32.mrf.mxu0
        %v4767 = vadd.f32 %v4678, %v4766
        %4768 = vmatmul.bf16.gmra.mxu0 %v1967
        %v4769 = vpop.f32.mrf.mxu0
        %v4770 = vadd.f32 %v4681, %v4769
        %v4771 = vpop.f32.mrf.mxu0
        %v4772 = vadd.f32 %v4683, %v4771
        %4773 = vmatmul.bf16.gmra.mxu0 %v1969
        %v4774 = vpop.f32.mrf.mxu0
        %v4775 = vadd.f32 %v4686, %v4774
        %v4776 = vpop.f32.mrf.mxu0
        %v4777 = vadd.f32 %v4688, %v4776
        %4778 = vmatmul.bf16.gmra.mxu0 %v1971
        %v4779 = vpop.f32.mrf.mxu0
        %v4780 = vadd.f32 %v4691, %v4779
        %v4781 = vpop.f32.mrf.mxu0
        %v4782 = vadd.f32 %v4693, %v4781
        %4783 = vmatmul.bf16.gmra.mxu0 %v1973
        %v4784 = vpop.f32.mrf.mxu0
        %v4785 = vadd.f32 %v4696, %v4784
        %v4786 = vpop.f32.mrf.mxu0
        %v4787 = vadd.f32 %v4698, %v4786
        %4788 = vdwg.mxu0
        %4789 = vmatpush.bf16.msra.mxu0 %v4538
        %4790 = vmatpush.bf16.msra.mxu0 %v4537
        %4791 = vmatpush.bf16.msra.mxu0 %v4536
        %4792 = vmatpush.bf16.msra.mxu0 %v4535
        %4793 = vmatpush.bf16.msra.mxu0 %v4534
        %4794 = vmatpush.bf16.msra.mxu0 %v4533
        %4795 = vmatpush.bf16.msra.mxu0 %v4532
        %4796 = vmatpush.bf16.msra.mxu0 %v4531
        %4797 = vmatmul.bf16.gmra.mxu0 %v1615
        %v4798 = vpop.f32.mrf.mxu0
        %v4799 = vadd.f32 %v4710, %v4798
        %v4800 = vpop.f32.mrf.mxu0
        %v4801 = vadd.f32 %v4712, %v4800
        %4802 = vmatmul.bf16.gmra.mxu0 %v1617
        %v4803 = vpop.f32.mrf.mxu0
        %v4804 = vadd.f32 %v4715, %v4803
        %v4805 = vpop.f32.mrf.mxu0
        %v4806 = vadd.f32 %v4717, %v4805
        %4807 = vmatmul.bf16.gmra.mxu0 %v1619
        %v4808 = vpop.f32.mrf.mxu0
        %v4809 = vadd.f32 %v4720, %v4808
        %v4810 = vpop.f32.mrf.mxu0
        %v4811 = vadd.f32 %v4722, %v4810
        %4812 = vmatmul.bf16.gmra.mxu0 %v1621
        %v4813 = vpop.f32.mrf.mxu0
        %v4814 = vadd.f32 %v4725, %v4813
        %v4815 = vpop.f32.mrf.mxu0
        %v4816 = vadd.f32 %v4727, %v4815
        %4817 = vmatmul.bf16.gmra.mxu0 %v1623
        %v4818 = vpop.f32.mrf.mxu0
        %v4819 = vadd.f32 %v4730, %v4818
        %v4820 = vpop.f32.mrf.mxu0
        %v4821 = vadd.f32 %v4732, %v4820
        %4822 = vmatmul.bf16.gmra.mxu0 %v1625
        %v4823 = vpop.f32.mrf.mxu0
        %v4824 = vadd.f32 %v4735, %v4823
        %v4825 = vpop.f32.mrf.mxu0
        %v4826 = vadd.f32 %v4737, %v4825
        %4827 = vmatmul.bf16.gmra.mxu0 %v1627
        %v4828 = vpop.f32.mrf.mxu0
        %v4829 = vadd.f32 %v4740, %v4828
        %v4830 = vpop.f32.mrf.mxu0
        %v4831 = vadd.f32 %v4742, %v4830
        %4832 = vmatmul.bf16.gmra.mxu0 %v1629
        %v4833 = vpop.f32.mrf.mxu0
        %v4834 = vadd.f32 %v4745, %v4833
        %v4835 = vpop.f32.mrf.mxu0
        %v4836 = vadd.f32 %v4747, %v4835
        %4837 = vmatmul.bf16.gmra.mxu0 %v1631
        %v4838 = vpop.f32.mrf.mxu0
        %v4839 = vadd.f32 %v4750, %v4838
        %v4840 = vpop.f32.mrf.mxu0
        %v4841 = vadd.f32 %v4752, %v4840
        %4842 = vmatmul.bf16.gmra.mxu0 %v1633
        %v4843 = vpop.f32.mrf.mxu0
        %v4844 = vadd.f32 %v4755, %v4843
        %v4845 = vpop.f32.mrf.mxu0
        %v4846 = vadd.f32 %v4757, %v4845
        %4847 = vmatmul.bf16.gmra.mxu0 %v1635
        %v4848 = vpop.f32.mrf.mxu0
        %v4849 = vadd.f32 %v4760, %v4848
        %v4850 = vpop.f32.mrf.mxu0
        %v4851 = vadd.f32 %v4762, %v4850
        %4852 = vmatmul.bf16.gmra.mxu0 %v1637
        %v4853 = vpop.f32.mrf.mxu0
        %v4854 = vadd.f32 %v4765, %v4853
        %v4855 = vpop.f32.mrf.mxu0
        %v4856 = vadd.f32 %v4767, %v4855
        %4857 = vmatmul.bf16.gmra.mxu0 %v1639
        %v4858 = vpop.f32.mrf.mxu0
        %v4859 = vadd.f32 %v4770, %v4858
        %v4860 = vpop.f32.mrf.mxu0
        %v4861 = vadd.f32 %v4772, %v4860
        %4862 = vmatmul.bf16.gmra.mxu0 %v1641
        %v4863 = vpop.f32.mrf.mxu0
        %v4864 = vadd.f32 %v4775, %v4863
        %v4865 = vpop.f32.mrf.mxu0
        %v4866 = vadd.f32 %v4777, %v4865
        %4867 = vmatmul.bf16.gmra.mxu0 %v1643
        %v4868 = vpop.f32.mrf.mxu0
        %v4869 = vadd.f32 %v4780, %v4868
        %v4870 = vpop.f32.mrf.mxu0
        %v4871 = vadd.f32 %v4782, %v4870
        %4872 = vmatmul.bf16.gmra.mxu0 %v1645
        %v4873 = vpop.f32.mrf.mxu0
        %v4874 = vadd.f32 %v4785, %v4873
        %v4875 = vpop.f32.mrf.mxu0
        %v4876 = vadd.f32 %v4787, %v4875
        %4877 = vdwg.mxu0
        %4878 = vmatpush.bf16.msra.mxu0 %v4546
        %4879 = vmatpush.bf16.msra.mxu0 %v4545
        %4880 = vmatpush.bf16.msra.mxu0 %v4544
        %4881 = vmatpush.bf16.msra.mxu0 %v4543
        %4882 = vmatpush.bf16.msra.mxu0 %v4542
        %4883 = vmatpush.bf16.msra.mxu0 %v4541
        %4884 = vmatpush.bf16.msra.mxu0 %v4540
        %4885 = vmatpush.bf16.msra.mxu0 %v4539
        %4886 = vmatmul.bf16.gmra.mxu0 %v1616
        %v4887 = vpop.f32.mrf.mxu0
        %v4888 = vadd.f32 %v4799, %v4887
        %v4889 = vpop.f32.mrf.mxu0
        %v4890 = vadd.f32 %v4801, %v4889
        %4891 = vmatmul.bf16.gmra.mxu0 %v1618
        %v4892 = vpop.f32.mrf.mxu0
        %v4893 = vadd.f32 %v4804, %v4892
        %v4894 = vpop.f32.mrf.mxu0
        %v4895 = vadd.f32 %v4806, %v4894
        %4896 = vmatmul.bf16.gmra.mxu0 %v1620
        %v4897 = vpop.f32.mrf.mxu0
        %v4898 = vadd.f32 %v4809, %v4897
        %v4899 = vpop.f32.mrf.mxu0
        %v4900 = vadd.f32 %v4811, %v4899
        %4901 = vmatmul.bf16.gmra.mxu0 %v1622
        %v4902 = vpop.f32.mrf.mxu0
        %v4903 = vadd.f32 %v4814, %v4902
        %v4904 = vpop.f32.mrf.mxu0
        %v4905 = vadd.f32 %v4816, %v4904
        %4906 = vmatmul.bf16.gmra.mxu0 %v1624
        %v4907 = vpop.f32.mrf.mxu0
        %v4908 = vadd.f32 %v4819, %v4907
        %v4909 = vpop.f32.mrf.mxu0
        %v4910 = vadd.f32 %v4821, %v4909
        %4911 = vmatmul.bf16.gmra.mxu0 %v1626
        %v4912 = vpop.f32.mrf.mxu0
        %v4913 = vadd.f32 %v4824, %v4912
        %v4914 = vpop.f32.mrf.mxu0
        %v4915 = vadd.f32 %v4826, %v4914
        %4916 = vmatmul.bf16.gmra.mxu0 %v1628
        %v4917 = vpop.f32.mrf.mxu0
        %v4918 = vadd.f32 %v4829, %v4917
        %v4919 = vpop.f32.mrf.mxu0
        %v4920 = vadd.f32 %v4831, %v4919
        %4921 = vmatmul.bf16.gmra.mxu0 %v1630
        %v4922 = vpop.f32.mrf.mxu0
        %v4923 = vadd.f32 %v4834, %v4922
        %v4924 = vpop.f32.mrf.mxu0
        %v4925 = vadd.f32 %v4836, %v4924
        %4926 = vmatmul.bf16.gmra.mxu0 %v1632
        %v4927 = vpop.f32.mrf.mxu0
        %v4928 = vadd.f32 %v4839, %v4927
        %v4929 = vpop.f32.mrf.mxu0
        %v4930 = vadd.f32 %v4841, %v4929
        %4931 = vmatmul.bf16.gmra.mxu0 %v1634
        %v4932 = vpop.f32.mrf.mxu0
        %v4933 = vadd.f32 %v4844, %v4932
        %v4934 = vpop.f32.mrf.mxu0
        %v4935 = vadd.f32 %v4846, %v4934
        %4936 = vmatmul.bf16.gmra.mxu0 %v1636
        %v4937 = vpop.f32.mrf.mxu0
        %v4938 = vadd.f32 %v4849, %v4937
        %v4939 = vpop.f32.mrf.mxu0
        %v4940 = vadd.f32 %v4851, %v4939
        %4941 = vmatmul.bf16.gmra.mxu0 %v1638
        %v4942 = vpop.f32.mrf.mxu0
        %v4943 = vadd.f32 %v4854, %v4942
        %v4944 = vpop.f32.mrf.mxu0
        %v4945 = vadd.f32 %v4856, %v4944
        %4946 = vmatmul.bf16.gmra.mxu0 %v1640
        %v4947 = vpop.f32.mrf.mxu0
        %v4948 = vadd.f32 %v4859, %v4947
        %v4949 = vpop.f32.mrf.mxu0
        %v4950 = vadd.f32 %v4861, %v4949
        %4951 = vmatmul.bf16.gmra.mxu0 %v1642
        %v4952 = vpop.f32.mrf.mxu0
        %v4953 = vadd.f32 %v4864, %v4952
        %v4954 = vpop.f32.mrf.mxu0
        %v4955 = vadd.f32 %v4866, %v4954
        %4956 = vmatmul.bf16.gmra.mxu0 %v1644
        %v4957 = vpop.f32.mrf.mxu0
        %v4958 = vadd.f32 %v4869, %v4957
        %v4959 = vpop.f32.mrf.mxu0
        %v4960 = vadd.f32 %v4871, %v4959
        %4961 = vmatmul.bf16.gmra.mxu0 %v1646
        %v4962 = vpop.f32.mrf.mxu0
        %v4963 = vadd.f32 %v4874, %v4962
        %v4964 = vpop.f32.mrf.mxu0
        %v4965 = vadd.f32 %v4876, %v4964
        %4966 = vdwg.mxu0
        %4967 = vmatpush.bf16.msra.mxu0 %v4554
        %4968 = vmatpush.bf16.msra.mxu0 %v4553
        %4969 = vmatpush.bf16.msra.mxu0 %v4552
        %4970 = vmatpush.bf16.msra.mxu0 %v4551
        %4971 = vmatpush.bf16.msra.mxu0 %v4550
        %4972 = vmatpush.bf16.msra.mxu0 %v4549
        %4973 = vmatpush.bf16.msra.mxu0 %v4548
        %4974 = vmatpush.bf16.msra.mxu0 %v4547
        %4975 = vmatmul.bf16.gmra.mxu0 %v2099
        %v4976 = vpop.f32.mrf.mxu0
        %v4977 = vadd.f32 %v4888, %v4976
        %v4978 = vpop.f32.mrf.mxu0
        %v4979 = vadd.f32 %v4890, %v4978
        %4980 = vmatmul.bf16.gmra.mxu0 %v2113
        %v4981 = vpop.f32.mrf.mxu0
        %v4982 = vadd.f32 %v4893, %v4981
        %v4983 = vpop.f32.mrf.mxu0
        %v4984 = vadd.f32 %v4895, %v4983
        %4985 = vmatmul.bf16.gmra.mxu0 %v2127
        %v4986 = vpop.f32.mrf.mxu0
        %v4987 = vadd.f32 %v4898, %v4986
        %v4988 = vpop.f32.mrf.mxu0
        %v4989 = vadd.f32 %v4900, %v4988
        %4990 = vmatmul.bf16.gmra.mxu0 %v2141
        %v4991 = vpop.f32.mrf.mxu0
        %v4992 = vadd.f32 %v4903, %v4991
        %v4993 = vpop.f32.mrf.mxu0
        %v4994 = vadd.f32 %v4905, %v4993
        %4995 = vmatmul.bf16.gmra.mxu0 %v2155
        %v4996 = vpop.f32.mrf.mxu0
        %v4997 = vadd.f32 %v4908, %v4996
        %v4998 = vpop.f32.mrf.mxu0
        %v4999 = vadd.f32 %v4910, %v4998
        %5000 = vmatmul.bf16.gmra.mxu0 %v2169
        %v5001 = vpop.f32.mrf.mxu0
        %v5002 = vadd.f32 %v4913, %v5001
        %v5003 = vpop.f32.mrf.mxu0
        %v5004 = vadd.f32 %v4915, %v5003
        %5005 = vmatmul.bf16.gmra.mxu0 %v2183
        %v5006 = vpop.f32.mrf.mxu0
        %v5007 = vadd.f32 %v4918, %v5006
        %v5008 = vpop.f32.mrf.mxu0
        %v5009 = vadd.f32 %v4920, %v5008
        %5010 = vmatmul.bf16.gmra.mxu0 %v2197
        %v5011 = vpop.f32.mrf.mxu0
        %v5012 = vadd.f32 %v4923, %v5011
        %v5013 = vpop.f32.mrf.mxu0
        %v5014 = vadd.f32 %v4925, %v5013
        %5015 = vmatmul.bf16.gmra.mxu0 %v2211
        %v5016 = vpop.f32.mrf.mxu0
        %v5017 = vadd.f32 %v4928, %v5016
        %v5018 = vpop.f32.mrf.mxu0
        %v5019 = vadd.f32 %v4930, %v5018
        %5020 = vmatmul.bf16.gmra.mxu0 %v2225
        %v5021 = vpop.f32.mrf.mxu0
        %v5022 = vadd.f32 %v4933, %v5021
        %v5023 = vpop.f32.mrf.mxu0
        %v5024 = vadd.f32 %v4935, %v5023
        %5025 = vmatmul.bf16.gmra.mxu0 %v2239
        %v5026 = vpop.f32.mrf.mxu0
        %v5027 = vadd.f32 %v4938, %v5026
        %v5028 = vpop.f32.mrf.mxu0
        %v5029 = vadd.f32 %v4940, %v5028
        %5030 = vmatmul.bf16.gmra.mxu0 %v2253
        %v5031 = vpop.f32.mrf.mxu0
        %v5032 = vadd.f32 %v4943, %v5031
        %v5033 = vpop.f32.mrf.mxu0
        %v5034 = vadd.f32 %v4945, %v5033
        %5035 = vmatmul.bf16.gmra.mxu0 %v2267
        %v5036 = vpop.f32.mrf.mxu0
        %v5037 = vadd.f32 %v4948, %v5036
        %v5038 = vpop.f32.mrf.mxu0
        %v5039 = vadd.f32 %v4950, %v5038
        %5040 = vmatmul.bf16.gmra.mxu0 %v2281
        %v5041 = vpop.f32.mrf.mxu0
        %v5042 = vadd.f32 %v4953, %v5041
        %v5043 = vpop.f32.mrf.mxu0
        %v5044 = vadd.f32 %v4955, %v5043
        %5045 = vmatmul.bf16.gmra.mxu0 %v2295
        %v5046 = vpop.f32.mrf.mxu0
        %v5047 = vadd.f32 %v4958, %v5046
        %v5048 = vpop.f32.mrf.mxu0
        %v5049 = vadd.f32 %v4960, %v5048
        %5050 = vmatmul.bf16.gmra.mxu0 %v2309
        %v5051 = vpop.f32.mrf.mxu0
        %v5052 = vadd.f32 %v4963, %v5051
        %v5053 = vpop.f32.mrf.mxu0
        %v5054 = vadd.f32 %v4965, %v5053
        %5055 = vdwg.mxu0
        %5056 = vmatpush.bf16.msra.mxu0 %v4562
        %5057 = vmatpush.bf16.msra.mxu0 %v4561
        %5058 = vmatpush.bf16.msra.mxu0 %v4560
        %5059 = vmatpush.bf16.msra.mxu0 %v4559
        %5060 = vmatpush.bf16.msra.mxu0 %v4558
        %5061 = vmatpush.bf16.msra.mxu0 %v4557
        %5062 = vmatpush.bf16.msra.mxu0 %v4556
        %5063 = vmatpush.bf16.msra.mxu0 %v4555
        %5064 = vmatmul.bf16.gmra.mxu0 %v2106
        %v5065 = vpop.f32.mrf.mxu0
        %v5066 = vadd.f32 %v4977, %v5065
        %v5067 = vpop.f32.mrf.mxu0
        %v5068 = vadd.f32 %v4979, %v5067
        %5069 = vmatmul.bf16.gmra.mxu0 %v2120
        %v5070 = vpop.f32.mrf.mxu0
        %v5071 = vadd.f32 %v4982, %v5070
        %v5072 = vpop.f32.mrf.mxu0
        %v5073 = vadd.f32 %v4984, %v5072
        %5074 = vmatmul.bf16.gmra.mxu0 %v2134
        %v5075 = vpop.f32.mrf.mxu0
        %v5076 = vadd.f32 %v4987, %v5075
        %v5077 = vpop.f32.mrf.mxu0
        %v5078 = vadd.f32 %v4989, %v5077
        %5079 = vmatmul.bf16.gmra.mxu0 %v2148
        %v5080 = vpop.f32.mrf.mxu0
        %v5081 = vadd.f32 %v4992, %v5080
        %v5082 = vpop.f32.mrf.mxu0
        %v5083 = vadd.f32 %v4994, %v5082
        %5084 = vmatmul.bf16.gmra.mxu0 %v2162
        %v5085 = vpop.f32.mrf.mxu0
        %v5086 = vadd.f32 %v4997, %v5085
        %v5087 = vpop.f32.mrf.mxu0
        %v5088 = vadd.f32 %v4999, %v5087
        %5089 = vmatmul.bf16.gmra.mxu0 %v2176
        %v5090 = vpop.f32.mrf.mxu0
        %v5091 = vadd.f32 %v5002, %v5090
        %v5092 = vpop.f32.mrf.mxu0
        %v5093 = vadd.f32 %v5004, %v5092
        %5094 = vmatmul.bf16.gmra.mxu0 %v2190
        %v5095 = vpop.f32.mrf.mxu0
        %v5096 = vadd.f32 %v5007, %v5095
        %v5097 = vpop.f32.mrf.mxu0
        %v5098 = vadd.f32 %v5009, %v5097
        %5099 = vmatmul.bf16.gmra.mxu0 %v2204
        %v5100 = vpop.f32.mrf.mxu0
        %v5101 = vadd.f32 %v5012, %v5100
        %v5102 = vpop.f32.mrf.mxu0
        %v5103 = vadd.f32 %v5014, %v5102
        %5104 = vmatmul.bf16.gmra.mxu0 %v2218
        %v5105 = vpop.f32.mrf.mxu0
        %v5106 = vadd.f32 %v5017, %v5105
        %v5107 = vpop.f32.mrf.mxu0
        %v5108 = vadd.f32 %v5019, %v5107
        %5109 = vmatmul.bf16.gmra.mxu0 %v2232
        %v5110 = vpop.f32.mrf.mxu0
        %v5111 = vadd.f32 %v5022, %v5110
        %v5112 = vpop.f32.mrf.mxu0
        %v5113 = vadd.f32 %v5024, %v5112
        %5114 = vmatmul.bf16.gmra.mxu0 %v2246
        %v5115 = vpop.f32.mrf.mxu0
        %v5116 = vadd.f32 %v5027, %v5115
        %v5117 = vpop.f32.mrf.mxu0
        %v5118 = vadd.f32 %v5029, %v5117
        %5119 = vmatmul.bf16.gmra.mxu0 %v2260
        %v5120 = vpop.f32.mrf.mxu0
        %v5121 = vadd.f32 %v5032, %v5120
        %v5122 = vpop.f32.mrf.mxu0
        %v5123 = vadd.f32 %v5034, %v5122
        %5124 = vmatmul.bf16.gmra.mxu0 %v2274
        %v5125 = vpop.f32.mrf.mxu0
        %v5126 = vadd.f32 %v5037, %v5125
        %v5127 = vpop.f32.mrf.mxu0
        %v5128 = vadd.f32 %v5039, %v5127
        %5129 = vmatmul.bf16.gmra.mxu0 %v2288
        %v5130 = vpop.f32.mrf.mxu0
        %v5131 = vadd.f32 %v5042, %v5130
        %v5132 = vpop.f32.mrf.mxu0
        %v5133 = vadd.f32 %v5044, %v5132
        %5134 = vmatmul.bf16.gmra.mxu0 %v2302
        %v5135 = vpop.f32.mrf.mxu0
        %v5136 = vadd.f32 %v5047, %v5135
        %v5137 = vpop.f32.mrf.mxu0
        %v5138 = vadd.f32 %v5049, %v5137
        %5139 = vmatmul.bf16.gmra.mxu0 %v2316
        %v5140 = vpop.f32.mrf.mxu0
        %v5141 = vadd.f32 %v5052, %v5140
        %v5142 = vpop.f32.mrf.mxu0
        %v5143 = vadd.f32 %v5054, %v5142
        %5144 = vdwg.mxu0
        %v5145 = vadd.f32 %v4147, %v5066
        %v5146 = vadd.f32 %v4149, %v5068
        %v5147 = vadd.f32 %v4152, %v5071
        %v5148 = vadd.f32 %v4154, %v5073
        %v5149 = vadd.f32 %v4157, %v5076
        %v5150 = vadd.f32 %v4159, %v5078
        %v5151 = vadd.f32 %v4162, %v5081
        %v5152 = vadd.f32 %v4164, %v5083
        %v5153 = vadd.f32 %v4167, %v5086
        %v5154 = vadd.f32 %v4169, %v5088
        %v5155 = vadd.f32 %v4172, %v5091
        %v5156 = vadd.f32 %v4174, %v5093
        %v5157 = vadd.f32 %v4177, %v5096
        %v5158 = vadd.f32 %v4179, %v5098
        %v5159 = vadd.f32 %v4182, %v5101
        %v5160 = vadd.f32 %v4184, %v5103
        %v5161 = vadd.f32 %v4187, %v5106
        %v5162 = vadd.f32 %v4189, %v5108
        %v5163 = vadd.f32 %v4192, %v5111
        %v5164 = vadd.f32 %v4194, %v5113
        %v5165 = vadd.f32 %v4197, %v5116
        %v5166 = vadd.f32 %v4199, %v5118
        %v5167 = vadd.f32 %v4202, %v5121
        %v5168 = vadd.f32 %v4204, %v5123
        %v5169 = vadd.f32 %v4207, %v5126
        %v5170 = vadd.f32 %v4209, %v5128
        %v5171 = vadd.f32 %v4212, %v5131
        %v5172 = vadd.f32 %v4214, %v5133
        %v5173 = vadd.f32 %v4217, %v5136
        %v5174 = vadd.f32 %v4219, %v5138
        %v5175 = vadd.f32 %v4222, %v5141
        %v5176 = vadd.f32 %v4224, %v5143
        %v5177 = vld [vmem:[%s4] sm:$0x1]
        %v5179 = vperm.slane %v5177, 0
        %v5181 = vmul.f32 %v5145, %v5179
        %v5182 = vmul.f32 %v5146, %v5179
        %v5183 = vmul.f32 %v5147, %v5179
        %v5184 = vmul.f32 %v5148, %v5179
        %v5185 = vmul.f32 %v5149, %v5179
        %v5186 = vmul.f32 %v5150, %v5179
        %v5187 = vmul.f32 %v5151, %v5179
        %v5188 = vmul.f32 %v5152, %v5179
        %v5189 = vmul.f32 %v5153, %v5179
        %v5190 = vmul.f32 %v5154, %v5179
        %v5191 = vmul.f32 %v5155, %v5179
        %v5192 = vmul.f32 %v5156, %v5179
        %v5193 = vmul.f32 %v5157, %v5179
        %v5194 = vmul.f32 %v5158, %v5179
        %v5195 = vmul.f32 %v5159, %v5179
        %v5196 = vmul.f32 %v5160, %v5179
        %v5197 = vmul.f32 %v5161, %v5179
        %v5198 = vmul.f32 %v5162, %v5179
        %v5199 = vmul.f32 %v5163, %v5179
        %v5200 = vmul.f32 %v5164, %v5179
        %v5201 = vmul.f32 %v5165, %v5179
        %v5202 = vmul.f32 %v5166, %v5179
        %v5203 = vmul.f32 %v5167, %v5179
        %v5204 = vmul.f32 %v5168, %v5179
        %v5205 = vmul.f32 %v5169, %v5179
        %v5206 = vmul.f32 %v5170, %v5179
        %v5207 = vmul.f32 %v5171, %v5179
        %v5208 = vmul.f32 %v5172, %v5179
        %v5209 = vmul.f32 %v5173, %v5179
        %v5210 = vmul.f32 %v5174, %v5179
        %v5211 = vmul.f32 %v5175, %v5179
        %v5212 = vmul.f32 %v5176, %v5179
        %v5213 = vld [vmem:[%s5] sm:$0x1]
        %v5215 = vperm.slane %v5213, 0
        %v5217 = vadd.f32 %v5181, %v5215
        %v5218 = vadd.f32 %v5182, %v5215
        %v5219 = vadd.f32 %v5183, %v5215
        %v5220 = vadd.f32 %v5184, %v5215
        %v5221 = vadd.f32 %v5185, %v5215
        %v5222 = vadd.f32 %v5186, %v5215
        %v5223 = vadd.f32 %v5187, %v5215
        %v5224 = vadd.f32 %v5188, %v5215
        %v5225 = vadd.f32 %v5189, %v5215
        %v5226 = vadd.f32 %v5190, %v5215
        %v5227 = vadd.f32 %v5191, %v5215
        %v5228 = vadd.f32 %v5192, %v5215
        %v5229 = vadd.f32 %v5193, %v5215
        %v5230 = vadd.f32 %v5194, %v5215
        %v5231 = vadd.f32 %v5195, %v5215
        %v5232 = vadd.f32 %v5196, %v5215
        %v5233 = vadd.f32 %v5197, %v5215
        %v5234 = vadd.f32 %v5198, %v5215
        %v5235 = vadd.f32 %v5199, %v5215
        %v5236 = vadd.f32 %v5200, %v5215
        %v5237 = vadd.f32 %v5201, %v5215
        %v5238 = vadd.f32 %v5202, %v5215
        %v5239 = vadd.f32 %v5203, %v5215
        %v5240 = vadd.f32 %v5204, %v5215
        %v5241 = vadd.f32 %v5205, %v5215
        %v5242 = vadd.f32 %v5206, %v5215
        %v5243 = vadd.f32 %v5207, %v5215
        %v5244 = vadd.f32 %v5208, %v5215
        %v5245 = vadd.f32 %v5209, %v5215
        %v5246 = vadd.f32 %v5210, %v5215
        %v5247 = vadd.f32 %v5211, %v5215
        %v5248 = vadd.f32 %v5212, %v5215
        %vm5249 = vcmp.ge.f32.partialorder %v5217, 0.0
        %vm5250 = vcmp.ge.f32.partialorder %v5218, 0.0
        %vm5251 = vcmp.ge.f32.partialorder %v5219, 0.0
        %vm5252 = vcmp.ge.f32.partialorder %v5220, 0.0
        %vm5253 = vcmp.ge.f32.partialorder %v5221, 0.0
        %vm5254 = vcmp.ge.f32.partialorder %v5222, 0.0
        %vm5255 = vcmp.ge.f32.partialorder %v5223, 0.0
        %vm5256 = vcmp.ge.f32.partialorder %v5224, 0.0
        %vm5257 = vcmp.ge.f32.partialorder %v5225, 0.0
        %vm5258 = vcmp.ge.f32.partialorder %v5226, 0.0
        %vm5259 = vcmp.ge.f32.partialorder %v5227, 0.0
        %vm5260 = vcmp.ge.f32.partialorder %v5228, 0.0
        %vm5261 = vcmp.ge.f32.partialorder %v5229, 0.0
        %vm5262 = vcmp.ge.f32.partialorder %v5230, 0.0
        %vm5263 = vcmp.ge.f32.partialorder %v5231, 0.0
        %vm5264 = vcmp.ge.f32.partialorder %v5232, 0.0
        %vm5265 = vcmp.ge.f32.partialorder %v5233, 0.0
        %vm5266 = vcmp.ge.f32.partialorder %v5234, 0.0
        %vm5267 = vcmp.ge.f32.partialorder %v5235, 0.0
        %vm5268 = vcmp.ge.f32.partialorder %v5236, 0.0
        %vm5269 = vcmp.ge.f32.partialorder %v5237, 0.0
        %vm5270 = vcmp.ge.f32.partialorder %v5238, 0.0
        %vm5271 = vcmp.ge.f32.partialorder %v5239, 0.0
        %vm5272 = vcmp.ge.f32.partialorder %v5240, 0.0
        %vm5273 = vcmp.ge.f32.partialorder %v5241, 0.0
        %vm5274 = vcmp.ge.f32.partialorder %v5242, 0.0
        %vm5275 = vcmp.ge.f32.partialorder %v5243, 0.0
        %vm5276 = vcmp.ge.f32.partialorder %v5244, 0.0
        %vm5277 = vcmp.ge.f32.partialorder %v5245, 0.0
        %vm5278 = vcmp.ge.f32.partialorder %v5246, 0.0
        %vm5279 = vcmp.ge.f32.partialorder %v5247, 0.0
        %vm5280 = vcmp.ge.f32.partialorder %v5248, 0.0
        %v5281 = vmul.f32 %v5217, 0.01
        %v5282 = vmul.f32 %v5218, 0.01
        %v5283 = vmul.f32 %v5219, 0.01
        %v5284 = vmul.f32 %v5220, 0.01
        %v5285 = vmul.f32 %v5221, 0.01
        %v5286 = vmul.f32 %v5222, 0.01
        %v5287 = vmul.f32 %v5223, 0.01
        %v5288 = vmul.f32 %v5224, 0.01
        %v5289 = vmul.f32 %v5225, 0.01
        %v5290 = vmul.f32 %v5226, 0.01
        %v5291 = vmul.f32 %v5227, 0.01
        %v5292 = vmul.f32 %v5228, 0.01
        %v5293 = vmul.f32 %v5229, 0.01
        %v5294 = vmul.f32 %v5230, 0.01
        %v5295 = vmul.f32 %v5231, 0.01
        %v5296 = vmul.f32 %v5232, 0.01
        %v5297 = vmul.f32 %v5233, 0.01
        %v5298 = vmul.f32 %v5234, 0.01
        %v5299 = vmul.f32 %v5235, 0.01
        %v5300 = vmul.f32 %v5236, 0.01
        %v5301 = vmul.f32 %v5237, 0.01
        %v5302 = vmul.f32 %v5238, 0.01
        %v5303 = vmul.f32 %v5239, 0.01
        %v5304 = vmul.f32 %v5240, 0.01
        %v5305 = vmul.f32 %v5241, 0.01
        %v5306 = vmul.f32 %v5242, 0.01
        %v5307 = vmul.f32 %v5243, 0.01
        %v5308 = vmul.f32 %v5244, 0.01
        %v5309 = vmul.f32 %v5245, 0.01
        %v5310 = vmul.f32 %v5246, 0.01
        %v5311 = vmul.f32 %v5247, 0.01
        %v5312 = vmul.f32 %v5248, 0.01
        %v5313 = vsel %vm5249, %v5217, %v5281
        %v5314 = vsel %vm5250, %v5218, %v5282
        %v5315 = vsel %vm5251, %v5219, %v5283
        %v5316 = vsel %vm5252, %v5220, %v5284
        %v5317 = vsel %vm5253, %v5221, %v5285
        %v5318 = vsel %vm5254, %v5222, %v5286
        %v5319 = vsel %vm5255, %v5223, %v5287
        %v5320 = vsel %vm5256, %v5224, %v5288
        %v5321 = vsel %vm5257, %v5225, %v5289
        %v5322 = vsel %vm5258, %v5226, %v5290
        %v5323 = vsel %vm5259, %v5227, %v5291
        %v5324 = vsel %vm5260, %v5228, %v5292
        %v5325 = vsel %vm5261, %v5229, %v5293
        %v5326 = vsel %vm5262, %v5230, %v5294
        %v5327 = vsel %vm5263, %v5231, %v5295
        %v5328 = vsel %vm5264, %v5232, %v5296
        %v5329 = vsel %vm5265, %v5233, %v5297
        %v5330 = vsel %vm5266, %v5234, %v5298
        %v5331 = vsel %vm5267, %v5235, %v5299
        %v5332 = vsel %vm5268, %v5236, %v5300
        %v5333 = vsel %vm5269, %v5237, %v5301
        %v5334 = vsel %vm5270, %v5238, %v5302
        %v5335 = vsel %vm5271, %v5239, %v5303
        %v5336 = vsel %vm5272, %v5240, %v5304
        %v5337 = vsel %vm5273, %v5241, %v5305
        %v5338 = vsel %vm5274, %v5242, %v5306
        %v5339 = vsel %vm5275, %v5243, %v5307
        %v5340 = vsel %vm5276, %v5244, %v5308
        %v5341 = vsel %vm5277, %v5245, %v5309
        %v5342 = vsel %vm5278, %v5246, %v5310
        %v5343 = vsel %vm5279, %v5247, %v5311
        %v5344 = vsel %vm5280, %v5248, %v5312
        %5345 = vst [vmem:[%s444] sm:$0xff] %v5313
        %5346 = vst [vmem:[%s444 + $0x8] sm:$0xff] %v5314
        %5347 = vst [vmem:[%s444 + $0x18] sm:$0xff] %v5315
        %5348 = vst [vmem:[%s444 + $0x20] sm:$0xff] %v5316
        %5349 = vst [vmem:[%s444 + $0x30] sm:$0xff] %v5317
        %5350 = vst [vmem:[%s444 + $0x38] sm:$0xff] %v5318
        %5351 = vst [vmem:[%s444 + $0x48] sm:$0xff] %v5319
        %5352 = vst [vmem:[%s444 + $0x50] sm:$0xff] %v5320
        %5353 = vst [vmem:[%s444 + $0x60] sm:$0xff] %v5321
        %5354 = vst [vmem:[%s444 + $0x68] sm:$0xff] %v5322
        %5355 = vst [vmem:[%s444 + $0x78] sm:$0xff] %v5323
        %5356 = vst [vmem:[%s444 + $0x80] sm:$0xff] %v5324
        %5357 = vst [vmem:[%s444 + $0x90] sm:$0xff] %v5325
        %5358 = vst [vmem:[%s444 + $0x98] sm:$0xff] %v5326
        %5359 = vst [vmem:[%s444 + $0xa8] sm:$0xff] %v5327
        %5360 = vst [vmem:[%s444 + $0xb0] sm:$0xff] %v5328
        %5361 = vst [vmem:[%s444 + $0xc0] sm:$0xff] %v5329
        %5362 = vst [vmem:[%s444 + $0xc8] sm:$0xff] %v5330
        %5363 = vst [vmem:[%s444 + $0xd8] sm:$0xff] %v5331
        %5364 = vst [vmem:[%s444 + $0xe0] sm:$0xff] %v5332
        %5365 = vst [vmem:[%s444 + $0xf0] sm:$0xff] %v5333
        %5366 = vst [vmem:[%s444 + $0xf8] sm:$0xff] %v5334
        %5367 = vst [vmem:[%s444 + $0x108] sm:$0xff] %v5335
        %5368 = vst [vmem:[%s444 + $0x110] sm:$0xff] %v5336
        %5369 = vst [vmem:[%s444 + $0x120] sm:$0xff] %v5337
        %5370 = vst [vmem:[%s444 + $0x128] sm:$0xff] %v5338
        %5371 = vst [vmem:[%s444 + $0x138] sm:$0xff] %v5339
        %5372 = vst [vmem:[%s444 + $0x140] sm:$0xff] %v5340
        %5373 = vst [vmem:[%s444 + $0x150] sm:$0xff] %v5341
        %5374 = vst [vmem:[%s444 + $0x158] sm:$0xff] %v5342
        %5375 = vst [vmem:[%s444 + $0x168] sm:$0xff] %v5343
        %5376 = vst [vmem:[%s444 + $0x170] sm:$0xff] %v5344
        %v5377 = vld [vmem:[#allocation3] sm:$0xff]
        %v5378 = vld [vmem:[#allocation3 + $0x8] sm:$0xff]
        %v5379 = vld [vmem:[#allocation3 + $0x10] sm:$0xff]
        %v5380 = vld [vmem:[#allocation3 + $0x18] sm:$0xff]
        %v5381 = vld [vmem:[#allocation3 + $0x20] sm:$0xff]
        %v5382 = vld [vmem:[#allocation3 + $0x28] sm:$0xff]
        %v5383 = vld [vmem:[#allocation3 + $0x30] sm:$0xff]
        %v5384 = vld [vmem:[#allocation3 + $0x38] sm:$0xff]
        %v5385 = vld [vmem:[#allocation3 + $0x40] sm:$0xff]
        %v5386 = vld [vmem:[#allocation3 + $0x48] sm:$0xff]
        %v5387 = vld [vmem:[#allocation3 + $0x50] sm:$0xff]
        %v5388 = vld [vmem:[#allocation3 + $0x58] sm:$0xff]
        %v5389 = vld [vmem:[#allocation3 + $0x60] sm:$0xff]
        %v5390 = vld [vmem:[#allocation3 + $0x68] sm:$0xff]
        %v5391 = vld [vmem:[#allocation3 + $0x70] sm:$0xff]
        %v5392 = vld [vmem:[#allocation3 + $0x78] sm:$0xff]
        %v5393 = vld [vmem:[#allocation3 + $0x80] sm:$0xff]
        %v5394 = vld [vmem:[#allocation3 + $0x88] sm:$0xff]
        %v5395 = vld [vmem:[#allocation3 + $0x90] sm:$0xff]
        %v5396 = vld [vmem:[#allocation3 + $0x98] sm:$0xff]
        %v5397 = vld [vmem:[#allocation3 + $0xa0] sm:$0xff]
        %v5398 = vld [vmem:[#allocation3 + $0xa8] sm:$0xff]
        %v5399 = vld [vmem:[#allocation3 + $0xb0] sm:$0xff]
        %v5400 = vld [vmem:[#allocation3 + $0xb8] sm:$0xff]
        %v5401 = vld [vmem:[#allocation3 + $0xc0] sm:$0xff]
        %v5402 = vld [vmem:[#allocation3 + $0xc8] sm:$0xff]
        %v5403 = vld [vmem:[#allocation3 + $0xd0] sm:$0xff]
        %v5404 = vld [vmem:[#allocation3 + $0xd8] sm:$0xff]
        %v5405 = vld [vmem:[#allocation3 + $0xe0] sm:$0xff]
        %v5406 = vld [vmem:[#allocation3 + $0xe8] sm:$0xff]
        %v5407 = vld [vmem:[#allocation3 + $0xf0] sm:$0xff]
        %v5408 = vld [vmem:[#allocation3 + $0xf8] sm:$0xff]
        %v5409 = vld [vmem:[#allocation3 + $0x100] sm:$0xff]
        %v5410 = vld [vmem:[#allocation3 + $0x108] sm:$0xff]
        %v5411 = vld [vmem:[#allocation3 + $0x110] sm:$0xff]
        %v5412 = vld [vmem:[#allocation3 + $0x118] sm:$0xff]
        %v5413 = vld [vmem:[#allocation3 + $0x120] sm:$0xff]
        %v5414 = vld [vmem:[#allocation3 + $0x128] sm:$0xff]
        %v5415 = vld [vmem:[#allocation3 + $0x130] sm:$0xff]
        %v5416 = vld [vmem:[#allocation3 + $0x138] sm:$0xff]
        %v5417 = vld [vmem:[#allocation3 + $0x140] sm:$0xff]
        %v5418 = vld [vmem:[#allocation3 + $0x148] sm:$0xff]
        %v5419 = vld [vmem:[#allocation3 + $0x150] sm:$0xff]
        %v5420 = vld [vmem:[#allocation3 + $0x158] sm:$0xff]
        %v5421 = vld [vmem:[#allocation3 + $0x160] sm:$0xff]
        %v5422 = vld [vmem:[#allocation3 + $0x168] sm:$0xff]
        %v5423 = vld [vmem:[#allocation3 + $0x170] sm:$0xff]
        %v5424 = vld [vmem:[#allocation3 + $0x178] sm:$0xff]
        %v5425 = vld [vmem:[#allocation3 + $0x180] sm:$0xff]
        %v5426 = vld [vmem:[#allocation3 + $0x188] sm:$0xff]
        %v5427 = vld [vmem:[#allocation3 + $0x190] sm:$0xff]
        %v5428 = vld [vmem:[#allocation3 + $0x198] sm:$0xff]
        %v5429 = vld [vmem:[#allocation3 + $0x1a0] sm:$0xff]
        %v5430 = vld [vmem:[#allocation3 + $0x1a8] sm:$0xff]
        %v5431 = vld [vmem:[%s6] sm:$0xff]
        %v5432 = vld [vmem:[%s6 + $0x8] sm:$0x1]
        %v5433 = vld [vmem:[%s7] sm:$0x1]
        %vm5470 = vcmask 1040384
        %v5471 = vrot.slane %v5377, 7
        %v5472 = vrot.slane %v5378, 7
        %v5473 = vsel %vm5470, %v5471, %v5472
        %v5474 = vrot.slane %v5380, 7
        %v5475 = vrot.slane %v5381, 7
        %v5476 = vsel %vm5470, %v5474, %v5475
        %v5477 = vrot.slane %v5383, 7
        %v5478 = vrot.slane %v5384, 7
        %v5479 = vsel %vm5470, %v5477, %v5478
        %v5480 = vrot.slane %v5386, 7
        %v5481 = vrot.slane %v5387, 7
        %v5482 = vsel %vm5470, %v5480, %v5481
        %v5483 = vrot.slane %v5389, 7
        %v5484 = vrot.slane %v5390, 7
        %v5485 = vsel %vm5470, %v5483, %v5484
        %v5486 = vrot.slane %v5392, 7
        %v5487 = vrot.slane %v5393, 7
        %v5488 = vsel %vm5470, %v5486, %v5487
        %v5489 = vrot.slane %v5395, 7
        %v5490 = vrot.slane %v5396, 7
        %v5491 = vsel %vm5470, %v5489, %v5490
        %v5492 = vrot.slane %v5398, 7
        %v5493 = vrot.slane %v5399, 7
        %v5494 = vsel %vm5470, %v5492, %v5493
        %v5495 = vrot.slane %v5401, 7
        %v5496 = vrot.slane %v5402, 7
        %v5497 = vsel %vm5470, %v5495, %v5496
        %v5498 = vrot.slane %v5404, 7
        %v5499 = vrot.slane %v5405, 7
        %v5500 = vsel %vm5470, %v5498, %v5499
        %v5501 = vrot.slane %v5407, 7
        %v5502 = vrot.slane %v5408, 7
        %v5503 = vsel %vm5470, %v5501, %v5502
        %v5504 = vrot.slane %v5410, 7
        %v5505 = vrot.slane %v5411, 7
        %v5506 = vsel %vm5470, %v5504, %v5505
        %v5507 = vrot.slane %v5413, 7
        %v5508 = vrot.slane %v5414, 7
        %v5509 = vsel %vm5470, %v5507, %v5508
        %v5510 = vrot.slane %v5416, 7
        %v5511 = vrot.slane %v5417, 7
        %v5512 = vsel %vm5470, %v5510, %v5511
        %v5513 = vrot.slane %v5419, 7
        %v5514 = vrot.slane %v5420, 7
        %v5515 = vsel %vm5470, %v5513, %v5514
        %v5516 = vrot.slane %v5422, 7
        %v5517 = vrot.slane %v5423, 7
        %v5518 = vsel %vm5470, %v5516, %v5517
        %v5519 = vrot.slane %v5425, 7
        %v5520 = vrot.slane %v5426, 7
        %v5521 = vsel %vm5470, %v5519, %v5520
        %v5522 = vrot.slane %v5428, 7
        %v5523 = vrot.slane %v5429, 7
        %v5524 = vsel %vm5470, %v5522, %v5523
        %v5561 = vsel %vm5470, 0.0, %v5471
        %v5562 = vsel %vm5470, 0.0, %v5474
        %v5563 = vsel %vm5470, 0.0, %v5477
        %v5564 = vsel %vm5470, 0.0, %v5480
        %v5565 = vsel %vm5470, 0.0, %v5483
        %v5566 = vsel %vm5470, 0.0, %v5486
        %v5567 = vsel %vm5470, 0.0, %v5489
        %v5568 = vsel %vm5470, 0.0, %v5492
        %v5569 = vsel %vm5470, 0.0, %v5495
        %v5570 = vsel %vm5470, 0.0, %v5498
        %v5571 = vsel %vm5470, 0.0, %v5501
        %v5572 = vsel %vm5470, 0.0, %v5504
        %v5573 = vsel %vm5470, 0.0, %v5507
        %v5574 = vsel %vm5470, 0.0, %v5510
        %v5575 = vsel %vm5470, 0.0, %v5513
        %v5576 = vsel %vm5470, 0.0, %v5516
        %v5577 = vsel %vm5470, 0.0, %v5519
        %v5578 = vsel %vm5470, 0.0, %v5522
        %vm5597 = vcmask 1046528
        %v5598 = vrot.slane %v5377, 1
        %v5599 = vrot.slane %v5378, 1
        %v5600 = vsel %vm5597, %v5598, %v5599
        %v5601 = vrot.slane %v5379, 1
        %v5602 = vsel %vm5597, %v5599, %v5601
        %v5603 = vrot.slane %v5380, 1
        %v5604 = vrot.slane %v5381, 1
        %v5605 = vsel %vm5597, %v5603, %v5604
        %v5606 = vrot.slane %v5382, 1
        %v5607 = vsel %vm5597, %v5604, %v5606
        %v5608 = vrot.slane %v5383, 1
        %v5609 = vrot.slane %v5384, 1
        %v5610 = vsel %vm5597, %v5608, %v5609
        %v5611 = vrot.slane %v5385, 1
        %v5612 = vsel %vm5597, %v5609, %v5611
        %v5613 = vrot.slane %v5386, 1
        %v5614 = vrot.slane %v5387, 1
        %v5615 = vsel %vm5597, %v5613, %v5614
        %v5616 = vrot.slane %v5388, 1
        %v5617 = vsel %vm5597, %v5614, %v5616
        %v5618 = vrot.slane %v5389, 1
        %v5619 = vrot.slane %v5390, 1
        %v5620 = vsel %vm5597, %v5618, %v5619
        %v5621 = vrot.slane %v5391, 1
        %v5622 = vsel %vm5597, %v5619, %v5621
        %v5623 = vrot.slane %v5392, 1
        %v5624 = vrot.slane %v5393, 1
        %v5625 = vsel %vm5597, %v5623, %v5624
        %v5626 = vrot.slane %v5394, 1
        %v5627 = vsel %vm5597, %v5624, %v5626
        %v5628 = vrot.slane %v5395, 1
        %v5629 = vrot.slane %v5396, 1
        %v5630 = vsel %vm5597, %v5628, %v5629
        %v5631 = vrot.slane %v5397, 1
        %v5632 = vsel %vm5597, %v5629, %v5631
        %v5633 = vrot.slane %v5398, 1
        %v5634 = vrot.slane %v5399, 1
        %v5635 = vsel %vm5597, %v5633, %v5634
        %v5636 = vrot.slane %v5400, 1
        %v5637 = vsel %vm5597, %v5634, %v5636
        %v5638 = vrot.slane %v5401, 1
        %v5639 = vrot.slane %v5402, 1
        %v5640 = vsel %vm5597, %v5638, %v5639
        %v5641 = vrot.slane %v5403, 1
        %v5642 = vsel %vm5597, %v5639, %v5641
        %v5643 = vrot.slane %v5404, 1
        %v5644 = vrot.slane %v5405, 1
        %v5645 = vsel %vm5597, %v5643, %v5644
        %v5646 = vrot.slane %v5406, 1
        %v5647 = vsel %vm5597, %v5644, %v5646
        %v5648 = vrot.slane %v5407, 1
        %v5649 = vrot.slane %v5408, 1
        %v5650 = vsel %vm5597, %v5648, %v5649
        %v5651 = vrot.slane %v5409, 1
        %v5652 = vsel %vm5597, %v5649, %v5651
        %v5653 = vrot.slane %v5410, 1
        %v5654 = vrot.slane %v5411, 1
        %v5655 = vsel %vm5597, %v5653, %v5654
        %v5656 = vrot.slane %v5412, 1
        %v5657 = vsel %vm5597, %v5654, %v5656
        %v5658 = vrot.slane %v5413, 1
        %v5659 = vrot.slane %v5414, 1
        %v5660 = vsel %vm5597, %v5658, %v5659
        %v5661 = vrot.slane %v5415, 1
        %v5662 = vsel %vm5597, %v5659, %v5661
        %v5663 = vrot.slane %v5416, 1
        %v5664 = vrot.slane %v5417, 1
        %v5665 = vsel %vm5597, %v5663, %v5664
        %v5666 = vrot.slane %v5418, 1
        %v5667 = vsel %vm5597, %v5664, %v5666
        %v5668 = vrot.slane %v5419, 1
        %v5669 = vrot.slane %v5420, 1
        %v5670 = vsel %vm5597, %v5668, %v5669
        %v5671 = vrot.slane %v5421, 1
        %v5672 = vsel %vm5597, %v5669, %v5671
        %v5673 = vrot.slane %v5422, 1
        %v5674 = vrot.slane %v5423, 1
        %v5675 = vsel %vm5597, %v5673, %v5674
        %v5676 = vrot.slane %v5424, 1
        %v5677 = vsel %vm5597, %v5674, %v5676
        %v5678 = vrot.slane %v5425, 1
        %v5679 = vrot.slane %v5426, 1
        %v5680 = vsel %vm5597, %v5678, %v5679
        %v5681 = vrot.slane %v5427, 1
        %v5682 = vsel %vm5597, %v5679, %v5681
        %v5683 = vrot.slane %v5428, 1
        %v5684 = vrot.slane %v5429, 1
        %v5685 = vsel %vm5597, %v5683, %v5684
        %v5686 = vrot.slane %v5430, 1
        %v5687 = vsel %vm5597, %v5684, %v5686
        %v5724 = vperm.slane %v5431, 0
        %v5725 = vmul.f32 %v5561, %v5724
        %v5726 = vmul.f32 %v5473, %v5724
        %v5727 = vmul.f32 %v5562, %v5724
        %v5728 = vmul.f32 %v5476, %v5724
        %v5729 = vmul.f32 %v5563, %v5724
        %v5730 = vmul.f32 %v5479, %v5724
        %v5731 = vmul.f32 %v5564, %v5724
        %v5732 = vmul.f32 %v5482, %v5724
        %v5733 = vmul.f32 %v5565, %v5724
        %v5734 = vmul.f32 %v5485, %v5724
        %v5735 = vmul.f32 %v5566, %v5724
        %v5736 = vmul.f32 %v5488, %v5724
        %v5737 = vmul.f32 %v5567, %v5724
        %v5738 = vmul.f32 %v5491, %v5724
        %v5739 = vmul.f32 %v5568, %v5724
        %v5740 = vmul.f32 %v5494, %v5724
        %v5741 = vmul.f32 %v5569, %v5724
        %v5742 = vmul.f32 %v5497, %v5724
        %v5743 = vmul.f32 %v5570, %v5724
        %v5744 = vmul.f32 %v5500, %v5724
        %v5745 = vmul.f32 %v5571, %v5724
        %v5746 = vmul.f32 %v5503, %v5724
        %v5747 = vmul.f32 %v5572, %v5724
        %v5748 = vmul.f32 %v5506, %v5724
        %v5749 = vmul.f32 %v5573, %v5724
        %v5750 = vmul.f32 %v5509, %v5724
        %v5751 = vmul.f32 %v5574, %v5724
        %v5752 = vmul.f32 %v5512, %v5724
        %v5753 = vmul.f32 %v5575, %v5724
        %v5754 = vmul.f32 %v5515, %v5724
        %v5755 = vmul.f32 %v5576, %v5724
        %v5756 = vmul.f32 %v5518, %v5724
        %v5757 = vadd.f32 %v5725, 0.0
        %v5758 = vadd.f32 %v5726, 0.0
        %v5759 = vadd.f32 %v5727, 0.0
        %v5760 = vadd.f32 %v5728, 0.0
        %v5761 = vadd.f32 %v5729, 0.0
        %v5762 = vadd.f32 %v5730, 0.0
        %v5763 = vadd.f32 %v5731, 0.0
        %v5764 = vadd.f32 %v5732, 0.0
        %v5765 = vadd.f32 %v5733, 0.0
        %v5766 = vadd.f32 %v5734, 0.0
        %v5767 = vadd.f32 %v5735, 0.0
        %v5768 = vadd.f32 %v5736, 0.0
        %v5769 = vadd.f32 %v5737, 0.0
        %v5770 = vadd.f32 %v5738, 0.0
        %v5771 = vadd.f32 %v5739, 0.0
        %v5772 = vadd.f32 %v5740, 0.0
        %v5773 = vadd.f32 %v5741, 0.0
        %v5774 = vadd.f32 %v5742, 0.0
        %v5775 = vadd.f32 %v5743, 0.0
        %v5776 = vadd.f32 %v5744, 0.0
        %v5777 = vadd.f32 %v5745, 0.0
        %v5778 = vadd.f32 %v5746, 0.0
        %v5779 = vadd.f32 %v5747, 0.0
        %v5780 = vadd.f32 %v5748, 0.0
        %v5781 = vadd.f32 %v5749, 0.0
        %v5782 = vadd.f32 %v5750, 0.0
        %v5783 = vadd.f32 %v5751, 0.0
        %v5784 = vadd.f32 %v5752, 0.0
        %v5785 = vadd.f32 %v5753, 0.0
        %v5786 = vadd.f32 %v5754, 0.0
        %v5787 = vadd.f32 %v5755, 0.0
        %v5788 = vadd.f32 %v5756, 0.0
        %v5789 = vperm.slane %v5431, 3
        %v5790 = vmul.f32 %v5562, %v5789
        %v5791 = vmul.f32 %v5476, %v5789
        %v5792 = vmul.f32 %v5563, %v5789
        %v5793 = vmul.f32 %v5479, %v5789
        %v5794 = vmul.f32 %v5564, %v5789
        %v5795 = vmul.f32 %v5482, %v5789
        %v5796 = vmul.f32 %v5565, %v5789
        %v5797 = vmul.f32 %v5485, %v5789
        %v5798 = vmul.f32 %v5566, %v5789
        %v5799 = vmul.f32 %v5488, %v5789
        %v5800 = vmul.f32 %v5567, %v5789
        %v5801 = vmul.f32 %v5491, %v5789
        %v5802 = vmul.f32 %v5568, %v5789
        %v5803 = vmul.f32 %v5494, %v5789
        %v5804 = vmul.f32 %v5569, %v5789
        %v5805 = vmul.f32 %v5497, %v5789
        %v5806 = vmul.f32 %v5570, %v5789
        %v5807 = vmul.f32 %v5500, %v5789
        %v5808 = vmul.f32 %v5571, %v5789
        %v5809 = vmul.f32 %v5503, %v5789
        %v5810 = vmul.f32 %v5572, %v5789
        %v5811 = vmul.f32 %v5506, %v5789
        %v5812 = vmul.f32 %v5573, %v5789
        %v5813 = vmul.f32 %v5509, %v5789
        %v5814 = vmul.f32 %v5574, %v5789
        %v5815 = vmul.f32 %v5512, %v5789
        %v5816 = vmul.f32 %v5575, %v5789
        %v5817 = vmul.f32 %v5515, %v5789
        %v5818 = vmul.f32 %v5576, %v5789
        %v5819 = vmul.f32 %v5518, %v5789
        %v5820 = vmul.f32 %v5577, %v5789
        %v5821 = vmul.f32 %v5521, %v5789
        %v5822 = vadd.f32 %v5757, %v5790
        %v5823 = vadd.f32 %v5758, %v5791
        %v5824 = vadd.f32 %v5759, %v5792
        %v5825 = vadd.f32 %v5760, %v5793
        %v5826 = vadd.f32 %v5761, %v5794
        %v5827 = vadd.f32 %v5762, %v5795
        %v5828 = vadd.f32 %v5763, %v5796
        %v5829 = vadd.f32 %v5764, %v5797
        %v5830 = vadd.f32 %v5765, %v5798
        %v5831 = vadd.f32 %v5766, %v5799
        %v5832 = vadd.f32 %v5767, %v5800
        %v5833 = vadd.f32 %v5768, %v5801
        %v5834 = vadd.f32 %v5769, %v5802
        %v5835 = vadd.f32 %v5770, %v5803
        %v5836 = vadd.f32 %v5771, %v5804
        %v5837 = vadd.f32 %v5772, %v5805
        %v5838 = vadd.f32 %v5773, %v5806
        %v5839 = vadd.f32 %v5774, %v5807
        %v5840 = vadd.f32 %v5775, %v5808
        %v5841 = vadd.f32 %v5776, %v5809
        %v5842 = vadd.f32 %v5777, %v5810
        %v5843 = vadd.f32 %v5778, %v5811
        %v5844 = vadd.f32 %v5779, %v5812
        %v5845 = vadd.f32 %v5780, %v5813
        %v5846 = vadd.f32 %v5781, %v5814
        %v5847 = vadd.f32 %v5782, %v5815
        %v5848 = vadd.f32 %v5783, %v5816
        %v5849 = vadd.f32 %v5784, %v5817
        %v5850 = vadd.f32 %v5785, %v5818
        %v5851 = vadd.f32 %v5786, %v5819
        %v5852 = vadd.f32 %v5787, %v5820
        %v5853 = vadd.f32 %v5788, %v5821
        %v5854 = vperm.slane %v5431, 6
        %v5855 = vmul.f32 %v5563, %v5854
        %v5856 = vmul.f32 %v5479, %v5854
        %v5857 = vmul.f32 %v5564, %v5854
        %v5858 = vmul.f32 %v5482, %v5854
        %v5859 = vmul.f32 %v5565, %v5854
        %v5860 = vmul.f32 %v5485, %v5854
        %v5861 = vmul.f32 %v5566, %v5854
        %v5862 = vmul.f32 %v5488, %v5854
        %v5863 = vmul.f32 %v5567, %v5854
        %v5864 = vmul.f32 %v5491, %v5854
        %v5865 = vmul.f32 %v5568, %v5854
        %v5866 = vmul.f32 %v5494, %v5854
        %v5867 = vmul.f32 %v5569, %v5854
        %v5868 = vmul.f32 %v5497, %v5854
        %v5869 = vmul.f32 %v5570, %v5854
        %v5870 = vmul.f32 %v5500, %v5854
        %v5871 = vmul.f32 %v5571, %v5854
        %v5872 = vmul.f32 %v5503, %v5854
        %v5873 = vmul.f32 %v5572, %v5854
        %v5874 = vmul.f32 %v5506, %v5854
        %v5875 = vmul.f32 %v5573, %v5854
        %v5876 = vmul.f32 %v5509, %v5854
        %v5877 = vmul.f32 %v5574, %v5854
        %v5878 = vmul.f32 %v5512, %v5854
        %v5879 = vmul.f32 %v5575, %v5854
        %v5880 = vmul.f32 %v5515, %v5854
        %v5881 = vmul.f32 %v5576, %v5854
        %v5882 = vmul.f32 %v5518, %v5854
        %v5883 = vmul.f32 %v5577, %v5854
        %v5884 = vmul.f32 %v5521, %v5854
        %v5885 = vmul.f32 %v5578, %v5854
        %v5886 = vmul.f32 %v5524, %v5854
        %v5887 = vadd.f32 %v5822, %v5855
        %v5888 = vadd.f32 %v5823, %v5856
        %v5889 = vadd.f32 %v5824, %v5857
        %v5890 = vadd.f32 %v5825, %v5858
        %v5891 = vadd.f32 %v5826, %v5859
        %v5892 = vadd.f32 %v5827, %v5860
        %v5893 = vadd.f32 %v5828, %v5861
        %v5894 = vadd.f32 %v5829, %v5862
        %v5895 = vadd.f32 %v5830, %v5863
        %v5896 = vadd.f32 %v5831, %v5864
        %v5897 = vadd.f32 %v5832, %v5865
        %v5898 = vadd.f32 %v5833, %v5866
        %v5899 = vadd.f32 %v5834, %v5867
        %v5900 = vadd.f32 %v5835, %v5868
        %v5901 = vadd.f32 %v5836, %v5869
        %v5902 = vadd.f32 %v5837, %v5870
        %v5903 = vadd.f32 %v5838, %v5871
        %v5904 = vadd.f32 %v5839, %v5872
        %v5905 = vadd.f32 %v5840, %v5873
        %v5906 = vadd.f32 %v5841, %v5874
        %v5907 = vadd.f32 %v5842, %v5875
        %v5908 = vadd.f32 %v5843, %v5876
        %v5909 = vadd.f32 %v5844, %v5877
        %v5910 = vadd.f32 %v5845, %v5878
        %v5911 = vadd.f32 %v5846, %v5879
        %v5912 = vadd.f32 %v5847, %v5880
        %v5913 = vadd.f32 %v5848, %v5881
        %v5914 = vadd.f32 %v5849, %v5882
        %v5915 = vadd.f32 %v5850, %v5883
        %v5916 = vadd.f32 %v5851, %v5884
        %v5917 = vadd.f32 %v5852, %v5885
        %v5918 = vadd.f32 %v5853, %v5886
        %v5919 = vperm.slane %v5431, 1
        %v5920 = vmul.f32 %v5377, %v5919
        %v5921 = vmul.f32 %v5378, %v5919
        %v5922 = vmul.f32 %v5380, %v5919
        %v5923 = vmul.f32 %v5381, %v5919
        %v5924 = vmul.f32 %v5383, %v5919
        %v5925 = vmul.f32 %v5384, %v5919
        %v5926 = vmul.f32 %v5386, %v5919
        %v5927 = vmul.f32 %v5387, %v5919
        %v5928 = vmul.f32 %v5389, %v5919
        %v5929 = vmul.f32 %v5390, %v5919
        %v5930 = vmul.f32 %v5392, %v5919
        %v5931 = vmul.f32 %v5393, %v5919
        %v5932 = vmul.f32 %v5395, %v5919
        %v5933 = vmul.f32 %v5396, %v5919
        %v5934 = vmul.f32 %v5398, %v5919
        %v5935 = vmul.f32 %v5399, %v5919
        %v5936 = vmul.f32 %v5401, %v5919
        %v5937 = vmul.f32 %v5402, %v5919
        %v5938 = vmul.f32 %v5404, %v5919
        %v5939 = vmul.f32 %v5405, %v5919
        %v5940 = vmul.f32 %v5407, %v5919
        %v5941 = vmul.f32 %v5408, %v5919
        %v5942 = vmul.f32 %v5410, %v5919
        %v5943 = vmul.f32 %v5411, %v5919
        %v5944 = vmul.f32 %v5413, %v5919
        %v5945 = vmul.f32 %v5414, %v5919
        %v5946 = vmul.f32 %v5416, %v5919
        %v5947 = vmul.f32 %v5417, %v5919
        %v5948 = vmul.f32 %v5419, %v5919
        %v5949 = vmul.f32 %v5420, %v5919
        %v5950 = vmul.f32 %v5422, %v5919
        %v5951 = vmul.f32 %v5423, %v5919
        %v5952 = vadd.f32 %v5887, %v5920
        %v5953 = vadd.f32 %v5888, %v5921
        %v5954 = vadd.f32 %v5889, %v5922
        %v5955 = vadd.f32 %v5890, %v5923
        %v5956 = vadd.f32 %v5891, %v5924
        %v5957 = vadd.f32 %v5892, %v5925
        %v5958 = vadd.f32 %v5893, %v5926
        %v5959 = vadd.f32 %v5894, %v5927
        %v5960 = vadd.f32 %v5895, %v5928
        %v5961 = vadd.f32 %v5896, %v5929
        %v5962 = vadd.f32 %v5897, %v5930
        %v5963 = vadd.f32 %v5898, %v5931
        %v5964 = vadd.f32 %v5899, %v5932
        %v5965 = vadd.f32 %v5900, %v5933
        %v5966 = vadd.f32 %v5901, %v5934
        %v5967 = vadd.f32 %v5902, %v5935
        %v5968 = vadd.f32 %v5903, %v5936
        %v5969 = vadd.f32 %v5904, %v5937
        %v5970 = vadd.f32 %v5905, %v5938
        %v5971 = vadd.f32 %v5906, %v5939
        %v5972 = vadd.f32 %v5907, %v5940
        %v5973 = vadd.f32 %v5908, %v5941
        %v5974 = vadd.f32 %v5909, %v5942
        %v5975 = vadd.f32 %v5910, %v5943
        %v5976 = vadd.f32 %v5911, %v5944
        %v5977 = vadd.f32 %v5912, %v5945
        %v5978 = vadd.f32 %v5913, %v5946
        %v5979 = vadd.f32 %v5914, %v5947
        %v5980 = vadd.f32 %v5915, %v5948
        %v5981 = vadd.f32 %v5916, %v5949
        %v5982 = vadd.f32 %v5917, %v5950
        %v5983 = vadd.f32 %v5918, %v5951
        %v5984 = vperm.slane %v5431, 4
        %v5985 = vmul.f32 %v5380, %v5984
        %v5986 = vmul.f32 %v5381, %v5984
        %v5987 = vmul.f32 %v5383, %v5984
        %v5988 = vmul.f32 %v5384, %v5984
        %v5989 = vmul.f32 %v5386, %v5984
        %v5990 = vmul.f32 %v5387, %v5984
        %v5991 = vmul.f32 %v5389, %v5984
        %v5992 = vmul.f32 %v5390, %v5984
        %v5993 = vmul.f32 %v5392, %v5984
        %v5994 = vmul.f32 %v5393, %v5984
        %v5995 = vmul.f32 %v5395, %v5984
        %v5996 = vmul.f32 %v5396, %v5984
        %v5997 = vmul.f32 %v5398, %v5984
        %v5998 = vmul.f32 %v5399, %v5984
        %v5999 = vmul.f32 %v5401, %v5984
        %v6000 = vmul.f32 %v5402, %v5984
        %v6001 = vmul.f32 %v5404, %v5984
        %v6002 = vmul.f32 %v5405, %v5984
        %v6003 = vmul.f32 %v5407, %v5984
        %v6004 = vmul.f32 %v5408, %v5984
        %v6005 = vmul.f32 %v5410, %v5984
        %v6006 = vmul.f32 %v5411, %v5984
        %v6007 = vmul.f32 %v5413, %v5984
        %v6008 = vmul.f32 %v5414, %v5984
        %v6009 = vmul.f32 %v5416, %v5984
        %v6010 = vmul.f32 %v5417, %v5984
        %v6011 = vmul.f32 %v5419, %v5984
        %v6012 = vmul.f32 %v5420, %v5984
        %v6013 = vmul.f32 %v5422, %v5984
        %v6014 = vmul.f32 %v5423, %v5984
        %v6015 = vmul.f32 %v5425, %v5984
        %v6016 = vmul.f32 %v5426, %v5984
        %v6017 = vadd.f32 %v5952, %v5985
        %v6018 = vadd.f32 %v5953, %v5986
        %v6019 = vadd.f32 %v5954, %v5987
        %v6020 = vadd.f32 %v5955, %v5988
        %v6021 = vadd.f32 %v5956, %v5989
        %v6022 = vadd.f32 %v5957, %v5990
        %v6023 = vadd.f32 %v5958, %v5991
        %v6024 = vadd.f32 %v5959, %v5992
        %v6025 = vadd.f32 %v5960, %v5993
        %v6026 = vadd.f32 %v5961, %v5994
        %v6027 = vadd.f32 %v5962, %v5995
        %v6028 = vadd.f32 %v5963, %v5996
        %v6029 = vadd.f32 %v5964, %v5997
        %v6030 = vadd.f32 %v5965, %v5998
        %v6031 = vadd.f32 %v5966, %v5999
        %v6032 = vadd.f32 %v5967, %v6000
        %v6033 = vadd.f32 %v5968, %v6001
        %v6034 = vadd.f32 %v5969, %v6002
        %v6035 = vadd.f32 %v5970, %v6003
        %v6036 = vadd.f32 %v5971, %v6004
        %v6037 = vadd.f32 %v5972, %v6005
        %v6038 = vadd.f32 %v5973, %v6006
        %v6039 = vadd.f32 %v5974, %v6007
        %v6040 = vadd.f32 %v5975, %v6008
        %v6041 = vadd.f32 %v5976, %v6009
        %v6042 = vadd.f32 %v5977, %v6010
        %v6043 = vadd.f32 %v5978, %v6011
        %v6044 = vadd.f32 %v5979, %v6012
        %v6045 = vadd.f32 %v5980, %v6013
        %v6046 = vadd.f32 %v5981, %v6014
        %v6047 = vadd.f32 %v5982, %v6015
        %v6048 = vadd.f32 %v5983, %v6016
        %v6049 = vperm.slane %v5431, 7
        %v6050 = vmul.f32 %v5383, %v6049
        %v6051 = vmul.f32 %v5384, %v6049
        %v6052 = vmul.f32 %v5386, %v6049
        %v6053 = vmul.f32 %v5387, %v6049
        %v6054 = vmul.f32 %v5389, %v6049
        %v6055 = vmul.f32 %v5390, %v6049
        %v6056 = vmul.f32 %v5392, %v6049
        %v6057 = vmul.f32 %v5393, %v6049
        %v6058 = vmul.f32 %v5395, %v6049
        %v6059 = vmul.f32 %v5396, %v6049
        %v6060 = vmul.f32 %v5398, %v6049
        %v6061 = vmul.f32 %v5399, %v6049
        %v6062 = vmul.f32 %v5401, %v6049
        %v6063 = vmul.f32 %v5402, %v6049
        %v6064 = vmul.f32 %v5404, %v6049
        %v6065 = vmul.f32 %v5405, %v6049
        %v6066 = vmul.f32 %v5407, %v6049
        %v6067 = vmul.f32 %v5408, %v6049
        %v6068 = vmul.f32 %v5410, %v6049
        %v6069 = vmul.f32 %v5411, %v6049
        %v6070 = vmul.f32 %v5413, %v6049
        %v6071 = vmul.f32 %v5414, %v6049
        %v6072 = vmul.f32 %v5416, %v6049
        %v6073 = vmul.f32 %v5417, %v6049
        %v6074 = vmul.f32 %v5419, %v6049
        %v6075 = vmul.f32 %v5420, %v6049
        %v6076 = vmul.f32 %v5422, %v6049
        %v6077 = vmul.f32 %v5423, %v6049
        %v6078 = vmul.f32 %v5425, %v6049
        %v6079 = vmul.f32 %v5426, %v6049
        %v6080 = vmul.f32 %v5428, %v6049
        %v6081 = vmul.f32 %v5429, %v6049
        %v6082 = vadd.f32 %v6017, %v6050
        %v6083 = vadd.f32 %v6018, %v6051
        %v6084 = vadd.f32 %v6019, %v6052
        %v6085 = vadd.f32 %v6020, %v6053
        %v6086 = vadd.f32 %v6021, %v6054
        %v6087 = vadd.f32 %v6022, %v6055
        %v6088 = vadd.f32 %v6023, %v6056
        %v6089 = vadd.f32 %v6024, %v6057
        %v6090 = vadd.f32 %v6025, %v6058
        %v6091 = vadd.f32 %v6026, %v6059
        %v6092 = vadd.f32 %v6027, %v6060
        %v6093 = vadd.f32 %v6028, %v6061
        %v6094 = vadd.f32 %v6029, %v6062
        %v6095 = vadd.f32 %v6030, %v6063
        %v6096 = vadd.f32 %v6031, %v6064
        %v6097 = vadd.f32 %v6032, %v6065
        %v6098 = vadd.f32 %v6033, %v6066
        %v6099 = vadd.f32 %v6034, %v6067
        %v6100 = vadd.f32 %v6035, %v6068
        %v6101 = vadd.f32 %v6036, %v6069
        %v6102 = vadd.f32 %v6037, %v6070
        %v6103 = vadd.f32 %v6038, %v6071
        %v6104 = vadd.f32 %v6039, %v6072
        %v6105 = vadd.f32 %v6040, %v6073
        %v6106 = vadd.f32 %v6041, %v6074
        %v6107 = vadd.f32 %v6042, %v6075
        %v6108 = vadd.f32 %v6043, %v6076
        %v6109 = vadd.f32 %v6044, %v6077
        %v6110 = vadd.f32 %v6045, %v6078
        %v6111 = vadd.f32 %v6046, %v6079
        %v6112 = vadd.f32 %v6047, %v6080
        %v6113 = vadd.f32 %v6048, %v6081
        %v6114 = vperm.slane %v5431, 2
        %v6115 = vmul.f32 %v5600, %v6114
        %v6116 = vmul.f32 %v5602, %v6114
        %v6117 = vmul.f32 %v5605, %v6114
        %v6118 = vmul.f32 %v5607, %v6114
        %v6119 = vmul.f32 %v5610, %v6114
        %v6120 = vmul.f32 %v5612, %v6114
        %v6121 = vmul.f32 %v5615, %v6114
        %v6122 = vmul.f32 %v5617, %v6114
        %v6123 = vmul.f32 %v5620, %v6114
        %v6124 = vmul.f32 %v5622, %v6114
        %v6125 = vmul.f32 %v5625, %v6114
        %v6126 = vmul.f32 %v5627, %v6114
        %v6127 = vmul.f32 %v5630, %v6114
        %v6128 = vmul.f32 %v5632, %v6114
        %v6129 = vmul.f32 %v5635, %v6114
        %v6130 = vmul.f32 %v5637, %v6114
        %v6131 = vmul.f32 %v5640, %v6114
        %v6132 = vmul.f32 %v5642, %v6114
        %v6133 = vmul.f32 %v5645, %v6114
        %v6134 = vmul.f32 %v5647, %v6114
        %v6135 = vmul.f32 %v5650, %v6114
        %v6136 = vmul.f32 %v5652, %v6114
        %v6137 = vmul.f32 %v5655, %v6114
        %v6138 = vmul.f32 %v5657, %v6114
        %v6139 = vmul.f32 %v5660, %v6114
        %v6140 = vmul.f32 %v5662, %v6114
        %v6141 = vmul.f32 %v5665, %v6114
        %v6142 = vmul.f32 %v5667, %v6114
        %v6143 = vmul.f32 %v5670, %v6114
        %v6144 = vmul.f32 %v5672, %v6114
        %v6145 = vmul.f32 %v5675, %v6114
        %v6146 = vmul.f32 %v5677, %v6114
        %v6147 = vadd.f32 %v6082, %v6115
        %v6148 = vadd.f32 %v6083, %v6116
        %v6149 = vadd.f32 %v6084, %v6117
        %v6150 = vadd.f32 %v6085, %v6118
        %v6151 = vadd.f32 %v6086, %v6119
        %v6152 = vadd.f32 %v6087, %v6120
        %v6153 = vadd.f32 %v6088, %v6121
        %v6154 = vadd.f32 %v6089, %v6122
        %v6155 = vadd.f32 %v6090, %v6123
        %v6156 = vadd.f32 %v6091, %v6124
        %v6157 = vadd.f32 %v6092, %v6125
        %v6158 = vadd.f32 %v6093, %v6126
        %v6159 = vadd.f32 %v6094, %v6127
        %v6160 = vadd.f32 %v6095, %v6128
        %v6161 = vadd.f32 %v6096, %v6129
        %v6162 = vadd.f32 %v6097, %v6130
        %v6163 = vadd.f32 %v6098, %v6131
        %v6164 = vadd.f32 %v6099, %v6132
        %v6165 = vadd.f32 %v6100, %v6133
        %v6166 = vadd.f32 %v6101, %v6134
        %v6167 = vadd.f32 %v6102, %v6135
        %v6168 = vadd.f32 %v6103, %v6136
        %v6169 = vadd.f32 %v6104, %v6137
        %v6170 = vadd.f32 %v6105, %v6138
        %v6171 = vadd.f32 %v6106, %v6139
        %v6172 = vadd.f32 %v6107, %v6140
        %v6173 = vadd.f32 %v6108, %v6141
        %v6174 = vadd.f32 %v6109, %v6142
        %v6175 = vadd.f32 %v6110, %v6143
        %v6176 = vadd.f32 %v6111, %v6144
        %v6177 = vadd.f32 %v6112, %v6145
        %v6178 = vadd.f32 %v6113, %v6146
        %v6179 = vperm.slane %v5431, 5
        %v6180 = vmul.f32 %v5605, %v6179
        %v6181 = vmul.f32 %v5607, %v6179
        %v6182 = vmul.f32 %v5610, %v6179
        %v6183 = vmul.f32 %v5612, %v6179
        %v6184 = vmul.f32 %v5615, %v6179
        %v6185 = vmul.f32 %v5617, %v6179
        %v6186 = vmul.f32 %v5620, %v6179
        %v6187 = vmul.f32 %v5622, %v6179
        %v6188 = vmul.f32 %v5625, %v6179
        %v6189 = vmul.f32 %v5627, %v6179
        %v6190 = vmul.f32 %v5630, %v6179
        %v6191 = vmul.f32 %v5632, %v6179
        %v6192 = vmul.f32 %v5635, %v6179
        %v6193 = vmul.f32 %v5637, %v6179
        %v6194 = vmul.f32 %v5640, %v6179
        %v6195 = vmul.f32 %v5642, %v6179
        %v6196 = vmul.f32 %v5645, %v6179
        %v6197 = vmul.f32 %v5647, %v6179
        %v6198 = vmul.f32 %v5650, %v6179
        %v6199 = vmul.f32 %v5652, %v6179
        %v6200 = vmul.f32 %v5655, %v6179
        %v6201 = vmul.f32 %v5657, %v6179
        %v6202 = vmul.f32 %v5660, %v6179
        %v6203 = vmul.f32 %v5662, %v6179
        %v6204 = vmul.f32 %v5665, %v6179
        %v6205 = vmul.f32 %v5667, %v6179
        %v6206 = vmul.f32 %v5670, %v6179
        %v6207 = vmul.f32 %v5672, %v6179
        %v6208 = vmul.f32 %v5675, %v6179
        %v6209 = vmul.f32 %v5677, %v6179
        %v6210 = vmul.f32 %v5680, %v6179
        %v6211 = vmul.f32 %v5682, %v6179
        %v6212 = vadd.f32 %v6147, %v6180
        %v6213 = vadd.f32 %v6148, %v6181
        %v6214 = vadd.f32 %v6149, %v6182
        %v6215 = vadd.f32 %v6150, %v6183
        %v6216 = vadd.f32 %v6151, %v6184
        %v6217 = vadd.f32 %v6152, %v6185
        %v6218 = vadd.f32 %v6153, %v6186
        %v6219 = vadd.f32 %v6154, %v6187
        %v6220 = vadd.f32 %v6155, %v6188
        %v6221 = vadd.f32 %v6156, %v6189
        %v6222 = vadd.f32 %v6157, %v6190
        %v6223 = vadd.f32 %v6158, %v6191
        %v6224 = vadd.f32 %v6159, %v6192
        %v6225 = vadd.f32 %v6160, %v6193
        %v6226 = vadd.f32 %v6161, %v6194
        %v6227 = vadd.f32 %v6162, %v6195
        %v6228 = vadd.f32 %v6163, %v6196
        %v6229 = vadd.f32 %v6164, %v6197
        %v6230 = vadd.f32 %v6165, %v6198
        %v6231 = vadd.f32 %v6166, %v6199
        %v6232 = vadd.f32 %v6167, %v6200
        %v6233 = vadd.f32 %v6168, %v6201
        %v6234 = vadd.f32 %v6169, %v6202
        %v6235 = vadd.f32 %v6170, %v6203
        %v6236 = vadd.f32 %v6171, %v6204
        %v6237 = vadd.f32 %v6172, %v6205
        %v6238 = vadd.f32 %v6173, %v6206
        %v6239 = vadd.f32 %v6174, %v6207
        %v6240 = vadd.f32 %v6175, %v6208
        %v6241 = vadd.f32 %v6176, %v6209
        %v6242 = vadd.f32 %v6177, %v6210
        %v6243 = vadd.f32 %v6178, %v6211
        %v6244 = vperm.slane %v5432, 0
        %v6245 = vmul.f32 %v5610, %v6244
        %v6246 = vmul.f32 %v5612, %v6244
        %v6247 = vmul.f32 %v5615, %v6244
        %v6248 = vmul.f32 %v5617, %v6244
        %v6249 = vmul.f32 %v5620, %v6244
        %v6250 = vmul.f32 %v5622, %v6244
        %v6251 = vmul.f32 %v5625, %v6244
        %v6252 = vmul.f32 %v5627, %v6244
        %v6253 = vmul.f32 %v5630, %v6244
        %v6254 = vmul.f32 %v5632, %v6244
        %v6255 = vmul.f32 %v5635, %v6244
        %v6256 = vmul.f32 %v5637, %v6244
        %v6257 = vmul.f32 %v5640, %v6244
        %v6258 = vmul.f32 %v5642, %v6244
        %v6259 = vmul.f32 %v5645, %v6244
        %v6260 = vmul.f32 %v5647, %v6244
        %v6261 = vmul.f32 %v5650, %v6244
        %v6262 = vmul.f32 %v5652, %v6244
        %v6263 = vmul.f32 %v5655, %v6244
        %v6264 = vmul.f32 %v5657, %v6244
        %v6265 = vmul.f32 %v5660, %v6244
        %v6266 = vmul.f32 %v5662, %v6244
        %v6267 = vmul.f32 %v5665, %v6244
        %v6268 = vmul.f32 %v5667, %v6244
        %v6269 = vmul.f32 %v5670, %v6244
        %v6270 = vmul.f32 %v5672, %v6244
        %v6271 = vmul.f32 %v5675, %v6244
        %v6272 = vmul.f32 %v5677, %v6244
        %v6273 = vmul.f32 %v5680, %v6244
        %v6274 = vmul.f32 %v5682, %v6244
        %v6275 = vmul.f32 %v5685, %v6244
        %v6276 = vmul.f32 %v5687, %v6244
        %v6277 = vadd.f32 %v6212, %v6245
        %v6278 = vadd.f32 %v6213, %v6246
        %v6279 = vadd.f32 %v6214, %v6247
        %v6280 = vadd.f32 %v6215, %v6248
        %v6281 = vadd.f32 %v6216, %v6249
        %v6282 = vadd.f32 %v6217, %v6250
        %v6283 = vadd.f32 %v6218, %v6251
        %v6284 = vadd.f32 %v6219, %v6252
        %v6285 = vadd.f32 %v6220, %v6253
        %v6286 = vadd.f32 %v6221, %v6254
        %v6287 = vadd.f32 %v6222, %v6255
        %v6288 = vadd.f32 %v6223, %v6256
        %v6289 = vadd.f32 %v6224, %v6257
        %v6290 = vadd.f32 %v6225, %v6258
        %v6291 = vadd.f32 %v6226, %v6259
        %v6292 = vadd.f32 %v6227, %v6260
        %v6293 = vadd.f32 %v6228, %v6261
        %v6294 = vadd.f32 %v6229, %v6262
        %v6295 = vadd.f32 %v6230, %v6263
        %v6296 = vadd.f32 %v6231, %v6264
        %v6297 = vadd.f32 %v6232, %v6265
        %v6298 = vadd.f32 %v6233, %v6266
        %v6299 = vadd.f32 %v6234, %v6267
        %v6300 = vadd.f32 %v6235, %v6268
        %v6301 = vadd.f32 %v6236, %v6269
        %v6302 = vadd.f32 %v6237, %v6270
        %v6303 = vadd.f32 %v6238, %v6271
        %v6304 = vadd.f32 %v6239, %v6272
        %v6305 = vadd.f32 %v6240, %v6273
        %v6306 = vadd.f32 %v6241, %v6274
        %v6307 = vadd.f32 %v6242, %v6275
        %v6308 = vadd.f32 %v6243, %v6276
        %v6310 = vperm.slane %v5433, 0
        %v6312 = vadd.f32 %v6277, %v6310
        %v6313 = vadd.f32 %v6278, %v6310
        %v6314 = vadd.f32 %v6279, %v6310
        %v6315 = vadd.f32 %v6280, %v6310
        %v6316 = vadd.f32 %v6281, %v6310
        %v6317 = vadd.f32 %v6282, %v6310
        %v6318 = vadd.f32 %v6283, %v6310
        %v6319 = vadd.f32 %v6284, %v6310
        %v6320 = vadd.f32 %v6285, %v6310
        %v6321 = vadd.f32 %v6286, %v6310
        %v6322 = vadd.f32 %v6287, %v6310
        %v6323 = vadd.f32 %v6288, %v6310
        %v6324 = vadd.f32 %v6289, %v6310
        %v6325 = vadd.f32 %v6290, %v6310
        %v6326 = vadd.f32 %v6291, %v6310
        %v6327 = vadd.f32 %v6292, %v6310
        %v6328 = vadd.f32 %v6293, %v6310
        %v6329 = vadd.f32 %v6294, %v6310
        %v6330 = vadd.f32 %v6295, %v6310
        %v6331 = vadd.f32 %v6296, %v6310
        %v6332 = vadd.f32 %v6297, %v6310
        %v6333 = vadd.f32 %v6298, %v6310
        %v6334 = vadd.f32 %v6299, %v6310
        %v6335 = vadd.f32 %v6300, %v6310
        %v6336 = vadd.f32 %v6301, %v6310
        %v6337 = vadd.f32 %v6302, %v6310
        %v6338 = vadd.f32 %v6303, %v6310
        %v6339 = vadd.f32 %v6304, %v6310
        %v6340 = vadd.f32 %v6305, %v6310
        %v6341 = vadd.f32 %v6306, %v6310
        %v6342 = vadd.f32 %v6307, %v6310
        %v6343 = vadd.f32 %v6308, %v6310
        %v6344 = vpack.c.bf16 %v6312, %v6312
        %v6345 = vpack.c.bf16 %v6313, %v6313
        %v6346 = vpack.c.bf16 %v6314, %v6314
        %v6347 = vpack.c.bf16 %v6315, %v6315
        %v6348 = vpack.c.bf16 %v6316, %v6316
        %v6349 = vpack.c.bf16 %v6317, %v6317
        %v6350 = vpack.c.bf16 %v6318, %v6318
        %v6351 = vpack.c.bf16 %v6319, %v6319
        %v6352 = vpack.c.bf16 %v6320, %v6320
        %v6353 = vpack.c.bf16 %v6321, %v6321
        %v6354 = vpack.c.bf16 %v6322, %v6322
        %v6355 = vpack.c.bf16 %v6323, %v6323
        %v6356 = vpack.c.bf16 %v6324, %v6324
        %v6357 = vpack.c.bf16 %v6325, %v6325
        %v6358 = vpack.c.bf16 %v6326, %v6326
        %v6359 = vpack.c.bf16 %v6327, %v6327
        %v6360 = vpack.c.bf16 %v6328, %v6328
        %v6361 = vpack.c.bf16 %v6329, %v6329
        %v6362 = vpack.c.bf16 %v6330, %v6330
        %v6363 = vpack.c.bf16 %v6331, %v6331
        %v6364 = vpack.c.bf16 %v6332, %v6332
        %v6365 = vpack.c.bf16 %v6333, %v6333
        %v6366 = vpack.c.bf16 %v6334, %v6334
        %v6367 = vpack.c.bf16 %v6335, %v6335
        %v6368 = vpack.c.bf16 %v6336, %v6336
        %v6369 = vpack.c.bf16 %v6337, %v6337
        %v6370 = vpack.c.bf16 %v6338, %v6338
        %v6371 = vpack.c.bf16 %v6339, %v6339
        %v6372 = vpack.c.bf16 %v6340, %v6340
        %v6373 = vpack.c.bf16 %v6341, %v6341
        %v6374 = vpack.c.bf16 %v6342, %v6342
        %v6375 = vpack.c.bf16 %v6343, %v6343
        %6376 = vst [vmem:[%s468] sm:$0xf] %v6344
        %6377 = vst [vmem:[%s468 + $0x4] sm:$0xf] %v6345
        %6378 = vst [vmem:[%s468 + $0xc] sm:$0xf] %v6346
        %6379 = vst [vmem:[%s468 + $0x10] sm:$0xf] %v6347
        %6380 = vst [vmem:[%s468 + $0x18] sm:$0xf] %v6348
        %6381 = vst [vmem:[%s468 + $0x1c] sm:$0xf] %v6349
        %6382 = vst [vmem:[%s468 + $0x24] sm:$0xf] %v6350
        %6383 = vst [vmem:[%s468 + $0x28] sm:$0xf] %v6351
        %6384 = vst [vmem:[%s468 + $0x30] sm:$0xf] %v6352
        %6385 = vst [vmem:[%s468 + $0x34] sm:$0xf] %v6353
        %6386 = vst [vmem:[%s468 + $0x3c] sm:$0xf] %v6354
        %6387 = vst [vmem:[%s468 + $0x40] sm:$0xf] %v6355
        %6388 = vst [vmem:[%s468 + $0x48] sm:$0xf] %v6356
        %6389 = vst [vmem:[%s468 + $0x4c] sm:$0xf] %v6357
        %6390 = vst [vmem:[%s468 + $0x54] sm:$0xf] %v6358
        %6391 = vst [vmem:[%s468 + $0x58] sm:$0xf] %v6359
        %6392 = vst [vmem:[%s468 + $0x60] sm:$0xf] %v6360
        %6393 = vst [vmem:[%s468 + $0x64] sm:$0xf] %v6361
        %6394 = vst [vmem:[%s468 + $0x6c] sm:$0xf] %v6362
        %6395 = vst [vmem:[%s468 + $0x70] sm:$0xf] %v6363
        %6396 = vst [vmem:[%s468 + $0x78] sm:$0xf] %v6364
        %6397 = vst [vmem:[%s468 + $0x7c] sm:$0xf] %v6365
        %6398 = vst [vmem:[%s468 + $0x84] sm:$0xf] %v6366
        %6399 = vst [vmem:[%s468 + $0x88] sm:$0xf] %v6367
        %6400 = vst [vmem:[%s468 + $0x90] sm:$0xf] %v6368
        %6401 = vst [vmem:[%s468 + $0x94] sm:$0xf] %v6369
        %6402 = vst [vmem:[%s468 + $0x9c] sm:$0xf] %v6370
        %6403 = vst [vmem:[%s468 + $0xa0] sm:$0xf] %v6371
        %6404 = vst [vmem:[%s468 + $0xa8] sm:$0xf] %v6372
        %6405 = vst [vmem:[%s468 + $0xac] sm:$0xf] %v6373
        %6406 = vst [vmem:[%s468 + $0xb4] sm:$0xf] %v6374
        %6407 = vst [vmem:[%s468 + $0xb8] sm:$0xf] %v6375
        %v6408 = vld [vmem:[#allocation4] sm:$0xf]
        %v6409 = vld [vmem:[#allocation4 + $0x4] sm:$0xf]
        %v6410 = vld [vmem:[#allocation4 + $0x8] sm:$0xf]
        %v6411 = vld [vmem:[#allocation4 + $0xc] sm:$0xf]
        %v6412 = vld [vmem:[#allocation4 + $0x10] sm:$0xf]
        %v6413 = vld [vmem:[#allocation4 + $0x14] sm:$0xf]
        %v6414 = vld [vmem:[#allocation4 + $0x18] sm:$0xf]
        %v6415 = vld [vmem:[#allocation4 + $0x1c] sm:$0xf]
        %v6416 = vld [vmem:[#allocation4 + $0x20] sm:$0xf]
        %v6417 = vld [vmem:[#allocation4 + $0x24] sm:$0xf]
        %v6418 = vld [vmem:[#allocation4 + $0x28] sm:$0xf]
        %v6419 = vld [vmem:[#allocation4 + $0x2c] sm:$0xf]
        %v6420 = vld [vmem:[#allocation4 + $0x30] sm:$0xf]
        %v6421 = vld [vmem:[#allocation4 + $0x34] sm:$0xf]
        %v6422 = vld [vmem:[#allocation4 + $0x38] sm:$0xf]
        %v6423 = vld [vmem:[#allocation4 + $0x3c] sm:$0xf]
        %v6424 = vld [vmem:[#allocation4 + $0x40] sm:$0xf]
        %v6425 = vld [vmem:[#allocation4 + $0x44] sm:$0xf]
        %v6426 = vld [vmem:[#allocation4 + $0x48] sm:$0xf]
        %v6427 = vld [vmem:[#allocation4 + $0x4c] sm:$0xf]
        %v6428 = vld [vmem:[#allocation4 + $0x50] sm:$0xf]
        %v6429 = vld [vmem:[#allocation4 + $0x54] sm:$0xf]
        %v6430 = vld [vmem:[#allocation4 + $0x58] sm:$0xf]
        %v6431 = vld [vmem:[#allocation4 + $0x5c] sm:$0xf]
        %v6432 = vld [vmem:[#allocation4 + $0x60] sm:$0xf]
        %v6433 = vld [vmem:[#allocation4 + $0x64] sm:$0xf]
        %v6434 = vld [vmem:[#allocation4 + $0x68] sm:$0xf]
        %v6435 = vld [vmem:[#allocation4 + $0x6c] sm:$0xf]
        %v6436 = vld [vmem:[#allocation4 + $0x70] sm:$0xf]
        %v6437 = vld [vmem:[#allocation4 + $0x74] sm:$0xf]
        %v6438 = vld [vmem:[#allocation4 + $0x78] sm:$0xf]
        %v6439 = vld [vmem:[#allocation4 + $0x7c] sm:$0xf]
        %v6440 = vld [vmem:[#allocation4 + $0x80] sm:$0xf]
        %v6441 = vld [vmem:[#allocation4 + $0x84] sm:$0xf]
        %v6442 = vld [vmem:[#allocation4 + $0x88] sm:$0xf]
        %v6443 = vld [vmem:[#allocation4 + $0x8c] sm:$0xf]
        %v6444 = vld [vmem:[#allocation4 + $0x90] sm:$0xf]
        %v6445 = vld [vmem:[#allocation4 + $0x94] sm:$0xf]
        %v6446 = vld [vmem:[#allocation4 + $0x98] sm:$0xf]
        %v6447 = vld [vmem:[#allocation4 + $0x9c] sm:$0xf]
        %v6448 = vld [vmem:[#allocation4 + $0xa0] sm:$0xf]
        %v6449 = vld [vmem:[#allocation4 + $0xa4] sm:$0xf]
        %v6450 = vld [vmem:[#allocation4 + $0xa8] sm:$0xf]
        %v6451 = vld [vmem:[#allocation4 + $0xac] sm:$0xf]
        %v6452 = vld [vmem:[#allocation4 + $0xb0] sm:$0xf]
        %v6453 = vld [vmem:[#allocation4 + $0xb4] sm:$0xf]
        %v6454 = vld [vmem:[#allocation4 + $0xb8] sm:$0xf]
        %v6455 = vld [vmem:[#allocation4 + $0xbc] sm:$0xf]
        %v6456 = vld [vmem:[#allocation4 + $0xc0] sm:$0xf]
        %v6457 = vld [vmem:[#allocation4 + $0xc4] sm:$0xf]
        %v6458 = vld [vmem:[#allocation4 + $0xc8] sm:$0xf]
        %v6459 = vld [vmem:[#allocation4 + $0xcc] sm:$0xf]
        %v6460 = vld [vmem:[#allocation4 + $0xd0] sm:$0xf]
        %v6461 = vld [vmem:[#allocation4 + $0xd4] sm:$0xf]
        %v6498 = vunpack.c.l.b16 %v6408
        %v6499 = vunpack.c.l.b16 %v6409
        %v6500 = vunpack.c.l.b16 %v6411
        %v6501 = vunpack.c.l.b16 %v6412
        %v6502 = vunpack.c.l.b16 %v6414
        %v6503 = vunpack.c.l.b16 %v6415
        %v6504 = vunpack.c.l.b16 %v6417
        %v6505 = vunpack.c.l.b16 %v6418
        %v6506 = vunpack.c.l.b16 %v6420
        %v6507 = vunpack.c.l.b16 %v6421
        %v6508 = vunpack.c.l.b16 %v6423
        %v6509 = vunpack.c.l.b16 %v6424
        %v6510 = vunpack.c.l.b16 %v6426
        %v6511 = vunpack.c.l.b16 %v6427
        %v6512 = vunpack.c.l.b16 %v6429
        %v6513 = vunpack.c.l.b16 %v6430
        %v6514 = vunpack.c.l.b16 %v6432
        %v6515 = vunpack.c.l.b16 %v6433
        %v6516 = vunpack.c.l.b16 %v6435
        %v6517 = vunpack.c.l.b16 %v6436
        %v6518 = vunpack.c.l.b16 %v6438
        %v6519 = vunpack.c.l.b16 %v6439
        %v6520 = vunpack.c.l.b16 %v6441
        %v6521 = vunpack.c.l.b16 %v6442
        %v6522 = vunpack.c.l.b16 %v6444
        %v6523 = vunpack.c.l.b16 %v6445
        %v6524 = vunpack.c.l.b16 %v6447
        %v6525 = vunpack.c.l.b16 %v6448
        %v6526 = vunpack.c.l.b16 %v6450
        %v6527 = vunpack.c.l.b16 %v6451
        %v6528 = vunpack.c.l.b16 %v6453
        %v6529 = vunpack.c.l.b16 %v6454
        %v6530 = vunpack.c.l.b16 %v6456
        %v6531 = vunpack.c.l.b16 %v6457
        %v6532 = vunpack.c.l.b16 %v6459
        %v6533 = vunpack.c.l.b16 %v6460
        %v6534 = vpack.c.b16 %v6499, %v6498
        %v6535 = vpack.c.b16 %v6501, %v6500
        %v6536 = vpack.c.b16 %v6503, %v6502
        %v6537 = vpack.c.b16 %v6505, %v6504
        %v6538 = vpack.c.b16 %v6507, %v6506
        %v6539 = vpack.c.b16 %v6509, %v6508
        %v6540 = vpack.c.b16 %v6511, %v6510
        %v6541 = vpack.c.b16 %v6513, %v6512
        %v6542 = vpack.c.b16 %v6515, %v6514
        %v6543 = vpack.c.b16 %v6517, %v6516
        %v6544 = vpack.c.b16 %v6519, %v6518
        %v6545 = vpack.c.b16 %v6521, %v6520
        %v6546 = vpack.c.b16 %v6523, %v6522
        %v6547 = vpack.c.b16 %v6525, %v6524
        %v6548 = vpack.c.b16 %v6527, %v6526
        %v6549 = vpack.c.b16 %v6529, %v6528
        %v6550 = vpack.c.b16 %v6531, %v6530
        %v6551 = vpack.c.b16 %v6533, %v6532
        %v6553 = vshrl.u32 %v6534, 16
        %v6555 = vrot.slane %v6553, 7
        %v6556 = vshll.u32 %v6534, 16
        %v6558 = vor.u32 %v6555, %v6556
        %v6560 = vshrl.u32 %v6535, 16
        %v6562 = vrot.slane %v6560, 7
        %v6563 = vshll.u32 %v6535, 16
        %v6565 = vor.u32 %v6562, %v6563
        %v6567 = vshrl.u32 %v6536, 16
        %v6569 = vrot.slane %v6567, 7
        %v6570 = vshll.u32 %v6536, 16
        %v6572 = vor.u32 %v6569, %v6570
        %v6574 = vshrl.u32 %v6537, 16
        %v6576 = vrot.slane %v6574, 7
        %v6577 = vshll.u32 %v6537, 16
        %v6579 = vor.u32 %v6576, %v6577
        %v6581 = vshrl.u32 %v6538, 16
        %v6583 = vrot.slane %v6581, 7
        %v6584 = vshll.u32 %v6538, 16
        %v6586 = vor.u32 %v6583, %v6584
        %v6588 = vshrl.u32 %v6539, 16
        %v6590 = vrot.slane %v6588, 7
        %v6591 = vshll.u32 %v6539, 16
        %v6593 = vor.u32 %v6590, %v6591
        %v6595 = vshrl.u32 %v6540, 16
        %v6597 = vrot.slane %v6595, 7
        %v6598 = vshll.u32 %v6540, 16
        %v6600 = vor.u32 %v6597, %v6598
        %v6602 = vshrl.u32 %v6541, 16
        %v6604 = vrot.slane %v6602, 7
        %v6605 = vshll.u32 %v6541, 16
        %v6607 = vor.u32 %v6604, %v6605
        %v6609 = vshrl.u32 %v6542, 16
        %v6611 = vrot.slane %v6609, 7
        %v6612 = vshll.u32 %v6542, 16
        %v6614 = vor.u32 %v6611, %v6612
        %v6616 = vshrl.u32 %v6543, 16
        %v6618 = vrot.slane %v6616, 7
        %v6619 = vshll.u32 %v6543, 16
        %v6621 = vor.u32 %v6618, %v6619
        %v6623 = vshrl.u32 %v6544, 16
        %v6625 = vrot.slane %v6623, 7
        %v6626 = vshll.u32 %v6544, 16
        %v6628 = vor.u32 %v6625, %v6626
        %v6630 = vshrl.u32 %v6545, 16
        %v6632 = vrot.slane %v6630, 7
        %v6633 = vshll.u32 %v6545, 16
        %v6635 = vor.u32 %v6632, %v6633
        %v6637 = vshrl.u32 %v6546, 16
        %v6639 = vrot.slane %v6637, 7
        %v6640 = vshll.u32 %v6546, 16
        %v6642 = vor.u32 %v6639, %v6640
        %v6644 = vshrl.u32 %v6547, 16
        %v6646 = vrot.slane %v6644, 7
        %v6647 = vshll.u32 %v6547, 16
        %v6649 = vor.u32 %v6646, %v6647
        %v6651 = vshrl.u32 %v6548, 16
        %v6653 = vrot.slane %v6651, 7
        %v6654 = vshll.u32 %v6548, 16
        %v6656 = vor.u32 %v6653, %v6654
        %v6658 = vshrl.u32 %v6549, 16
        %v6660 = vrot.slane %v6658, 7
        %v6661 = vshll.u32 %v6549, 16
        %v6663 = vor.u32 %v6660, %v6661
        %v6665 = vshrl.u32 %v6550, 16
        %v6667 = vrot.slane %v6665, 7
        %v6668 = vshll.u32 %v6550, 16
        %v6670 = vor.u32 %v6667, %v6668
        %v6672 = vshrl.u32 %v6551, 16
        %v6674 = vrot.slane %v6672, 7
        %v6675 = vshll.u32 %v6551, 16
        %v6677 = vor.u32 %v6674, %v6675
        %v6696 = vsel %vm1937, 0, %v6558
        %v6697 = vsel %vm1937, 0, %v6565
        %v6698 = vsel %vm1937, 0, %v6572
        %v6699 = vsel %vm1937, 0, %v6579
        %v6700 = vsel %vm1937, 0, %v6586
        %v6701 = vsel %vm1937, 0, %v6593
        %v6702 = vsel %vm1937, 0, %v6600
        %v6703 = vsel %vm1937, 0, %v6607
        %v6704 = vsel %vm1937, 0, %v6614
        %v6705 = vsel %vm1937, 0, %v6621
        %v6706 = vsel %vm1937, 0, %v6628
        %v6707 = vsel %vm1937, 0, %v6635
        %v6708 = vsel %vm1937, 0, %v6642
        %v6709 = vsel %vm1937, 0, %v6649
        %v6710 = vsel %vm1937, 0, %v6656
        %v6711 = vsel %vm1937, 0, %v6663
        %v6712 = vsel %vm1937, 0, %v6670
        %v6713 = vsel %vm1937, 0, %v6677
        %v6732 = vunpack.c.l.b16 %v6410
        %v6733 = vunpack.c.l.b16 %v6413
        %v6734 = vunpack.c.l.b16 %v6416
        %v6735 = vunpack.c.l.b16 %v6419
        %v6736 = vunpack.c.l.b16 %v6422
        %v6737 = vunpack.c.l.b16 %v6425
        %v6738 = vunpack.c.l.b16 %v6428
        %v6739 = vunpack.c.l.b16 %v6431
        %v6740 = vunpack.c.l.b16 %v6434
        %v6741 = vunpack.c.l.b16 %v6437
        %v6742 = vunpack.c.l.b16 %v6440
        %v6743 = vunpack.c.l.b16 %v6443
        %v6744 = vunpack.c.l.b16 %v6446
        %v6745 = vunpack.c.l.b16 %v6449
        %v6746 = vunpack.c.l.b16 %v6452
        %v6747 = vunpack.c.l.b16 %v6455
        %v6748 = vunpack.c.l.b16 %v6458
        %v6749 = vunpack.c.l.b16 %v6461
        %v6750 = vpack.c.b16 %v6732, %v6732
        %v6751 = vpack.c.b16 %v6733, %v6733
        %v6752 = vpack.c.b16 %v6734, %v6734
        %v6753 = vpack.c.b16 %v6735, %v6735
        %v6754 = vpack.c.b16 %v6736, %v6736
        %v6755 = vpack.c.b16 %v6737, %v6737
        %v6756 = vpack.c.b16 %v6738, %v6738
        %v6757 = vpack.c.b16 %v6739, %v6739
        %v6758 = vpack.c.b16 %v6740, %v6740
        %v6759 = vpack.c.b16 %v6741, %v6741
        %v6760 = vpack.c.b16 %v6742, %v6742
        %v6761 = vpack.c.b16 %v6743, %v6743
        %v6762 = vpack.c.b16 %v6744, %v6744
        %v6763 = vpack.c.b16 %v6745, %v6745
        %v6764 = vpack.c.b16 %v6746, %v6746
        %v6765 = vpack.c.b16 %v6747, %v6747
        %v6766 = vpack.c.b16 %v6748, %v6748
        %v6767 = vpack.c.b16 %v6749, %v6749
        %v6768 = vrot.slane %v6556, 1
        %v6769 = vor.u32 %v6553, %v6768
        %v6771 = vshll.u32 %v6750, 16
        %v6773 = vrot.slane %v6771, 1
        %v6774 = vsel %vm2064, %v6769, %v6773
        %v6775 = vrot.slane %v6563, 1
        %v6776 = vor.u32 %v6560, %v6775
        %v6778 = vshll.u32 %v6751, 16
        %v6780 = vrot.slane %v6778, 1
        %v6781 = vsel %vm2064, %v6776, %v6780
        %v6782 = vrot.slane %v6570, 1
        %v6783 = vor.u32 %v6567, %v6782
        %v6785 = vshll.u32 %v6752, 16
        %v6787 = vrot.slane %v6785, 1
        %v6788 = vsel %vm2064, %v6783, %v6787
        %v6789 = vrot.slane %v6577, 1
        %v6790 = vor.u32 %v6574, %v6789
        %v6792 = vshll.u32 %v6753, 16
        %v6794 = vrot.slane %v6792, 1
        %v6795 = vsel %vm2064, %v6790, %v6794
        %v6796 = vrot.slane %v6584, 1
        %v6797 = vor.u32 %v6581, %v6796
        %v6799 = vshll.u32 %v6754, 16
        %v6801 = vrot.slane %v6799, 1
        %v6802 = vsel %vm2064, %v6797, %v6801
        %v6803 = vrot.slane %v6591, 1
        %v6804 = vor.u32 %v6588, %v6803
        %v6806 = vshll.u32 %v6755, 16
        %v6808 = vrot.slane %v6806, 1
        %v6809 = vsel %vm2064, %v6804, %v6808
        %v6810 = vrot.slane %v6598, 1
        %v6811 = vor.u32 %v6595, %v6810
        %v6813 = vshll.u32 %v6756, 16
        %v6815 = vrot.slane %v6813, 1
        %v6816 = vsel %vm2064, %v6811, %v6815
        %v6817 = vrot.slane %v6605, 1
        %v6818 = vor.u32 %v6602, %v6817
        %v6820 = vshll.u32 %v6757, 16
        %v6822 = vrot.slane %v6820, 1
        %v6823 = vsel %vm2064, %v6818, %v6822
        %v6824 = vrot.slane %v6612, 1
        %v6825 = vor.u32 %v6609, %v6824
        %v6827 = vshll.u32 %v6758, 16
        %v6829 = vrot.slane %v6827, 1
        %v6830 = vsel %vm2064, %v6825, %v6829
        %v6831 = vrot.slane %v6619, 1
        %v6832 = vor.u32 %v6616, %v6831
        %v6834 = vshll.u32 %v6759, 16
        %v6836 = vrot.slane %v6834, 1
        %v6837 = vsel %vm2064, %v6832, %v6836
        %v6838 = vrot.slane %v6626, 1
        %v6839 = vor.u32 %v6623, %v6838
        %v6841 = vshll.u32 %v6760, 16
        %v6843 = vrot.slane %v6841, 1
        %v6844 = vsel %vm2064, %v6839, %v6843
        %v6845 = vrot.slane %v6633, 1
        %v6846 = vor.u32 %v6630, %v6845
        %v6848 = vshll.u32 %v6761, 16
        %v6850 = vrot.slane %v6848, 1
        %v6851 = vsel %vm2064, %v6846, %v6850
        %v6852 = vrot.slane %v6640, 1
        %v6853 = vor.u32 %v6637, %v6852
        %v6855 = vshll.u32 %v6762, 16
        %v6857 = vrot.slane %v6855, 1
        %v6858 = vsel %vm2064, %v6853, %v6857
        %v6859 = vrot.slane %v6647, 1
        %v6860 = vor.u32 %v6644, %v6859
        %v6862 = vshll.u32 %v6763, 16
        %v6864 = vrot.slane %v6862, 1
        %v6865 = vsel %vm2064, %v6860, %v6864
        %v6866 = vrot.slane %v6654, 1
        %v6867 = vor.u32 %v6651, %v6866
        %v6869 = vshll.u32 %v6764, 16
        %v6871 = vrot.slane %v6869, 1
        %v6872 = vsel %vm2064, %v6867, %v6871
        %v6873 = vrot.slane %v6661, 1
        %v6874 = vor.u32 %v6658, %v6873
        %v6876 = vshll.u32 %v6765, 16
        %v6878 = vrot.slane %v6876, 1
        %v6879 = vsel %vm2064, %v6874, %v6878
        %v6880 = vrot.slane %v6668, 1
        %v6881 = vor.u32 %v6665, %v6880
        %v6883 = vshll.u32 %v6766, 16
        %v6885 = vrot.slane %v6883, 1
        %v6886 = vsel %vm2064, %v6881, %v6885
        %v6887 = vrot.slane %v6675, 1
        %v6888 = vor.u32 %v6672, %v6887
        %v6890 = vshll.u32 %v6767, 16
        %v6892 = vrot.slane %v6890, 1
        %v6893 = vsel %vm2064, %v6888, %v6892
        %v6930 = vld [vmem:[%s8] sm:$0xf]
        %v6931 = vld [vmem:[%s8 + $0x4] sm:$0xf]
        %v6932 = vld [vmem:[%s8 + $0x8] sm:$0xf]
        %v6933 = vld [vmem:[%s8 + $0xc] sm:$0xf]
        %v6934 = vld [vmem:[%s8 + $0x10] sm:$0xf]
        %v6935 = vld [vmem:[%s8 + $0x14] sm:$0xf]
        %v6936 = vld [vmem:[%s8 + $0x18] sm:$0xf]
        %v6937 = vld [vmem:[%s8 + $0x1c] sm:$0xf]
        %v6938 = vld [vmem:[%s8 + $0x20] sm:$0xf]
        %v6939 = vld [vmem:[%s8 + $0x24] sm:$0xf]
        %v6940 = vld [vmem:[%s8 + $0x28] sm:$0xf]
        %v6941 = vld [vmem:[%s8 + $0x2c] sm:$0xf]
        %v6942 = vld [vmem:[%s8 + $0x30] sm:$0xf]
        %v6943 = vld [vmem:[%s8 + $0x34] sm:$0xf]
        %v6944 = vld [vmem:[%s8 + $0x38] sm:$0xf]
        %v6945 = vld [vmem:[%s8 + $0x3c] sm:$0xf]
        %v6946 = vld [vmem:[%s8 + $0x40] sm:$0xf]
        %v6947 = vld [vmem:[%s8 + $0x44] sm:$0xf]
        %v6948 = vld [vmem:[%s8 + $0x48] sm:$0xf]
        %v6949 = vld [vmem:[%s8 + $0x4c] sm:$0xf]
        %v6950 = vld [vmem:[%s8 + $0x50] sm:$0xf]
        %v6951 = vld [vmem:[%s8 + $0x54] sm:$0xf]
        %v6952 = vld [vmem:[%s8 + $0x58] sm:$0xf]
        %v6953 = vld [vmem:[%s8 + $0x5c] sm:$0xf]
        %v6954 = vld [vmem:[%s8 + $0x60] sm:$0xf]
        %v6955 = vld [vmem:[%s8 + $0x64] sm:$0xf]
        %v6956 = vld [vmem:[%s8 + $0x68] sm:$0xf]
        %v6957 = vld [vmem:[%s8 + $0x6c] sm:$0xf]
        %v6958 = vld [vmem:[%s8 + $0x70] sm:$0xf]
        %v6959 = vld [vmem:[%s8 + $0x74] sm:$0xf]
        %v6960 = vld [vmem:[%s8 + $0x78] sm:$0xf]
        %v6961 = vld [vmem:[%s8 + $0x7c] sm:$0xf]
        %v6962 = vld [vmem:[%s8 + $0x80] sm:$0xf]
        %v6963 = vld [vmem:[%s8 + $0x84] sm:$0xf]
        %v6964 = vld [vmem:[%s8 + $0x88] sm:$0xf]
        %v6965 = vld [vmem:[%s8 + $0x8c] sm:$0xf]
        %v6966 = vld [vmem:[%s8 + $0x90] sm:$0xf]
        %v6967 = vld [vmem:[%s8 + $0x94] sm:$0xf]
        %v6968 = vld [vmem:[%s8 + $0x98] sm:$0xf]
        %v6969 = vld [vmem:[%s8 + $0x9c] sm:$0xf]
        %v6970 = vld [vmem:[%s8 + $0xa0] sm:$0xf]
        %v6971 = vld [vmem:[%s8 + $0xa4] sm:$0xf]
        %v6972 = vld [vmem:[%s8 + $0xa8] sm:$0xf]
        %v6973 = vld [vmem:[%s8 + $0xac] sm:$0xf]
        %v6974 = vld [vmem:[%s8 + $0xb0] sm:$0xf]
        %v6975 = vld [vmem:[%s8 + $0xb4] sm:$0xf]
        %v6976 = vld [vmem:[%s8 + $0xb8] sm:$0xf]
        %v6977 = vld [vmem:[%s8 + $0xbc] sm:$0xf]
        %s6978 = scalar_lea.vmem %s8, 192
        %v6979 = vld [vmem:[%s6978] sm:$0xf]
        %v6980 = vld [vmem:[%s6978 + $0x4] sm:$0xf]
        %v6981 = vld [vmem:[%s6978 + $0x8] sm:$0xf]
        %v6982 = vld [vmem:[%s6978 + $0xc] sm:$0xf]
        %v6983 = vld [vmem:[%s6978 + $0x10] sm:$0xf]
        %v6984 = vld [vmem:[%s6978 + $0x14] sm:$0xf]
        %v6985 = vld [vmem:[%s6978 + $0x18] sm:$0xf]
        %v6986 = vld [vmem:[%s6978 + $0x1c] sm:$0xf]
        %v6987 = vld [vmem:[%s6978 + $0x20] sm:$0xf]
        %v6988 = vld [vmem:[%s6978 + $0x24] sm:$0xf]
        %v6989 = vld [vmem:[%s6978 + $0x28] sm:$0xf]
        %v6990 = vld [vmem:[%s6978 + $0x2c] sm:$0xf]
        %v6991 = vld [vmem:[%s6978 + $0x30] sm:$0xf]
        %v6992 = vld [vmem:[%s6978 + $0x34] sm:$0xf]
        %v6993 = vld [vmem:[%s6978 + $0x38] sm:$0xf]
        %v6994 = vld [vmem:[%s6978 + $0x3c] sm:$0xf]
        %v6995 = vld [vmem:[%s6978 + $0x40] sm:$0xf]
        %v6996 = vld [vmem:[%s6978 + $0x44] sm:$0xf]
        %v6997 = vld [vmem:[%s6978 + $0x48] sm:$0xf]
        %v6998 = vld [vmem:[%s6978 + $0x4c] sm:$0xf]
        %v6999 = vld [vmem:[%s6978 + $0x50] sm:$0xf]
        %v7000 = vld [vmem:[%s6978 + $0x54] sm:$0xf]
        %v7001 = vld [vmem:[%s6978 + $0x58] sm:$0xf]
        %v7002 = vld [vmem:[%s6978 + $0x5c] sm:$0xf]
        %v7003 = vld [vmem:[%s6978 + $0x60] sm:$0xf]
        %v7004 = vld [vmem:[%s6978 + $0x64] sm:$0xf]
        %v7005 = vld [vmem:[%s6978 + $0x68] sm:$0xf]
        %v7006 = vld [vmem:[%s6978 + $0x6c] sm:$0xf]
        %v7007 = vld [vmem:[%s6978 + $0x70] sm:$0xf]
        %v7008 = vld [vmem:[%s6978 + $0x74] sm:$0xf]
        %v7009 = vld [vmem:[%s6978 + $0x78] sm:$0xf]
        %v7010 = vld [vmem:[%s6978 + $0x7c] sm:$0xf]
        %v7011 = vld [vmem:[%s6978 + $0x80] sm:$0xf]
        %v7012 = vld [vmem:[%s6978 + $0x84] sm:$0xf]
        %v7013 = vld [vmem:[%s6978 + $0x88] sm:$0xf]
        %v7014 = vld [vmem:[%s6978 + $0x8c] sm:$0xf]
        %v7015 = vld [vmem:[%s6978 + $0x90] sm:$0xf]
        %v7016 = vld [vmem:[%s6978 + $0x94] sm:$0xf]
        %v7017 = vld [vmem:[%s6978 + $0x98] sm:$0xf]
        %v7018 = vld [vmem:[%s6978 + $0x9c] sm:$0xf]
        %v7019 = vld [vmem:[%s6978 + $0xa0] sm:$0xf]
        %v7020 = vld [vmem:[%s6978 + $0xa4] sm:$0xf]
        %v7021 = vld [vmem:[%s6978 + $0xa8] sm:$0xf]
        %v7022 = vld [vmem:[%s6978 + $0xac] sm:$0xf]
        %v7023 = vld [vmem:[%s6978 + $0xb0] sm:$0xf]
        %v7024 = vld [vmem:[%s6978 + $0xb4] sm:$0xf]
        %v7025 = vld [vmem:[%s6978 + $0xb8] sm:$0xf]
        %v7026 = vld [vmem:[%s6978 + $0xbc] sm:$0xf]
        %v7075 = vunpack.c.l.b16 %v6979
        %v7076 = vunpack.c.l.b16 %v6980
        %v7077 = vunpack.c.l.b16 %v6981
        %v7078 = vunpack.c.l.b16 %v6982
        %v7079 = vunpack.c.l.b16 %v6983
        %v7080 = vunpack.c.l.b16 %v6984
        %v7081 = vunpack.c.l.b16 %v6985
        %v7082 = vunpack.c.l.b16 %v6986
        %v7083 = vunpack.c.l.b16 %v6987
        %v7084 = vunpack.c.l.b16 %v6988
        %v7085 = vunpack.c.l.b16 %v6989
        %v7086 = vunpack.c.l.b16 %v6990
        %v7087 = vunpack.c.l.b16 %v6991
        %v7088 = vunpack.c.l.b16 %v6992
        %v7089 = vunpack.c.l.b16 %v6993
        %v7090 = vunpack.c.l.b16 %v6994
        %v7091 = vunpack.c.l.b16 %v6995
        %v7092 = vunpack.c.l.b16 %v6996
        %v7093 = vunpack.c.l.b16 %v6997
        %v7094 = vunpack.c.l.b16 %v6998
        %v7095 = vunpack.c.l.b16 %v6999
        %v7096 = vunpack.c.l.b16 %v7000
        %v7097 = vunpack.c.l.b16 %v7001
        %v7098 = vunpack.c.l.b16 %v7002
        %v7099 = vunpack.c.l.b16 %v7003
        %v7100 = vunpack.c.l.b16 %v7004
        %v7101 = vunpack.c.l.b16 %v7005
        %v7102 = vunpack.c.l.b16 %v7006
        %v7103 = vunpack.c.l.b16 %v7007
        %v7104 = vunpack.c.l.b16 %v7008
        %v7105 = vunpack.c.l.b16 %v7009
        %v7106 = vunpack.c.l.b16 %v7010
        %v7107 = vunpack.c.l.b16 %v7011
        %v7108 = vunpack.c.l.b16 %v7012
        %v7109 = vunpack.c.l.b16 %v7013
        %v7110 = vunpack.c.l.b16 %v7014
        %v7111 = vunpack.c.l.b16 %v7015
        %v7112 = vunpack.c.l.b16 %v7016
        %v7113 = vunpack.c.l.b16 %v7017
        %v7114 = vunpack.c.l.b16 %v7018
        %v7115 = vunpack.c.l.b16 %v7019
        %v7116 = vunpack.c.l.b16 %v7020
        %v7117 = vunpack.c.l.b16 %v7021
        %v7118 = vunpack.c.l.b16 %v7022
        %v7119 = vunpack.c.l.b16 %v7023
        %v7120 = vunpack.c.l.b16 %v7024
        %v7121 = vunpack.c.l.b16 %v7025
        %v7122 = vunpack.c.l.b16 %v7026
        %v7123 = vpack.c.b16 %v7076, %v7075
        %v7124 = vpack.c.b16 %v7078, %v7077
        %v7125 = vpack.c.b16 %v7080, %v7079
        %v7126 = vpack.c.b16 %v7082, %v7081
        %v7127 = vpack.c.b16 %v7084, %v7083
        %v7128 = vpack.c.b16 %v7086, %v7085
        %v7129 = vpack.c.b16 %v7088, %v7087
        %v7130 = vpack.c.b16 %v7090, %v7089
        %v7131 = vpack.c.b16 %v7092, %v7091
        %v7132 = vpack.c.b16 %v7094, %v7093
        %v7133 = vpack.c.b16 %v7096, %v7095
        %v7134 = vpack.c.b16 %v7098, %v7097
        %v7135 = vpack.c.b16 %v7100, %v7099
        %v7136 = vpack.c.b16 %v7102, %v7101
        %v7137 = vpack.c.b16 %v7104, %v7103
        %v7138 = vpack.c.b16 %v7106, %v7105
        %v7139 = vpack.c.b16 %v7108, %v7107
        %v7140 = vpack.c.b16 %v7110, %v7109
        %v7141 = vpack.c.b16 %v7112, %v7111
        %v7142 = vpack.c.b16 %v7114, %v7113
        %v7143 = vpack.c.b16 %v7116, %v7115
        %v7144 = vpack.c.b16 %v7118, %v7117
        %v7145 = vpack.c.b16 %v7120, %v7119
        %v7146 = vpack.c.b16 %v7122, %v7121
        %7171 = vmatpush.bf16.msra.mxu0 %v7130
        %7172 = vmatpush.bf16.msra.mxu0 %v7129
        %7173 = vmatpush.bf16.msra.mxu0 %v7128
        %7174 = vmatpush.bf16.msra.mxu0 %v7127
        %7175 = vmatpush.bf16.msra.mxu0 %v7126
        %7176 = vmatpush.bf16.msra.mxu0 %v7125
        %7177 = vmatpush.bf16.msra.mxu0 %v7124
        %7178 = vmatpush.bf16.msra.mxu0 %v7123
        %7179 = vmatmul.bf16.gmra.mxu0 %v6697
        %v7180 = vpop.f32.mrf.mxu0
        %v7181 = vadd.f32 0.0, %v7180
        %v7182 = vpop.f32.mrf.mxu0
        %v7183 = vadd.f32 0.0, %v7182
        %7184 = vmatmul.bf16.gmra.mxu0 %v6698
        %v7185 = vpop.f32.mrf.mxu0
        %v7186 = vadd.f32 0.0, %v7185
        %v7187 = vpop.f32.mrf.mxu0
        %v7188 = vadd.f32 0.0, %v7187
        %7189 = vmatmul.bf16.gmra.mxu0 %v6699
        %v7190 = vpop.f32.mrf.mxu0
        %v7191 = vadd.f32 0.0, %v7190
        %v7192 = vpop.f32.mrf.mxu0
        %v7193 = vadd.f32 0.0, %v7192
        %7194 = vmatmul.bf16.gmra.mxu0 %v6700
        %v7195 = vpop.f32.mrf.mxu0
        %v7196 = vadd.f32 0.0, %v7195
        %v7197 = vpop.f32.mrf.mxu0
        %v7198 = vadd.f32 0.0, %v7197
        %7199 = vmatmul.bf16.gmra.mxu0 %v6701
        %v7200 = vpop.f32.mrf.mxu0
        %v7201 = vadd.f32 0.0, %v7200
        %v7202 = vpop.f32.mrf.mxu0
        %v7203 = vadd.f32 0.0, %v7202
        %7204 = vmatmul.bf16.gmra.mxu0 %v6702
        %v7205 = vpop.f32.mrf.mxu0
        %v7206 = vadd.f32 0.0, %v7205
        %v7207 = vpop.f32.mrf.mxu0
        %v7208 = vadd.f32 0.0, %v7207
        %7209 = vmatmul.bf16.gmra.mxu0 %v6703
        %v7210 = vpop.f32.mrf.mxu0
        %v7211 = vadd.f32 0.0, %v7210
        %v7212 = vpop.f32.mrf.mxu0
        %v7213 = vadd.f32 0.0, %v7212
        %7214 = vmatmul.bf16.gmra.mxu0 %v6704
        %v7215 = vpop.f32.mrf.mxu0
        %v7216 = vadd.f32 0.0, %v7215
        %v7217 = vpop.f32.mrf.mxu0
        %v7218 = vadd.f32 0.0, %v7217
        %7219 = vmatmul.bf16.gmra.mxu0 %v6705
        %v7220 = vpop.f32.mrf.mxu0
        %v7221 = vadd.f32 0.0, %v7220
        %v7222 = vpop.f32.mrf.mxu0
        %v7223 = vadd.f32 0.0, %v7222
        %7224 = vmatmul.bf16.gmra.mxu0 %v6706
        %v7225 = vpop.f32.mrf.mxu0
        %v7226 = vadd.f32 0.0, %v7225
        %v7227 = vpop.f32.mrf.mxu0
        %v7228 = vadd.f32 0.0, %v7227
        %7229 = vmatmul.bf16.gmra.mxu0 %v6707
        %v7230 = vpop.f32.mrf.mxu0
        %v7231 = vadd.f32 0.0, %v7230
        %v7232 = vpop.f32.mrf.mxu0
        %v7233 = vadd.f32 0.0, %v7232
        %7234 = vmatmul.bf16.gmra.mxu0 %v6708
        %v7235 = vpop.f32.mrf.mxu0
        %v7236 = vadd.f32 0.0, %v7235
        %v7237 = vpop.f32.mrf.mxu0
        %v7238 = vadd.f32 0.0, %v7237
        %7239 = vmatmul.bf16.gmra.mxu0 %v6709
        %v7240 = vpop.f32.mrf.mxu0
        %v7241 = vadd.f32 0.0, %v7240
        %v7242 = vpop.f32.mrf.mxu0
        %v7243 = vadd.f32 0.0, %v7242
        %7244 = vmatmul.bf16.gmra.mxu0 %v6710
        %v7245 = vpop.f32.mrf.mxu0
        %v7246 = vadd.f32 0.0, %v7245
        %v7247 = vpop.f32.mrf.mxu0
        %v7248 = vadd.f32 0.0, %v7247
        %7249 = vmatmul.bf16.gmra.mxu0 %v6711
        %v7250 = vpop.f32.mrf.mxu0
        %v7251 = vadd.f32 0.0, %v7250
        %v7252 = vpop.f32.mrf.mxu0
        %v7253 = vadd.f32 0.0, %v7252
        %7254 = vmatmul.bf16.gmra.mxu0 %v6712
        %v7255 = vpop.f32.mrf.mxu0
        %v7256 = vadd.f32 0.0, %v7255
        %v7257 = vpop.f32.mrf.mxu0
        %v7258 = vadd.f32 0.0, %v7257
        %7259 = vdwg.mxu0
        %7260 = vmatpush.bf16.msra.mxu0 %v7138
        %7261 = vmatpush.bf16.msra.mxu0 %v7137
        %7262 = vmatpush.bf16.msra.mxu0 %v7136
        %7263 = vmatpush.bf16.msra.mxu0 %v7135
        %7264 = vmatpush.bf16.msra.mxu0 %v7134
        %7265 = vmatpush.bf16.msra.mxu0 %v7133
        %7266 = vmatpush.bf16.msra.mxu0 %v7132
        %7267 = vmatpush.bf16.msra.mxu0 %v7131
        %7268 = vmatmul.bf16.gmra.mxu0 %v6535
        %v7269 = vpop.f32.mrf.mxu0
        %v7270 = vadd.f32 %v7181, %v7269
        %v7271 = vpop.f32.mrf.mxu0
        %v7272 = vadd.f32 %v7183, %v7271
        %7273 = vmatmul.bf16.gmra.mxu0 %v6536
        %v7274 = vpop.f32.mrf.mxu0
        %v7275 = vadd.f32 %v7186, %v7274
        %v7276 = vpop.f32.mrf.mxu0
        %v7277 = vadd.f32 %v7188, %v7276
        %7278 = vmatmul.bf16.gmra.mxu0 %v6537
        %v7279 = vpop.f32.mrf.mxu0
        %v7280 = vadd.f32 %v7191, %v7279
        %v7281 = vpop.f32.mrf.mxu0
        %v7282 = vadd.f32 %v7193, %v7281
        %7283 = vmatmul.bf16.gmra.mxu0 %v6538
        %v7284 = vpop.f32.mrf.mxu0
        %v7285 = vadd.f32 %v7196, %v7284
        %v7286 = vpop.f32.mrf.mxu0
        %v7287 = vadd.f32 %v7198, %v7286
        %7288 = vmatmul.bf16.gmra.mxu0 %v6539
        %v7289 = vpop.f32.mrf.mxu0
        %v7290 = vadd.f32 %v7201, %v7289
        %v7291 = vpop.f32.mrf.mxu0
        %v7292 = vadd.f32 %v7203, %v7291
        %7293 = vmatmul.bf16.gmra.mxu0 %v6540
        %v7294 = vpop.f32.mrf.mxu0
        %v7295 = vadd.f32 %v7206, %v7294
        %v7296 = vpop.f32.mrf.mxu0
        %v7297 = vadd.f32 %v7208, %v7296
        %7298 = vmatmul.bf16.gmra.mxu0 %v6541
        %v7299 = vpop.f32.mrf.mxu0
        %v7300 = vadd.f32 %v7211, %v7299
        %v7301 = vpop.f32.mrf.mxu0
        %v7302 = vadd.f32 %v7213, %v7301
        %7303 = vmatmul.bf16.gmra.mxu0 %v6542
        %v7304 = vpop.f32.mrf.mxu0
        %v7305 = vadd.f32 %v7216, %v7304
        %v7306 = vpop.f32.mrf.mxu0
        %v7307 = vadd.f32 %v7218, %v7306
        %7308 = vmatmul.bf16.gmra.mxu0 %v6543
        %v7309 = vpop.f32.mrf.mxu0
        %v7310 = vadd.f32 %v7221, %v7309
        %v7311 = vpop.f32.mrf.mxu0
        %v7312 = vadd.f32 %v7223, %v7311
        %7313 = vmatmul.bf16.gmra.mxu0 %v6544
        %v7314 = vpop.f32.mrf.mxu0
        %v7315 = vadd.f32 %v7226, %v7314
        %v7316 = vpop.f32.mrf.mxu0
        %v7317 = vadd.f32 %v7228, %v7316
        %7318 = vmatmul.bf16.gmra.mxu0 %v6545
        %v7319 = vpop.f32.mrf.mxu0
        %v7320 = vadd.f32 %v7231, %v7319
        %v7321 = vpop.f32.mrf.mxu0
        %v7322 = vadd.f32 %v7233, %v7321
        %7323 = vmatmul.bf16.gmra.mxu0 %v6546
        %v7324 = vpop.f32.mrf.mxu0
        %v7325 = vadd.f32 %v7236, %v7324
        %v7326 = vpop.f32.mrf.mxu0
        %v7327 = vadd.f32 %v7238, %v7326
        %7328 = vmatmul.bf16.gmra.mxu0 %v6547
        %v7329 = vpop.f32.mrf.mxu0
        %v7330 = vadd.f32 %v7241, %v7329
        %v7331 = vpop.f32.mrf.mxu0
        %v7332 = vadd.f32 %v7243, %v7331
        %7333 = vmatmul.bf16.gmra.mxu0 %v6548
        %v7334 = vpop.f32.mrf.mxu0
        %v7335 = vadd.f32 %v7246, %v7334
        %v7336 = vpop.f32.mrf.mxu0
        %v7337 = vadd.f32 %v7248, %v7336
        %7338 = vmatmul.bf16.gmra.mxu0 %v6549
        %v7339 = vpop.f32.mrf.mxu0
        %v7340 = vadd.f32 %v7251, %v7339
        %v7341 = vpop.f32.mrf.mxu0
        %v7342 = vadd.f32 %v7253, %v7341
        %7343 = vmatmul.bf16.gmra.mxu0 %v6550
        %v7344 = vpop.f32.mrf.mxu0
        %v7345 = vadd.f32 %v7256, %v7344
        %v7346 = vpop.f32.mrf.mxu0
        %v7347 = vadd.f32 %v7258, %v7346
        %7348 = vdwg.mxu0
        %7349 = vmatpush.bf16.msra.mxu0 %v7146
        %7350 = vmatpush.bf16.msra.mxu0 %v7145
        %7351 = vmatpush.bf16.msra.mxu0 %v7144
        %7352 = vmatpush.bf16.msra.mxu0 %v7143
        %7353 = vmatpush.bf16.msra.mxu0 %v7142
        %7354 = vmatpush.bf16.msra.mxu0 %v7141
        %7355 = vmatpush.bf16.msra.mxu0 %v7140
        %7356 = vmatpush.bf16.msra.mxu0 %v7139
        %7357 = vmatmul.bf16.gmra.mxu0 %v6781
        %v7358 = vpop.f32.mrf.mxu0
        %v7359 = vadd.f32 %v7270, %v7358
        %v7360 = vpop.f32.mrf.mxu0
        %v7361 = vadd.f32 %v7272, %v7360
        %7362 = vmatmul.bf16.gmra.mxu0 %v6788
        %v7363 = vpop.f32.mrf.mxu0
        %v7364 = vadd.f32 %v7275, %v7363
        %v7365 = vpop.f32.mrf.mxu0
        %v7366 = vadd.f32 %v7277, %v7365
        %7367 = vmatmul.bf16.gmra.mxu0 %v6795
        %v7368 = vpop.f32.mrf.mxu0
        %v7369 = vadd.f32 %v7280, %v7368
        %v7370 = vpop.f32.mrf.mxu0
        %v7371 = vadd.f32 %v7282, %v7370
        %7372 = vmatmul.bf16.gmra.mxu0 %v6802
        %v7373 = vpop.f32.mrf.mxu0
        %v7374 = vadd.f32 %v7285, %v7373
        %v7375 = vpop.f32.mrf.mxu0
        %v7376 = vadd.f32 %v7287, %v7375
        %7377 = vmatmul.bf16.gmra.mxu0 %v6809
        %v7378 = vpop.f32.mrf.mxu0
        %v7379 = vadd.f32 %v7290, %v7378
        %v7380 = vpop.f32.mrf.mxu0
        %v7381 = vadd.f32 %v7292, %v7380
        %7382 = vmatmul.bf16.gmra.mxu0 %v6816
        %v7383 = vpop.f32.mrf.mxu0
        %v7384 = vadd.f32 %v7295, %v7383
        %v7385 = vpop.f32.mrf.mxu0
        %v7386 = vadd.f32 %v7297, %v7385
        %7387 = vmatmul.bf16.gmra.mxu0 %v6823
        %v7388 = vpop.f32.mrf.mxu0
        %v7389 = vadd.f32 %v7300, %v7388
        %v7390 = vpop.f32.mrf.mxu0
        %v7391 = vadd.f32 %v7302, %v7390
        %7392 = vmatmul.bf16.gmra.mxu0 %v6830
        %v7393 = vpop.f32.mrf.mxu0
        %v7394 = vadd.f32 %v7305, %v7393
        %v7395 = vpop.f32.mrf.mxu0
        %v7396 = vadd.f32 %v7307, %v7395
        %7397 = vmatmul.bf16.gmra.mxu0 %v6837
        %v7398 = vpop.f32.mrf.mxu0
        %v7399 = vadd.f32 %v7310, %v7398
        %v7400 = vpop.f32.mrf.mxu0
        %v7401 = vadd.f32 %v7312, %v7400
        %7402 = vmatmul.bf16.gmra.mxu0 %v6844
        %v7403 = vpop.f32.mrf.mxu0
        %v7404 = vadd.f32 %v7315, %v7403
        %v7405 = vpop.f32.mrf.mxu0
        %v7406 = vadd.f32 %v7317, %v7405
        %7407 = vmatmul.bf16.gmra.mxu0 %v6851
        %v7408 = vpop.f32.mrf.mxu0
        %v7409 = vadd.f32 %v7320, %v7408
        %v7410 = vpop.f32.mrf.mxu0
        %v7411 = vadd.f32 %v7322, %v7410
        %7412 = vmatmul.bf16.gmra.mxu0 %v6858
        %v7413 = vpop.f32.mrf.mxu0
        %v7414 = vadd.f32 %v7325, %v7413
        %v7415 = vpop.f32.mrf.mxu0
        %v7416 = vadd.f32 %v7327, %v7415
        %7417 = vmatmul.bf16.gmra.mxu0 %v6865
        %v7418 = vpop.f32.mrf.mxu0
        %v7419 = vadd.f32 %v7330, %v7418
        %v7420 = vpop.f32.mrf.mxu0
        %v7421 = vadd.f32 %v7332, %v7420
        %7422 = vmatmul.bf16.gmra.mxu0 %v6872
        %v7423 = vpop.f32.mrf.mxu0
        %v7424 = vadd.f32 %v7335, %v7423
        %v7425 = vpop.f32.mrf.mxu0
        %v7426 = vadd.f32 %v7337, %v7425
        %7427 = vmatmul.bf16.gmra.mxu0 %v6879
        %v7428 = vpop.f32.mrf.mxu0
        %v7429 = vadd.f32 %v7340, %v7428
        %v7430 = vpop.f32.mrf.mxu0
        %v7431 = vadd.f32 %v7342, %v7430
        %7432 = vmatmul.bf16.gmra.mxu0 %v6886
        %v7433 = vpop.f32.mrf.mxu0
        %v7434 = vadd.f32 %v7345, %v7433
        %v7435 = vpop.f32.mrf.mxu0
        %v7436 = vadd.f32 %v7347, %v7435
        %7437 = vdwg.mxu0
        %v7486 = vunpack.c.l.b16 %v6930
        %v7487 = vunpack.c.l.b16 %v6931
        %v7488 = vunpack.c.l.b16 %v6932
        %v7489 = vunpack.c.l.b16 %v6933
        %v7490 = vunpack.c.l.b16 %v6934
        %v7491 = vunpack.c.l.b16 %v6935
        %v7492 = vunpack.c.l.b16 %v6936
        %v7493 = vunpack.c.l.b16 %v6937
        %v7494 = vunpack.c.l.b16 %v6938
        %v7495 = vunpack.c.l.b16 %v6939
        %v7496 = vunpack.c.l.b16 %v6940
        %v7497 = vunpack.c.l.b16 %v6941
        %v7498 = vunpack.c.l.b16 %v6942
        %v7499 = vunpack.c.l.b16 %v6943
        %v7500 = vunpack.c.l.b16 %v6944
        %v7501 = vunpack.c.l.b16 %v6945
        %v7502 = vunpack.c.l.b16 %v6946
        %v7503 = vunpack.c.l.b16 %v6947
        %v7504 = vunpack.c.l.b16 %v6948
        %v7505 = vunpack.c.l.b16 %v6949
        %v7506 = vunpack.c.l.b16 %v6950
        %v7507 = vunpack.c.l.b16 %v6951
        %v7508 = vunpack.c.l.b16 %v6952
        %v7509 = vunpack.c.l.b16 %v6953
        %v7510 = vunpack.c.l.b16 %v6954
        %v7511 = vunpack.c.l.b16 %v6955
        %v7512 = vunpack.c.l.b16 %v6956
        %v7513 = vunpack.c.l.b16 %v6957
        %v7514 = vunpack.c.l.b16 %v6958
        %v7515 = vunpack.c.l.b16 %v6959
        %v7516 = vunpack.c.l.b16 %v6960
        %v7517 = vunpack.c.l.b16 %v6961
        %v7518 = vunpack.c.l.b16 %v6962
        %v7519 = vunpack.c.l.b16 %v6963
        %v7520 = vunpack.c.l.b16 %v6964
        %v7521 = vunpack.c.l.b16 %v6965
        %v7522 = vunpack.c.l.b16 %v6966
        %v7523 = vunpack.c.l.b16 %v6967
        %v7524 = vunpack.c.l.b16 %v6968
        %v7525 = vunpack.c.l.b16 %v6969
        %v7526 = vunpack.c.l.b16 %v6970
        %v7527 = vunpack.c.l.b16 %v6971
        %v7528 = vunpack.c.l.b16 %v6972
        %v7529 = vunpack.c.l.b16 %v6973
        %v7530 = vunpack.c.l.b16 %v6974
        %v7531 = vunpack.c.l.b16 %v6975
        %v7532 = vunpack.c.l.b16 %v6976
        %v7533 = vunpack.c.l.b16 %v6977
        %v7534 = vpack.c.b16 %v7487, %v7486
        %v7535 = vpack.c.b16 %v7489, %v7488
        %v7536 = vpack.c.b16 %v7491, %v7490
        %v7537 = vpack.c.b16 %v7493, %v7492
        %v7538 = vpack.c.b16 %v7495, %v7494
        %v7539 = vpack.c.b16 %v7497, %v7496
        %v7540 = vpack.c.b16 %v7499, %v7498
        %v7541 = vpack.c.b16 %v7501, %v7500
        %v7542 = vpack.c.b16 %v7503, %v7502
        %v7543 = vpack.c.b16 %v7505, %v7504
        %v7544 = vpack.c.b16 %v7507, %v7506
        %v7545 = vpack.c.b16 %v7509, %v7508
        %v7546 = vpack.c.b16 %v7511, %v7510
        %v7547 = vpack.c.b16 %v7513, %v7512
        %v7548 = vpack.c.b16 %v7515, %v7514
        %v7549 = vpack.c.b16 %v7517, %v7516
        %v7550 = vpack.c.b16 %v7519, %v7518
        %v7551 = vpack.c.b16 %v7521, %v7520
        %v7552 = vpack.c.b16 %v7523, %v7522
        %v7553 = vpack.c.b16 %v7525, %v7524
        %v7554 = vpack.c.b16 %v7527, %v7526
        %v7555 = vpack.c.b16 %v7529, %v7528
        %v7556 = vpack.c.b16 %v7531, %v7530
        %v7557 = vpack.c.b16 %v7533, %v7532
        %7582 = vmatpush.bf16.msra.mxu0 %v7541
        %7583 = vmatpush.bf16.msra.mxu0 %v7540
        %7584 = vmatpush.bf16.msra.mxu0 %v7539
        %7585 = vmatpush.bf16.msra.mxu0 %v7538
        %7586 = vmatpush.bf16.msra.mxu0 %v7537
        %7587 = vmatpush.bf16.msra.mxu0 %v7536
        %7588 = vmatpush.bf16.msra.mxu0 %v7535
        %7589 = vmatpush.bf16.msra.mxu0 %v7534
        %7590 = vmatmul.bf16.gmra.mxu0 %v6696
        %v7591 = vpop.f32.mrf.mxu0
        %v7592 = vadd.f32 %v7359, %v7591
        %v7593 = vpop.f32.mrf.mxu0
        %v7594 = vadd.f32 %v7361, %v7593
        %7595 = vmatmul.bf16.gmra.mxu0 %v6697
        %v7596 = vpop.f32.mrf.mxu0
        %v7597 = vadd.f32 %v7364, %v7596
        %v7598 = vpop.f32.mrf.mxu0
        %v7599 = vadd.f32 %v7366, %v7598
        %7600 = vmatmul.bf16.gmra.mxu0 %v6698
        %v7601 = vpop.f32.mrf.mxu0
        %v7602 = vadd.f32 %v7369, %v7601
        %v7603 = vpop.f32.mrf.mxu0
        %v7604 = vadd.f32 %v7371, %v7603
        %7605 = vmatmul.bf16.gmra.mxu0 %v6699
        %v7606 = vpop.f32.mrf.mxu0
        %v7607 = vadd.f32 %v7374, %v7606
        %v7608 = vpop.f32.mrf.mxu0
        %v7609 = vadd.f32 %v7376, %v7608
        %7610 = vmatmul.bf16.gmra.mxu0 %v6700
        %v7611 = vpop.f32.mrf.mxu0
        %v7612 = vadd.f32 %v7379, %v7611
        %v7613 = vpop.f32.mrf.mxu0
        %v7614 = vadd.f32 %v7381, %v7613
        %7615 = vmatmul.bf16.gmra.mxu0 %v6701
        %v7616 = vpop.f32.mrf.mxu0
        %v7617 = vadd.f32 %v7384, %v7616
        %v7618 = vpop.f32.mrf.mxu0
        %v7619 = vadd.f32 %v7386, %v7618
        %7620 = vmatmul.bf16.gmra.mxu0 %v6702
        %v7621 = vpop.f32.mrf.mxu0
        %v7622 = vadd.f32 %v7389, %v7621
        %v7623 = vpop.f32.mrf.mxu0
        %v7624 = vadd.f32 %v7391, %v7623
        %7625 = vmatmul.bf16.gmra.mxu0 %v6703
        %v7626 = vpop.f32.mrf.mxu0
        %v7627 = vadd.f32 %v7394, %v7626
        %v7628 = vpop.f32.mrf.mxu0
        %v7629 = vadd.f32 %v7396, %v7628
        %7630 = vmatmul.bf16.gmra.mxu0 %v6704
        %v7631 = vpop.f32.mrf.mxu0
        %v7632 = vadd.f32 %v7399, %v7631
        %v7633 = vpop.f32.mrf.mxu0
        %v7634 = vadd.f32 %v7401, %v7633
        %7635 = vmatmul.bf16.gmra.mxu0 %v6705
        %v7636 = vpop.f32.mrf.mxu0
        %v7637 = vadd.f32 %v7404, %v7636
        %v7638 = vpop.f32.mrf.mxu0
        %v7639 = vadd.f32 %v7406, %v7638
        %7640 = vmatmul.bf16.gmra.mxu0 %v6706
        %v7641 = vpop.f32.mrf.mxu0
        %v7642 = vadd.f32 %v7409, %v7641
        %v7643 = vpop.f32.mrf.mxu0
        %v7644 = vadd.f32 %v7411, %v7643
        %7645 = vmatmul.bf16.gmra.mxu0 %v6707
        %v7646 = vpop.f32.mrf.mxu0
        %v7647 = vadd.f32 %v7414, %v7646
        %v7648 = vpop.f32.mrf.mxu0
        %v7649 = vadd.f32 %v7416, %v7648
        %7650 = vmatmul.bf16.gmra.mxu0 %v6708
        %v7651 = vpop.f32.mrf.mxu0
        %v7652 = vadd.f32 %v7419, %v7651
        %v7653 = vpop.f32.mrf.mxu0
        %v7654 = vadd.f32 %v7421, %v7653
        %7655 = vmatmul.bf16.gmra.mxu0 %v6709
        %v7656 = vpop.f32.mrf.mxu0
        %v7657 = vadd.f32 %v7424, %v7656
        %v7658 = vpop.f32.mrf.mxu0
        %v7659 = vadd.f32 %v7426, %v7658
        %7660 = vmatmul.bf16.gmra.mxu0 %v6710
        %v7661 = vpop.f32.mrf.mxu0
        %v7662 = vadd.f32 %v7429, %v7661
        %v7663 = vpop.f32.mrf.mxu0
        %v7664 = vadd.f32 %v7431, %v7663
        %7665 = vmatmul.bf16.gmra.mxu0 %v6711
        %v7666 = vpop.f32.mrf.mxu0
        %v7667 = vadd.f32 %v7434, %v7666
        %v7668 = vpop.f32.mrf.mxu0
        %v7669 = vadd.f32 %v7436, %v7668
        %7670 = vdwg.mxu0
        %7671 = vmatpush.bf16.msra.mxu0 %v7549
        %7672 = vmatpush.bf16.msra.mxu0 %v7548
        %7673 = vmatpush.bf16.msra.mxu0 %v7547
        %7674 = vmatpush.bf16.msra.mxu0 %v7546
        %7675 = vmatpush.bf16.msra.mxu0 %v7545
        %7676 = vmatpush.bf16.msra.mxu0 %v7544
        %7677 = vmatpush.bf16.msra.mxu0 %v7543
        %7678 = vmatpush.bf16.msra.mxu0 %v7542
        %7679 = vmatmul.bf16.gmra.mxu0 %v6534
        %v7680 = vpop.f32.mrf.mxu0
        %v7681 = vadd.f32 %v7592, %v7680
        %v7682 = vpop.f32.mrf.mxu0
        %v7683 = vadd.f32 %v7594, %v7682
        %7684 = vmatmul.bf16.gmra.mxu0 %v6535
        %v7685 = vpop.f32.mrf.mxu0
        %v7686 = vadd.f32 %v7597, %v7685
        %v7687 = vpop.f32.mrf.mxu0
        %v7688 = vadd.f32 %v7599, %v7687
        %7689 = vmatmul.bf16.gmra.mxu0 %v6536
        %v7690 = vpop.f32.mrf.mxu0
        %v7691 = vadd.f32 %v7602, %v7690
        %v7692 = vpop.f32.mrf.mxu0
        %v7693 = vadd.f32 %v7604, %v7692
        %7694 = vmatmul.bf16.gmra.mxu0 %v6537
        %v7695 = vpop.f32.mrf.mxu0
        %v7696 = vadd.f32 %v7607, %v7695
        %v7697 = vpop.f32.mrf.mxu0
        %v7698 = vadd.f32 %v7609, %v7697
        %7699 = vmatmul.bf16.gmra.mxu0 %v6538
        %v7700 = vpop.f32.mrf.mxu0
        %v7701 = vadd.f32 %v7612, %v7700
        %v7702 = vpop.f32.mrf.mxu0
        %v7703 = vadd.f32 %v7614, %v7702
        %7704 = vmatmul.bf16.gmra.mxu0 %v6539
        %v7705 = vpop.f32.mrf.mxu0
        %v7706 = vadd.f32 %v7617, %v7705
        %v7707 = vpop.f32.mrf.mxu0
        %v7708 = vadd.f32 %v7619, %v7707
        %7709 = vmatmul.bf16.gmra.mxu0 %v6540
        %v7710 = vpop.f32.mrf.mxu0
        %v7711 = vadd.f32 %v7622, %v7710
        %v7712 = vpop.f32.mrf.mxu0
        %v7713 = vadd.f32 %v7624, %v7712
        %7714 = vmatmul.bf16.gmra.mxu0 %v6541
        %v7715 = vpop.f32.mrf.mxu0
        %v7716 = vadd.f32 %v7627, %v7715
        %v7717 = vpop.f32.mrf.mxu0
        %v7718 = vadd.f32 %v7629, %v7717
        %7719 = vmatmul.bf16.gmra.mxu0 %v6542
        %v7720 = vpop.f32.mrf.mxu0
        %v7721 = vadd.f32 %v7632, %v7720
        %v7722 = vpop.f32.mrf.mxu0
        %v7723 = vadd.f32 %v7634, %v7722
        %7724 = vmatmul.bf16.gmra.mxu0 %v6543
        %v7725 = vpop.f32.mrf.mxu0
        %v7726 = vadd.f32 %v7637, %v7725
        %v7727 = vpop.f32.mrf.mxu0
        %v7728 = vadd.f32 %v7639, %v7727
        %7729 = vmatmul.bf16.gmra.mxu0 %v6544
        %v7730 = vpop.f32.mrf.mxu0
        %v7731 = vadd.f32 %v7642, %v7730
        %v7732 = vpop.f32.mrf.mxu0
        %v7733 = vadd.f32 %v7644, %v7732
        %7734 = vmatmul.bf16.gmra.mxu0 %v6545
        %v7735 = vpop.f32.mrf.mxu0
        %v7736 = vadd.f32 %v7647, %v7735
        %v7737 = vpop.f32.mrf.mxu0
        %v7738 = vadd.f32 %v7649, %v7737
        %7739 = vmatmul.bf16.gmra.mxu0 %v6546
        %v7740 = vpop.f32.mrf.mxu0
        %v7741 = vadd.f32 %v7652, %v7740
        %v7742 = vpop.f32.mrf.mxu0
        %v7743 = vadd.f32 %v7654, %v7742
        %7744 = vmatmul.bf16.gmra.mxu0 %v6547
        %v7745 = vpop.f32.mrf.mxu0
        %v7746 = vadd.f32 %v7657, %v7745
        %v7747 = vpop.f32.mrf.mxu0
        %v7748 = vadd.f32 %v7659, %v7747
        %7749 = vmatmul.bf16.gmra.mxu0 %v6548
        %v7750 = vpop.f32.mrf.mxu0
        %v7751 = vadd.f32 %v7662, %v7750
        %v7752 = vpop.f32.mrf.mxu0
        %v7753 = vadd.f32 %v7664, %v7752
        %7754 = vmatmul.bf16.gmra.mxu0 %v6549
        %v7755 = vpop.f32.mrf.mxu0
        %v7756 = vadd.f32 %v7667, %v7755
        %v7757 = vpop.f32.mrf.mxu0
        %v7758 = vadd.f32 %v7669, %v7757
        %7759 = vdwg.mxu0
        %7760 = vmatpush.bf16.msra.mxu0 %v7557
        %7761 = vmatpush.bf16.msra.mxu0 %v7556
        %7762 = vmatpush.bf16.msra.mxu0 %v7555
        %7763 = vmatpush.bf16.msra.mxu0 %v7554
        %7764 = vmatpush.bf16.msra.mxu0 %v7553
        %7765 = vmatpush.bf16.msra.mxu0 %v7552
        %7766 = vmatpush.bf16.msra.mxu0 %v7551
        %7767 = vmatpush.bf16.msra.mxu0 %v7550
        %7768 = vmatmul.bf16.gmra.mxu0 %v6774
        %v7769 = vpop.f32.mrf.mxu0
        %v7770 = vadd.f32 %v7681, %v7769
        %v7771 = vpop.f32.mrf.mxu0
        %v7772 = vadd.f32 %v7683, %v7771
        %7773 = vmatmul.bf16.gmra.mxu0 %v6781
        %v7774 = vpop.f32.mrf.mxu0
        %v7775 = vadd.f32 %v7686, %v7774
        %v7776 = vpop.f32.mrf.mxu0
        %v7777 = vadd.f32 %v7688, %v7776
        %7778 = vmatmul.bf16.gmra.mxu0 %v6788
        %v7779 = vpop.f32.mrf.mxu0
        %v7780 = vadd.f32 %v7691, %v7779
        %v7781 = vpop.f32.mrf.mxu0
        %v7782 = vadd.f32 %v7693, %v7781
        %7783 = vmatmul.bf16.gmra.mxu0 %v6795
        %v7784 = vpop.f32.mrf.mxu0
        %v7785 = vadd.f32 %v7696, %v7784
        %v7786 = vpop.f32.mrf.mxu0
        %v7787 = vadd.f32 %v7698, %v7786
        %7788 = vmatmul.bf16.gmra.mxu0 %v6802
        %v7789 = vpop.f32.mrf.mxu0
        %v7790 = vadd.f32 %v7701, %v7789
        %v7791 = vpop.f32.mrf.mxu0
        %v7792 = vadd.f32 %v7703, %v7791
        %7793 = vmatmul.bf16.gmra.mxu0 %v6809
        %v7794 = vpop.f32.mrf.mxu0
        %v7795 = vadd.f32 %v7706, %v7794
        %v7796 = vpop.f32.mrf.mxu0
        %v7797 = vadd.f32 %v7708, %v7796
        %7798 = vmatmul.bf16.gmra.mxu0 %v6816
        %v7799 = vpop.f32.mrf.mxu0
        %v7800 = vadd.f32 %v7711, %v7799
        %v7801 = vpop.f32.mrf.mxu0
        %v7802 = vadd.f32 %v7713, %v7801
        %7803 = vmatmul.bf16.gmra.mxu0 %v6823
        %v7804 = vpop.f32.mrf.mxu0
        %v7805 = vadd.f32 %v7716, %v7804
        %v7806 = vpop.f32.mrf.mxu0
        %v7807 = vadd.f32 %v7718, %v7806
        %7808 = vmatmul.bf16.gmra.mxu0 %v6830
        %v7809 = vpop.f32.mrf.mxu0
        %v7810 = vadd.f32 %v7721, %v7809
        %v7811 = vpop.f32.mrf.mxu0
        %v7812 = vadd.f32 %v7723, %v7811
        %7813 = vmatmul.bf16.gmra.mxu0 %v6837
        %v7814 = vpop.f32.mrf.mxu0
        %v7815 = vadd.f32 %v7726, %v7814
        %v7816 = vpop.f32.mrf.mxu0
        %v7817 = vadd.f32 %v7728, %v7816
        %7818 = vmatmul.bf16.gmra.mxu0 %v6844
        %v7819 = vpop.f32.mrf.mxu0
        %v7820 = vadd.f32 %v7731, %v7819
        %v7821 = vpop.f32.mrf.mxu0
        %v7822 = vadd.f32 %v7733, %v7821
        %7823 = vmatmul.bf16.gmra.mxu0 %v6851
        %v7824 = vpop.f32.mrf.mxu0
        %v7825 = vadd.f32 %v7736, %v7824
        %v7826 = vpop.f32.mrf.mxu0
        %v7827 = vadd.f32 %v7738, %v7826
        %7828 = vmatmul.bf16.gmra.mxu0 %v6858
        %v7829 = vpop.f32.mrf.mxu0
        %v7830 = vadd.f32 %v7741, %v7829
        %v7831 = vpop.f32.mrf.mxu0
        %v7832 = vadd.f32 %v7743, %v7831
        %7833 = vmatmul.bf16.gmra.mxu0 %v6865
        %v7834 = vpop.f32.mrf.mxu0
        %v7835 = vadd.f32 %v7746, %v7834
        %v7836 = vpop.f32.mrf.mxu0
        %v7837 = vadd.f32 %v7748, %v7836
        %7838 = vmatmul.bf16.gmra.mxu0 %v6872
        %v7839 = vpop.f32.mrf.mxu0
        %v7840 = vadd.f32 %v7751, %v7839
        %v7841 = vpop.f32.mrf.mxu0
        %v7842 = vadd.f32 %v7753, %v7841
        %7843 = vmatmul.bf16.gmra.mxu0 %v6879
        %v7844 = vpop.f32.mrf.mxu0
        %v7845 = vadd.f32 %v7756, %v7844
        %v7846 = vpop.f32.mrf.mxu0
        %v7847 = vadd.f32 %v7758, %v7846
        %7848 = vdwg.mxu0
        %s7849 = scalar_lea.vmem %s8, 384
        %v7850 = vld [vmem:[%s7849] sm:$0xf]
        %v7851 = vld [vmem:[%s7849 + $0x4] sm:$0xf]
        %v7852 = vld [vmem:[%s7849 + $0x8] sm:$0xf]
        %v7853 = vld [vmem:[%s7849 + $0xc] sm:$0xf]
        %v7854 = vld [vmem:[%s7849 + $0x10] sm:$0xf]
        %v7855 = vld [vmem:[%s7849 + $0x14] sm:$0xf]
        %v7856 = vld [vmem:[%s7849 + $0x18] sm:$0xf]
        %v7857 = vld [vmem:[%s7849 + $0x1c] sm:$0xf]
        %v7858 = vld [vmem:[%s7849 + $0x20] sm:$0xf]
        %v7859 = vld [vmem:[%s7849 + $0x24] sm:$0xf]
        %v7860 = vld [vmem:[%s7849 + $0x28] sm:$0xf]
        %v7861 = vld [vmem:[%s7849 + $0x2c] sm:$0xf]
        %v7862 = vld [vmem:[%s7849 + $0x30] sm:$0xf]
        %v7863 = vld [vmem:[%s7849 + $0x34] sm:$0xf]
        %v7864 = vld [vmem:[%s7849 + $0x38] sm:$0xf]
        %v7865 = vld [vmem:[%s7849 + $0x3c] sm:$0xf]
        %v7866 = vld [vmem:[%s7849 + $0x40] sm:$0xf]
        %v7867 = vld [vmem:[%s7849 + $0x44] sm:$0xf]
        %v7868 = vld [vmem:[%s7849 + $0x48] sm:$0xf]
        %v7869 = vld [vmem:[%s7849 + $0x4c] sm:$0xf]
        %v7870 = vld [vmem:[%s7849 + $0x50] sm:$0xf]
        %v7871 = vld [vmem:[%s7849 + $0x54] sm:$0xf]
        %v7872 = vld [vmem:[%s7849 + $0x58] sm:$0xf]
        %v7873 = vld [vmem:[%s7849 + $0x5c] sm:$0xf]
        %v7874 = vld [vmem:[%s7849 + $0x60] sm:$0xf]
        %v7875 = vld [vmem:[%s7849 + $0x64] sm:$0xf]
        %v7876 = vld [vmem:[%s7849 + $0x68] sm:$0xf]
        %v7877 = vld [vmem:[%s7849 + $0x6c] sm:$0xf]
        %v7878 = vld [vmem:[%s7849 + $0x70] sm:$0xf]
        %v7879 = vld [vmem:[%s7849 + $0x74] sm:$0xf]
        %v7880 = vld [vmem:[%s7849 + $0x78] sm:$0xf]
        %v7881 = vld [vmem:[%s7849 + $0x7c] sm:$0xf]
        %v7882 = vld [vmem:[%s7849 + $0x80] sm:$0xf]
        %v7883 = vld [vmem:[%s7849 + $0x84] sm:$0xf]
        %v7884 = vld [vmem:[%s7849 + $0x88] sm:$0xf]
        %v7885 = vld [vmem:[%s7849 + $0x8c] sm:$0xf]
        %v7886 = vld [vmem:[%s7849 + $0x90] sm:$0xf]
        %v7887 = vld [vmem:[%s7849 + $0x94] sm:$0xf]
        %v7888 = vld [vmem:[%s7849 + $0x98] sm:$0xf]
        %v7889 = vld [vmem:[%s7849 + $0x9c] sm:$0xf]
        %v7890 = vld [vmem:[%s7849 + $0xa0] sm:$0xf]
        %v7891 = vld [vmem:[%s7849 + $0xa4] sm:$0xf]
        %v7892 = vld [vmem:[%s7849 + $0xa8] sm:$0xf]
        %v7893 = vld [vmem:[%s7849 + $0xac] sm:$0xf]
        %v7894 = vld [vmem:[%s7849 + $0xb0] sm:$0xf]
        %v7895 = vld [vmem:[%s7849 + $0xb4] sm:$0xf]
        %v7896 = vld [vmem:[%s7849 + $0xb8] sm:$0xf]
        %v7897 = vld [vmem:[%s7849 + $0xbc] sm:$0xf]
        %v7946 = vunpack.c.l.b16 %v7850
        %v7947 = vunpack.c.l.b16 %v7851
        %v7948 = vunpack.c.l.b16 %v7852
        %v7949 = vunpack.c.l.b16 %v7853
        %v7950 = vunpack.c.l.b16 %v7854
        %v7951 = vunpack.c.l.b16 %v7855
        %v7952 = vunpack.c.l.b16 %v7856
        %v7953 = vunpack.c.l.b16 %v7857
        %v7954 = vunpack.c.l.b16 %v7858
        %v7955 = vunpack.c.l.b16 %v7859
        %v7956 = vunpack.c.l.b16 %v7860
        %v7957 = vunpack.c.l.b16 %v7861
        %v7958 = vunpack.c.l.b16 %v7862
        %v7959 = vunpack.c.l.b16 %v7863
        %v7960 = vunpack.c.l.b16 %v7864
        %v7961 = vunpack.c.l.b16 %v7865
        %v7962 = vunpack.c.l.b16 %v7866
        %v7963 = vunpack.c.l.b16 %v7867
        %v7964 = vunpack.c.l.b16 %v7868
        %v7965 = vunpack.c.l.b16 %v7869
        %v7966 = vunpack.c.l.b16 %v7870
        %v7967 = vunpack.c.l.b16 %v7871
        %v7968 = vunpack.c.l.b16 %v7872
        %v7969 = vunpack.c.l.b16 %v7873
        %v7970 = vunpack.c.l.b16 %v7874
        %v7971 = vunpack.c.l.b16 %v7875
        %v7972 = vunpack.c.l.b16 %v7876
        %v7973 = vunpack.c.l.b16 %v7877
        %v7974 = vunpack.c.l.b16 %v7878
        %v7975 = vunpack.c.l.b16 %v7879
        %v7976 = vunpack.c.l.b16 %v7880
        %v7977 = vunpack.c.l.b16 %v7881
        %v7978 = vunpack.c.l.b16 %v7882
        %v7979 = vunpack.c.l.b16 %v7883
        %v7980 = vunpack.c.l.b16 %v7884
        %v7981 = vunpack.c.l.b16 %v7885
        %v7982 = vunpack.c.l.b16 %v7886
        %v7983 = vunpack.c.l.b16 %v7887
        %v7984 = vunpack.c.l.b16 %v7888
        %v7985 = vunpack.c.l.b16 %v7889
        %v7986 = vunpack.c.l.b16 %v7890
        %v7987 = vunpack.c.l.b16 %v7891
        %v7988 = vunpack.c.l.b16 %v7892
        %v7989 = vunpack.c.l.b16 %v7893
        %v7990 = vunpack.c.l.b16 %v7894
        %v7991 = vunpack.c.l.b16 %v7895
        %v7992 = vunpack.c.l.b16 %v7896
        %v7993 = vunpack.c.l.b16 %v7897
        %v7994 = vpack.c.b16 %v7947, %v7946
        %v7995 = vpack.c.b16 %v7949, %v7948
        %v7996 = vpack.c.b16 %v7951, %v7950
        %v7997 = vpack.c.b16 %v7953, %v7952
        %v7998 = vpack.c.b16 %v7955, %v7954
        %v7999 = vpack.c.b16 %v7957, %v7956
        %v8000 = vpack.c.b16 %v7959, %v7958
        %v8001 = vpack.c.b16 %v7961, %v7960
        %v8002 = vpack.c.b16 %v7963, %v7962
        %v8003 = vpack.c.b16 %v7965, %v7964
        %v8004 = vpack.c.b16 %v7967, %v7966
        %v8005 = vpack.c.b16 %v7969, %v7968
        %v8006 = vpack.c.b16 %v7971, %v7970
        %v8007 = vpack.c.b16 %v7973, %v7972
        %v8008 = vpack.c.b16 %v7975, %v7974
        %v8009 = vpack.c.b16 %v7977, %v7976
        %v8010 = vpack.c.b16 %v7979, %v7978
        %v8011 = vpack.c.b16 %v7981, %v7980
        %v8012 = vpack.c.b16 %v7983, %v7982
        %v8013 = vpack.c.b16 %v7985, %v7984
        %v8014 = vpack.c.b16 %v7987, %v7986
        %v8015 = vpack.c.b16 %v7989, %v7988
        %v8016 = vpack.c.b16 %v7991, %v7990
        %v8017 = vpack.c.b16 %v7993, %v7992
        %8042 = vmatpush.bf16.msra.mxu0 %v8001
        %8043 = vmatpush.bf16.msra.mxu0 %v8000
        %8044 = vmatpush.bf16.msra.mxu0 %v7999
        %8045 = vmatpush.bf16.msra.mxu0 %v7998
        %8046 = vmatpush.bf16.msra.mxu0 %v7997
        %8047 = vmatpush.bf16.msra.mxu0 %v7996
        %8048 = vmatpush.bf16.msra.mxu0 %v7995
        %8049 = vmatpush.bf16.msra.mxu0 %v7994
        %8050 = vmatmul.bf16.gmra.mxu0 %v6698
        %v8051 = vpop.f32.mrf.mxu0
        %v8052 = vadd.f32 0.0, %v8051
        %v8053 = vpop.f32.mrf.mxu0
        %v8054 = vadd.f32 0.0, %v8053
        %8055 = vmatmul.bf16.gmra.mxu0 %v6699
        %v8056 = vpop.f32.mrf.mxu0
        %v8057 = vadd.f32 0.0, %v8056
        %v8058 = vpop.f32.mrf.mxu0
        %v8059 = vadd.f32 0.0, %v8058
        %8060 = vmatmul.bf16.gmra.mxu0 %v6700
        %v8061 = vpop.f32.mrf.mxu0
        %v8062 = vadd.f32 0.0, %v8061
        %v8063 = vpop.f32.mrf.mxu0
        %v8064 = vadd.f32 0.0, %v8063
        %8065 = vmatmul.bf16.gmra.mxu0 %v6701
        %v8066 = vpop.f32.mrf.mxu0
        %v8067 = vadd.f32 0.0, %v8066
        %v8068 = vpop.f32.mrf.mxu0
        %v8069 = vadd.f32 0.0, %v8068
        %8070 = vmatmul.bf16.gmra.mxu0 %v6702
        %v8071 = vpop.f32.mrf.mxu0
        %v8072 = vadd.f32 0.0, %v8071
        %v8073 = vpop.f32.mrf.mxu0
        %v8074 = vadd.f32 0.0, %v8073
        %8075 = vmatmul.bf16.gmra.mxu0 %v6703
        %v8076 = vpop.f32.mrf.mxu0
        %v8077 = vadd.f32 0.0, %v8076
        %v8078 = vpop.f32.mrf.mxu0
        %v8079 = vadd.f32 0.0, %v8078
        %8080 = vmatmul.bf16.gmra.mxu0 %v6704
        %v8081 = vpop.f32.mrf.mxu0
        %v8082 = vadd.f32 0.0, %v8081
        %v8083 = vpop.f32.mrf.mxu0
        %v8084 = vadd.f32 0.0, %v8083
        %8085 = vmatmul.bf16.gmra.mxu0 %v6705
        %v8086 = vpop.f32.mrf.mxu0
        %v8087 = vadd.f32 0.0, %v8086
        %v8088 = vpop.f32.mrf.mxu0
        %v8089 = vadd.f32 0.0, %v8088
        %8090 = vmatmul.bf16.gmra.mxu0 %v6706
        %v8091 = vpop.f32.mrf.mxu0
        %v8092 = vadd.f32 0.0, %v8091
        %v8093 = vpop.f32.mrf.mxu0
        %v8094 = vadd.f32 0.0, %v8093
        %8095 = vmatmul.bf16.gmra.mxu0 %v6707
        %v8096 = vpop.f32.mrf.mxu0
        %v8097 = vadd.f32 0.0, %v8096
        %v8098 = vpop.f32.mrf.mxu0
        %v8099 = vadd.f32 0.0, %v8098
        %8100 = vmatmul.bf16.gmra.mxu0 %v6708
        %v8101 = vpop.f32.mrf.mxu0
        %v8102 = vadd.f32 0.0, %v8101
        %v8103 = vpop.f32.mrf.mxu0
        %v8104 = vadd.f32 0.0, %v8103
        %8105 = vmatmul.bf16.gmra.mxu0 %v6709
        %v8106 = vpop.f32.mrf.mxu0
        %v8107 = vadd.f32 0.0, %v8106
        %v8108 = vpop.f32.mrf.mxu0
        %v8109 = vadd.f32 0.0, %v8108
        %8110 = vmatmul.bf16.gmra.mxu0 %v6710
        %v8111 = vpop.f32.mrf.mxu0
        %v8112 = vadd.f32 0.0, %v8111
        %v8113 = vpop.f32.mrf.mxu0
        %v8114 = vadd.f32 0.0, %v8113
        %8115 = vmatmul.bf16.gmra.mxu0 %v6711
        %v8116 = vpop.f32.mrf.mxu0
        %v8117 = vadd.f32 0.0, %v8116
        %v8118 = vpop.f32.mrf.mxu0
        %v8119 = vadd.f32 0.0, %v8118
        %8120 = vmatmul.bf16.gmra.mxu0 %v6712
        %v8121 = vpop.f32.mrf.mxu0
        %v8122 = vadd.f32 0.0, %v8121
        %v8123 = vpop.f32.mrf.mxu0
        %v8124 = vadd.f32 0.0, %v8123
        %8125 = vmatmul.bf16.gmra.mxu0 %v6713
        %v8126 = vpop.f32.mrf.mxu0
        %v8127 = vadd.f32 0.0, %v8126
        %v8128 = vpop.f32.mrf.mxu0
        %v8129 = vadd.f32 0.0, %v8128
        %8130 = vdwg.mxu0
        %8131 = vmatpush.bf16.msra.mxu0 %v8009
        %8132 = vmatpush.bf16.msra.mxu0 %v8008
        %8133 = vmatpush.bf16.msra.mxu0 %v8007
        %8134 = vmatpush.bf16.msra.mxu0 %v8006
        %8135 = vmatpush.bf16.msra.mxu0 %v8005
        %8136 = vmatpush.bf16.msra.mxu0 %v8004
        %8137 = vmatpush.bf16.msra.mxu0 %v8003
        %8138 = vmatpush.bf16.msra.mxu0 %v8002
        %8139 = vmatmul.bf16.gmra.mxu0 %v6536
        %v8140 = vpop.f32.mrf.mxu0
        %v8141 = vadd.f32 %v8052, %v8140
        %v8142 = vpop.f32.mrf.mxu0
        %v8143 = vadd.f32 %v8054, %v8142
        %8144 = vmatmul.bf16.gmra.mxu0 %v6537
        %v8145 = vpop.f32.mrf.mxu0
        %v8146 = vadd.f32 %v8057, %v8145
        %v8147 = vpop.f32.mrf.mxu0
        %v8148 = vadd.f32 %v8059, %v8147
        %8149 = vmatmul.bf16.gmra.mxu0 %v6538
        %v8150 = vpop.f32.mrf.mxu0
        %v8151 = vadd.f32 %v8062, %v8150
        %v8152 = vpop.f32.mrf.mxu0
        %v8153 = vadd.f32 %v8064, %v8152
        %8154 = vmatmul.bf16.gmra.mxu0 %v6539
        %v8155 = vpop.f32.mrf.mxu0
        %v8156 = vadd.f32 %v8067, %v8155
        %v8157 = vpop.f32.mrf.mxu0
        %v8158 = vadd.f32 %v8069, %v8157
        %8159 = vmatmul.bf16.gmra.mxu0 %v6540
        %v8160 = vpop.f32.mrf.mxu0
        %v8161 = vadd.f32 %v8072, %v8160
        %v8162 = vpop.f32.mrf.mxu0
        %v8163 = vadd.f32 %v8074, %v8162
        %8164 = vmatmul.bf16.gmra.mxu0 %v6541
        %v8165 = vpop.f32.mrf.mxu0
        %v8166 = vadd.f32 %v8077, %v8165
        %v8167 = vpop.f32.mrf.mxu0
        %v8168 = vadd.f32 %v8079, %v8167
        %8169 = vmatmul.bf16.gmra.mxu0 %v6542
        %v8170 = vpop.f32.mrf.mxu0
        %v8171 = vadd.f32 %v8082, %v8170
        %v8172 = vpop.f32.mrf.mxu0
        %v8173 = vadd.f32 %v8084, %v8172
        %8174 = vmatmul.bf16.gmra.mxu0 %v6543
        %v8175 = vpop.f32.mrf.mxu0
        %v8176 = vadd.f32 %v8087, %v8175
        %v8177 = vpop.f32.mrf.mxu0
        %v8178 = vadd.f32 %v8089, %v8177
        %8179 = vmatmul.bf16.gmra.mxu0 %v6544
        %v8180 = vpop.f32.mrf.mxu0
        %v8181 = vadd.f32 %v8092, %v8180
        %v8182 = vpop.f32.mrf.mxu0
        %v8183 = vadd.f32 %v8094, %v8182
        %8184 = vmatmul.bf16.gmra.mxu0 %v6545
        %v8185 = vpop.f32.mrf.mxu0
        %v8186 = vadd.f32 %v8097, %v8185
        %v8187 = vpop.f32.mrf.mxu0
        %v8188 = vadd.f32 %v8099, %v8187
        %8189 = vmatmul.bf16.gmra.mxu0 %v6546
        %v8190 = vpop.f32.mrf.mxu0
        %v8191 = vadd.f32 %v8102, %v8190
        %v8192 = vpop.f32.mrf.mxu0
        %v8193 = vadd.f32 %v8104, %v8192
        %8194 = vmatmul.bf16.gmra.mxu0 %v6547
        %v8195 = vpop.f32.mrf.mxu0
        %v8196 = vadd.f32 %v8107, %v8195
        %v8197 = vpop.f32.mrf.mxu0
        %v8198 = vadd.f32 %v8109, %v8197
        %8199 = vmatmul.bf16.gmra.mxu0 %v6548
        %v8200 = vpop.f32.mrf.mxu0
        %v8201 = vadd.f32 %v8112, %v8200
        %v8202 = vpop.f32.mrf.mxu0
        %v8203 = vadd.f32 %v8114, %v8202
        %8204 = vmatmul.bf16.gmra.mxu0 %v6549
        %v8205 = vpop.f32.mrf.mxu0
        %v8206 = vadd.f32 %v8117, %v8205
        %v8207 = vpop.f32.mrf.mxu0
        %v8208 = vadd.f32 %v8119, %v8207
        %8209 = vmatmul.bf16.gmra.mxu0 %v6550
        %v8210 = vpop.f32.mrf.mxu0
        %v8211 = vadd.f32 %v8122, %v8210
        %v8212 = vpop.f32.mrf.mxu0
        %v8213 = vadd.f32 %v8124, %v8212
        %8214 = vmatmul.bf16.gmra.mxu0 %v6551
        %v8215 = vpop.f32.mrf.mxu0
        %v8216 = vadd.f32 %v8127, %v8215
        %v8217 = vpop.f32.mrf.mxu0
        %v8218 = vadd.f32 %v8129, %v8217
        %8219 = vdwg.mxu0
        %8220 = vmatpush.bf16.msra.mxu0 %v8017
        %8221 = vmatpush.bf16.msra.mxu0 %v8016
        %8222 = vmatpush.bf16.msra.mxu0 %v8015
        %8223 = vmatpush.bf16.msra.mxu0 %v8014
        %8224 = vmatpush.bf16.msra.mxu0 %v8013
        %8225 = vmatpush.bf16.msra.mxu0 %v8012
        %8226 = vmatpush.bf16.msra.mxu0 %v8011
        %8227 = vmatpush.bf16.msra.mxu0 %v8010
        %8228 = vmatmul.bf16.gmra.mxu0 %v6788
        %v8229 = vpop.f32.mrf.mxu0
        %v8230 = vadd.f32 %v8141, %v8229
        %v8231 = vpop.f32.mrf.mxu0
        %v8232 = vadd.f32 %v8143, %v8231
        %8233 = vmatmul.bf16.gmra.mxu0 %v6795
        %v8234 = vpop.f32.mrf.mxu0
        %v8235 = vadd.f32 %v8146, %v8234
        %v8236 = vpop.f32.mrf.mxu0
        %v8237 = vadd.f32 %v8148, %v8236
        %8238 = vmatmul.bf16.gmra.mxu0 %v6802
        %v8239 = vpop.f32.mrf.mxu0
        %v8240 = vadd.f32 %v8151, %v8239
        %v8241 = vpop.f32.mrf.mxu0
        %v8242 = vadd.f32 %v8153, %v8241
        %8243 = vmatmul.bf16.gmra.mxu0 %v6809
        %v8244 = vpop.f32.mrf.mxu0
        %v8245 = vadd.f32 %v8156, %v8244
        %v8246 = vpop.f32.mrf.mxu0
        %v8247 = vadd.f32 %v8158, %v8246
        %8248 = vmatmul.bf16.gmra.mxu0 %v6816
        %v8249 = vpop.f32.mrf.mxu0
        %v8250 = vadd.f32 %v8161, %v8249
        %v8251 = vpop.f32.mrf.mxu0
        %v8252 = vadd.f32 %v8163, %v8251
        %8253 = vmatmul.bf16.gmra.mxu0 %v6823
        %v8254 = vpop.f32.mrf.mxu0
        %v8255 = vadd.f32 %v8166, %v8254
        %v8256 = vpop.f32.mrf.mxu0
        %v8257 = vadd.f32 %v8168, %v8256
        %8258 = vmatmul.bf16.gmra.mxu0 %v6830
        %v8259 = vpop.f32.mrf.mxu0
        %v8260 = vadd.f32 %v8171, %v8259
        %v8261 = vpop.f32.mrf.mxu0
        %v8262 = vadd.f32 %v8173, %v8261
        %8263 = vmatmul.bf16.gmra.mxu0 %v6837
        %v8264 = vpop.f32.mrf.mxu0
        %v8265 = vadd.f32 %v8176, %v8264
        %v8266 = vpop.f32.mrf.mxu0
        %v8267 = vadd.f32 %v8178, %v8266
        %8268 = vmatmul.bf16.gmra.mxu0 %v6844
        %v8269 = vpop.f32.mrf.mxu0
        %v8270 = vadd.f32 %v8181, %v8269
        %v8271 = vpop.f32.mrf.mxu0
        %v8272 = vadd.f32 %v8183, %v8271
        %8273 = vmatmul.bf16.gmra.mxu0 %v6851
        %v8274 = vpop.f32.mrf.mxu0
        %v8275 = vadd.f32 %v8186, %v8274
        %v8276 = vpop.f32.mrf.mxu0
        %v8277 = vadd.f32 %v8188, %v8276
        %8278 = vmatmul.bf16.gmra.mxu0 %v6858
        %v8279 = vpop.f32.mrf.mxu0
        %v8280 = vadd.f32 %v8191, %v8279
        %v8281 = vpop.f32.mrf.mxu0
        %v8282 = vadd.f32 %v8193, %v8281
        %8283 = vmatmul.bf16.gmra.mxu0 %v6865
        %v8284 = vpop.f32.mrf.mxu0
        %v8285 = vadd.f32 %v8196, %v8284
        %v8286 = vpop.f32.mrf.mxu0
        %v8287 = vadd.f32 %v8198, %v8286
        %8288 = vmatmul.bf16.gmra.mxu0 %v6872
        %v8289 = vpop.f32.mrf.mxu0
        %v8290 = vadd.f32 %v8201, %v8289
        %v8291 = vpop.f32.mrf.mxu0
        %v8292 = vadd.f32 %v8203, %v8291
        %8293 = vmatmul.bf16.gmra.mxu0 %v6879
        %v8294 = vpop.f32.mrf.mxu0
        %v8295 = vadd.f32 %v8206, %v8294
        %v8296 = vpop.f32.mrf.mxu0
        %v8297 = vadd.f32 %v8208, %v8296
        %8298 = vmatmul.bf16.gmra.mxu0 %v6886
        %v8299 = vpop.f32.mrf.mxu0
        %v8300 = vadd.f32 %v8211, %v8299
        %v8301 = vpop.f32.mrf.mxu0
        %v8302 = vadd.f32 %v8213, %v8301
        %8303 = vmatmul.bf16.gmra.mxu0 %v6893
        %v8304 = vpop.f32.mrf.mxu0
        %v8305 = vadd.f32 %v8216, %v8304
        %v8306 = vpop.f32.mrf.mxu0
        %v8307 = vadd.f32 %v8218, %v8306
        %8308 = vdwg.mxu0
        %v8309 = vadd.f32 %v7770, %v8230
        %v8310 = vadd.f32 %v7772, %v8232
        %v8311 = vadd.f32 %v7775, %v8235
        %v8312 = vadd.f32 %v7777, %v8237
        %v8313 = vadd.f32 %v7780, %v8240
        %v8314 = vadd.f32 %v7782, %v8242
        %v8315 = vadd.f32 %v7785, %v8245
        %v8316 = vadd.f32 %v7787, %v8247
        %v8317 = vadd.f32 %v7790, %v8250
        %v8318 = vadd.f32 %v7792, %v8252
        %v8319 = vadd.f32 %v7795, %v8255
        %v8320 = vadd.f32 %v7797, %v8257
        %v8321 = vadd.f32 %v7800, %v8260
        %v8322 = vadd.f32 %v7802, %v8262
        %v8323 = vadd.f32 %v7805, %v8265
        %v8324 = vadd.f32 %v7807, %v8267
        %v8325 = vadd.f32 %v7810, %v8270
        %v8326 = vadd.f32 %v7812, %v8272
        %v8327 = vadd.f32 %v7815, %v8275
        %v8328 = vadd.f32 %v7817, %v8277
        %v8329 = vadd.f32 %v7820, %v8280
        %v8330 = vadd.f32 %v7822, %v8282
        %v8331 = vadd.f32 %v7825, %v8285
        %v8332 = vadd.f32 %v7827, %v8287
        %v8333 = vadd.f32 %v7830, %v8290
        %v8334 = vadd.f32 %v7832, %v8292
        %v8335 = vadd.f32 %v7835, %v8295
        %v8336 = vadd.f32 %v7837, %v8297
        %v8337 = vadd.f32 %v7840, %v8300
        %v8338 = vadd.f32 %v7842, %v8302
        %v8339 = vadd.f32 %v7845, %v8305
        %v8340 = vadd.f32 %v7847, %v8307
        %v8341 = vld [vmem:[%s9] sm:$0x1]
        %v8343 = vperm.slane %v8341, 0
        %v8345 = vmul.f32 %v8309, %v8343
        %v8346 = vmul.f32 %v8310, %v8343
        %v8347 = vmul.f32 %v8311, %v8343
        %v8348 = vmul.f32 %v8312, %v8343
        %v8349 = vmul.f32 %v8313, %v8343
        %v8350 = vmul.f32 %v8314, %v8343
        %v8351 = vmul.f32 %v8315, %v8343
        %v8352 = vmul.f32 %v8316, %v8343
        %v8353 = vmul.f32 %v8317, %v8343
        %v8354 = vmul.f32 %v8318, %v8343
        %v8355 = vmul.f32 %v8319, %v8343
        %v8356 = vmul.f32 %v8320, %v8343
        %v8357 = vmul.f32 %v8321, %v8343
        %v8358 = vmul.f32 %v8322, %v8343
        %v8359 = vmul.f32 %v8323, %v8343
        %v8360 = vmul.f32 %v8324, %v8343
        %v8361 = vmul.f32 %v8325, %v8343
        %v8362 = vmul.f32 %v8326, %v8343
        %v8363 = vmul.f32 %v8327, %v8343
        %v8364 = vmul.f32 %v8328, %v8343
        %v8365 = vmul.f32 %v8329, %v8343
        %v8366 = vmul.f32 %v8330, %v8343
        %v8367 = vmul.f32 %v8331, %v8343
        %v8368 = vmul.f32 %v8332, %v8343
        %v8369 = vmul.f32 %v8333, %v8343
        %v8370 = vmul.f32 %v8334, %v8343
        %v8371 = vmul.f32 %v8335, %v8343
        %v8372 = vmul.f32 %v8336, %v8343
        %v8373 = vmul.f32 %v8337, %v8343
        %v8374 = vmul.f32 %v8338, %v8343
        %v8375 = vmul.f32 %v8339, %v8343
        %v8376 = vmul.f32 %v8340, %v8343
        %v8377 = vld [vmem:[%s10] sm:$0x1]
        %v8379 = vperm.slane %v8377, 0
        %v8381 = vadd.f32 %v8345, %v8379
        %v8382 = vadd.f32 %v8346, %v8379
        %v8383 = vadd.f32 %v8347, %v8379
        %v8384 = vadd.f32 %v8348, %v8379
        %v8385 = vadd.f32 %v8349, %v8379
        %v8386 = vadd.f32 %v8350, %v8379
        %v8387 = vadd.f32 %v8351, %v8379
        %v8388 = vadd.f32 %v8352, %v8379
        %v8389 = vadd.f32 %v8353, %v8379
        %v8390 = vadd.f32 %v8354, %v8379
        %v8391 = vadd.f32 %v8355, %v8379
        %v8392 = vadd.f32 %v8356, %v8379
        %v8393 = vadd.f32 %v8357, %v8379
        %v8394 = vadd.f32 %v8358, %v8379
        %v8395 = vadd.f32 %v8359, %v8379
        %v8396 = vadd.f32 %v8360, %v8379
        %v8397 = vadd.f32 %v8361, %v8379
        %v8398 = vadd.f32 %v8362, %v8379
        %v8399 = vadd.f32 %v8363, %v8379
        %v8400 = vadd.f32 %v8364, %v8379
        %v8401 = vadd.f32 %v8365, %v8379
        %v8402 = vadd.f32 %v8366, %v8379
        %v8403 = vadd.f32 %v8367, %v8379
        %v8404 = vadd.f32 %v8368, %v8379
        %v8405 = vadd.f32 %v8369, %v8379
        %v8406 = vadd.f32 %v8370, %v8379
        %v8407 = vadd.f32 %v8371, %v8379
        %v8408 = vadd.f32 %v8372, %v8379
        %v8409 = vadd.f32 %v8373, %v8379
        %v8410 = vadd.f32 %v8374, %v8379
        %v8411 = vadd.f32 %v8375, %v8379
        %v8412 = vadd.f32 %v8376, %v8379
        %vm8413 = vcmp.ge.f32.partialorder %v8381, 0.0
        %vm8414 = vcmp.ge.f32.partialorder %v8382, 0.0
        %vm8415 = vcmp.ge.f32.partialorder %v8383, 0.0
        %vm8416 = vcmp.ge.f32.partialorder %v8384, 0.0
        %vm8417 = vcmp.ge.f32.partialorder %v8385, 0.0
        %vm8418 = vcmp.ge.f32.partialorder %v8386, 0.0
        %vm8419 = vcmp.ge.f32.partialorder %v8387, 0.0
        %vm8420 = vcmp.ge.f32.partialorder %v8388, 0.0
        %vm8421 = vcmp.ge.f32.partialorder %v8389, 0.0
        %vm8422 = vcmp.ge.f32.partialorder %v8390, 0.0
        %vm8423 = vcmp.ge.f32.partialorder %v8391, 0.0
        %vm8424 = vcmp.ge.f32.partialorder %v8392, 0.0
        %vm8425 = vcmp.ge.f32.partialorder %v8393, 0.0
        %vm8426 = vcmp.ge.f32.partialorder %v8394, 0.0
        %vm8427 = vcmp.ge.f32.partialorder %v8395, 0.0
        %vm8428 = vcmp.ge.f32.partialorder %v8396, 0.0
        %vm8429 = vcmp.ge.f32.partialorder %v8397, 0.0
        %vm8430 = vcmp.ge.f32.partialorder %v8398, 0.0
        %vm8431 = vcmp.ge.f32.partialorder %v8399, 0.0
        %vm8432 = vcmp.ge.f32.partialorder %v8400, 0.0
        %vm8433 = vcmp.ge.f32.partialorder %v8401, 0.0
        %vm8434 = vcmp.ge.f32.partialorder %v8402, 0.0
        %vm8435 = vcmp.ge.f32.partialorder %v8403, 0.0
        %vm8436 = vcmp.ge.f32.partialorder %v8404, 0.0
        %vm8437 = vcmp.ge.f32.partialorder %v8405, 0.0
        %vm8438 = vcmp.ge.f32.partialorder %v8406, 0.0
        %vm8439 = vcmp.ge.f32.partialorder %v8407, 0.0
        %vm8440 = vcmp.ge.f32.partialorder %v8408, 0.0
        %vm8441 = vcmp.ge.f32.partialorder %v8409, 0.0
        %vm8442 = vcmp.ge.f32.partialorder %v8410, 0.0
        %vm8443 = vcmp.ge.f32.partialorder %v8411, 0.0
        %vm8444 = vcmp.ge.f32.partialorder %v8412, 0.0
        %v8445 = vmul.f32 %v8381, 0.01
        %v8446 = vmul.f32 %v8382, 0.01
        %v8447 = vmul.f32 %v8383, 0.01
        %v8448 = vmul.f32 %v8384, 0.01
        %v8449 = vmul.f32 %v8385, 0.01
        %v8450 = vmul.f32 %v8386, 0.01
        %v8451 = vmul.f32 %v8387, 0.01
        %v8452 = vmul.f32 %v8388, 0.01
        %v8453 = vmul.f32 %v8389, 0.01
        %v8454 = vmul.f32 %v8390, 0.01
        %v8455 = vmul.f32 %v8391, 0.01
        %v8456 = vmul.f32 %v8392, 0.01
        %v8457 = vmul.f32 %v8393, 0.01
        %v8458 = vmul.f32 %v8394, 0.01
        %v8459 = vmul.f32 %v8395, 0.01
        %v8460 = vmul.f32 %v8396, 0.01
        %v8461 = vmul.f32 %v8397, 0.01
        %v8462 = vmul.f32 %v8398, 0.01
        %v8463 = vmul.f32 %v8399, 0.01
        %v8464 = vmul.f32 %v8400, 0.01
        %v8465 = vmul.f32 %v8401, 0.01
        %v8466 = vmul.f32 %v8402, 0.01
        %v8467 = vmul.f32 %v8403, 0.01
        %v8468 = vmul.f32 %v8404, 0.01
        %v8469 = vmul.f32 %v8405, 0.01
        %v8470 = vmul.f32 %v8406, 0.01
        %v8471 = vmul.f32 %v8407, 0.01
        %v8472 = vmul.f32 %v8408, 0.01
        %v8473 = vmul.f32 %v8409, 0.01
        %v8474 = vmul.f32 %v8410, 0.01
        %v8475 = vmul.f32 %v8411, 0.01
        %v8476 = vmul.f32 %v8412, 0.01
        %v8477 = vsel %vm8413, %v8381, %v8445
        %v8478 = vsel %vm8414, %v8382, %v8446
        %v8479 = vsel %vm8415, %v8383, %v8447
        %v8480 = vsel %vm8416, %v8384, %v8448
        %v8481 = vsel %vm8417, %v8385, %v8449
        %v8482 = vsel %vm8418, %v8386, %v8450
        %v8483 = vsel %vm8419, %v8387, %v8451
        %v8484 = vsel %vm8420, %v8388, %v8452
        %v8485 = vsel %vm8421, %v8389, %v8453
        %v8486 = vsel %vm8422, %v8390, %v8454
        %v8487 = vsel %vm8423, %v8391, %v8455
        %v8488 = vsel %vm8424, %v8392, %v8456
        %v8489 = vsel %vm8425, %v8393, %v8457
        %v8490 = vsel %vm8426, %v8394, %v8458
        %v8491 = vsel %vm8427, %v8395, %v8459
        %v8492 = vsel %vm8428, %v8396, %v8460
        %v8493 = vsel %vm8429, %v8397, %v8461
        %v8494 = vsel %vm8430, %v8398, %v8462
        %v8495 = vsel %vm8431, %v8399, %v8463
        %v8496 = vsel %vm8432, %v8400, %v8464
        %v8497 = vsel %vm8433, %v8401, %v8465
        %v8498 = vsel %vm8434, %v8402, %v8466
        %v8499 = vsel %vm8435, %v8403, %v8467
        %v8500 = vsel %vm8436, %v8404, %v8468
        %v8501 = vsel %vm8437, %v8405, %v8469
        %v8502 = vsel %vm8438, %v8406, %v8470
        %v8503 = vsel %vm8439, %v8407, %v8471
        %v8504 = vsel %vm8440, %v8408, %v8472
        %v8505 = vsel %vm8441, %v8409, %v8473
        %v8506 = vsel %vm8442, %v8410, %v8474
        %v8507 = vsel %vm8443, %v8411, %v8475
        %v8508 = vsel %vm8444, %v8412, %v8476
        %v8509 = vld [vmem:[%s11] sm:$0xff]
        %v8510 = vld [vmem:[%s11 + $0x8] sm:$0xff]
        %v8511 = vld [vmem:[%s11 + $0x10] sm:$0xff]
        %v8512 = vld [vmem:[%s11 + $0x18] sm:$0xff]
        %v8513 = vld [vmem:[%s11 + $0x20] sm:$0xff]
        %v8514 = vld [vmem:[%s11 + $0x28] sm:$0xff]
        %v8515 = vld [vmem:[%s11 + $0x30] sm:$0xff]
        %v8516 = vld [vmem:[%s11 + $0x38] sm:$0xff]
        %v8517 = vld [vmem:[%s11 + $0x40] sm:$0xff]
        %v8518 = vld [vmem:[%s11 + $0x48] sm:$0xff]
        %v8519 = vld [vmem:[%s11 + $0x50] sm:$0xff]
        %v8520 = vld [vmem:[%s11 + $0x58] sm:$0xff]
        %v8521 = vld [vmem:[%s11 + $0x60] sm:$0xff]
        %v8522 = vld [vmem:[%s11 + $0x68] sm:$0xff]
        %v8523 = vld [vmem:[%s11 + $0x70] sm:$0xff]
        %v8524 = vld [vmem:[%s11 + $0x78] sm:$0xff]
        %v8525 = vld [vmem:[%s11 + $0x80] sm:$0xff]
        %v8526 = vld [vmem:[%s11 + $0x88] sm:$0xff]
        %v8527 = vld [vmem:[%s11 + $0x90] sm:$0xff]
        %v8528 = vld [vmem:[%s11 + $0x98] sm:$0xff]
        %v8529 = vld [vmem:[%s11 + $0xa0] sm:$0xff]
        %v8530 = vld [vmem:[%s11 + $0xa8] sm:$0xff]
        %v8531 = vld [vmem:[%s11 + $0xb0] sm:$0xff]
        %v8532 = vld [vmem:[%s11 + $0xb8] sm:$0xff]
        %v8533 = vld [vmem:[%s11 + $0xc0] sm:$0xff]
        %v8534 = vld [vmem:[%s11 + $0xc8] sm:$0xff]
        %v8535 = vld [vmem:[%s11 + $0xd0] sm:$0xff]
        %v8536 = vld [vmem:[%s11 + $0xd8] sm:$0xff]
        %v8537 = vld [vmem:[%s11 + $0xe0] sm:$0xff]
        %v8538 = vld [vmem:[%s11 + $0xe8] sm:$0xff]
        %v8539 = vld [vmem:[%s11 + $0xf0] sm:$0xff]
        %v8540 = vld [vmem:[%s11 + $0xf8] sm:$0xff]
        %v8541 = vld [vmem:[%s11 + $0x100] sm:$0xff]
        %v8542 = vld [vmem:[%s11 + $0x108] sm:$0xff]
        %v8543 = vld [vmem:[%s11 + $0x110] sm:$0xff]
        %v8544 = vld [vmem:[%s11 + $0x118] sm:$0xff]
        %v8545 = vld [vmem:[%s11 + $0x120] sm:$0xff]
        %v8546 = vld [vmem:[%s11 + $0x128] sm:$0xff]
        %v8547 = vld [vmem:[%s11 + $0x130] sm:$0xff]
        %v8548 = vld [vmem:[%s11 + $0x138] sm:$0xff]
        %v8549 = vld [vmem:[%s11 + $0x140] sm:$0xff]
        %v8550 = vld [vmem:[%s11 + $0x148] sm:$0xff]
        %v8551 = vld [vmem:[%s11 + $0x150] sm:$0xff]
        %v8552 = vld [vmem:[%s11 + $0x158] sm:$0xff]
        %v8553 = vld [vmem:[%s11 + $0x160] sm:$0xff]
        %v8554 = vld [vmem:[%s11 + $0x168] sm:$0xff]
        %v8555 = vld [vmem:[%s11 + $0x170] sm:$0xff]
        %v8556 = vld [vmem:[%s11 + $0x178] sm:$0xff]
        %v8557 = vld [vmem:[%s11 + $0x180] sm:$0xff]
        %v8558 = vld [vmem:[%s11 + $0x188] sm:$0xff]
        %v8559 = vld [vmem:[%s11 + $0x190] sm:$0xff]
        %v8560 = vld [vmem:[%s11 + $0x198] sm:$0xff]
        %v8561 = vld [vmem:[%s11 + $0x1a0] sm:$0xff]
        %v8562 = vld [vmem:[%s11 + $0x1a8] sm:$0xff]
        %v8563 = vld [vmem:[%s11 + $0x1b0] sm:$0xff]
        %v8564 = vld [vmem:[%s11 + $0x1b8] sm:$0xff]
        %v8565 = vld [vmem:[%s11 + $0x1c0] sm:$0xff]
        %v8566 = vld [vmem:[%s11 + $0x1c8] sm:$0xff]
        %v8567 = vld [vmem:[%s11 + $0x1d0] sm:$0xff]
        %v8568 = vld [vmem:[%s11 + $0x1d8] sm:$0xff]
        %v8569 = vld [vmem:[%s11 + $0x1e0] sm:$0xff]
        %v8570 = vld [vmem:[%s11 + $0x1e8] sm:$0xff]
        %v8571 = vld [vmem:[%s11 + $0x1f0] sm:$0xff]
        %v8572 = vld [vmem:[%s11 + $0x1f8] sm:$0xff]
        %v8573 = vld [vmem:[%s11 + $0x200] sm:$0xff]
        %v8574 = vld [vmem:[%s11 + $0x208] sm:$0xff]
        %v8575 = vld [vmem:[%s11 + $0x210] sm:$0xff]
        %v8576 = vld [vmem:[%s11 + $0x218] sm:$0xff]
        %v8577 = vld [vmem:[%s11 + $0x220] sm:$0xff]
        %v8578 = vld [vmem:[%s11 + $0x228] sm:$0xff]
        %v8579 = vld [vmem:[%s11 + $0x230] sm:$0xff]
        %v8580 = vld [vmem:[%s11 + $0x238] sm:$0xff]
        %v8581 = vpack.c.bf16 %v8478, %v8477
        %v8582 = vpack.c.bf16 %v8480, %v8479
        %v8583 = vpack.c.bf16 %v8482, %v8481
        %v8584 = vpack.c.bf16 %v8484, %v8483
        %v8585 = vpack.c.bf16 %v8486, %v8485
        %v8586 = vpack.c.bf16 %v8488, %v8487
        %v8587 = vpack.c.bf16 %v8490, %v8489
        %v8588 = vpack.c.bf16 %v8492, %v8491
        %v8589 = vpack.c.bf16 %v8494, %v8493
        %v8590 = vpack.c.bf16 %v8496, %v8495
        %v8591 = vpack.c.bf16 %v8498, %v8497
        %v8592 = vpack.c.bf16 %v8500, %v8499
        %v8593 = vpack.c.bf16 %v8502, %v8501
        %v8594 = vpack.c.bf16 %v8504, %v8503
        %v8595 = vpack.c.bf16 %v8506, %v8505
        %v8596 = vpack.c.bf16 %v8508, %v8507
        %v8669 = vunpack.c.l.b16 %v8509
        %v8670 = vunpack.c.h.b16 %v8509
        %v8671 = vunpack.c.l.b16 %v8510
        %v8672 = vunpack.c.h.b16 %v8510
        %v8673 = vunpack.c.l.b16 %v8511
        %v8674 = vunpack.c.h.b16 %v8511
        %v8675 = vunpack.c.l.b16 %v8512
        %v8676 = vunpack.c.h.b16 %v8512
        %v8677 = vunpack.c.l.b16 %v8513
        %v8678 = vunpack.c.h.b16 %v8513
        %v8679 = vunpack.c.l.b16 %v8514
        %v8680 = vunpack.c.h.b16 %v8514
        %v8681 = vunpack.c.l.b16 %v8515
        %v8682 = vunpack.c.h.b16 %v8515
        %v8683 = vunpack.c.l.b16 %v8516
        %v8684 = vunpack.c.h.b16 %v8516
        %v8685 = vunpack.c.l.b16 %v8517
        %v8686 = vunpack.c.h.b16 %v8517
        %v8687 = vunpack.c.l.b16 %v8518
        %v8688 = vunpack.c.h.b16 %v8518
        %v8689 = vunpack.c.l.b16 %v8519
        %v8690 = vunpack.c.h.b16 %v8519
        %v8691 = vunpack.c.l.b16 %v8520
        %v8692 = vunpack.c.h.b16 %v8520
        %v8693 = vunpack.c.l.b16 %v8521
        %v8694 = vunpack.c.h.b16 %v8521
        %v8695 = vunpack.c.l.b16 %v8522
        %v8696 = vunpack.c.h.b16 %v8522
        %v8697 = vunpack.c.l.b16 %v8523
        %v8698 = vunpack.c.h.b16 %v8523
        %v8699 = vunpack.c.l.b16 %v8524
        %v8700 = vunpack.c.h.b16 %v8524
        %v8701 = vunpack.c.l.b16 %v8525
        %v8702 = vunpack.c.h.b16 %v8525
        %v8703 = vunpack.c.l.b16 %v8526
        %v8704 = vunpack.c.h.b16 %v8526
        %v8705 = vunpack.c.l.b16 %v8527
        %v8706 = vunpack.c.h.b16 %v8527
        %v8707 = vunpack.c.l.b16 %v8528
        %v8708 = vunpack.c.h.b16 %v8528
        %v8709 = vunpack.c.l.b16 %v8529
        %v8710 = vunpack.c.h.b16 %v8529
        %v8711 = vunpack.c.l.b16 %v8530
        %v8712 = vunpack.c.h.b16 %v8530
        %v8713 = vunpack.c.l.b16 %v8531
        %v8714 = vunpack.c.h.b16 %v8531
        %v8715 = vunpack.c.l.b16 %v8532
        %v8716 = vunpack.c.h.b16 %v8532
        %v8717 = vunpack.c.l.b16 %v8533
        %v8718 = vunpack.c.h.b16 %v8533
        %v8719 = vunpack.c.l.b16 %v8534
        %v8720 = vunpack.c.h.b16 %v8534
        %v8721 = vunpack.c.l.b16 %v8535
        %v8722 = vunpack.c.h.b16 %v8535
        %v8723 = vunpack.c.l.b16 %v8536
        %v8724 = vunpack.c.h.b16 %v8536
        %v8725 = vunpack.c.l.b16 %v8537
        %v8726 = vunpack.c.h.b16 %v8537
        %v8727 = vunpack.c.l.b16 %v8538
        %v8728 = vunpack.c.h.b16 %v8538
        %v8729 = vunpack.c.l.b16 %v8539
        %v8730 = vunpack.c.h.b16 %v8539
        %v8731 = vunpack.c.l.b16 %v8540
        %v8732 = vunpack.c.h.b16 %v8540
        %v8733 = vunpack.c.l.b16 %v8541
        %v8734 = vunpack.c.h.b16 %v8541
        %v8735 = vunpack.c.l.b16 %v8542
        %v8736 = vunpack.c.h.b16 %v8542
        %v8737 = vunpack.c.l.b16 %v8543
        %v8738 = vunpack.c.h.b16 %v8543
        %v8739 = vunpack.c.l.b16 %v8544
        %v8740 = vunpack.c.h.b16 %v8544
        %v8741 = vunpack.c.l.b16 %v8545
        %v8742 = vunpack.c.h.b16 %v8545
        %v8743 = vunpack.c.l.b16 %v8546
        %v8744 = vunpack.c.h.b16 %v8546
        %v8745 = vunpack.c.l.b16 %v8547
        %v8746 = vunpack.c.h.b16 %v8547
        %v8747 = vunpack.c.l.b16 %v8548
        %v8748 = vunpack.c.h.b16 %v8548
        %v8749 = vunpack.c.l.b16 %v8549
        %v8750 = vunpack.c.h.b16 %v8549
        %v8751 = vunpack.c.l.b16 %v8550
        %v8752 = vunpack.c.h.b16 %v8550
        %v8753 = vunpack.c.l.b16 %v8551
        %v8754 = vunpack.c.h.b16 %v8551
        %v8755 = vunpack.c.l.b16 %v8552
        %v8756 = vunpack.c.h.b16 %v8552
        %v8757 = vunpack.c.l.b16 %v8553
        %v8758 = vunpack.c.h.b16 %v8553
        %v8759 = vunpack.c.l.b16 %v8554
        %v8760 = vunpack.c.h.b16 %v8554
        %v8761 = vunpack.c.l.b16 %v8555
        %v8762 = vunpack.c.h.b16 %v8555
        %v8763 = vunpack.c.l.b16 %v8556
        %v8764 = vunpack.c.h.b16 %v8556
        %v8765 = vunpack.c.l.b16 %v8557
        %v8766 = vunpack.c.h.b16 %v8557
        %v8767 = vunpack.c.l.b16 %v8558
        %v8768 = vunpack.c.h.b16 %v8558
        %v8769 = vunpack.c.l.b16 %v8559
        %v8770 = vunpack.c.h.b16 %v8559
        %v8771 = vunpack.c.l.b16 %v8560
        %v8772 = vunpack.c.h.b16 %v8560
        %v8773 = vunpack.c.l.b16 %v8561
        %v8774 = vunpack.c.h.b16 %v8561
        %v8775 = vunpack.c.l.b16 %v8562
        %v8776 = vunpack.c.h.b16 %v8562
        %v8777 = vunpack.c.l.b16 %v8563
        %v8778 = vunpack.c.h.b16 %v8563
        %v8779 = vunpack.c.l.b16 %v8564
        %v8780 = vunpack.c.h.b16 %v8564
        %v8781 = vunpack.c.l.b16 %v8565
        %v8782 = vunpack.c.h.b16 %v8565
        %v8783 = vunpack.c.l.b16 %v8566
        %v8784 = vunpack.c.h.b16 %v8566
        %v8785 = vunpack.c.l.b16 %v8567
        %v8786 = vunpack.c.h.b16 %v8567
        %v8787 = vunpack.c.l.b16 %v8568
        %v8788 = vunpack.c.h.b16 %v8568
        %v8789 = vunpack.c.l.b16 %v8569
        %v8790 = vunpack.c.h.b16 %v8569
        %v8791 = vunpack.c.l.b16 %v8570
        %v8792 = vunpack.c.h.b16 %v8570
        %v8793 = vunpack.c.l.b16 %v8571
        %v8794 = vunpack.c.h.b16 %v8571
        %v8795 = vunpack.c.l.b16 %v8572
        %v8796 = vunpack.c.h.b16 %v8572
        %v8797 = vunpack.c.l.b16 %v8573
        %v8798 = vunpack.c.h.b16 %v8573
        %v8799 = vunpack.c.l.b16 %v8574
        %v8800 = vunpack.c.h.b16 %v8574
        %v8801 = vunpack.c.l.b16 %v8575
        %v8802 = vunpack.c.h.b16 %v8575
        %v8803 = vunpack.c.l.b16 %v8576
        %v8804 = vunpack.c.h.b16 %v8576
        %v8805 = vunpack.c.l.b16 %v8577
        %v8806 = vunpack.c.h.b16 %v8577
        %v8807 = vunpack.c.l.b16 %v8578
        %v8808 = vunpack.c.h.b16 %v8578
        %v8809 = vunpack.c.l.b16 %v8579
        %v8810 = vunpack.c.h.b16 %v8579
        %v8811 = vunpack.c.l.b16 %v8580
        %v8812 = vunpack.c.h.b16 %v8580
        %v8813 = vpack.c.b16 %v8671, %v8669
        %v8814 = vpack.c.b16 %v8672, %v8670
        %v8815 = vpack.c.b16 %v8675, %v8673
        %v8816 = vpack.c.b16 %v8676, %v8674
        %v8817 = vpack.c.b16 %v8679, %v8677
        %v8818 = vpack.c.b16 %v8680, %v8678
        %v8819 = vpack.c.b16 %v8683, %v8681
        %v8820 = vpack.c.b16 %v8684, %v8682
        %v8821 = vpack.c.b16 %v8687, %v8685
        %v8822 = vpack.c.b16 %v8688, %v8686
        %v8823 = vpack.c.b16 %v8691, %v8689
        %v8824 = vpack.c.b16 %v8692, %v8690
        %v8825 = vpack.c.b16 %v8695, %v8693
        %v8826 = vpack.c.b16 %v8696, %v8694
        %v8827 = vpack.c.b16 %v8699, %v8697
        %v8828 = vpack.c.b16 %v8700, %v8698
        %v8829 = vpack.c.b16 %v8703, %v8701
        %v8830 = vpack.c.b16 %v8704, %v8702
        %v8831 = vpack.c.b16 %v8707, %v8705
        %v8832 = vpack.c.b16 %v8708, %v8706
        %v8833 = vpack.c.b16 %v8711, %v8709
        %v8834 = vpack.c.b16 %v8712, %v8710
        %v8835 = vpack.c.b16 %v8715, %v8713
        %v8836 = vpack.c.b16 %v8716, %v8714
        %v8837 = vpack.c.b16 %v8719, %v8717
        %v8838 = vpack.c.b16 %v8720, %v8718
        %v8839 = vpack.c.b16 %v8723, %v8721
        %v8840 = vpack.c.b16 %v8724, %v8722
        %v8841 = vpack.c.b16 %v8727, %v8725
        %v8842 = vpack.c.b16 %v8728, %v8726
        %v8843 = vpack.c.b16 %v8731, %v8729
        %v8844 = vpack.c.b16 %v8732, %v8730
        %v8845 = vpack.c.b16 %v8735, %v8733
        %v8846 = vpack.c.b16 %v8736, %v8734
        %v8847 = vpack.c.b16 %v8739, %v8737
        %v8848 = vpack.c.b16 %v8740, %v8738
        %v8849 = vpack.c.b16 %v8743, %v8741
        %v8850 = vpack.c.b16 %v8744, %v8742
        %v8851 = vpack.c.b16 %v8747, %v8745
        %v8852 = vpack.c.b16 %v8748, %v8746
        %v8853 = vpack.c.b16 %v8751, %v8749
        %v8854 = vpack.c.b16 %v8752, %v8750
        %v8855 = vpack.c.b16 %v8755, %v8753
        %v8856 = vpack.c.b16 %v8756, %v8754
        %v8857 = vpack.c.b16 %v8759, %v8757
        %v8858 = vpack.c.b16 %v8760, %v8758
        %v8859 = vpack.c.b16 %v8763, %v8761
        %v8860 = vpack.c.b16 %v8764, %v8762
        %v8861 = vpack.c.b16 %v8767, %v8765
        %v8862 = vpack.c.b16 %v8768, %v8766
        %v8863 = vpack.c.b16 %v8771, %v8769
        %v8864 = vpack.c.b16 %v8772, %v8770
        %v8865 = vpack.c.b16 %v8775, %v8773
        %v8866 = vpack.c.b16 %v8776, %v8774
        %v8867 = vpack.c.b16 %v8779, %v8777
        %v8868 = vpack.c.b16 %v8780, %v8778
        %v8869 = vpack.c.b16 %v8783, %v8781
        %v8870 = vpack.c.b16 %v8784, %v8782
        %v8871 = vpack.c.b16 %v8787, %v8785
        %v8872 = vpack.c.b16 %v8788, %v8786
        %v8873 = vpack.c.b16 %v8791, %v8789
        %v8874 = vpack.c.b16 %v8792, %v8790
        %v8875 = vpack.c.b16 %v8795, %v8793
        %v8876 = vpack.c.b16 %v8796, %v8794
        %v8877 = vpack.c.b16 %v8799, %v8797
        %v8878 = vpack.c.b16 %v8800, %v8798
        %v8879 = vpack.c.b16 %v8803, %v8801
        %v8880 = vpack.c.b16 %v8804, %v8802
        %v8881 = vpack.c.b16 %v8807, %v8805
        %v8882 = vpack.c.b16 %v8808, %v8806
        %v8883 = vpack.c.b16 %v8811, %v8809
        %v8884 = vpack.c.b16 %v8812, %v8810
        %8957 = vmatpush.bf16.msra.mxu0 %v8588
        %8958 = vmatpush.bf16.msra.mxu0 %v8587
        %8959 = vmatpush.bf16.msra.mxu0 %v8586
        %8960 = vmatpush.bf16.msra.mxu0 %v8585
        %8961 = vmatpush.bf16.msra.mxu0 %v8584
        %8962 = vmatpush.bf16.msra.mxu0 %v8583
        %8963 = vmatpush.bf16.msra.mxu0 %v8582
        %8964 = vmatpush.bf16.msra.mxu0 %v8581
        %8965 = vmatmul.bf16.gmra.mxu0 %v8813
        %v8966 = vpop.f32.mrf.mxu0
        %v8967 = vadd.f32 0.0, %v8966
        %v8968 = vpop.f32.mrf.mxu0
        %v8969 = vadd.f32 0.0, %v8968
        %8970 = vmatmul.bf16.gmra.mxu0 %v8815
        %v8971 = vpop.f32.mrf.mxu0
        %v8972 = vadd.f32 0.0, %v8971
        %v8973 = vpop.f32.mrf.mxu0
        %v8974 = vadd.f32 0.0, %v8973
        %8975 = vmatmul.bf16.gmra.mxu0 %v8817
        %v8976 = vpop.f32.mrf.mxu0
        %v8977 = vadd.f32 0.0, %v8976
        %v8978 = vpop.f32.mrf.mxu0
        %v8979 = vadd.f32 0.0, %v8978
        %8980 = vmatmul.bf16.gmra.mxu0 %v8819
        %v8981 = vpop.f32.mrf.mxu0
        %v8982 = vadd.f32 0.0, %v8981
        %v8983 = vpop.f32.mrf.mxu0
        %v8984 = vadd.f32 0.0, %v8983
        %8985 = vmatmul.bf16.gmra.mxu0 %v8821
        %v8986 = vpop.f32.mrf.mxu0
        %v8987 = vadd.f32 0.0, %v8986
        %v8988 = vpop.f32.mrf.mxu0
        %v8989 = vadd.f32 0.0, %v8988
        %8990 = vmatmul.bf16.gmra.mxu0 %v8823
        %v8991 = vpop.f32.mrf.mxu0
        %v8992 = vadd.f32 0.0, %v8991
        %v8993 = vpop.f32.mrf.mxu0
        %v8994 = vadd.f32 0.0, %v8993
        %8995 = vmatmul.bf16.gmra.mxu0 %v8825
        %v8996 = vpop.f32.mrf.mxu0
        %v8997 = vadd.f32 0.0, %v8996
        %v8998 = vpop.f32.mrf.mxu0
        %v8999 = vadd.f32 0.0, %v8998
        %9000 = vmatmul.bf16.gmra.mxu0 %v8827
        %v9001 = vpop.f32.mrf.mxu0
        %v9002 = vadd.f32 0.0, %v9001
        %v9003 = vpop.f32.mrf.mxu0
        %v9004 = vadd.f32 0.0, %v9003
        %9005 = vmatmul.bf16.gmra.mxu0 %v8829
        %v9006 = vpop.f32.mrf.mxu0
        %v9007 = vadd.f32 0.0, %v9006
        %v9008 = vpop.f32.mrf.mxu0
        %v9009 = vadd.f32 0.0, %v9008
        %9010 = vmatmul.bf16.gmra.mxu0 %v8831
        %v9011 = vpop.f32.mrf.mxu0
        %v9012 = vadd.f32 0.0, %v9011
        %v9013 = vpop.f32.mrf.mxu0
        %v9014 = vadd.f32 0.0, %v9013
        %9015 = vmatmul.bf16.gmra.mxu0 %v8833
        %v9016 = vpop.f32.mrf.mxu0
        %v9017 = vadd.f32 0.0, %v9016
        %v9018 = vpop.f32.mrf.mxu0
        %v9019 = vadd.f32 0.0, %v9018
        %9020 = vmatmul.bf16.gmra.mxu0 %v8835
        %v9021 = vpop.f32.mrf.mxu0
        %v9022 = vadd.f32 0.0, %v9021
        %v9023 = vpop.f32.mrf.mxu0
        %v9024 = vadd.f32 0.0, %v9023
        %9025 = vmatmul.bf16.gmra.mxu0 %v8837
        %v9026 = vpop.f32.mrf.mxu0
        %v9027 = vadd.f32 0.0, %v9026
        %v9028 = vpop.f32.mrf.mxu0
        %v9029 = vadd.f32 0.0, %v9028
        %9030 = vmatmul.bf16.gmra.mxu0 %v8839
        %v9031 = vpop.f32.mrf.mxu0
        %v9032 = vadd.f32 0.0, %v9031
        %v9033 = vpop.f32.mrf.mxu0
        %v9034 = vadd.f32 0.0, %v9033
        %9035 = vmatmul.bf16.gmra.mxu0 %v8841
        %v9036 = vpop.f32.mrf.mxu0
        %v9037 = vadd.f32 0.0, %v9036
        %v9038 = vpop.f32.mrf.mxu0
        %v9039 = vadd.f32 0.0, %v9038
        %9040 = vmatmul.bf16.gmra.mxu0 %v8843
        %v9041 = vpop.f32.mrf.mxu0
        %v9042 = vadd.f32 0.0, %v9041
        %v9043 = vpop.f32.mrf.mxu0
        %v9044 = vadd.f32 0.0, %v9043
        %9045 = vmatmul.bf16.gmra.mxu0 %v8845
        %v9046 = vpop.f32.mrf.mxu0
        %v9047 = vadd.f32 0.0, %v9046
        %v9048 = vpop.f32.mrf.mxu0
        %v9049 = vadd.f32 0.0, %v9048
        %9050 = vmatmul.bf16.gmra.mxu0 %v8847
        %v9051 = vpop.f32.mrf.mxu0
        %v9052 = vadd.f32 0.0, %v9051
        %v9053 = vpop.f32.mrf.mxu0
        %v9054 = vadd.f32 0.0, %v9053
        %9055 = vmatmul.bf16.gmra.mxu0 %v8849
        %v9056 = vpop.f32.mrf.mxu0
        %v9057 = vadd.f32 0.0, %v9056
        %v9058 = vpop.f32.mrf.mxu0
        %v9059 = vadd.f32 0.0, %v9058
        %9060 = vmatmul.bf16.gmra.mxu0 %v8851
        %v9061 = vpop.f32.mrf.mxu0
        %v9062 = vadd.f32 0.0, %v9061
        %v9063 = vpop.f32.mrf.mxu0
        %v9064 = vadd.f32 0.0, %v9063
        %9065 = vmatmul.bf16.gmra.mxu0 %v8853
        %v9066 = vpop.f32.mrf.mxu0
        %v9067 = vadd.f32 0.0, %v9066
        %v9068 = vpop.f32.mrf.mxu0
        %v9069 = vadd.f32 0.0, %v9068
        %9070 = vmatmul.bf16.gmra.mxu0 %v8855
        %v9071 = vpop.f32.mrf.mxu0
        %v9072 = vadd.f32 0.0, %v9071
        %v9073 = vpop.f32.mrf.mxu0
        %v9074 = vadd.f32 0.0, %v9073
        %9075 = vmatmul.bf16.gmra.mxu0 %v8857
        %v9076 = vpop.f32.mrf.mxu0
        %v9077 = vadd.f32 0.0, %v9076
        %v9078 = vpop.f32.mrf.mxu0
        %v9079 = vadd.f32 0.0, %v9078
        %9080 = vmatmul.bf16.gmra.mxu0 %v8859
        %v9081 = vpop.f32.mrf.mxu0
        %v9082 = vadd.f32 0.0, %v9081
        %v9083 = vpop.f32.mrf.mxu0
        %v9084 = vadd.f32 0.0, %v9083
        %9085 = vmatmul.bf16.gmra.mxu0 %v8861
        %v9086 = vpop.f32.mrf.mxu0
        %v9087 = vadd.f32 0.0, %v9086
        %v9088 = vpop.f32.mrf.mxu0
        %v9089 = vadd.f32 0.0, %v9088
        %9090 = vmatmul.bf16.gmra.mxu0 %v8863
        %v9091 = vpop.f32.mrf.mxu0
        %v9092 = vadd.f32 0.0, %v9091
        %v9093 = vpop.f32.mrf.mxu0
        %v9094 = vadd.f32 0.0, %v9093
        %9095 = vmatmul.bf16.gmra.mxu0 %v8865
        %v9096 = vpop.f32.mrf.mxu0
        %v9097 = vadd.f32 0.0, %v9096
        %v9098 = vpop.f32.mrf.mxu0
        %v9099 = vadd.f32 0.0, %v9098
        %9100 = vmatmul.bf16.gmra.mxu0 %v8867
        %v9101 = vpop.f32.mrf.mxu0
        %v9102 = vadd.f32 0.0, %v9101
        %v9103 = vpop.f32.mrf.mxu0
        %v9104 = vadd.f32 0.0, %v9103
        %9105 = vmatmul.bf16.gmra.mxu0 %v8869
        %v9106 = vpop.f32.mrf.mxu0
        %v9107 = vadd.f32 0.0, %v9106
        %v9108 = vpop.f32.mrf.mxu0
        %v9109 = vadd.f32 0.0, %v9108
        %9110 = vmatmul.bf16.gmra.mxu0 %v8871
        %v9111 = vpop.f32.mrf.mxu0
        %v9112 = vadd.f32 0.0, %v9111
        %v9113 = vpop.f32.mrf.mxu0
        %v9114 = vadd.f32 0.0, %v9113
        %9115 = vmatmul.bf16.gmra.mxu0 %v8873
        %v9116 = vpop.f32.mrf.mxu0
        %v9117 = vadd.f32 0.0, %v9116
        %v9118 = vpop.f32.mrf.mxu0
        %v9119 = vadd.f32 0.0, %v9118
        %9120 = vmatmul.bf16.gmra.mxu0 %v8875
        %v9121 = vpop.f32.mrf.mxu0
        %v9122 = vadd.f32 0.0, %v9121
        %v9123 = vpop.f32.mrf.mxu0
        %v9124 = vadd.f32 0.0, %v9123
        %9125 = vmatmul.bf16.gmra.mxu0 %v8877
        %v9126 = vpop.f32.mrf.mxu0
        %v9127 = vadd.f32 0.0, %v9126
        %v9128 = vpop.f32.mrf.mxu0
        %v9129 = vadd.f32 0.0, %v9128
        %9130 = vmatmul.bf16.gmra.mxu0 %v8879
        %v9131 = vpop.f32.mrf.mxu0
        %v9132 = vadd.f32 0.0, %v9131
        %v9133 = vpop.f32.mrf.mxu0
        %v9134 = vadd.f32 0.0, %v9133
        %9135 = vmatmul.bf16.gmra.mxu0 %v8881
        %v9136 = vpop.f32.mrf.mxu0
        %v9137 = vadd.f32 0.0, %v9136
        %v9138 = vpop.f32.mrf.mxu0
        %v9139 = vadd.f32 0.0, %v9138
        %9140 = vmatmul.bf16.gmra.mxu0 %v8883
        %v9141 = vpop.f32.mrf.mxu0
        %v9142 = vadd.f32 0.0, %v9141
        %v9143 = vpop.f32.mrf.mxu0
        %v9144 = vadd.f32 0.0, %v9143
        %9145 = vdwg.mxu0
        %9146 = vmatpush.bf16.msra.mxu0 %v8596
        %9147 = vmatpush.bf16.msra.mxu0 %v8595
        %9148 = vmatpush.bf16.msra.mxu0 %v8594
        %9149 = vmatpush.bf16.msra.mxu0 %v8593
        %9150 = vmatpush.bf16.msra.mxu0 %v8592
        %9151 = vmatpush.bf16.msra.mxu0 %v8591
        %9152 = vmatpush.bf16.msra.mxu0 %v8590
        %9153 = vmatpush.bf16.msra.mxu0 %v8589
        %9154 = vmatmul.bf16.gmra.mxu0 %v8814
        %v9155 = vpop.f32.mrf.mxu0
        %v9156 = vadd.f32 %v8967, %v9155
        %v9157 = vpop.f32.mrf.mxu0
        %v9158 = vadd.f32 %v8969, %v9157
        %9159 = vmatmul.bf16.gmra.mxu0 %v8816
        %v9160 = vpop.f32.mrf.mxu0
        %v9161 = vadd.f32 %v8972, %v9160
        %v9162 = vpop.f32.mrf.mxu0
        %v9163 = vadd.f32 %v8974, %v9162
        %9164 = vmatmul.bf16.gmra.mxu0 %v8818
        %v9165 = vpop.f32.mrf.mxu0
        %v9166 = vadd.f32 %v8977, %v9165
        %v9167 = vpop.f32.mrf.mxu0
        %v9168 = vadd.f32 %v8979, %v9167
        %9169 = vmatmul.bf16.gmra.mxu0 %v8820
        %v9170 = vpop.f32.mrf.mxu0
        %v9171 = vadd.f32 %v8982, %v9170
        %v9172 = vpop.f32.mrf.mxu0
        %v9173 = vadd.f32 %v8984, %v9172
        %9174 = vmatmul.bf16.gmra.mxu0 %v8822
        %v9175 = vpop.f32.mrf.mxu0
        %v9176 = vadd.f32 %v8987, %v9175
        %v9177 = vpop.f32.mrf.mxu0
        %v9178 = vadd.f32 %v8989, %v9177
        %9179 = vmatmul.bf16.gmra.mxu0 %v8824
        %v9180 = vpop.f32.mrf.mxu0
        %v9181 = vadd.f32 %v8992, %v9180
        %v9182 = vpop.f32.mrf.mxu0
        %v9183 = vadd.f32 %v8994, %v9182
        %9184 = vmatmul.bf16.gmra.mxu0 %v8826
        %v9185 = vpop.f32.mrf.mxu0
        %v9186 = vadd.f32 %v8997, %v9185
        %v9187 = vpop.f32.mrf.mxu0
        %v9188 = vadd.f32 %v8999, %v9187
        %9189 = vmatmul.bf16.gmra.mxu0 %v8828
        %v9190 = vpop.f32.mrf.mxu0
        %v9191 = vadd.f32 %v9002, %v9190
        %v9192 = vpop.f32.mrf.mxu0
        %v9193 = vadd.f32 %v9004, %v9192
        %9194 = vmatmul.bf16.gmra.mxu0 %v8830
        %v9195 = vpop.f32.mrf.mxu0
        %v9196 = vadd.f32 %v9007, %v9195
        %v9197 = vpop.f32.mrf.mxu0
        %v9198 = vadd.f32 %v9009, %v9197
        %9199 = vmatmul.bf16.gmra.mxu0 %v8832
        %v9200 = vpop.f32.mrf.mxu0
        %v9201 = vadd.f32 %v9012, %v9200
        %v9202 = vpop.f32.mrf.mxu0
        %v9203 = vadd.f32 %v9014, %v9202
        %9204 = vmatmul.bf16.gmra.mxu0 %v8834
        %v9205 = vpop.f32.mrf.mxu0
        %v9206 = vadd.f32 %v9017, %v9205
        %v9207 = vpop.f32.mrf.mxu0
        %v9208 = vadd.f32 %v9019, %v9207
        %9209 = vmatmul.bf16.gmra.mxu0 %v8836
        %v9210 = vpop.f32.mrf.mxu0
        %v9211 = vadd.f32 %v9022, %v9210
        %v9212 = vpop.f32.mrf.mxu0
        %v9213 = vadd.f32 %v9024, %v9212
        %9214 = vmatmul.bf16.gmra.mxu0 %v8838
        %v9215 = vpop.f32.mrf.mxu0
        %v9216 = vadd.f32 %v9027, %v9215
        %v9217 = vpop.f32.mrf.mxu0
        %v9218 = vadd.f32 %v9029, %v9217
        %9219 = vmatmul.bf16.gmra.mxu0 %v8840
        %v9220 = vpop.f32.mrf.mxu0
        %v9221 = vadd.f32 %v9032, %v9220
        %v9222 = vpop.f32.mrf.mxu0
        %v9223 = vadd.f32 %v9034, %v9222
        %9224 = vmatmul.bf16.gmra.mxu0 %v8842
        %v9225 = vpop.f32.mrf.mxu0
        %v9226 = vadd.f32 %v9037, %v9225
        %v9227 = vpop.f32.mrf.mxu0
        %v9228 = vadd.f32 %v9039, %v9227
        %9229 = vmatmul.bf16.gmra.mxu0 %v8844
        %v9230 = vpop.f32.mrf.mxu0
        %v9231 = vadd.f32 %v9042, %v9230
        %v9232 = vpop.f32.mrf.mxu0
        %v9233 = vadd.f32 %v9044, %v9232
        %9234 = vmatmul.bf16.gmra.mxu0 %v8846
        %v9235 = vpop.f32.mrf.mxu0
        %v9236 = vadd.f32 %v9047, %v9235
        %v9237 = vpop.f32.mrf.mxu0
        %v9238 = vadd.f32 %v9049, %v9237
        %9239 = vmatmul.bf16.gmra.mxu0 %v8848
        %v9240 = vpop.f32.mrf.mxu0
        %v9241 = vadd.f32 %v9052, %v9240
        %v9242 = vpop.f32.mrf.mxu0
        %v9243 = vadd.f32 %v9054, %v9242
        %9244 = vmatmul.bf16.gmra.mxu0 %v8850
        %v9245 = vpop.f32.mrf.mxu0
        %v9246 = vadd.f32 %v9057, %v9245
        %v9247 = vpop.f32.mrf.mxu0
        %v9248 = vadd.f32 %v9059, %v9247
        %9249 = vmatmul.bf16.gmra.mxu0 %v8852
        %v9250 = vpop.f32.mrf.mxu0
        %v9251 = vadd.f32 %v9062, %v9250
        %v9252 = vpop.f32.mrf.mxu0
        %v9253 = vadd.f32 %v9064, %v9252
        %9254 = vmatmul.bf16.gmra.mxu0 %v8854
        %v9255 = vpop.f32.mrf.mxu0
        %v9256 = vadd.f32 %v9067, %v9255
        %v9257 = vpop.f32.mrf.mxu0
        %v9258 = vadd.f32 %v9069, %v9257
        %9259 = vmatmul.bf16.gmra.mxu0 %v8856
        %v9260 = vpop.f32.mrf.mxu0
        %v9261 = vadd.f32 %v9072, %v9260
        %v9262 = vpop.f32.mrf.mxu0
        %v9263 = vadd.f32 %v9074, %v9262
        %9264 = vmatmul.bf16.gmra.mxu0 %v8858
        %v9265 = vpop.f32.mrf.mxu0
        %v9266 = vadd.f32 %v9077, %v9265
        %v9267 = vpop.f32.mrf.mxu0
        %v9268 = vadd.f32 %v9079, %v9267
        %9269 = vmatmul.bf16.gmra.mxu0 %v8860
        %v9270 = vpop.f32.mrf.mxu0
        %v9271 = vadd.f32 %v9082, %v9270
        %v9272 = vpop.f32.mrf.mxu0
        %v9273 = vadd.f32 %v9084, %v9272
        %9274 = vmatmul.bf16.gmra.mxu0 %v8862
        %v9275 = vpop.f32.mrf.mxu0
        %v9276 = vadd.f32 %v9087, %v9275
        %v9277 = vpop.f32.mrf.mxu0
        %v9278 = vadd.f32 %v9089, %v9277
        %9279 = vmatmul.bf16.gmra.mxu0 %v8864
        %v9280 = vpop.f32.mrf.mxu0
        %v9281 = vadd.f32 %v9092, %v9280
        %v9282 = vpop.f32.mrf.mxu0
        %v9283 = vadd.f32 %v9094, %v9282
        %9284 = vmatmul.bf16.gmra.mxu0 %v8866
        %v9285 = vpop.f32.mrf.mxu0
        %v9286 = vadd.f32 %v9097, %v9285
        %v9287 = vpop.f32.mrf.mxu0
        %v9288 = vadd.f32 %v9099, %v9287
        %9289 = vmatmul.bf16.gmra.mxu0 %v8868
        %v9290 = vpop.f32.mrf.mxu0
        %v9291 = vadd.f32 %v9102, %v9290
        %v9292 = vpop.f32.mrf.mxu0
        %v9293 = vadd.f32 %v9104, %v9292
        %9294 = vmatmul.bf16.gmra.mxu0 %v8870
        %v9295 = vpop.f32.mrf.mxu0
        %v9296 = vadd.f32 %v9107, %v9295
        %v9297 = vpop.f32.mrf.mxu0
        %v9298 = vadd.f32 %v9109, %v9297
        %9299 = vmatmul.bf16.gmra.mxu0 %v8872
        %v9300 = vpop.f32.mrf.mxu0
        %v9301 = vadd.f32 %v9112, %v9300
        %v9302 = vpop.f32.mrf.mxu0
        %v9303 = vadd.f32 %v9114, %v9302
        %9304 = vmatmul.bf16.gmra.mxu0 %v8874
        %v9305 = vpop.f32.mrf.mxu0
        %v9306 = vadd.f32 %v9117, %v9305
        %v9307 = vpop.f32.mrf.mxu0
        %v9308 = vadd.f32 %v9119, %v9307
        %9309 = vmatmul.bf16.gmra.mxu0 %v8876
        %v9310 = vpop.f32.mrf.mxu0
        %v9311 = vadd.f32 %v9122, %v9310
        %v9312 = vpop.f32.mrf.mxu0
        %v9313 = vadd.f32 %v9124, %v9312
        %9314 = vmatmul.bf16.gmra.mxu0 %v8878
        %v9315 = vpop.f32.mrf.mxu0
        %v9316 = vadd.f32 %v9127, %v9315
        %v9317 = vpop.f32.mrf.mxu0
        %v9318 = vadd.f32 %v9129, %v9317
        %9319 = vmatmul.bf16.gmra.mxu0 %v8880
        %v9320 = vpop.f32.mrf.mxu0
        %v9321 = vadd.f32 %v9132, %v9320
        %v9322 = vpop.f32.mrf.mxu0
        %v9323 = vadd.f32 %v9134, %v9322
        %9324 = vmatmul.bf16.gmra.mxu0 %v8882
        %v9325 = vpop.f32.mrf.mxu0
        %v9326 = vadd.f32 %v9137, %v9325
        %v9327 = vpop.f32.mrf.mxu0
        %v9328 = vadd.f32 %v9139, %v9327
        %9329 = vmatmul.bf16.gmra.mxu0 %v8884
        %v9330 = vpop.f32.mrf.mxu0
        %v9331 = vadd.f32 %v9142, %v9330
        %v9332 = vpop.f32.mrf.mxu0
        %v9333 = vadd.f32 %v9144, %v9332
        %9334 = vdwg.mxu0
        %9335 = vst [vmem:[%s406] sm:$0xff] %v9156
        %9336 = vst [vmem:[%s406 + $0x8] sm:$0xff] %v9158
        %9337 = vst [vmem:[%s406 + $0x10] sm:$0xff] %v9161
        %9338 = vst [vmem:[%s406 + $0x18] sm:$0xff] %v9163
        %9339 = vst [vmem:[%s406 + $0x20] sm:$0xff] %v9166
        %9340 = vst [vmem:[%s406 + $0x28] sm:$0xff] %v9168
        %9341 = vst [vmem:[%s406 + $0x30] sm:$0xff] %v9171
        %9342 = vst [vmem:[%s406 + $0x38] sm:$0xff] %v9173
        %9343 = vst [vmem:[%s406 + $0x40] sm:$0xff] %v9176
        %9344 = vst [vmem:[%s406 + $0x48] sm:$0xff] %v9178
        %9345 = vst [vmem:[%s406 + $0x50] sm:$0xff] %v9181
        %9346 = vst [vmem:[%s406 + $0x58] sm:$0xff] %v9183
        %9347 = vst [vmem:[%s406 + $0x60] sm:$0xff] %v9186
        %9348 = vst [vmem:[%s406 + $0x68] sm:$0xff] %v9188
        %9349 = vst [vmem:[%s406 + $0x70] sm:$0xff] %v9191
        %9350 = vst [vmem:[%s406 + $0x78] sm:$0xff] %v9193
        %9351 = vst [vmem:[%s406 + $0x80] sm:$0xff] %v9196
        %9352 = vst [vmem:[%s406 + $0x88] sm:$0xff] %v9198
        %9353 = vst [vmem:[%s406 + $0x90] sm:$0xff] %v9201
        %9354 = vst [vmem:[%s406 + $0x98] sm:$0xff] %v9203
        %9355 = vst [vmem:[%s406 + $0xa0] sm:$0xff] %v9206
        %9356 = vst [vmem:[%s406 + $0xa8] sm:$0xff] %v9208
        %9357 = vst [vmem:[%s406 + $0xb0] sm:$0xff] %v9211
        %9358 = vst [vmem:[%s406 + $0xb8] sm:$0xff] %v9213
        %9359 = vst [vmem:[%s406 + $0xc0] sm:$0xff] %v9216
        %9360 = vst [vmem:[%s406 + $0xc8] sm:$0xff] %v9218
        %9361 = vst [vmem:[%s406 + $0xd0] sm:$0xff] %v9221
        %9362 = vst [vmem:[%s406 + $0xd8] sm:$0xff] %v9223
        %9363 = vst [vmem:[%s406 + $0xe0] sm:$0xff] %v9226
        %9364 = vst [vmem:[%s406 + $0xe8] sm:$0xff] %v9228
        %9365 = vst [vmem:[%s406 + $0xf0] sm:$0xff] %v9231
        %9366 = vst [vmem:[%s406 + $0xf8] sm:$0xff] %v9233
        %9367 = vst [vmem:[%s406 + $0x100] sm:$0xff] %v9236
        %9368 = vst [vmem:[%s406 + $0x108] sm:$0xff] %v9238
        %9369 = vst [vmem:[%s406 + $0x110] sm:$0xff] %v9241
        %9370 = vst [vmem:[%s406 + $0x118] sm:$0xff] %v9243
        %9371 = vst [vmem:[%s406 + $0x120] sm:$0xff] %v9246
        %9372 = vst [vmem:[%s406 + $0x128] sm:$0xff] %v9248
        %9373 = vst [vmem:[%s406 + $0x130] sm:$0xff] %v9251
        %9374 = vst [vmem:[%s406 + $0x138] sm:$0xff] %v9253
        %9375 = vst [vmem:[%s406 + $0x140] sm:$0xff] %v9256
        %9376 = vst [vmem:[%s406 + $0x148] sm:$0xff] %v9258
        %9377 = vst [vmem:[%s406 + $0x150] sm:$0xff] %v9261
        %9378 = vst [vmem:[%s406 + $0x158] sm:$0xff] %v9263
        %9379 = vst [vmem:[%s406 + $0x160] sm:$0xff] %v9266
        %9380 = vst [vmem:[%s406 + $0x168] sm:$0xff] %v9268
        %9381 = vst [vmem:[%s406 + $0x170] sm:$0xff] %v9271
        %9382 = vst [vmem:[%s406 + $0x178] sm:$0xff] %v9273
        %9383 = vst [vmem:[%s406 + $0x180] sm:$0xff] %v9276
        %9384 = vst [vmem:[%s406 + $0x188] sm:$0xff] %v9278
        %9385 = vst [vmem:[%s406 + $0x190] sm:$0xff] %v9281
        %9386 = vst [vmem:[%s406 + $0x198] sm:$0xff] %v9283
        %9387 = vst [vmem:[%s406 + $0x1a0] sm:$0xff] %v9286
        %9388 = vst [vmem:[%s406 + $0x1a8] sm:$0xff] %v9288
        %9389 = vst [vmem:[%s406 + $0x1b0] sm:$0xff] %v9291
        %9390 = vst [vmem:[%s406 + $0x1b8] sm:$0xff] %v9293
        %9391 = vst [vmem:[%s406 + $0x1c0] sm:$0xff] %v9296
        %9392 = vst [vmem:[%s406 + $0x1c8] sm:$0xff] %v9298
        %9393 = vst [vmem:[%s406 + $0x1d0] sm:$0xff] %v9301
        %9394 = vst [vmem:[%s406 + $0x1d8] sm:$0xff] %v9303
        %9395 = vst [vmem:[%s406 + $0x1e0] sm:$0xff] %v9306
        %9396 = vst [vmem:[%s406 + $0x1e8] sm:$0xff] %v9308
        %9397 = vst [vmem:[%s406 + $0x1f0] sm:$0xff] %v9311
        %9398 = vst [vmem:[%s406 + $0x1f8] sm:$0xff] %v9313
        %9399 = vst [vmem:[%s406 + $0x200] sm:$0xff] %v9316
        %9400 = vst [vmem:[%s406 + $0x208] sm:$0xff] %v9318
        %9401 = vst [vmem:[%s406 + $0x210] sm:$0xff] %v9321
        %9402 = vst [vmem:[%s406 + $0x218] sm:$0xff] %v9323
        %9403 = vst [vmem:[%s406 + $0x220] sm:$0xff] %v9326
        %9404 = vst [vmem:[%s406 + $0x228] sm:$0xff] %v9328
        %9405 = vst [vmem:[%s406 + $0x230] sm:$0xff] %v9331
        %9406 = vst [vmem:[%s406 + $0x238] sm:$0xff] %v9333
        %s9407 = sand.u32 %s291, 1
        %s9408 = scalar_lea.sflag [#allocation6], %s9407
        %s9409 = sand.u32 %s291, 1
        %s9410 = smul.addr %s9409, 576
        %s9411 = scalar_lea.vmem [#allocation5], %s9410
        // Predicated region
        $region69: #{mc_forward.1} parent=67 // pred_check
          %p9412 = pneg %p301
        $region70: #{mc_forward.1} parent=67 // pred_check_branch
          %9414 = sbr.rel (%p9412) target = $region72
        $region71: #{mc_forward.1} parent=67 // pred_region
          %9416 = vsyncadd %s9408, 0
          %s9417 = smul.addr %s26, 72
          %s9418 = smul.addr %s9417, 8
          %s9419 = scalar_lea.hbm %s12, %s9418
          %s9420 = sshll.u32 %s9411, 4
          %s9421 = int_to_ptr.vmem [resolvable:$true] %s9420
          %s9422 = sshll.u32 %s9419, 4
          %s9423 = int_to_ptr.hbm [resolvable:$true] %s9422
          %9428 = dma.vmem_to_hbm [thread:$0]  %s9421, 9216, %s9423, %s9408, 128, 128, 8
        $region72: #{mc_forward.1} parent=67 // pred_fallthru
          _
      $region68: #{mc_forward.1} parent=5 // pred_fallthru
        _
      %p9429 = scmp.le.s32.totalorder 2, %s21
      // Predicated region
      $region73: #{mc_forward.1} parent=5 // pred_check
        %p9430 = pneg %p9429
      $region74: #{mc_forward.1} parent=5 // pred_check_branch
        %9432 = sbr.rel (%p9430) target = $region76
      $region75: #{mc_forward.1} parent=5 // pred_region
        %s9433 = ssub.s32 %s21, 2
        // Predicated region
        $region77: #{mc_forward.1} parent=75 // pred_check
          %p9434 = pneg %p307
        $region78: #{mc_forward.1} parent=75 // pred_check_branch
          %9436 = sbr.rel (%p9434) target = $region80
        $region79: #{mc_forward.1} parent=75 // pred_region
          %s9437 = sand.u32 %s292, 1
          %s9438 = scalar_lea.sflag [#allocation6], %s9437
          %s9439 = sand.u32 %s292, 1
          %s9440 = smul.addr %s9439, 576
          %s9441 = scalar_lea.vmem [#allocation5], %s9440
          %9443 = dma.done %s9438, 9216
        $region80: #{mc_forward.1} parent=75 // pred_fallthru
          _
      $region76: #{mc_forward.1} parent=5 // pred_fallthru
        _
    $region6: #{mc_forward.1} parent=1 // loop_footer
      %s25 = sadd.s32 1, %s21
    $region7: #{mc_forward.1} parent=1 // loop_footer_branch
      %20 = sbr.rel target = $region3
    $region8: #{mc_forward.1} parent=1 // loop_exit
      _
    %9444 = vsyncpa [#allocation6], 1
    %s9445 = scalar_lea.sflag [#allocation6], 1
    %9446 = vsyncpa %s9445, 1

</llo_original>
